<compile_context>
chip_gen: v5e
topology: v5e:2x2
jax: 0.10.0
libtpu: 0.0.40
codegen_flags: <defaults>
</compile_context>

<pallas_src>
import functools

import jax
import jax.numpy as jnp
from jax import lax
from jax.experimental import pallas as pl
from jax.experimental.pallas import tpu as pltpu

_VMEM_LIMIT = 32 * 1024 * 1024
_M_TILE = 256

LATENT_DIM = 128
CHANNELS = 3


# ----------------------------- Pallas kernels ------------------------------

def _gemm_bias_act_kernel(a_ref, b_ref, bias_ref, o_ref, *, act):
    """o = act(a @ b + bias).  bf16 operands, f32 MXU accumulate."""
    acc = jnp.dot(a_ref[...], b_ref[...], preferred_element_type=jnp.float32)
    acc = acc + bias_ref[...]
    if act == "relu":
        acc = jnp.maximum(acc, 0.0)
    elif act == "tanh":
        acc = jnp.tanh(acc)
    o_ref[...] = acc.astype(o_ref.dtype)


def _fc_fused_kernel(h_ref, wmu_ref, wlv_ref, wdec_ref, bmu_ref, blv_ref,
                     bdec_ref, eps_ref, mu_ref, lv_ref, hd_ref):
    """fc_mu + fc_logvar + reparameterize + fc_decode fused in one kernel."""
    h = h_ref[...]
    mu = jnp.dot(h, wmu_ref[...], preferred_element_type=jnp.float32) + bmu_ref[...]
    lv = jnp.dot(h, wlv_ref[...], preferred_element_type=jnp.float32) + blv_ref[...]
    z = mu + eps_ref[...] * jnp.exp(0.5 * lv)
    hd = jnp.dot(z.astype(jnp.bfloat16), wdec_ref[...],
                 preferred_element_type=jnp.float32) + bdec_ref[...]
    mu_ref[...] = mu
    lv_ref[...] = lv
    hd_ref[...] = hd.astype(hd_ref.dtype)


# ----------------------------- GEMM wrappers --------------------------------

def _m_tile(m):
    return _M_TILE if (m > _M_TILE and m % _M_TILE == 0) else m


def gemm_cf(w, colsT, bias, act, out_dtype=jnp.bfloat16):
    """o[Cout, M] = act(w[Cout, K] @ colsT[K, M] + bias[:, None])."""
    Cout, K = w.shape
    K2, M = colsT.shape
    assert K == K2
    tm = _m_tile(M)
    bias2 = bias.reshape(Cout, 1).astype(jnp.float32)
    return pl.pallas_call(
        functools.partial(_gemm_bias_act_kernel, act=act),
        out_shape=jax.ShapeDtypeStruct((Cout, M), out_dtype),
        grid=(M // tm,),
        in_specs=[
            pl.BlockSpec((Cout, K), lambda m: (0, 0)),
            pl.BlockSpec((K, tm), lambda m: (0, m)),
            pl.BlockSpec((Cout, 1), lambda m: (0, 0)),
        ],
        out_specs=pl.BlockSpec((Cout, tm), lambda m: (0, m)),
        compiler_params=pltpu.CompilerParams(
            dimension_semantics=("parallel",),
            vmem_limit_bytes=_VMEM_LIMIT),
    )(w.astype(jnp.bfloat16), colsT.astype(jnp.bfloat16), bias2)


def gemm_cf_phases(w_all, colsT_all, bias, act, out_dtype=jnp.bfloat16):
    """Phase-batched variant: o[p, Cout, M] for the 4 conv-transpose phases."""
    P, Cout, K = w_all.shape
    _, K2, M = colsT_all.shape
    assert K == K2
    tm = _m_tile(M)
    bias2 = bias.reshape(Cout, 1).astype(jnp.float32)
    return pl.pallas_call(
        functools.partial(_gemm_bias_act_kernel, act=act),
        out_shape=jax.ShapeDtypeStruct((P, Cout, M), out_dtype),
        grid=(P, M // tm),
        in_specs=[
            pl.BlockSpec((None, Cout, K), lambda p, m: (p, 0, 0)),
            pl.BlockSpec((None, K, tm), lambda p, m: (p, 0, m)),
            pl.BlockSpec((Cout, 1), lambda p, m: (0, 0)),
        ],
        out_specs=pl.BlockSpec((None, Cout, tm), lambda p, m: (p, 0, m)),
        compiler_params=pltpu.CompilerParams(
            dimension_semantics=("parallel", "parallel"),
            vmem_limit_bytes=_VMEM_LIMIT),
    )(w_all.astype(jnp.bfloat16), colsT_all.astype(jnp.bfloat16), bias2)


def fc_heads_and_decode(h, w_mu, b_mu, w_lv, b_lv, w_dec, b_dec, eps):
    """Fused fc_mu / fc_logvar / reparameterize / fc_decode (one pallas_call)."""
    B, K = h.shape
    D = w_mu.shape[0]
    Kd = w_dec.shape[0]
    return pl.pallas_call(
        _fc_fused_kernel,
        out_shape=(jax.ShapeDtypeStruct((B, D), jnp.float32),
                   jax.ShapeDtypeStruct((B, D), jnp.float32),
                   jax.ShapeDtypeStruct((B, Kd), jnp.bfloat16)),
        grid=(1,),
        in_specs=[
            pl.BlockSpec((B, K), lambda i: (0, 0)),
            pl.BlockSpec((K, D), lambda i: (0, 0)),
            pl.BlockSpec((K, D), lambda i: (0, 0)),
            pl.BlockSpec((D, Kd), lambda i: (0, 0)),
            pl.BlockSpec((1, D), lambda i: (0, 0)),
            pl.BlockSpec((1, D), lambda i: (0, 0)),
            pl.BlockSpec((1, Kd), lambda i: (0, 0)),
            pl.BlockSpec((B, D), lambda i: (0, 0)),
        ],
        out_specs=(pl.BlockSpec((B, D), lambda i: (0, 0)),
                   pl.BlockSpec((B, D), lambda i: (0, 0)),
                   pl.BlockSpec((B, Kd), lambda i: (0, 0))),
        compiler_params=pltpu.CompilerParams(vmem_limit_bytes=_VMEM_LIMIT),
    )(h.astype(jnp.bfloat16),
      w_mu.T.astype(jnp.bfloat16), w_lv.T.astype(jnp.bfloat16),
      w_dec.T.astype(jnp.bfloat16),
      b_mu.reshape(1, D).astype(jnp.float32),
      b_lv.reshape(1, D).astype(jnp.float32),
      b_dec.reshape(1, Kd).astype(jnp.float32),
      eps.astype(jnp.float32))


# --------------------------- Convolution lowering ---------------------------

def conv2d_cf(x_cf, w, b, act, out_dtype=jnp.bfloat16):
    """PyTorch Conv2d(k=4, s=2, p=1).  x_cf:[Cin,B,H,W], w:[Cout,Cin,4,4]."""
    Cout, Cin, k, _ = w.shape
    C, B, H, W = x_cf.shape
    stride, pad = 2, 1
    Ho = (H + 2 * pad - k) // stride + 1
    Wo = (W + 2 * pad - k) // stride + 1
    xp = jnp.pad(x_cf, ((0, 0), (0, 0), (pad, pad), (pad, pad)))
    taps = [xp[:, :, i:i + stride * Ho:stride, j:j + stride * Wo:stride]
            for i in range(k) for j in range(k)]
    colsT = jnp.concatenate(taps, axis=0).reshape(k * k * Cin, B * Ho * Wo)
    w_r = w.transpose(0, 2, 3, 1).reshape(Cout, k * k * Cin)  # K order (ki,kj,ci)
    y = gemm_cf(w_r, colsT, b, act, out_dtype)                # [Cout, B*Ho*Wo]
    return y.reshape(Cout, B, Ho, Wo)


# For output phase r = y % 2: (padded-row offset, kernel tap ki) pairs.
_SUBPIX_TAPS = (((0, 3), (1, 1)),   # even output index
                ((1, 2), (2, 0)))   # odd output index


def conv_transpose2d_cf(x_cf, w, b, act, out_dtype=jnp.bfloat16):
    """PyTorch ConvTranspose2d(k=4, s=2, p=1) via sub-pixel decomposition.

    x_cf:[Cin,B,H,W], w:[Cin,Cout,4,4] -> [Cout,B,2H,2W].  Each output phase
    (y%2, x%2) is a 2x2-tap conv over the 1-padded input, so K = 4*Cin.
    """
    Cin, Cout, k, _ = w.shape
    C, B, H, W = x_cf.shape
    xp = jnp.pad(x_cf, ((0, 0), (0, 0), (1, 1), (1, 1)))
    cols_list, w_list = [], []
    for r in range(2):
        for c in range(2):
            taps, w_taps = [], []
            for dr, ki in _SUBPIX_TAPS[r]:
                for dc, kj in _SUBPIX_TAPS[c]:
                    taps.append(xp[:, :, dr:dr + H, dc:dc + W])
                    w_taps.append(w[:, :, ki, kj])            # [Cin, Cout]
            cols_list.append(
                jnp.concatenate(taps, axis=0).reshape(4 * Cin, B * H * W))
            w_ph = jnp.stack(w_taps, axis=0)                  # [4, Cin, Cout]
            w_list.append(w_ph.transpose(2, 0, 1).reshape(Cout, 4 * Cin))
    colsT_all = jnp.stack(cols_list, axis=0)                  # [4, 4*Cin, M]
    w_all = jnp.stack(w_list, axis=0)                         # [4, Cout, 4*Cin]
    y = gemm_cf_phases(w_all, colsT_all, b, act, out_dtype)   # [4, Cout, M]
    y = y.reshape(2, 2, Cout, B, H, W)                        # (r, c, Cout, B, h, w)
    return y.transpose(2, 3, 4, 0, 5, 1).reshape(Cout, B, 2 * H, 2 * W)


# ------------------------------- VAE module ---------------------------------

def init_params(key, latent_dim=LATENT_DIM, channels=CHANNELS):
    params = {}
    keys = iter(jax.random.split(key, 32))

    def conv_init(cout, cin, k):
        fan_in = cin * k * k
        w = jax.random.normal(next(keys), (cout, cin, k, k), jnp.float32) / jnp.sqrt(fan_in)
        b = jax.random.normal(next(keys), (cout,), jnp.float32) * 0.01
        return w, b

    def convT_init(cin, cout, k):
        fan_in = cin * k * k
        w = jax.random.normal(next(keys), (cin, cout, k, k), jnp.float32) / jnp.sqrt(fan_in)
        b = jax.random.normal(next(keys), (cout,), jnp.float32) * 0.01
        return w, b

    def lin_init(dout, din):
        w = jax.random.normal(next(keys), (dout, din), jnp.float32) / jnp.sqrt(din)
        b = jax.random.normal(next(keys), (dout,), jnp.float32) * 0.01
        return w, b

    enc_chans = [(channels, 32), (32, 64), (64, 128), (128, 256)]
    for i, (cin, cout) in enumerate(enc_chans):
        params[f"enc{i}_w"], params[f"enc{i}_b"] = conv_init(cout, cin, 4)

    params["fc_mu_w"], params["fc_mu_b"] = lin_init(latent_dim, 256 * 2 * 2)
    params["fc_logvar_w"], params["fc_logvar_b"] = lin_init(latent_dim, 256 * 2 * 2)
    params["fc_dec_w"], params["fc_dec_b"] = lin_init(256 * 2 * 2, latent_dim)

    dec_chans = [(256, 128), (128, 64), (64, 32), (32, channels)]
    for i, (cin, cout) in enumerate(dec_chans):
        params[f"dec{i}_w"], params[f"dec{i}_b"] = convT_init(cin, cout, 4)

    return params


def vae_forward(params, x, eps):
    B = x.shape[0]

    # ---- encode (channel-first internal layout: [C, B, H, W]) ----
    h = jnp.transpose(x, (1, 0, 2, 3)).astype(jnp.bfloat16)
    for i in range(4):
        h = conv2d_cf(h, params[f"enc{i}_w"], params[f"enc{i}_b"], act="relu")
    # [256, B, 2, 2] -> [B, 256*2*2]  (same ordering as PyTorch .view(B, -1))
    h_flat = jnp.transpose(h, (1, 0, 2, 3)).reshape(B, -1)

    # ---- fc heads + reparameterize + fc_decode (single fused kernel) ----
    mu, logvar, hd = fc_heads_and_decode(
        h_flat, params["fc_mu_w"], params["fc_mu_b"],
        params["fc_logvar_w"], params["fc_logvar_b"],
        params["fc_dec_w"], params["fc_dec_b"], eps)

    # ---- decode ----
    d = jnp.transpose(hd.reshape(B, 256, 2, 2), (1, 0, 2, 3))   # [256, B, 2, 2]
    acts = ("relu", "relu", "relu", "tanh")
    for i in range(4):
        out_dtype = jnp.float32 if i == 3 else jnp.bfloat16
        d = conv_transpose2d_cf(d, params[f"dec{i}_w"], params[f"dec{i}_b"],
                                acts[i], out_dtype)
    recon = jnp.transpose(d, (1, 0, 2, 3))                       # [B, C, 32, 32]
    return recon, mu, logvar


# ----------------------- pure-XLA f32 reference (check) ---------------------

def _ref_forward(params, x, eps):
    B = x.shape[0]

    def conv(h, w, b):
        y = lax.conv_general_dilated(h, w, (2, 2), ((1, 1), (1, 1)),
                                     dimension_numbers=("NCHW", "OIHW", "NCHW"))
        return y + b.reshape(1, -1, 1, 1)

    def convT(h, w, b):
        wf = jnp.flip(w, (2, 3)).transpose(1, 0, 2, 3)
        y = lax.conv_general_dilated(h, wf, (1, 1), ((2, 2), (2, 2)),
                                     lhs_dilation=(2, 2),
                                     dimension_numbers=("NCHW", "OIHW", "NCHW"))
        return y + b.reshape(1, -1, 1, 1)

    h = x
    for i in range(4):
        h = jax.nn.relu(conv(h, params[f"enc{i}_w"], params[f"enc{i}_b"]))
    hf = h.reshape(B, -1)
    mu = hf @ params["fc_mu_w"].T + params["fc_mu_b"]
    logvar = hf @ params["fc_logvar_w"].T + params["fc_logvar_b"]
    z = mu + eps * jnp.exp(0.5 * logvar)
    d = (z @ params["fc_dec_w"].T + params["fc_dec_b"]).reshape(B, 256, 2, 2)
    for i in range(4):
        d = convT(d, params[f"dec{i}_w"], params[f"dec{i}_b"])
        d = jnp.tanh(d) if i == 3 else jax.nn.relu(d)
    return d, mu, logvar


# --------------------------------- driver -----------------------------------

if __name__ == "__main__":
    key = jax.random.PRNGKey(0)
    k_param, k_x, k_eps = jax.random.split(key, 3)

    B = 2
    # input must be 32x32 so the encoder bottoms out at 256*2*2 (fc_mu in-dim)
    x = jax.random.normal(k_x, (B, CHANNELS, 32, 32), jnp.float32)
    eps = jax.random.normal(k_eps, (B, LATENT_DIM), jnp.float32)  # randn_like(std)

    params = init_params(k_param)

    fwd = jax.jit(vae_forward)
    recon, mu, logvar = fwd(params, x, eps)
    jax.block_until_ready((recon, mu, logvar))

    assert recon.shape == (B, CHANNELS, 32, 32)
    assert mu.shape == (B, LATENT_DIM)
    assert logvar.shape == (B, LATENT_DIM)

    # Loose tolerance check against a pure-XLA f32 reference (bf16 GEMM
    # operands introduce small drift; a structural bug would be O(scale)).
    r_ref, mu_ref, lv_ref = jax.jit(_ref_forward)(params, x, eps)
    for got, ref in ((recon, r_ref), (mu, mu_ref), (logvar, lv_ref)):
        err = float(jnp.max(jnp.abs(got.astype(jnp.float32) - ref)))
        scale = float(jnp.max(jnp.abs(ref)))
        assert err <= 0.1 * scale + 1e-2, (err, scale)

    print("KERNEL_OK")
</pallas_src>

<mosaic_0001>
module attributes {stable_mosaic.version = 11 : i64} {
  func.func @_gemm_bias_act_kernel(%arg0: i32, %arg1: memref<32x48xbf16, #tpu.memory_space<vmem>>, %arg2: memref<48x256xbf16, #tpu.memory_space<vmem>>, %arg3: memref<32x1xf32, #tpu.memory_space<vmem>>, %arg4: memref<32x256xbf16, #tpu.memory_space<vmem>>) attributes {dimension_semantics = [#tpu.dimension_semantics<parallel>], iteration_bounds = array<i64: 2>, scalar_prefetch = 0 : i64, scratch_operands = 0 : i64, tpu.core_type = #tpu.core_type<tc>, window_params = [{pipeline_mode = #tpu.pipeline_mode<synchronous>, transform_indices = @transform_0, window_bounds = array<i64: 32, 48>}, {transform_indices = @transform_1, window_bounds = array<i64: 48, 256>}, {pipeline_mode = #tpu.pipeline_mode<synchronous>, transform_indices = @transform_2, window_bounds = array<i64: 32, 1>}, {transform_indices = @transform_3, window_bounds = array<i64: 32, 256>}]} {
    %c0 = arith.constant 0 : index
    %c0_0 = arith.constant 0 : index
    %0 = vector.load %arg1[%c0, %c0_0] : memref<32x48xbf16, #tpu.memory_space<vmem>>, vector<32x48xbf16>
    %c0_1 = arith.constant 0 : index
    %c0_2 = arith.constant 0 : index
    %1 = vector.load %arg2[%c0_1, %c0_2] : memref<48x256xbf16, #tpu.memory_space<vmem>>, vector<48x256xbf16>
    %cst = arith.constant dense<0.000000e+00> : vector<32x256xf32>
    %2 = tpu.matmul %0, %1, %cst {dimension_numbers = #tpu.dot_dimension_numbers<[1], [0], [0], [1], [0, 0, 1, 1], [], []>} : vector<32x48xbf16>, vector<48x256xbf16>, vector<32x256xf32> -> vector<32x256xf32>
    %c0_3 = arith.constant 0 : index
    %c0_4 = arith.constant 0 : index
    %3 = vector.load %arg3[%c0_3, %c0_4] : memref<32x1xf32, #tpu.memory_space<vmem>>, vector<32x1xf32>
    %4 = vector.broadcast %3 : vector<32x1xf32> to vector<32x256xf32>
    %5 = arith.addf %2, %4 : vector<32x256xf32>
    %cst_5 = arith.constant 0.000000e+00 : f32
    %6 = vector.broadcast %cst_5 : f32 to vector<32x256xf32>
    %7 = arith.maximumf %5, %6 : vector<32x256xf32>
    %8 = arith.truncf %7 : vector<32x256xf32> to vector<32x256xbf16>
    %c0_6 = arith.constant 0 : index
    %c0_7 = arith.constant 0 : index
    %9 = vector.load %arg4[%c0_6, %c0_7] : memref<32x256xbf16, #tpu.memory_space<vmem>>, vector<32x256xbf16>
    tpu.vector_store %arg4[%c0_6, %c0_7], %8 {strides = array<i32>} : memref<32x256xbf16, #tpu.memory_space<vmem>>, vector<32x256xbf16>,
    return
  }
  func.func @transform_0(%arg0: i32) -> (i32, i32) {
    %c0_i32 = arith.constant 0 : i32
    %c0_i32_0 = arith.constant 0 : i32
    %c0_i32_1 = arith.constant 0 : i32
    return %c0_i32, %c0_i32_0 : i32, i32
  }
  func.func @transform_1(%arg0: i32) -> (i32, i32) {
    %c0_i32 = arith.constant 0 : i32
    %c0_i32_0 = arith.constant 0 : i32
    return %c0_i32, %arg0 : i32, i32
  }
  func.func @transform_2(%arg0: i32) -> (i32, i32) {
    %c0_i32 = arith.constant 0 : i32
    %c0_i32_0 = arith.constant 0 : i32
    %c0_i32_1 = arith.constant 0 : i32
    return %c0_i32, %c0_i32_0 : i32, i32
  }
  func.func @transform_3(%arg0: i32) -> (i32, i32) {
    %c0_i32 = arith.constant 0 : i32
    %c0_i32_0 = arith.constant 0 : i32
    return %c0_i32, %arg0 : i32, i32
  }
}

module attributes {stable_mosaic.version = 11 : i64} {
  func.func @_gemm_bias_act_kernel(%arg0: i32, %arg1: memref<64x512xbf16, #tpu.memory_space<vmem>>, %arg2: memref<512x128xbf16, #tpu.memory_space<vmem>>, %arg3: memref<64x1xf32, #tpu.memory_space<vmem>>, %arg4: memref<64x128xbf16, #tpu.memory_space<vmem>>) attributes {dimension_semantics = [#tpu.dimension_semantics<parallel>], iteration_bounds = array<i64: 1>, scalar_prefetch = 0 : i64, scratch_operands = 0 : i64, tpu.core_type = #tpu.core_type<tc>, window_params = [{pipeline_mode = #tpu.pipeline_mode<synchronous>, transform_indices = @transform_0, window_bounds = array<i64: 64, 512>}, {transform_indices = @transform_1, window_bounds = array<i64: 512, 128>}, {pipeline_mode = #tpu.pipeline_mode<synchronous>, transform_indices = @transform_2, window_bounds = array<i64: 64, 1>}, {transform_indices = @transform_3, window_bounds = array<i64: 64, 128>}]} {
    %c0 = arith.constant 0 : index
    %c0_0 = arith.constant 0 : index
    %0 = vector.load %arg1[%c0, %c0_0] : memref<64x512xbf16, #tpu.memory_space<vmem>>, vector<64x512xbf16>
    %c0_1 = arith.constant 0 : index
    %c0_2 = arith.constant 0 : index
    %1 = vector.load %arg2[%c0_1, %c0_2] : memref<512x128xbf16, #tpu.memory_space<vmem>>, vector<512x128xbf16>
    %cst = arith.constant dense<0.000000e+00> : vector<64x128xf32>
    %2 = tpu.matmul %0, %1, %cst {dimension_numbers = #tpu.dot_dimension_numbers<[1], [0], [0], [1], [0, 0, 1, 1], [], []>} : vector<64x512xbf16>, vector<512x128xbf16>, vector<64x128xf32> -> vector<64x128xf32>
    %c0_3 = arith.constant 0 : index
    %c0_4 = arith.constant 0 : index
    %3 = vector.load %arg3[%c0_3, %c0_4] : memref<64x1xf32, #tpu.memory_space<vmem>>, vector<64x1xf32>
    %4 = vector.broadcast %3 : vector<64x1xf32> to vector<64x128xf32>
    %5 = arith.addf %2, %4 : vector<64x128xf32>
    %cst_5 = arith.constant 0.000000e+00 : f32
    %6 = vector.broadcast %cst_5 : f32 to vector<64x128xf32>
    %7 = arith.maximumf %5, %6 : vector<64x128xf32>
    %8 = arith.truncf %7 : vector<64x128xf32> to vector<64x128xbf16>
    %c0_6 = arith.constant 0 : index
    %c0_7 = arith.constant 0 : index
    %9 = vector.load %arg4[%c0_6, %c0_7] : memref<64x128xbf16, #tpu.memory_space<vmem>>, vector<64x128xbf16>
    tpu.vector_store %arg4[%c0_6, %c0_7], %8 {strides = array<i32>} : memref<64x128xbf16, #tpu.memory_space<vmem>>, vector<64x128xbf16>,
    return
  }
  func.func @transform_0(%arg0: i32) -> (i32, i32) {
    %c0_i32 = arith.constant 0 : i32
    %c0_i32_0 = arith.constant 0 : i32
    %c0_i32_1 = arith.constant 0 : i32
    return %c0_i32, %c0_i32_0 : i32, i32
  }
  func.func @transform_1(%arg0: i32) -> (i32, i32) {
    %c0_i32 = arith.constant 0 : i32
    %c0_i32_0 = arith.constant 0 : i32
    return %c0_i32, %arg0 : i32, i32
  }
  func.func @transform_2(%arg0: i32) -> (i32, i32) {
    %c0_i32 = arith.constant 0 : i32
    %c0_i32_0 = arith.constant 0 : i32
    %c0_i32_1 = arith.constant 0 : i32
    return %c0_i32, %c0_i32_0 : i32, i32
  }
  func.func @transform_3(%arg0: i32) -> (i32, i32) {
    %c0_i32 = arith.constant 0 : i32
    %c0_i32_0 = arith.constant 0 : i32
    return %c0_i32, %arg0 : i32, i32
  }
}

module attributes {stable_mosaic.version = 11 : i64} {
  func.func @_gemm_bias_act_kernel(%arg0: i32, %arg1: memref<128x1024xbf16, #tpu.memory_space<vmem>>, %arg2: memref<1024x32xbf16, #tpu.memory_space<vmem>>, %arg3: memref<128x1xf32, #tpu.memory_space<vmem>>, %arg4: memref<128x32xbf16, #tpu.memory_space<vmem>>) attributes {dimension_semantics = [#tpu.dimension_semantics<parallel>], iteration_bounds = array<i64: 1>, scalar_prefetch = 0 : i64, scratch_operands = 0 : i64, tpu.core_type = #tpu.core_type<tc>, window_params = [{pipeline_mode = #tpu.pipeline_mode<synchronous>, transform_indices = @transform_0, window_bounds = array<i64: 128, 1024>}, {transform_indices = @transform_1, window_bounds = array<i64: 1024, 32>}, {pipeline_mode = #tpu.pipeline_mode<synchronous>, transform_indices = @transform_2, window_bounds = array<i64: 128, 1>}, {transform_indices = @transform_3, window_bounds = array<i64: 128, 32>}]} {
    %c0 = arith.constant 0 : index
    %c0_0 = arith.constant 0 : index
    %0 = vector.load %arg1[%c0, %c0_0] : memref<128x1024xbf16, #tpu.memory_space<vmem>>, vector<128x1024xbf16>
    %c0_1 = arith.constant 0 : index
    %c0_2 = arith.constant 0 : index
    %1 = vector.load %arg2[%c0_1, %c0_2] : memref<1024x32xbf16, #tpu.memory_space<vmem>>, vector<1024x32xbf16>
    %cst = arith.constant dense<0.000000e+00> : vector<128x32xf32>
    %2 = tpu.matmul %0, %1, %cst {dimension_numbers = #tpu.dot_dimension_numbers<[1], [0], [0], [1], [0, 0, 1, 1], [], []>} : vector<128x1024xbf16>, vector<1024x32xbf16>, vector<128x32xf32> -> vector<128x32xf32>
    %c0_3 = arith.constant 0 : index
    %c0_4 = arith.constant 0 : index
    %3 = vector.load %arg3[%c0_3, %c0_4] : memref<128x1xf32, #tpu.memory_space<vmem>>, vector<128x1xf32>
    %4 = vector.broadcast %3 : vector<128x1xf32> to vector<128x32xf32>
    %5 = arith.addf %2, %4 : vector<128x32xf32>
    %cst_5 = arith.constant 0.000000e+00 : f32
    %6 = vector.broadcast %cst_5 : f32 to vector<128x32xf32>
    %7 = arith.maximumf %5, %6 : vector<128x32xf32>
    %8 = arith.truncf %7 : vector<128x32xf32> to vector<128x32xbf16>
    %c0_6 = arith.constant 0 : index
    %c0_7 = arith.constant 0 : index
    %9 = vector.load %arg4[%c0_6, %c0_7] : memref<128x32xbf16, #tpu.memory_space<vmem>>, vector<128x32xbf16>
    tpu.vector_store %arg4[%c0_6, %c0_7], %8 {strides = array<i32>} : memref<128x32xbf16, #tpu.memory_space<vmem>>, vector<128x32xbf16>,
    return
  }
  func.func @transform_0(%arg0: i32) -> (i32, i32) {
    %c0_i32 = arith.constant 0 : i32
    %c0_i32_0 = arith.constant 0 : i32
    %c0_i32_1 = arith.constant 0 : i32
    return %c0_i32, %c0_i32_0 : i32, i32
  }
  func.func @transform_1(%arg0: i32) -> (i32, i32) {
    %c0_i32 = arith.constant 0 : i32
    %c0_i32_0 = arith.constant 0 : i32
    return %c0_i32, %arg0 : i32, i32
  }
  func.func @transform_2(%arg0: i32) -> (i32, i32) {
    %c0_i32 = arith.constant 0 : i32
    %c0_i32_0 = arith.constant 0 : i32
    %c0_i32_1 = arith.constant 0 : i32
    return %c0_i32, %c0_i32_0 : i32, i32
  }
  func.func @transform_3(%arg0: i32) -> (i32, i32) {
    %c0_i32 = arith.constant 0 : i32
    %c0_i32_0 = arith.constant 0 : i32
    return %c0_i32, %arg0 : i32, i32
  }
}

module attributes {stable_mosaic.version = 11 : i64} {
  func.func @_gemm_bias_act_kernel(%arg0: i32, %arg1: memref<256x2048xbf16, #tpu.memory_space<vmem>>, %arg2: memref<2048x8xbf16, #tpu.memory_space<vmem>>, %arg3: memref<256x1xf32, #tpu.memory_space<vmem>>, %arg4: memref<256x8xbf16, #tpu.memory_space<vmem>>) attributes {dimension_semantics = [#tpu.dimension_semantics<parallel>], iteration_bounds = array<i64: 1>, scalar_prefetch = 0 : i64, scratch_operands = 0 : i64, tpu.core_type = #tpu.core_type<tc>, window_params = [{pipeline_mode = #tpu.pipeline_mode<synchronous>, transform_indices = @transform_0, window_bounds = array<i64: 256, 2048>}, {transform_indices = @transform_1, window_bounds = array<i64: 2048, 8>}, {pipeline_mode = #tpu.pipeline_mode<synchronous>, transform_indices = @transform_2, window_bounds = array<i64: 256, 1>}, {transform_indices = @transform_3, window_bounds = array<i64: 256, 8>}]} {
    %c0 = arith.constant 0 : index
    %c0_0 = arith.constant 0 : index
    %0 = vector.load %arg1[%c0, %c0_0] : memref<256x2048xbf16, #tpu.memory_space<vmem>>, vector<256x2048xbf16>
    %c0_1 = arith.constant 0 : index
    %c0_2 = arith.constant 0 : index
    %1 = vector.load %arg2[%c0_1, %c0_2] : memref<2048x8xbf16, #tpu.memory_space<vmem>>, vector<2048x8xbf16>
    %cst = arith.constant dense<0.000000e+00> : vector<256x8xf32>
    %2 = tpu.matmul %0, %1, %cst {dimension_numbers = #tpu.dot_dimension_numbers<[1], [0], [0], [1], [0, 0, 1, 1], [], []>} : vector<256x2048xbf16>, vector<2048x8xbf16>, vector<256x8xf32> -> vector<256x8xf32>
    %c0_3 = arith.constant 0 : index
    %c0_4 = arith.constant 0 : index
    %3 = vector.load %arg3[%c0_3, %c0_4] : memref<256x1xf32, #tpu.memory_space<vmem>>, vector<256x1xf32>
    %4 = vector.broadcast %3 : vector<256x1xf32> to vector<256x8xf32>
    %5 = arith.addf %2, %4 : vector<256x8xf32>
    %cst_5 = arith.constant 0.000000e+00 : f32
    %6 = vector.broadcast %cst_5 : f32 to vector<256x8xf32>
    %7 = arith.maximumf %5, %6 : vector<256x8xf32>
    %8 = arith.truncf %7 : vector<256x8xf32> to vector<256x8xbf16>
    %c0_6 = arith.constant 0 : index
    %c0_7 = arith.constant 0 : index
    %9 = vector.load %arg4[%c0_6, %c0_7] : memref<256x8xbf16, #tpu.memory_space<vmem>>, vector<256x8xbf16>
    tpu.vector_store %arg4[%c0_6, %c0_7], %8 {strides = array<i32>} : memref<256x8xbf16, #tpu.memory_space<vmem>>, vector<256x8xbf16>,
    return
  }
  func.func @transform_0(%arg0: i32) -> (i32, i32) {
    %c0_i32 = arith.constant 0 : i32
    %c0_i32_0 = arith.constant 0 : i32
    %c0_i32_1 = arith.constant 0 : i32
    return %c0_i32, %c0_i32_0 : i32, i32
  }
  func.func @transform_1(%arg0: i32) -> (i32, i32) {
    %c0_i32 = arith.constant 0 : i32
    %c0_i32_0 = arith.constant 0 : i32
    return %c0_i32, %arg0 : i32, i32
  }
  func.func @transform_2(%arg0: i32) -> (i32, i32) {
    %c0_i32 = arith.constant 0 : i32
    %c0_i32_0 = arith.constant 0 : i32
    %c0_i32_1 = arith.constant 0 : i32
    return %c0_i32, %c0_i32_0 : i32, i32
  }
  func.func @transform_3(%arg0: i32) -> (i32, i32) {
    %c0_i32 = arith.constant 0 : i32
    %c0_i32_0 = arith.constant 0 : i32
    return %c0_i32, %arg0 : i32, i32
  }
}

module attributes {stable_mosaic.version = 11 : i64} {
  func.func @_fc_fused_kernel(%arg0: i32, %arg1: memref<2x1024xbf16, #tpu.memory_space<vmem>>, %arg2: memref<1024x128xbf16, #tpu.memory_space<vmem>>, %arg3: memref<1024x128xbf16, #tpu.memory_space<vmem>>, %arg4: memref<128x1024xbf16, #tpu.memory_space<vmem>>, %arg5: memref<1x128xf32, #tpu.memory_space<vmem>>, %arg6: memref<1x128xf32, #tpu.memory_space<vmem>>, %arg7: memref<1x1024xf32, #tpu.memory_space<vmem>>, %arg8: memref<2x128xf32, #tpu.memory_space<vmem>>, %arg9: memref<2x128xf32, #tpu.memory_space<vmem>>, %arg10: memref<2x128xf32, #tpu.memory_space<vmem>>, %arg11: memref<2x1024xbf16, #tpu.memory_space<vmem>>) attributes {dimension_semantics = [#tpu.dimension_semantics<arbitrary>], iteration_bounds = array<i64: 1>, scalar_prefetch = 0 : i64, scratch_operands = 0 : i64, tpu.core_type = #tpu.core_type<tc>, window_params = [{pipeline_mode = #tpu.pipeline_mode<synchronous>, transform_indices = @transform_0, window_bounds = array<i64: 2, 1024>}, {pipeline_mode = #tpu.pipeline_mode<synchronous>, transform_indices = @transform_1, window_bounds = array<i64: 1024, 128>}, {pipeline_mode = #tpu.pipeline_mode<synchronous>, transform_indices = @transform_2, window_bounds = array<i64: 1024, 128>}, {pipeline_mode = #tpu.pipeline_mode<synchronous>, transform_indices = @transform_3, window_bounds = array<i64: 128, 1024>}, {pipeline_mode = #tpu.pipeline_mode<synchronous>, transform_indices = @transform_4, window_bounds = array<i64: 1, 128>}, {pipeline_mode = #tpu.pipeline_mode<synchronous>, transform_indices = @transform_5, window_bounds = array<i64: 1, 128>}, {pipeline_mode = #tpu.pipeline_mode<synchronous>, transform_indices = @transform_6, window_bounds = array<i64: 1, 1024>}, {pipeline_mode = #tpu.pipeline_mode<synchronous>, transform_indices = @transform_7, window_bounds = array<i64: 2, 128>}, {pipeline_mode = #tpu.pipeline_mode<synchronous>, transform_indices = @transform_8, window_bounds = array<i64: 2, 128>}, {pipeline_mode = #tpu.pipeline_mode<synchronous>, transform_indices = @transform_9, window_bounds = array<i64: 2, 128>}, {pipeline_mode = #tpu.pipeline_mode<synchronous>, transform_indices = @transform_10, window_bounds = array<i64: 2, 1024>}]} {
    %c0 = arith.constant 0 : index
    %c0_0 = arith.constant 0 : index
    %0 = vector.load %arg1[%c0, %c0_0] : memref<2x1024xbf16, #tpu.memory_space<vmem>>, vector<2x1024xbf16>
    %c0_1 = arith.constant 0 : index
    %c0_2 = arith.constant 0 : index
    %1 = vector.load %arg2[%c0_1, %c0_2] : memref<1024x128xbf16, #tpu.memory_space<vmem>>, vector<1024x128xbf16>
    %cst = arith.constant dense<0.000000e+00> : vector<2x128xf32>
    %2 = tpu.matmul %0, %1, %cst {dimension_numbers = #tpu.dot_dimension_numbers<[1], [0], [0], [1], [0, 0, 1, 1], [], []>} : vector<2x1024xbf16>, vector<1024x128xbf16>, vector<2x128xf32> -> vector<2x128xf32>
    %c0_3 = arith.constant 0 : index
    %c0_4 = arith.constant 0 : index
    %3 = vector.load %arg5[%c0_3, %c0_4] : memref<1x128xf32, #tpu.memory_space<vmem>>, vector<1x128xf32>
    %4 = vector.broadcast %3 : vector<1x128xf32> to vector<2x128xf32>
    %5 = arith.addf %2, %4 : vector<2x128xf32>
    %c0_5 = arith.constant 0 : index
    %c0_6 = arith.constant 0 : index
    %6 = vector.load %arg3[%c0_5, %c0_6] : memref<1024x128xbf16, #tpu.memory_space<vmem>>, vector<1024x128xbf16>
    %cst_7 = arith.constant dense<0.000000e+00> : vector<2x128xf32>
    %7 = tpu.matmul %0, %6, %cst_7 {dimension_numbers = #tpu.dot_dimension_numbers<[1], [0], [0], [1], [0, 0, 1, 1], [], []>} : vector<2x1024xbf16>, vector<1024x128xbf16>, vector<2x128xf32> -> vector<2x128xf32>
    %c0_8 = arith.constant 0 : index
    %c0_9 = arith.constant 0 : index
    %8 = vector.load %arg6[%c0_8, %c0_9] : memref<1x128xf32, #tpu.memory_space<vmem>>, vector<1x128xf32>
    %9 = vector.broadcast %8 : vector<1x128xf32> to vector<2x128xf32>
    %10 = arith.addf %7, %9 : vector<2x128xf32>
    %c0_10 = arith.constant 0 : index
    %c0_11 = arith.constant 0 : index
    %11 = vector.load %arg8[%c0_10, %c0_11] : memref<2x128xf32, #tpu.memory_space<vmem>>, vector<2x128xf32>
    %cst_12 = arith.constant 5.000000e-01 : f32
    %12 = vector.broadcast %cst_12 : f32 to vector<2x128xf32>
    %13 = arith.mulf %12, %10 : vector<2x128xf32>
    %14 = math.exp %13 : vector<2x128xf32>
    %15 = arith.mulf %11, %14 : vector<2x128xf32>
    %16 = arith.addf %5, %15 : vector<2x128xf32>
    %17 = arith.truncf %16 : vector<2x128xf32> to vector<2x128xbf16>
    %c0_13 = arith.constant 0 : index
    %c0_14 = arith.constant 0 : index
    %18 = vector.load %arg4[%c0_13, %c0_14] : memref<128x1024xbf16, #tpu.memory_space<vmem>>, vector<128x1024xbf16>
    %cst_15 = arith.constant dense<0.000000e+00> : vector<2x1024xf32>
    %19 = tpu.matmul %17, %18, %cst_15 {dimension_numbers = #tpu.dot_dimension_numbers<[1], [0], [0], [1], [0, 0, 1, 1], [], []>} : vector<2x128xbf16>, vector<128x1024xbf16>, vector<2x1024xf32> -> vector<2x1024xf32>
    %c0_16 = arith.constant 0 : index
    %c0_17 = arith.constant 0 : index
    %20 = vector.load %arg7[%c0_16, %c0_17] : memref<1x1024xf32, #tpu.memory_space<vmem>>, vector<1x1024xf32>
    %21 = vector.broadcast %20 : vector<1x1024xf32> to vector<2x1024xf32>
    %22 = arith.addf %19, %21 : vector<2x1024xf32>
    %c0_18 = arith.constant 0 : index
    %c0_19 = arith.constant 0 : index
    %23 = vector.load %arg9[%c0_18, %c0_19] : memref<2x128xf32, #tpu.memory_space<vmem>>, vector<2x128xf32>
    tpu.vector_store %arg9[%c0_18, %c0_19], %5 {strides = array<i32>} : memref<2x128xf32, #tpu.memory_space<vmem>>, vector<2x128xf32>,
    %c0_20 = arith.constant 0 : index
    %c0_21 = arith.constant 0 : index
    %24 = vector.load %arg10[%c0_20, %c0_21] : memref<2x128xf32, #tpu.memory_space<vmem>>, vector<2x128xf32>
    tpu.vector_store %arg10[%c0_20, %c0_21], %10 {strides = array<i32>} : memref<2x128xf32, #tpu.memory_space<vmem>>, vector<2x128xf32>,
    %25 = arith.truncf %22 : vector<2x1024xf32> to vector<2x1024xbf16>
    %c0_22 = arith.constant 0 : index
    %c0_23 = arith.constant 0 : index
    %26 = vector.load %arg11[%c0_22, %c0_23] : memref<2x1024xbf16, #tpu.memory_space<vmem>>, vector<2x1024xbf16>
    tpu.vector_store %arg11[%c0_22, %c0_23], %25 {strides = array<i32>} : memref<2x1024xbf16, #tpu.memory_space<vmem>>, vector<2x1024xbf16>,
    return
  }
  func.func @transform_0(%arg0: i32) -> (i32, i32) {
    %c0_i32 = arith.constant 0 : i32
    %c0_i32_0 = arith.constant 0 : i32
    %c0_i32_1 = arith.constant 0 : i32
    return %c0_i32, %c0_i32_0 : i32, i32
  }
  func.func @transform_1(%arg0: i32) -> (i32, i32) {
    %c0_i32 = arith.constant 0 : i32
    %c0_i32_0 = arith.constant 0 : i32
    %c0_i32_1 = arith.constant 0 : i32
    return %c0_i32, %c0_i32_0 : i32, i32
  }
  func.func @transform_2(%arg0: i32) -> (i32, i32) {
    %c0_i32 = arith.constant 0 : i32
    %c0_i32_0 = arith.constant 0 : i32
    %c0_i32_1 = arith.constant 0 : i32
    return %c0_i32, %c0_i32_0 : i32, i32
  }
  func.func @transform_3(%arg0: i32) -> (i32, i32) {
    %c0_i32 = arith.constant 0 : i32
    %c0_i32_0 = arith.constant 0 : i32
    %c0_i32_1 = arith.constant 0 : i32
    return %c0_i32, %c0_i32_0 : i32, i32
  }
  func.func @transform_4(%arg0: i32) -> (i32, i32) {
    %c0_i32 = arith.constant 0 : i32
    %c0_i32_0 = arith.constant 0 : i32
    %c0_i32_1 = arith.constant 0 : i32
    return %c0_i32, %c0_i32_0 : i32, i32
  }
  func.func @transform_5(%arg0: i32) -> (i32, i32) {
    %c0_i32 = arith.constant 0 : i32
    %c0_i32_0 = arith.constant 0 : i32
    %c0_i32_1 = arith.constant 0 : i32
    return %c0_i32, %c0_i32_0 : i32, i32
  }
  func.func @transform_6(%arg0: i32) -> (i32, i32) {
    %c0_i32 = arith.constant 0 : i32
    %c0_i32_0 = arith.constant 0 : i32
    %c0_i32_1 = arith.constant 0 : i32
    return %c0_i32, %c0_i32_0 : i32, i32
  }
  func.func @transform_7(%arg0: i32) -> (i32, i32) {
    %c0_i32 = arith.constant 0 : i32
    %c0_i32_0 = arith.constant 0 : i32
    %c0_i32_1 = arith.constant 0 : i32
    return %c0_i32, %c0_i32_0 : i32, i32
  }
  func.func @transform_8(%arg0: i32) -> (i32, i32) {
    %c0_i32 = arith.constant 0 : i32
    %c0_i32_0 = arith.constant 0 : i32
    %c0_i32_1 = arith.constant 0 : i32
    return %c0_i32, %c0_i32_0 : i32, i32
  }
  func.func @transform_9(%arg0: i32) -> (i32, i32) {
    %c0_i32 = arith.constant 0 : i32
    %c0_i32_0 = arith.constant 0 : i32
    %c0_i32_1 = arith.constant 0 : i32
    return %c0_i32, %c0_i32_0 : i32, i32
  }
  func.func @transform_10(%arg0: i32) -> (i32, i32) {
    %c0_i32 = arith.constant 0 : i32
    %c0_i32_0 = arith.constant 0 : i32
    %c0_i32_1 = arith.constant 0 : i32
    return %c0_i32, %c0_i32_0 : i32, i32
  }
}

module attributes {stable_mosaic.version = 11 : i64} {
  func.func @_gemm_bias_act_kernel(%arg0: i32, %arg1: i32, %arg2: memref<1x128x1024xbf16, #tpu.memory_space<vmem>>, %arg3: memref<1x1024x8xbf16, #tpu.memory_space<vmem>>, %arg4: memref<128x1xf32, #tpu.memory_space<vmem>>, %arg5: memref<1x128x8xbf16, #tpu.memory_space<vmem>>) attributes {dimension_semantics = [#tpu.dimension_semantics<parallel>, #tpu.dimension_semantics<parallel>], iteration_bounds = array<i64: 4, 1>, scalar_prefetch = 0 : i64, scratch_operands = 0 : i64, tpu.core_type = #tpu.core_type<tc>, window_params = [{transform_indices = @transform_0, window_bounds = array<i64: 1, 128, 1024>}, {transform_indices = @transform_1, window_bounds = array<i64: 1, 1024, 8>}, {pipeline_mode = #tpu.pipeline_mode<synchronous>, transform_indices = @transform_2, window_bounds = array<i64: 128, 1>}, {transform_indices = @transform_3, window_bounds = array<i64: 1, 128, 8>}]} {
    %c0 = arith.constant 0 : index
    %c0_0 = arith.constant 0 : index
    %c0_1 = arith.constant 0 : index
    %0 = vector.load %arg2[%c0, %c0_0, %c0_1] : memref<1x128x1024xbf16, #tpu.memory_space<vmem>>, vector<1x128x1024xbf16>
    %1 = vector.shape_cast %0 : vector<1x128x1024xbf16> to vector<128x1024xbf16>
    %c0_2 = arith.constant 0 : index
    %c0_3 = arith.constant 0 : index
    %c0_4 = arith.constant 0 : index
    %2 = vector.load %arg3[%c0_2, %c0_3, %c0_4] : memref<1x1024x8xbf16, #tpu.memory_space<vmem>>, vector<1x1024x8xbf16>
    %3 = vector.shape_cast %2 : vector<1x1024x8xbf16> to vector<1024x8xbf16>
    %cst = arith.constant dense<0.000000e+00> : vector<128x8xf32>
    %4 = tpu.matmul %1, %3, %cst {dimension_numbers = #tpu.dot_dimension_numbers<[1], [0], [0], [1], [0, 0, 1, 1], [], []>} : vector<128x1024xbf16>, vector<1024x8xbf16>, vector<128x8xf32> -> vector<128x8xf32>
    %c0_5 = arith.constant 0 : index
    %c0_6 = arith.constant 0 : index
    %5 = vector.load %arg4[%c0_5, %c0_6] : memref<128x1xf32, #tpu.memory_space<vmem>>, vector<128x1xf32>
    %6 = vector.broadcast %5 : vector<128x1xf32> to vector<128x8xf32>
    %7 = arith.addf %4, %6 : vector<128x8xf32>
    %cst_7 = arith.constant 0.000000e+00 : f32
    %8 = vector.broadcast %cst_7 : f32 to vector<128x8xf32>
    %9 = arith.maximumf %7, %8 : vector<128x8xf32>
    %10 = arith.truncf %9 : vector<128x8xf32> to vector<128x8xbf16>
    %c0_8 = arith.constant 0 : index
    %c0_9 = arith.constant 0 : index
    %c0_10 = arith.constant 0 : index
    %11 = vector.load %arg5[%c0_8, %c0_9, %c0_10] : memref<1x128x8xbf16, #tpu.memory_space<vmem>>, vector<1x128x8xbf16>
    %12 = vector.shape_cast %11 : vector<1x128x8xbf16> to vector<128x8xbf16>
    %13 = vector.shape_cast %10 : vector<128x8xbf16> to vector<1x128x8xbf16>
    tpu.vector_store %arg5[%c0_8, %c0_9, %c0_10], %13 {strides = array<i32>} : memref<1x128x8xbf16, #tpu.memory_space<vmem>>, vector<1x128x8xbf16>,
    return
  }
  func.func @transform_0(%arg0: i32, %arg1: i32) -> (i32, i32, i32) {
    %c0_i32 = arith.constant 0 : i32
    %c0_i32_0 = arith.constant 0 : i32
    %c0_i32_1 = arith.constant 0 : i32
    return %arg0, %c0_i32, %c0_i32_0 : i32, i32, i32
  }
  func.func @transform_1(%arg0: i32, %arg1: i32) -> (i32, i32, i32) {
    %c0_i32 = arith.constant 0 : i32
    %c0_i32_0 = arith.constant 0 : i32
    return %arg0, %c0_i32, %arg1 : i32, i32, i32
  }
  func.func @transform_2(%arg0: i32, %arg1: i32) -> (i32, i32) {
    %c0_i32 = arith.constant 0 : i32
    %c0_i32_0 = arith.constant 0 : i32
    %c0_i32_1 = arith.constant 0 : i32
    return %c0_i32, %c0_i32_0 : i32, i32
  }
  func.func @transform_3(%arg0: i32, %arg1: i32) -> (i32, i32, i32) {
    %c0_i32 = arith.constant 0 : i32
    %c0_i32_0 = arith.constant 0 : i32
    return %arg0, %c0_i32, %arg1 : i32, i32, i32
  }
}

module attributes {stable_mosaic.version = 11 : i64} {
  func.func @_gemm_bias_act_kernel(%arg0: i32, %arg1: i32, %arg2: memref<1x64x512xbf16, #tpu.memory_space<vmem>>, %arg3: memref<1x512x32xbf16, #tpu.memory_space<vmem>>, %arg4: memref<64x1xf32, #tpu.memory_space<vmem>>, %arg5: memref<1x64x32xbf16, #tpu.memory_space<vmem>>) attributes {dimension_semantics = [#tpu.dimension_semantics<parallel>, #tpu.dimension_semantics<parallel>], iteration_bounds = array<i64: 4, 1>, scalar_prefetch = 0 : i64, scratch_operands = 0 : i64, tpu.core_type = #tpu.core_type<tc>, window_params = [{transform_indices = @transform_0, window_bounds = array<i64: 1, 64, 512>}, {transform_indices = @transform_1, window_bounds = array<i64: 1, 512, 32>}, {pipeline_mode = #tpu.pipeline_mode<synchronous>, transform_indices = @transform_2, window_bounds = array<i64: 64, 1>}, {transform_indices = @transform_3, window_bounds = array<i64: 1, 64, 32>}]} {
    %c0 = arith.constant 0 : index
    %c0_0 = arith.constant 0 : index
    %c0_1 = arith.constant 0 : index
    %0 = vector.load %arg2[%c0, %c0_0, %c0_1] : memref<1x64x512xbf16, #tpu.memory_space<vmem>>, vector<1x64x512xbf16>
    %1 = vector.shape_cast %0 : vector<1x64x512xbf16> to vector<64x512xbf16>
    %c0_2 = arith.constant 0 : index
    %c0_3 = arith.constant 0 : index
    %c0_4 = arith.constant 0 : index
    %2 = vector.load %arg3[%c0_2, %c0_3, %c0_4] : memref<1x512x32xbf16, #tpu.memory_space<vmem>>, vector<1x512x32xbf16>
    %3 = vector.shape_cast %2 : vector<1x512x32xbf16> to vector<512x32xbf16>
    %cst = arith.constant dense<0.000000e+00> : vector<64x32xf32>
    %4 = tpu.matmul %1, %3, %cst {dimension_numbers = #tpu.dot_dimension_numbers<[1], [0], [0], [1], [0, 0, 1, 1], [], []>} : vector<64x512xbf16>, vector<512x32xbf16>, vector<64x32xf32> -> vector<64x32xf32>
    %c0_5 = arith.constant 0 : index
    %c0_6 = arith.constant 0 : index
    %5 = vector.load %arg4[%c0_5, %c0_6] : memref<64x1xf32, #tpu.memory_space<vmem>>, vector<64x1xf32>
    %6 = vector.broadcast %5 : vector<64x1xf32> to vector<64x32xf32>
    %7 = arith.addf %4, %6 : vector<64x32xf32>
    %cst_7 = arith.constant 0.000000e+00 : f32
    %8 = vector.broadcast %cst_7 : f32 to vector<64x32xf32>
    %9 = arith.maximumf %7, %8 : vector<64x32xf32>
    %10 = arith.truncf %9 : vector<64x32xf32> to vector<64x32xbf16>
    %c0_8 = arith.constant 0 : index
    %c0_9 = arith.constant 0 : index
    %c0_10 = arith.constant 0 : index
    %11 = vector.load %arg5[%c0_8, %c0_9, %c0_10] : memref<1x64x32xbf16, #tpu.memory_space<vmem>>, vector<1x64x32xbf16>
    %12 = vector.shape_cast %11 : vector<1x64x32xbf16> to vector<64x32xbf16>
    %13 = vector.shape_cast %10 : vector<64x32xbf16> to vector<1x64x32xbf16>
    tpu.vector_store %arg5[%c0_8, %c0_9, %c0_10], %13 {strides = array<i32>} : memref<1x64x32xbf16, #tpu.memory_space<vmem>>, vector<1x64x32xbf16>,
    return
  }
  func.func @transform_0(%arg0: i32, %arg1: i32) -> (i32, i32, i32) {
    %c0_i32 = arith.constant 0 : i32
    %c0_i32_0 = arith.constant 0 : i32
    %c0_i32_1 = arith.constant 0 : i32
    return %arg0, %c0_i32, %c0_i32_0 : i32, i32, i32
  }
  func.func @transform_1(%arg0: i32, %arg1: i32) -> (i32, i32, i32) {
    %c0_i32 = arith.constant 0 : i32
    %c0_i32_0 = arith.constant 0 : i32
    return %arg0, %c0_i32, %arg1 : i32, i32, i32
  }
  func.func @transform_2(%arg0: i32, %arg1: i32) -> (i32, i32) {
    %c0_i32 = arith.constant 0 : i32
    %c0_i32_0 = arith.constant 0 : i32
    %c0_i32_1 = arith.constant 0 : i32
    return %c0_i32, %c0_i32_0 : i32, i32
  }
  func.func @transform_3(%arg0: i32, %arg1: i32) -> (i32, i32, i32) {
    %c0_i32 = arith.constant 0 : i32
    %c0_i32_0 = arith.constant 0 : i32
    return %arg0, %c0_i32, %arg1 : i32, i32, i32
  }
}

module attributes {stable_mosaic.version = 11 : i64} {
  func.func @_gemm_bias_act_kernel(%arg0: i32, %arg1: i32, %arg2: memref<1x32x256xbf16, #tpu.memory_space<vmem>>, %arg3: memref<1x256x128xbf16, #tpu.memory_space<vmem>>, %arg4: memref<32x1xf32, #tpu.memory_space<vmem>>, %arg5: memref<1x32x128xbf16, #tpu.memory_space<vmem>>) attributes {dimension_semantics = [#tpu.dimension_semantics<parallel>, #tpu.dimension_semantics<parallel>], iteration_bounds = array<i64: 4, 1>, scalar_prefetch = 0 : i64, scratch_operands = 0 : i64, tpu.core_type = #tpu.core_type<tc>, window_params = [{transform_indices = @transform_0, window_bounds = array<i64: 1, 32, 256>}, {transform_indices = @transform_1, window_bounds = array<i64: 1, 256, 128>}, {pipeline_mode = #tpu.pipeline_mode<synchronous>, transform_indices = @transform_2, window_bounds = array<i64: 32, 1>}, {transform_indices = @transform_3, window_bounds = array<i64: 1, 32, 128>}]} {
    %c0 = arith.constant 0 : index
    %c0_0 = arith.constant 0 : index
    %c0_1 = arith.constant 0 : index
    %0 = vector.load %arg2[%c0, %c0_0, %c0_1] : memref<1x32x256xbf16, #tpu.memory_space<vmem>>, vector<1x32x256xbf16>
    %1 = vector.shape_cast %0 : vector<1x32x256xbf16> to vector<32x256xbf16>
    %c0_2 = arith.constant 0 : index
    %c0_3 = arith.constant 0 : index
    %c0_4 = arith.constant 0 : index
    %2 = vector.load %arg3[%c0_2, %c0_3, %c0_4] : memref<1x256x128xbf16, #tpu.memory_space<vmem>>, vector<1x256x128xbf16>
    %3 = vector.shape_cast %2 : vector<1x256x128xbf16> to vector<256x128xbf16>
    %cst = arith.constant dense<0.000000e+00> : vector<32x128xf32>
    %4 = tpu.matmul %1, %3, %cst {dimension_numbers = #tpu.dot_dimension_numbers<[1], [0], [0], [1], [0, 0, 1, 1], [], []>} : vector<32x256xbf16>, vector<256x128xbf16>, vector<32x128xf32> -> vector<32x128xf32>
    %c0_5 = arith.constant 0 : index
    %c0_6 = arith.constant 0 : index
    %5 = vector.load %arg4[%c0_5, %c0_6] : memref<32x1xf32, #tpu.memory_space<vmem>>, vector<32x1xf32>
    %6 = vector.broadcast %5 : vector<32x1xf32> to vector<32x128xf32>
    %7 = arith.addf %4, %6 : vector<32x128xf32>
    %cst_7 = arith.constant 0.000000e+00 : f32
    %8 = vector.broadcast %cst_7 : f32 to vector<32x128xf32>
    %9 = arith.maximumf %7, %8 : vector<32x128xf32>
    %10 = arith.truncf %9 : vector<32x128xf32> to vector<32x128xbf16>
    %c0_8 = arith.constant 0 : index
    %c0_9 = arith.constant 0 : index
    %c0_10 = arith.constant 0 : index
    %11 = vector.load %arg5[%c0_8, %c0_9, %c0_10] : memref<1x32x128xbf16, #tpu.memory_space<vmem>>, vector<1x32x128xbf16>
    %12 = vector.shape_cast %11 : vector<1x32x128xbf16> to vector<32x128xbf16>
    %13 = vector.shape_cast %10 : vector<32x128xbf16> to vector<1x32x128xbf16>
    tpu.vector_store %arg5[%c0_8, %c0_9, %c0_10], %13 {strides = array<i32>} : memref<1x32x128xbf16, #tpu.memory_space<vmem>>, vector<1x32x128xbf16>,
    return
  }
  func.func @transform_0(%arg0: i32, %arg1: i32) -> (i32, i32, i32) {
    %c0_i32 = arith.constant 0 : i32
    %c0_i32_0 = arith.constant 0 : i32
    %c0_i32_1 = arith.constant 0 : i32
    return %arg0, %c0_i32, %c0_i32_0 : i32, i32, i32
  }
  func.func @transform_1(%arg0: i32, %arg1: i32) -> (i32, i32, i32) {
    %c0_i32 = arith.constant 0 : i32
    %c0_i32_0 = arith.constant 0 : i32
    return %arg0, %c0_i32, %arg1 : i32, i32, i32
  }
  func.func @transform_2(%arg0: i32, %arg1: i32) -> (i32, i32) {
    %c0_i32 = arith.constant 0 : i32
    %c0_i32_0 = arith.constant 0 : i32
    %c0_i32_1 = arith.constant 0 : i32
    return %c0_i32, %c0_i32_0 : i32, i32
  }
  func.func @transform_3(%arg0: i32, %arg1: i32) -> (i32, i32, i32) {
    %c0_i32 = arith.constant 0 : i32
    %c0_i32_0 = arith.constant 0 : i32
    return %arg0, %c0_i32, %arg1 : i32, i32, i32
  }
}

module attributes {stable_mosaic.version = 11 : i64} {
  func.func @_gemm_bias_act_kernel(%arg0: i32, %arg1: i32, %arg2: memref<1x3x128xbf16, #tpu.memory_space<vmem>>, %arg3: memref<1x128x256xbf16, #tpu.memory_space<vmem>>, %arg4: memref<3x1xf32, #tpu.memory_space<vmem>>, %arg5: memref<1x3x256xf32, #tpu.memory_space<vmem>>) attributes {dimension_semantics = [#tpu.dimension_semantics<parallel>, #tpu.dimension_semantics<parallel>], iteration_bounds = array<i64: 4, 2>, scalar_prefetch = 0 : i64, scratch_operands = 0 : i64, tpu.core_type = #tpu.core_type<tc>, window_params = [{transform_indices = @transform_0, window_bounds = array<i64: 1, 3, 128>}, {transform_indices = @transform_1, window_bounds = array<i64: 1, 128, 256>}, {pipeline_mode = #tpu.pipeline_mode<synchronous>, transform_indices = @transform_2, window_bounds = array<i64: 3, 1>}, {transform_indices = @transform_3, window_bounds = array<i64: 1, 3, 256>}]} {
    %c0 = arith.constant 0 : index
    %c0_0 = arith.constant 0 : index
    %c0_1 = arith.constant 0 : index
    %0 = vector.load %arg2[%c0, %c0_0, %c0_1] : memref<1x3x128xbf16, #tpu.memory_space<vmem>>, vector<1x3x128xbf16>
    %1 = vector.shape_cast %0 : vector<1x3x128xbf16> to vector<3x128xbf16>
    %c0_2 = arith.constant 0 : index
    %c0_3 = arith.constant 0 : index
    %c0_4 = arith.constant 0 : index
    %2 = vector.load %arg3[%c0_2, %c0_3, %c0_4] : memref<1x128x256xbf16, #tpu.memory_space<vmem>>, vector<1x128x256xbf16>
    %3 = vector.shape_cast %2 : vector<1x128x256xbf16> to vector<128x256xbf16>
    %cst = arith.constant dense<0.000000e+00> : vector<3x256xf32>
    %4 = tpu.matmul %1, %3, %cst {dimension_numbers = #tpu.dot_dimension_numbers<[1], [0], [0], [1], [0, 0, 1, 1], [], []>} : vector<3x128xbf16>, vector<128x256xbf16>, vector<3x256xf32> -> vector<3x256xf32>
    %c0_5 = arith.constant 0 : index
    %c0_6 = arith.constant 0 : index
    %5 = vector.load %arg4[%c0_5, %c0_6] : memref<3x1xf32, #tpu.memory_space<vmem>>, vector<3x1xf32>
    %6 = vector.broadcast %5 : vector<3x1xf32> to vector<3x256xf32>
    %7 = arith.addf %4, %6 : vector<3x256xf32>
    %8 = math.tanh %7 : vector<3x256xf32>
    %c0_7 = arith.constant 0 : index
    %c0_8 = arith.constant 0 : index
    %c0_9 = arith.constant 0 : index
    %9 = vector.load %arg5[%c0_7, %c0_8, %c0_9] : memref<1x3x256xf32, #tpu.memory_space<vmem>>, vector<1x3x256xf32>
    %10 = vector.shape_cast %9 : vector<1x3x256xf32> to vector<3x256xf32>
    %11 = vector.shape_cast %8 : vector<3x256xf32> to vector<1x3x256xf32>
    tpu.vector_store %arg5[%c0_7, %c0_8, %c0_9], %11 {strides = array<i32>} : memref<1x3x256xf32, #tpu.memory_space<vmem>>, vector<1x3x256xf32>,
    return
  }
  func.func @transform_0(%arg0: i32, %arg1: i32) -> (i32, i32, i32) {
    %c0_i32 = arith.constant 0 : i32
    %c0_i32_0 = arith.constant 0 : i32
    %c0_i32_1 = arith.constant 0 : i32
    return %arg0, %c0_i32, %c0_i32_0 : i32, i32, i32
  }
  func.func @transform_1(%arg0: i32, %arg1: i32) -> (i32, i32, i32) {
    %c0_i32 = arith.constant 0 : i32
    %c0_i32_0 = arith.constant 0 : i32
    return %arg0, %c0_i32, %arg1 : i32, i32, i32
  }
  func.func @transform_2(%arg0: i32, %arg1: i32) -> (i32, i32) {
    %c0_i32 = arith.constant 0 : i32
    %c0_i32_0 = arith.constant 0 : i32
    %c0_i32_1 = arith.constant 0 : i32
    return %c0_i32, %c0_i32_0 : i32, i32
  }
  func.func @transform_3(%arg0: i32, %arg1: i32) -> (i32, i32, i32) {
    %c0_i32 = arith.constant 0 : i32
    %c0_i32_0 = arith.constant 0 : i32
    return %arg0, %c0_i32, %arg1 : i32, i32, i32
  }
}

</mosaic_0001>

<llo_original>
// kernel: vae_forward.9
$region0: #{vae_forward.9}
  #allocation0 [shape = 'u32[]', space=smem, size = 0x4, offset = 0x4, fixed_abs, tag = 'smem constant byte address 0x4 - core index']
  #allocation1 [shape = 'u32[72,128]{1,0:T(1,128)}', space=vmem, size = 0x9000, scoped, tag = 'internal scratch']
  %s0 = inlined_call_operand.vmem [shape: bf16[32,48], index: 0, kind: input, shape index: {}]
  %s1 = inlined_call_operand.vmem [shape: bf16[48,512], index: 1, kind: input, shape index: {}]
  %s2 = inlined_call_operand.vmem [shape: f32[32,1], index: 2, kind: input, shape index: {}]
  %s3 = inlined_call_operand.vmem [shape: bf16[32,512], index: 3, kind: output, shape index: {}]
  %s4 = sld [smem:[#allocation0]]
  $region117: #{vae_forward.9} parent=0
    _
  %s6 = ssub.s32 1, %s4
  %s7 = scalar_select 0, %s6, %s4
  $region1: #{vae_forward.9} parent=0
    #allocation2 [shape = 'u8[49152]{0}', space=vmem, size = 0xc000, scoped, tag = 'input window, operand 1']
    #allocation3 [shape = 'u8[32768]{0}', space=vmem, size = 0x8000, scoped, tag = 'output window, operand 0']
    loop: start=0, step=1, limit=4
    $region2: #{vae_forward.9} parent=1 // loop_pre_header
      _
    $region3: #{vae_forward.9} parent=1 // loop_header
      %s9 = sphi 0, %s13
      %p10 = scmp.ge.s32.totalorder %s9, 4
      %s17 = sphi 0, %s17
      %s19 = sphi 0, %s17
      %s20 = sphi 0, %s19
      %s34 = sphi 0, %s20
      %s40 = sphi 0, %s42
      %s43 = sphi 0, %s40
      %s44 = sphi 0, %s43
      %s60 = sphi 0, %s44
      %s64 = sphi 0, %s64
      %s66 = sphi 0, %s64
      %s67 = sphi 0, %s66
      %s81 = sphi 0, %s67
      %s87 = sphi 0, %s89
      %s90 = sphi 0, %s87
      %s91 = sphi 0, %s90
      %s107 = sphi 0, %s91
    $region4: #{vae_forward.9} parent=1 // loop_header_branch
      %12 = sbr.rel (%p10) target = $region8
    $region5: #{vae_forward.9} parent=1 // loop_body
      %s14 = ssub.s32 %s9, 1
      %s15 = ssub.s32 %s9, 2
      %s16 = sadd.s32 %s9, 1
      %s18 = sadd.s32 %s17, 1
      %p21 = scmp.eq.s32.totalorder %s9, 1
      %p22 = scmp.ne.s32.totalorder %s17, %s19
      %p23 = scmp.eq.s32.totalorder %s9, 0
      %p24 = por %p22, %p23
      %p25 = scmp.ne.s32.totalorder %s17, %s19
      %p26 = scmp.eq.s32.totalorder %s14, 1
      %p27 = por %p25, %p26
      %p28 = scmp.ne.s32.totalorder %s19, %s20
      %p29 = scmp.eq.s32.totalorder %s14, 0
      %p30 = por %p28, %p29
      %p31 = scmp.ne.s32.totalorder %s19, %s20
      %p32 = scmp.eq.s32.totalorder %s15, 1
      %p33 = por %p31, %p32
      %p35 = scmp.ne.s32.totalorder %s20, %s34
      %p36 = scmp.eq.s32.totalorder %s15, 0
      %p37 = por %p35, %p36
      %s38 = ssub.s32 %s9, %s16
      %p39 = scmp.eq.s32.totalorder %s38, 0
      %s41 = sadd.s32 %s40, 1
      %s42 = scalar_select %p39, %s40, %s41
      %p45 = pneg %p39
      %p46 = scmp.eq.s32.totalorder %s9, 1
      %p47 = por %p45, %p46
      %p48 = scmp.ne.s32.totalorder %s40, %s43
      %p49 = scmp.eq.s32.totalorder %s9, 0
      %p50 = por %p48, %p49
      %p51 = scmp.ne.s32.totalorder %s40, %s43
      %p52 = scmp.eq.s32.totalorder %s14, 1
      %p53 = por %p51, %p52
      %p54 = scmp.ne.s32.totalorder %s43, %s44
      %p55 = scmp.eq.s32.totalorder %s14, 0
      %p56 = por %p54, %p55
      %p57 = scmp.ne.s32.totalorder %s43, %s44
      %p58 = scmp.eq.s32.totalorder %s15, 1
      %p59 = por %p57, %p58
      %p61 = scmp.ne.s32.totalorder %s44, %s60
      %p62 = scmp.eq.s32.totalorder %s15, 0
      %p63 = por %p61, %p62
      %s65 = sadd.s32 %s64, 1
      %p68 = scmp.eq.s32.totalorder %s9, 1
      %p69 = scmp.ne.s32.totalorder %s64, %s66
      %p70 = scmp.eq.s32.totalorder %s9, 0
      %p71 = por %p69, %p70
      %p72 = scmp.ne.s32.totalorder %s64, %s66
      %p73 = scmp.eq.s32.totalorder %s14, 1
      %p74 = por %p72, %p73
      %p75 = scmp.ne.s32.totalorder %s66, %s67
      %p76 = scmp.eq.s32.totalorder %s14, 0
      %p77 = por %p75, %p76
      %p78 = scmp.ne.s32.totalorder %s66, %s67
      %p79 = scmp.eq.s32.totalorder %s15, 1
      %p80 = por %p78, %p79
      %p82 = scmp.ne.s32.totalorder %s67, %s81
      %p83 = scmp.eq.s32.totalorder %s15, 0
      %p84 = por %p82, %p83
      %s85 = ssub.s32 %s9, %s16
      %p86 = scmp.eq.s32.totalorder %s85, 0
      %s88 = sadd.s32 %s87, 1
      %s89 = scalar_select %p86, %s87, %s88
      %p92 = pneg %p86
      %p93 = scmp.eq.s32.totalorder %s9, 1
      %p94 = por %p92, %p93
      %p95 = scmp.ne.s32.totalorder %s87, %s90
      %p96 = scmp.eq.s32.totalorder %s9, 0
      %p97 = por %p95, %p96
      %p98 = scmp.ne.s32.totalorder %s87, %s90
      %p99 = scmp.eq.s32.totalorder %s14, 1
      %p100 = por %p98, %p99
      %p101 = scmp.ne.s32.totalorder %s90, %s91
      %p102 = scmp.eq.s32.totalorder %s14, 0
      %p103 = por %p101, %p102
      %p104 = scmp.ne.s32.totalorder %s90, %s91
      %p105 = scmp.eq.s32.totalorder %s15, 1
      %p106 = por %p104, %p105
      %p108 = scmp.ne.s32.totalorder %s91, %s107
      %p109 = scmp.eq.s32.totalorder %s15, 0
      %p110 = por %p108, %p109
      %p111 = scmp.le.s32.totalorder 1, %s9
      %p112 = scmp.lt.s32.totalorder %s9, 3
      %p113 = pnand %p111, %p112
      %p114 = pneg %p113
      // Predicated region
      $region9: #{vae_forward.9} parent=5 // pred_check
        _
      $region10: #{vae_forward.9} parent=5 // pred_check_branch
        %116 = sbr.rel (%p113) target = $region12
      $region11: #{vae_forward.9} parent=5 // pred_region
        %s117 = ssub.s32 %s9, 1
        // Predicated region
        $region13: #{vae_forward.9} parent=11 // pred_check
          %p118 = pneg %p30
        $region14: #{vae_forward.9} parent=11 // pred_check_branch
          %120 = sbr.rel (%p118) target = $region16
        $region15: #{vae_forward.9} parent=11 // pred_region
          _
        $region16: #{vae_forward.9} parent=11 // pred_fallthru
          _
        // Predicated region
        $region17: #{vae_forward.9} parent=11 // pred_check
          %p121 = pneg %p77
        $region18: #{vae_forward.9} parent=11 // pred_check_branch
          %123 = sbr.rel (%p121) target = $region20
        $region19: #{vae_forward.9} parent=11 // pred_region
          _
        $region20: #{vae_forward.9} parent=11 // pred_fallthru
          _
      $region12: #{vae_forward.9} parent=5 // pred_fallthru
        _
      %p124 = scmp.lt.s32.totalorder %s9, 2
      // Predicated region
      $region21: #{vae_forward.9} parent=5 // pred_check
        %p125 = pneg %p124
      $region22: #{vae_forward.9} parent=5 // pred_check_branch
        %127 = sbr.rel (%p125) target = $region24
      $region23: #{vae_forward.9} parent=5 // pred_region
        // Predicated region
        $region25: #{vae_forward.9} parent=23 // pred_check
          %p128 = pneg %p50
        $region26: #{vae_forward.9} parent=23 // pred_check_branch
          %130 = sbr.rel (%p128) target = $region28
        $region27: #{vae_forward.9} parent=23 // pred_region
          %s131 = sand.u32 %s40, 1
          %s132 = sand.u32 %s40, 1
          %s133 = smul.addr %s132, 48
          %s134 = scalar_lea.vmem [#allocation2], %s133
          %s135 = smul.u32 2, %s9
          %s136 = smul.addr %s135, 4
          %s137 = scalar_lea.vmem %s1, %s136
          // Predicated region
          $region29: #{vae_forward.9} parent=27 // pred_check
            _
          $region30: #{vae_forward.9} parent=27 // pred_check_branch
            %139 = sbr.rel (0) target = $region32
          $region31: #{vae_forward.9} parent=27 // pred_region
            // Predicated region
            $region33: #{vae_forward.9} parent=31 // pred_check
              _
            $region34: #{vae_forward.9} parent=31 // pred_check_branch
              %141 = sbr.rel (0) target = $region36
            $region35: #{vae_forward.9} parent=31 // pred_region
              // Predicated region
              $region48: #{vae_forward.9} parent=35 // pred_check
                _
              $region49: #{vae_forward.9} parent=35 // pred_check_branch
                %167 = sbr.rel (0) target = $region51
              $region50: #{vae_forward.9} parent=35 // pred_region
                loop: start=0, step=1, limit=1
                $region52: #{vae_forward.9} parent=50 // loop_pre_header
                  _
                $region53: #{vae_forward.9} parent=50 // loop_header
                  %s169 = sphi 0, %s173
                  %p170 = scmp.ge.s32.totalorder %s169, 1
                  %s174 = sphi %s137, %s137
                  %s175 = sphi %s134, %s134
                $region54: #{vae_forward.9} parent=50 // loop_header_branch
                  %172 = sbr.rel (%p170) target = $region58
                $region55: #{vae_forward.9} parent=50 // loop_body
                  %v176 = vld [vmem:[%s174] sm:$0xff]
                  %177 = vst [vmem:[%s175] sm:$0xff] %v176
                  %v178 = vld [vmem:[%s174 + $0x10] sm:$0xff]
                  %179 = vst [vmem:[%s175 + $0x8] sm:$0xff] %v178
                  %v180 = vld [vmem:[%s174 + $0x20] sm:$0xff]
                  %181 = vst [vmem:[%s175 + $0x10] sm:$0xff] %v180
                  %v182 = vld [vmem:[%s174 + $0x30] sm:$0xff]
                  %183 = vst [vmem:[%s175 + $0x18] sm:$0xff] %v182
                  %v184 = vld [vmem:[%s174 + $0x40] sm:$0xff]
                  %185 = vst [vmem:[%s175 + $0x20] sm:$0xff] %v184
                  %v186 = vld [vmem:[%s174 + $0x50] sm:$0xff]
                  %187 = vst [vmem:[%s175 + $0x28] sm:$0xff] %v186
                $region56: #{vae_forward.9} parent=50 // loop_footer
                  %s173 = sadd.s32 1, %s169
                $region57: #{vae_forward.9} parent=50 // loop_footer_branch
                  %168 = sbr.rel target = $region53
                $region58: #{vae_forward.9} parent=50 // loop_exit
                  _
              $region51: #{vae_forward.9} parent=35 // pred_fallthru
                _
              // Predicated region
              $region59: #{vae_forward.9} parent=35 // pred_check
                _
              $region60: #{vae_forward.9} parent=35 // pred_check_branch
                %189 = sbr.rel target = $region62
              $region61: #{vae_forward.9} parent=35 // pred_region
                _
              $region62: #{vae_forward.9} parent=35 // pred_fallthru
                _
            $region36: #{vae_forward.9} parent=31 // pred_fallthru
              _
            // Predicated region
            $region37: #{vae_forward.9} parent=31 // pred_check
              _
            $region38: #{vae_forward.9} parent=31 // pred_check_branch
              %143 = sbr.rel target = $region40
            $region39: #{vae_forward.9} parent=31 // pred_region
              %s145 = ssub.s32 256, 1
              loop: start=0, step=1, limit=1
              $region41: #{vae_forward.9} parent=39 // loop_pre_header
                _
              $region42: #{vae_forward.9} parent=39 // loop_header
                %s147 = sphi 0, %s151
                %p148 = scmp.ge.s32.totalorder %s147, 1
                %s152 = sphi %s137, %s137
                %s153 = sphi %s134, %s134
              $region43: #{vae_forward.9} parent=39 // loop_header_branch
                %150 = sbr.rel (%p148) target = $region47
              $region44: #{vae_forward.9} parent=39 // loop_body
                %v154 = vld [vmem:[%s152] sm:%s145]
                %155 = vst [vmem:[%s153] sm:%s145] %v154
                %v156 = vld [vmem:[%s152 + $0x10] sm:%s145]
                %157 = vst [vmem:[%s153 + $0x8] sm:%s145] %v156
                %v158 = vld [vmem:[%s152 + $0x20] sm:%s145]
                %159 = vst [vmem:[%s153 + $0x10] sm:%s145] %v158
                %v160 = vld [vmem:[%s152 + $0x30] sm:%s145]
                %161 = vst [vmem:[%s153 + $0x18] sm:%s145] %v160
                %v162 = vld [vmem:[%s152 + $0x40] sm:%s145]
                %163 = vst [vmem:[%s153 + $0x20] sm:%s145] %v162
                %v164 = vld [vmem:[%s152 + $0x50] sm:%s145]
                %165 = vst [vmem:[%s153 + $0x28] sm:%s145] %v164
              $region45: #{vae_forward.9} parent=39 // loop_footer
                %s151 = sadd.s32 1, %s147
              $region46: #{vae_forward.9} parent=39 // loop_footer_branch
                %146 = sbr.rel target = $region42
              $region47: #{vae_forward.9} parent=39 // loop_exit
                _
            $region40: #{vae_forward.9} parent=31 // pred_fallthru
              _
          $region32: #{vae_forward.9} parent=27 // pred_fallthru
            _
          %190 = vnop
        $region28: #{vae_forward.9} parent=23 // pred_fallthru
          _
      $region24: #{vae_forward.9} parent=5 // pred_fallthru
        _
      %p191 = scmp.le.s32.totalorder 1, %s9
      %p192 = scmp.lt.s32.totalorder %s9, 3
      %p193 = pnand %p191, %p192
      %p194 = pneg %p193
      // Predicated region
      $region63: #{vae_forward.9} parent=5 // pred_check
        _
      $region64: #{vae_forward.9} parent=5 // pred_check_branch
        %196 = sbr.rel (%p193) target = $region66
      $region65: #{vae_forward.9} parent=5 // pred_region
        %s197 = ssub.s32 %s9, 1
        %s198 = sand.u32 %s43, 1
        %s199 = sand.u32 %s43, 1
        %s200 = smul.addr %s199, 48
        %s201 = scalar_lea.vmem [#allocation2], %s200
        // Predicated region
        $region67: #{vae_forward.9} parent=65 // pred_check
          %p202 = pneg %p56
        $region68: #{vae_forward.9} parent=65 // pred_check_branch
          %204 = sbr.rel (%p202) target = $region70
        $region69: #{vae_forward.9} parent=65 // pred_region
          _
        $region70: #{vae_forward.9} parent=65 // pred_fallthru
          _
        %p205 = pneg %p30
        %p206 = pneg %p27
        %s207 = sand.u32 %s43, 1
        %s208 = sand.u32 %s43, 1
        %s209 = smul.addr %s208, 48
        %s210 = scalar_lea.vmem [#allocation2], %s209
        %p211 = pneg %p56
        %p212 = pneg %p53
        %p213 = pneg %p77
        %p214 = pneg %p74
        %p215 = pneg %p103
        %p216 = pneg %p100
        %s217 = sand.u32 %s90, 1
        %s218 = sand.u32 %s90, 1
        %s219 = smul.addr %s218, 32
        %s220 = scalar_lea.vmem [#allocation3], %s219
        %s221 = smul.u32 2, %s14
        %s222 = smul.u32 2, %s14
        %v224 = vld [vmem:[%s0] sm:$0xf]
        %v225 = vld [vmem:[%s0 + $0x4] sm:$0xf]
        %v226 = vld [vmem:[%s0 + $0x8] sm:$0xf]
        %v227 = vld [vmem:[%s0 + $0xc] sm:$0xf]
        %v228 = vld [vmem:[%s201] sm:$0xff]
        %v229 = vld [vmem:[%s201 + $0x8] sm:$0xff]
        %v230 = vld [vmem:[%s201 + $0x10] sm:$0xff]
        %v231 = vld [vmem:[%s201 + $0x18] sm:$0xff]
        %v232 = vld [vmem:[%s201 + $0x20] sm:$0xff]
        %v233 = vld [vmem:[%s201 + $0x28] sm:$0xff]
        %v234 = vld [vmem:[%s2] sm:$0xff]
        %v235 = vld [vmem:[%s2 + $0x8] sm:$0xff]
        %v236 = vld [vmem:[%s2 + $0x10] sm:$0xff]
        %v237 = vld [vmem:[%s2 + $0x18] sm:$0xff]
        %239 = vset.pattern.permute.xlu0 0
        %240 = vperm.xlu0 %239, %v234
        %v241 = vpop.permute.xlu0 %240
        %244 = vset.pattern.permute.xlu0 0
        %245 = vperm.xlu0 %244, %v235
        %v246 = vpop.permute.xlu0 %245
        %249 = vset.pattern.permute.xlu0 0
        %250 = vperm.xlu0 %249, %v236
        %v251 = vpop.permute.xlu0 %250
        %254 = vset.pattern.permute.xlu0 0
        %255 = vperm.xlu0 %254, %v237
        %v256 = vpop.permute.xlu0 %255
        %v262 = vunpack.c.l.b16 %v224
        %v263 = vunpack.c.l.b16 %v225
        %v264 = vunpack.c.l.b16 %v226
        %v265 = vunpack.c.l.b16 %v227
        %v266 = vpack.c.b16 %v263, %v262
        %v267 = vpack.c.b16 %v265, %v264
        %v274 = vunpack.c.l.b16 %v228
        %v275 = vunpack.c.h.b16 %v228
        %v276 = vunpack.c.l.b16 %v229
        %v277 = vunpack.c.h.b16 %v229
        %v278 = vunpack.c.l.b16 %v230
        %v279 = vunpack.c.h.b16 %v230
        %v280 = vunpack.c.l.b16 %v231
        %v281 = vunpack.c.h.b16 %v231
        %v282 = vunpack.c.l.b16 %v232
        %v283 = vunpack.c.h.b16 %v232
        %v284 = vunpack.c.l.b16 %v233
        %v285 = vunpack.c.h.b16 %v233
        %v286 = vpack.c.b16 %v276, %v274
        %v287 = vpack.c.b16 %v277, %v275
        %v288 = vpack.c.b16 %v280, %v278
        %v289 = vpack.c.b16 %v281, %v279
        %v290 = vpack.c.b16 %v284, %v282
        %v291 = vpack.c.b16 %v285, %v283
        %vm298 = vcmask 392192
        %v300 = vsel %vm298, %v266, 0
        %v303 = vsel %vm298, %v267, 0
        %305 = vmatpush.bf16.msra.mxu0 0
        %306 = vmatpush.bf16.msra.mxu0 0
        %307 = vmatpush.bf16.msra.mxu0 0
        %308 = vmatpush.bf16.msra.mxu0 0
        %309 = vmatpush.bf16.msra.mxu0 0
        %310 = vmatpush.bf16.msra.mxu0 %v290
        %311 = vmatpush.bf16.msra.mxu0 %v288
        %312 = vmatpush.bf16.msra.mxu0 %v286
        %313 = vmatmul.bf16.gmra.mxu0 %v300
        %v314 = vpop.f32.mrf.mxu0
        %v315 = vadd.f32 %v241, %v314
        %v316 = vpop.f32.mrf.mxu0
        %v317 = vadd.f32 %v246, %v316
        %318 = vmatmul.bf16.gmra.mxu0 %v303
        %v319 = vpop.f32.mrf.mxu0
        %v320 = vadd.f32 %v251, %v319
        %v321 = vpop.f32.mrf.mxu0
        %v322 = vadd.f32 %v256, %v321
        %323 = vdwg.mxu0
        %324 = vmatpush.bf16.msra.mxu0 0
        %325 = vmatpush.bf16.msra.mxu0 0
        %326 = vmatpush.bf16.msra.mxu0 0
        %327 = vmatpush.bf16.msra.mxu0 0
        %328 = vmatpush.bf16.msra.mxu0 0
        %329 = vmatpush.bf16.msra.mxu0 %v291
        %330 = vmatpush.bf16.msra.mxu0 %v289
        %331 = vmatpush.bf16.msra.mxu0 %v287
        %332 = vmatmul.bf16.gmra.mxu0 %v300
        %v333 = vpop.f32.mrf.mxu0
        %v334 = vadd.f32 %v241, %v333
        %v335 = vpop.f32.mrf.mxu0
        %v336 = vadd.f32 %v246, %v335
        %337 = vmatmul.bf16.gmra.mxu0 %v303
        %v338 = vpop.f32.mrf.mxu0
        %v339 = vadd.f32 %v251, %v338
        %v340 = vpop.f32.mrf.mxu0
        %v341 = vadd.f32 %v256, %v340
        %342 = vdwg.mxu0
        %v343 = vmax.f32 %v315, 0.0
        %v344 = vmax.f32 %v334, 0.0
        %v345 = vmax.f32 %v317, 0.0
        %v346 = vmax.f32 %v336, 0.0
        %v347 = vmax.f32 %v320, 0.0
        %v348 = vmax.f32 %v339, 0.0
        %v349 = vmax.f32 %v322, 0.0
        %v350 = vmax.f32 %v341, 0.0
        %v351 = vpack.c.bf16 %v344, %v343
        %v352 = vpack.c.bf16 %v346, %v345
        %v353 = vpack.c.bf16 %v348, %v347
        %v354 = vpack.c.bf16 %v350, %v349
        %355 = vst [vmem:[%s220] sm:$0xff] %v351
        %356 = vst [vmem:[%s220 + $0x8] sm:$0xff] %v352
        %357 = vst [vmem:[%s220 + $0x10] sm:$0xff] %v353
        %358 = vst [vmem:[%s220 + $0x18] sm:$0xff] %v354
        %s359 = sand.u32 %s90, 1
        %s360 = sand.u32 %s90, 1
        %s361 = smul.addr %s360, 32
        %s362 = scalar_lea.vmem [#allocation3], %s361
        // Predicated region
        $region71: #{vae_forward.9} parent=65 // pred_check
          %p363 = pneg %p100
        $region72: #{vae_forward.9} parent=65 // pred_check_branch
          %365 = sbr.rel (%p363) target = $region74
        $region73: #{vae_forward.9} parent=65 // pred_region
          %s366 = smul.u32 2, %s14
          %s367 = smul.addr %s366, 4
          %s368 = scalar_lea.vmem %s3, %s367
          // Predicated region
          $region75: #{vae_forward.9} parent=73 // pred_check
            _
          $region76: #{vae_forward.9} parent=73 // pred_check_branch
            %370 = sbr.rel (0) target = $region78
          $region77: #{vae_forward.9} parent=73 // pred_region
            // Predicated region
            $region79: #{vae_forward.9} parent=77 // pred_check
              _
            $region80: #{vae_forward.9} parent=77 // pred_check_branch
              %372 = sbr.rel (0) target = $region82
            $region81: #{vae_forward.9} parent=77 // pred_region
              // Predicated region
              $region94: #{vae_forward.9} parent=81 // pred_check
                _
              $region95: #{vae_forward.9} parent=81 // pred_check_branch
                %394 = sbr.rel (0) target = $region97
              $region96: #{vae_forward.9} parent=81 // pred_region
                loop: start=0, step=1, limit=1
                $region98: #{vae_forward.9} parent=96 // loop_pre_header
                  _
                $region99: #{vae_forward.9} parent=96 // loop_header
                  %s396 = sphi 0, %s400
                  %p397 = scmp.ge.s32.totalorder %s396, 1
                  %s401 = sphi %s362, %s362
                  %s402 = sphi %s368, %s368
                $region100: #{vae_forward.9} parent=96 // loop_header_branch
                  %399 = sbr.rel (%p397) target = $region104
                $region101: #{vae_forward.9} parent=96 // loop_body
                  %v403 = vld [vmem:[%s401] sm:$0xff]
                  %404 = vst [vmem:[%s402] sm:$0xff] %v403
                  %v405 = vld [vmem:[%s401 + $0x8] sm:$0xff]
                  %406 = vst [vmem:[%s402 + $0x10] sm:$0xff] %v405
                  %v407 = vld [vmem:[%s401 + $0x10] sm:$0xff]
                  %408 = vst [vmem:[%s402 + $0x20] sm:$0xff] %v407
                  %v409 = vld [vmem:[%s401 + $0x18] sm:$0xff]
                  %410 = vst [vmem:[%s402 + $0x30] sm:$0xff] %v409
                $region102: #{vae_forward.9} parent=96 // loop_footer
                  %s400 = sadd.s32 1, %s396
                $region103: #{vae_forward.9} parent=96 // loop_footer_branch
                  %395 = sbr.rel target = $region99
                $region104: #{vae_forward.9} parent=96 // loop_exit
                  _
              $region97: #{vae_forward.9} parent=81 // pred_fallthru
                _
              // Predicated region
              $region105: #{vae_forward.9} parent=81 // pred_check
                _
              $region106: #{vae_forward.9} parent=81 // pred_check_branch
                %412 = sbr.rel target = $region108
              $region107: #{vae_forward.9} parent=81 // pred_region
                _
              $region108: #{vae_forward.9} parent=81 // pred_fallthru
                _
            $region82: #{vae_forward.9} parent=77 // pred_fallthru
              _
            // Predicated region
            $region83: #{vae_forward.9} parent=77 // pred_check
              _
            $region84: #{vae_forward.9} parent=77 // pred_check_branch
              %374 = sbr.rel target = $region86
            $region85: #{vae_forward.9} parent=77 // pred_region
              %s376 = ssub.s32 256, 1
              loop: start=0, step=1, limit=1
              $region87: #{vae_forward.9} parent=85 // loop_pre_header
                _
              $region88: #{vae_forward.9} parent=85 // loop_header
                %s378 = sphi 0, %s382
                %p379 = scmp.ge.s32.totalorder %s378, 1
                %s383 = sphi %s362, %s362
                %s384 = sphi %s368, %s368
              $region89: #{vae_forward.9} parent=85 // loop_header_branch
                %381 = sbr.rel (%p379) target = $region93
              $region90: #{vae_forward.9} parent=85 // loop_body
                %v385 = vld [vmem:[%s383] sm:%s376]
                %386 = vst [vmem:[%s384] sm:%s376] %v385
                %v387 = vld [vmem:[%s383 + $0x8] sm:%s376]
                %388 = vst [vmem:[%s384 + $0x10] sm:%s376] %v387
                %v389 = vld [vmem:[%s383 + $0x10] sm:%s376]
                %390 = vst [vmem:[%s384 + $0x20] sm:%s376] %v389
                %v391 = vld [vmem:[%s383 + $0x18] sm:%s376]
                %392 = vst [vmem:[%s384 + $0x30] sm:%s376] %v391
              $region91: #{vae_forward.9} parent=85 // loop_footer
                %s382 = sadd.s32 1, %s378
              $region92: #{vae_forward.9} parent=85 // loop_footer_branch
                %377 = sbr.rel target = $region88
              $region93: #{vae_forward.9} parent=85 // loop_exit
                _
            $region86: #{vae_forward.9} parent=77 // pred_fallthru
              _
          $region78: #{vae_forward.9} parent=73 // pred_fallthru
            _
          %413 = vnop
        $region74: #{vae_forward.9} parent=65 // pred_fallthru
          _
      $region66: #{vae_forward.9} parent=5 // pred_fallthru
        _
      %p414 = scmp.le.s32.totalorder 2, %s9
      // Predicated region
      $region109: #{vae_forward.9} parent=5 // pred_check
        %p415 = pneg %p414
      $region110: #{vae_forward.9} parent=5 // pred_check_branch
        %417 = sbr.rel (%p415) target = $region112
      $region111: #{vae_forward.9} parent=5 // pred_region
        %s418 = ssub.s32 %s9, 2
        // Predicated region
        $region113: #{vae_forward.9} parent=111 // pred_check
          %p419 = pneg %p106
        $region114: #{vae_forward.9} parent=111 // pred_check_branch
          %421 = sbr.rel (%p419) target = $region116
        $region115: #{vae_forward.9} parent=111 // pred_region
          %s422 = sand.u32 %s91, 1
          %s423 = sand.u32 %s91, 1
          %s424 = smul.addr %s423, 32
          %s425 = scalar_lea.vmem [#allocation3], %s424
        $region116: #{vae_forward.9} parent=111 // pred_fallthru
          _
      $region112: #{vae_forward.9} parent=5 // pred_fallthru
        _
    $region6: #{vae_forward.9} parent=1 // loop_footer
      %s13 = sadd.s32 1, %s9
    $region7: #{vae_forward.9} parent=1 // loop_footer_branch
      %8 = sbr.rel target = $region3
    $region8: #{vae_forward.9} parent=1 // loop_exit
      _

// kernel: vae_forward.10
$region0: #{vae_forward.10}
  #allocation0 [shape = 'u32[]', space=smem, size = 0x4, offset = 0x4, fixed_abs, tag = 'smem constant byte address 0x4 - core index']
  #allocation1 [shape = 'u32[72,128]{1,0:T(1,128)}', space=vmem, size = 0x9000, scoped, tag = 'internal scratch']
  %s0 = inlined_call_operand.vmem [shape: bf16[64,512], index: 0, kind: input, shape index: {}]
  %s1 = inlined_call_operand.vmem [shape: bf16[512,128], index: 1, kind: input, shape index: {}]
  %s2 = inlined_call_operand.vmem [shape: f32[64,1], index: 2, kind: input, shape index: {}]
  %s3 = inlined_call_operand.vmem [shape: bf16[64,128], index: 3, kind: output, shape index: {}]
  %s4 = sld [smem:[#allocation0]]
  $region22: #{vae_forward.10} parent=0
    _
  %s6 = ssub.s32 1, %s4
  %s7 = scalar_select 0, %s6, %s4
  // Predicated region
  $region2: #{vae_forward.10} parent=0 // pred_check
    _
  $region3: #{vae_forward.10} parent=0 // pred_check_branch
    %9 = sbr.rel (0) target = $region5
  $region4: #{vae_forward.10} parent=0 // pred_region
    _
  $region5: #{vae_forward.10} parent=0 // pred_fallthru
    _
  // Predicated region
  $region6: #{vae_forward.10} parent=0 // pred_check
    _
  $region7: #{vae_forward.10} parent=0 // pred_check_branch
    %11 = sbr.rel (0) target = $region9
  $region8: #{vae_forward.10} parent=0 // pred_region
    _
  $region9: #{vae_forward.10} parent=0 // pred_fallthru
    _
  // Predicated region
  $region10: #{vae_forward.10} parent=0 // pred_check
    _
  $region11: #{vae_forward.10} parent=0 // pred_check_branch
    %13 = sbr.rel (0) target = $region13
  $region12: #{vae_forward.10} parent=0 // pred_region
    _
  $region13: #{vae_forward.10} parent=0 // pred_fallthru
    _
  %v14 = vld [vmem:[%s0] sm:$0xff]
  %v15 = vld [vmem:[%s0 + $0x8] sm:$0xff]
  %v16 = vld [vmem:[%s0 + $0x10] sm:$0xff]
  %v17 = vld [vmem:[%s0 + $0x18] sm:$0xff]
  %v18 = vld [vmem:[%s0 + $0x20] sm:$0xff]
  %v19 = vld [vmem:[%s0 + $0x28] sm:$0xff]
  %v20 = vld [vmem:[%s0 + $0x30] sm:$0xff]
  %v21 = vld [vmem:[%s0 + $0x38] sm:$0xff]
  %v22 = vld [vmem:[%s0 + $0x40] sm:$0xff]
  %v23 = vld [vmem:[%s0 + $0x48] sm:$0xff]
  %v24 = vld [vmem:[%s0 + $0x50] sm:$0xff]
  %v25 = vld [vmem:[%s0 + $0x58] sm:$0xff]
  %v26 = vld [vmem:[%s0 + $0x60] sm:$0xff]
  %v27 = vld [vmem:[%s0 + $0x68] sm:$0xff]
  %v28 = vld [vmem:[%s0 + $0x70] sm:$0xff]
  %v29 = vld [vmem:[%s0 + $0x78] sm:$0xff]
  %v30 = vld [vmem:[%s1] sm:$0xf]
  %v31 = vld [vmem:[%s1 + $0x4] sm:$0xf]
  %v32 = vld [vmem:[%s1 + $0x8] sm:$0xf]
  %v33 = vld [vmem:[%s1 + $0xc] sm:$0xf]
  %v34 = vld [vmem:[%s1 + $0x10] sm:$0xf]
  %v35 = vld [vmem:[%s1 + $0x14] sm:$0xf]
  %v36 = vld [vmem:[%s1 + $0x18] sm:$0xf]
  %v37 = vld [vmem:[%s1 + $0x1c] sm:$0xf]
  %v38 = vld [vmem:[%s1 + $0x20] sm:$0xf]
  %v39 = vld [vmem:[%s1 + $0x24] sm:$0xf]
  %v40 = vld [vmem:[%s1 + $0x28] sm:$0xf]
  %v41 = vld [vmem:[%s1 + $0x2c] sm:$0xf]
  %v42 = vld [vmem:[%s1 + $0x30] sm:$0xf]
  %v43 = vld [vmem:[%s1 + $0x34] sm:$0xf]
  %v44 = vld [vmem:[%s1 + $0x38] sm:$0xf]
  %v45 = vld [vmem:[%s1 + $0x3c] sm:$0xf]
  %v46 = vld [vmem:[%s1 + $0x40] sm:$0xf]
  %v47 = vld [vmem:[%s1 + $0x44] sm:$0xf]
  %v48 = vld [vmem:[%s1 + $0x48] sm:$0xf]
  %v49 = vld [vmem:[%s1 + $0x4c] sm:$0xf]
  %v50 = vld [vmem:[%s1 + $0x50] sm:$0xf]
  %v51 = vld [vmem:[%s1 + $0x54] sm:$0xf]
  %v52 = vld [vmem:[%s1 + $0x58] sm:$0xf]
  %v53 = vld [vmem:[%s1 + $0x5c] sm:$0xf]
  %v54 = vld [vmem:[%s1 + $0x60] sm:$0xf]
  %v55 = vld [vmem:[%s1 + $0x64] sm:$0xf]
  %v56 = vld [vmem:[%s1 + $0x68] sm:$0xf]
  %v57 = vld [vmem:[%s1 + $0x6c] sm:$0xf]
  %v58 = vld [vmem:[%s1 + $0x70] sm:$0xf]
  %v59 = vld [vmem:[%s1 + $0x74] sm:$0xf]
  %v60 = vld [vmem:[%s1 + $0x78] sm:$0xf]
  %v61 = vld [vmem:[%s1 + $0x7c] sm:$0xf]
  %v62 = vld [vmem:[%s1 + $0x80] sm:$0xf]
  %v63 = vld [vmem:[%s1 + $0x84] sm:$0xf]
  %v64 = vld [vmem:[%s1 + $0x88] sm:$0xf]
  %v65 = vld [vmem:[%s1 + $0x8c] sm:$0xf]
  %v66 = vld [vmem:[%s1 + $0x90] sm:$0xf]
  %v67 = vld [vmem:[%s1 + $0x94] sm:$0xf]
  %v68 = vld [vmem:[%s1 + $0x98] sm:$0xf]
  %v69 = vld [vmem:[%s1 + $0x9c] sm:$0xf]
  %v70 = vld [vmem:[%s1 + $0xa0] sm:$0xf]
  %v71 = vld [vmem:[%s1 + $0xa4] sm:$0xf]
  %v72 = vld [vmem:[%s1 + $0xa8] sm:$0xf]
  %v73 = vld [vmem:[%s1 + $0xac] sm:$0xf]
  %v74 = vld [vmem:[%s1 + $0xb0] sm:$0xf]
  %v75 = vld [vmem:[%s1 + $0xb4] sm:$0xf]
  %v76 = vld [vmem:[%s1 + $0xb8] sm:$0xf]
  %v77 = vld [vmem:[%s1 + $0xbc] sm:$0xf]
  %v78 = vld [vmem:[%s1 + $0xc0] sm:$0xf]
  %v79 = vld [vmem:[%s1 + $0xc4] sm:$0xf]
  %v80 = vld [vmem:[%s1 + $0xc8] sm:$0xf]
  %v81 = vld [vmem:[%s1 + $0xcc] sm:$0xf]
  %v82 = vld [vmem:[%s1 + $0xd0] sm:$0xf]
  %v83 = vld [vmem:[%s1 + $0xd4] sm:$0xf]
  %v84 = vld [vmem:[%s1 + $0xd8] sm:$0xf]
  %v85 = vld [vmem:[%s1 + $0xdc] sm:$0xf]
  %v86 = vld [vmem:[%s1 + $0xe0] sm:$0xf]
  %v87 = vld [vmem:[%s1 + $0xe4] sm:$0xf]
  %v88 = vld [vmem:[%s1 + $0xe8] sm:$0xf]
  %v89 = vld [vmem:[%s1 + $0xec] sm:$0xf]
  %v90 = vld [vmem:[%s1 + $0xf0] sm:$0xf]
  %v91 = vld [vmem:[%s1 + $0xf4] sm:$0xf]
  %v92 = vld [vmem:[%s1 + $0xf8] sm:$0xf]
  %v93 = vld [vmem:[%s1 + $0xfc] sm:$0xf]
  %v94 = vld [vmem:[%s2] sm:$0xff]
  %v95 = vld [vmem:[%s2 + $0x8] sm:$0xff]
  %v96 = vld [vmem:[%s2 + $0x10] sm:$0xff]
  %v97 = vld [vmem:[%s2 + $0x18] sm:$0xff]
  %v98 = vld [vmem:[%s2 + $0x20] sm:$0xff]
  %v99 = vld [vmem:[%s2 + $0x28] sm:$0xff]
  %v100 = vld [vmem:[%s2 + $0x30] sm:$0xff]
  %v101 = vld [vmem:[%s2 + $0x38] sm:$0xff]
  %103 = vset.pattern.permute.xlu0 0
  %104 = vperm.xlu0 %103, %v94
  %v105 = vpop.permute.xlu0 %104
  %108 = vset.pattern.permute.xlu0 0
  %109 = vperm.xlu0 %108, %v95
  %v110 = vpop.permute.xlu0 %109
  %113 = vset.pattern.permute.xlu0 0
  %114 = vperm.xlu0 %113, %v96
  %v115 = vpop.permute.xlu0 %114
  %118 = vset.pattern.permute.xlu0 0
  %119 = vperm.xlu0 %118, %v97
  %v120 = vpop.permute.xlu0 %119
  %123 = vset.pattern.permute.xlu0 0
  %124 = vperm.xlu0 %123, %v98
  %v125 = vpop.permute.xlu0 %124
  %128 = vset.pattern.permute.xlu0 0
  %129 = vperm.xlu0 %128, %v99
  %v130 = vpop.permute.xlu0 %129
  %133 = vset.pattern.permute.xlu0 0
  %134 = vperm.xlu0 %133, %v100
  %v135 = vpop.permute.xlu0 %134
  %138 = vset.pattern.permute.xlu0 0
  %139 = vperm.xlu0 %138, %v101
  %v140 = vpop.permute.xlu0 %139
  %v158 = vunpack.c.l.b16 %v14
  %v159 = vunpack.c.h.b16 %v14
  %v160 = vunpack.c.l.b16 %v15
  %v161 = vunpack.c.h.b16 %v15
  %v162 = vunpack.c.l.b16 %v16
  %v163 = vunpack.c.h.b16 %v16
  %v164 = vunpack.c.l.b16 %v17
  %v165 = vunpack.c.h.b16 %v17
  %v166 = vunpack.c.l.b16 %v18
  %v167 = vunpack.c.h.b16 %v18
  %v168 = vunpack.c.l.b16 %v19
  %v169 = vunpack.c.h.b16 %v19
  %v170 = vunpack.c.l.b16 %v20
  %v171 = vunpack.c.h.b16 %v20
  %v172 = vunpack.c.l.b16 %v21
  %v173 = vunpack.c.h.b16 %v21
  %v174 = vunpack.c.l.b16 %v22
  %v175 = vunpack.c.h.b16 %v22
  %v176 = vunpack.c.l.b16 %v23
  %v177 = vunpack.c.h.b16 %v23
  %v178 = vunpack.c.l.b16 %v24
  %v179 = vunpack.c.h.b16 %v24
  %v180 = vunpack.c.l.b16 %v25
  %v181 = vunpack.c.h.b16 %v25
  %v182 = vunpack.c.l.b16 %v26
  %v183 = vunpack.c.h.b16 %v26
  %v184 = vunpack.c.l.b16 %v27
  %v185 = vunpack.c.h.b16 %v27
  %v186 = vunpack.c.l.b16 %v28
  %v187 = vunpack.c.h.b16 %v28
  %v188 = vunpack.c.l.b16 %v29
  %v189 = vunpack.c.h.b16 %v29
  %v190 = vpack.c.b16 %v162, %v158
  %v191 = vpack.c.b16 %v163, %v159
  %v192 = vpack.c.b16 %v164, %v160
  %v193 = vpack.c.b16 %v165, %v161
  %v194 = vpack.c.b16 %v170, %v166
  %v195 = vpack.c.b16 %v171, %v167
  %v196 = vpack.c.b16 %v172, %v168
  %v197 = vpack.c.b16 %v173, %v169
  %v198 = vpack.c.b16 %v178, %v174
  %v199 = vpack.c.b16 %v179, %v175
  %v200 = vpack.c.b16 %v180, %v176
  %v201 = vpack.c.b16 %v181, %v177
  %v202 = vpack.c.b16 %v186, %v182
  %v203 = vpack.c.b16 %v187, %v183
  %v204 = vpack.c.b16 %v188, %v184
  %v205 = vpack.c.b16 %v189, %v185
  %v286 = vunpack.c.l.b16 %v30
  %v287 = vunpack.c.l.b16 %v31
  %v288 = vunpack.c.l.b16 %v32
  %v289 = vunpack.c.l.b16 %v33
  %v290 = vunpack.c.l.b16 %v34
  %v291 = vunpack.c.l.b16 %v35
  %v292 = vunpack.c.l.b16 %v36
  %v293 = vunpack.c.l.b16 %v37
  %v294 = vunpack.c.l.b16 %v38
  %v295 = vunpack.c.l.b16 %v39
  %v296 = vunpack.c.l.b16 %v40
  %v297 = vunpack.c.l.b16 %v41
  %v298 = vunpack.c.l.b16 %v42
  %v299 = vunpack.c.l.b16 %v43
  %v300 = vunpack.c.l.b16 %v44
  %v301 = vunpack.c.l.b16 %v45
  %v302 = vunpack.c.l.b16 %v46
  %v303 = vunpack.c.l.b16 %v47
  %v304 = vunpack.c.l.b16 %v48
  %v305 = vunpack.c.l.b16 %v49
  %v306 = vunpack.c.l.b16 %v50
  %v307 = vunpack.c.l.b16 %v51
  %v308 = vunpack.c.l.b16 %v52
  %v309 = vunpack.c.l.b16 %v53
  %v310 = vunpack.c.l.b16 %v54
  %v311 = vunpack.c.l.b16 %v55
  %v312 = vunpack.c.l.b16 %v56
  %v313 = vunpack.c.l.b16 %v57
  %v314 = vunpack.c.l.b16 %v58
  %v315 = vunpack.c.l.b16 %v59
  %v316 = vunpack.c.l.b16 %v60
  %v317 = vunpack.c.l.b16 %v61
  %v318 = vunpack.c.l.b16 %v62
  %v319 = vunpack.c.l.b16 %v63
  %v320 = vunpack.c.l.b16 %v64
  %v321 = vunpack.c.l.b16 %v65
  %v322 = vunpack.c.l.b16 %v66
  %v323 = vunpack.c.l.b16 %v67
  %v324 = vunpack.c.l.b16 %v68
  %v325 = vunpack.c.l.b16 %v69
  %v326 = vunpack.c.l.b16 %v70
  %v327 = vunpack.c.l.b16 %v71
  %v328 = vunpack.c.l.b16 %v72
  %v329 = vunpack.c.l.b16 %v73
  %v330 = vunpack.c.l.b16 %v74
  %v331 = vunpack.c.l.b16 %v75
  %v332 = vunpack.c.l.b16 %v76
  %v333 = vunpack.c.l.b16 %v77
  %v334 = vunpack.c.l.b16 %v78
  %v335 = vunpack.c.l.b16 %v79
  %v336 = vunpack.c.l.b16 %v80
  %v337 = vunpack.c.l.b16 %v81
  %v338 = vunpack.c.l.b16 %v82
  %v339 = vunpack.c.l.b16 %v83
  %v340 = vunpack.c.l.b16 %v84
  %v341 = vunpack.c.l.b16 %v85
  %v342 = vunpack.c.l.b16 %v86
  %v343 = vunpack.c.l.b16 %v87
  %v344 = vunpack.c.l.b16 %v88
  %v345 = vunpack.c.l.b16 %v89
  %v346 = vunpack.c.l.b16 %v90
  %v347 = vunpack.c.l.b16 %v91
  %v348 = vunpack.c.l.b16 %v92
  %v349 = vunpack.c.l.b16 %v93
  %v350 = vpack.c.b16 %v287, %v286
  %v351 = vpack.c.b16 %v289, %v288
  %v352 = vpack.c.b16 %v291, %v290
  %v353 = vpack.c.b16 %v293, %v292
  %v354 = vpack.c.b16 %v295, %v294
  %v355 = vpack.c.b16 %v297, %v296
  %v356 = vpack.c.b16 %v299, %v298
  %v357 = vpack.c.b16 %v301, %v300
  %v358 = vpack.c.b16 %v303, %v302
  %v359 = vpack.c.b16 %v305, %v304
  %v360 = vpack.c.b16 %v307, %v306
  %v361 = vpack.c.b16 %v309, %v308
  %v362 = vpack.c.b16 %v311, %v310
  %v363 = vpack.c.b16 %v313, %v312
  %v364 = vpack.c.b16 %v315, %v314
  %v365 = vpack.c.b16 %v317, %v316
  %v366 = vpack.c.b16 %v319, %v318
  %v367 = vpack.c.b16 %v321, %v320
  %v368 = vpack.c.b16 %v323, %v322
  %v369 = vpack.c.b16 %v325, %v324
  %v370 = vpack.c.b16 %v327, %v326
  %v371 = vpack.c.b16 %v329, %v328
  %v372 = vpack.c.b16 %v331, %v330
  %v373 = vpack.c.b16 %v333, %v332
  %v374 = vpack.c.b16 %v335, %v334
  %v375 = vpack.c.b16 %v337, %v336
  %v376 = vpack.c.b16 %v339, %v338
  %v377 = vpack.c.b16 %v341, %v340
  %v378 = vpack.c.b16 %v343, %v342
  %v379 = vpack.c.b16 %v345, %v344
  %v380 = vpack.c.b16 %v347, %v346
  %v381 = vpack.c.b16 %v349, %v348
  %414 = vmatpush.bf16.msra.mxu0 %v357
  %415 = vmatpush.bf16.msra.mxu0 %v356
  %416 = vmatpush.bf16.msra.mxu0 %v355
  %417 = vmatpush.bf16.msra.mxu0 %v354
  %418 = vmatpush.bf16.msra.mxu0 %v353
  %419 = vmatpush.bf16.msra.mxu0 %v352
  %420 = vmatpush.bf16.msra.mxu0 %v351
  %421 = vmatpush.bf16.msra.mxu0 %v350
  %422 = vmatmul.bf16.gmra.mxu0 %v190
  %v423 = vpop.f32.mrf.mxu0
  %v424 = vadd.f32 %v105, %v423
  %v425 = vpop.f32.mrf.mxu0
  %v426 = vadd.f32 %v110, %v425
  %427 = vmatmul.bf16.gmra.mxu0 %v194
  %v428 = vpop.f32.mrf.mxu0
  %v429 = vadd.f32 %v115, %v428
  %v430 = vpop.f32.mrf.mxu0
  %v431 = vadd.f32 %v120, %v430
  %432 = vmatmul.bf16.gmra.mxu0 %v198
  %v433 = vpop.f32.mrf.mxu0
  %v434 = vadd.f32 %v125, %v433
  %v435 = vpop.f32.mrf.mxu0
  %v436 = vadd.f32 %v130, %v435
  %437 = vmatmul.bf16.gmra.mxu0 %v202
  %v438 = vpop.f32.mrf.mxu0
  %v439 = vadd.f32 %v135, %v438
  %v440 = vpop.f32.mrf.mxu0
  %v441 = vadd.f32 %v140, %v440
  %442 = vdwg.mxu0
  %443 = vmatpush.bf16.msra.mxu0 %v365
  %444 = vmatpush.bf16.msra.mxu0 %v364
  %445 = vmatpush.bf16.msra.mxu0 %v363
  %446 = vmatpush.bf16.msra.mxu0 %v362
  %447 = vmatpush.bf16.msra.mxu0 %v361
  %448 = vmatpush.bf16.msra.mxu0 %v360
  %449 = vmatpush.bf16.msra.mxu0 %v359
  %450 = vmatpush.bf16.msra.mxu0 %v358
  %451 = vmatmul.bf16.gmra.mxu0 %v191
  %v452 = vpop.f32.mrf.mxu0
  %v453 = vadd.f32 %v424, %v452
  %v454 = vpop.f32.mrf.mxu0
  %v455 = vadd.f32 %v426, %v454
  %456 = vmatmul.bf16.gmra.mxu0 %v195
  %v457 = vpop.f32.mrf.mxu0
  %v458 = vadd.f32 %v429, %v457
  %v459 = vpop.f32.mrf.mxu0
  %v460 = vadd.f32 %v431, %v459
  %461 = vmatmul.bf16.gmra.mxu0 %v199
  %v462 = vpop.f32.mrf.mxu0
  %v463 = vadd.f32 %v434, %v462
  %v464 = vpop.f32.mrf.mxu0
  %v465 = vadd.f32 %v436, %v464
  %466 = vmatmul.bf16.gmra.mxu0 %v203
  %v467 = vpop.f32.mrf.mxu0
  %v468 = vadd.f32 %v439, %v467
  %v469 = vpop.f32.mrf.mxu0
  %v470 = vadd.f32 %v441, %v469
  %471 = vdwg.mxu0
  %472 = vmatpush.bf16.msra.mxu0 %v373
  %473 = vmatpush.bf16.msra.mxu0 %v372
  %474 = vmatpush.bf16.msra.mxu0 %v371
  %475 = vmatpush.bf16.msra.mxu0 %v370
  %476 = vmatpush.bf16.msra.mxu0 %v369
  %477 = vmatpush.bf16.msra.mxu0 %v368
  %478 = vmatpush.bf16.msra.mxu0 %v367
  %479 = vmatpush.bf16.msra.mxu0 %v366
  %480 = vmatmul.bf16.gmra.mxu0 %v192
  %v481 = vpop.f32.mrf.mxu0
  %v482 = vadd.f32 %v453, %v481
  %v483 = vpop.f32.mrf.mxu0
  %v484 = vadd.f32 %v455, %v483
  %485 = vmatmul.bf16.gmra.mxu0 %v196
  %v486 = vpop.f32.mrf.mxu0
  %v487 = vadd.f32 %v458, %v486
  %v488 = vpop.f32.mrf.mxu0
  %v489 = vadd.f32 %v460, %v488
  %490 = vmatmul.bf16.gmra.mxu0 %v200
  %v491 = vpop.f32.mrf.mxu0
  %v492 = vadd.f32 %v463, %v491
  %v493 = vpop.f32.mrf.mxu0
  %v494 = vadd.f32 %v465, %v493
  %495 = vmatmul.bf16.gmra.mxu0 %v204
  %v496 = vpop.f32.mrf.mxu0
  %v497 = vadd.f32 %v468, %v496
  %v498 = vpop.f32.mrf.mxu0
  %v499 = vadd.f32 %v470, %v498
  %500 = vdwg.mxu0
  %501 = vmatpush.bf16.msra.mxu0 %v381
  %502 = vmatpush.bf16.msra.mxu0 %v380
  %503 = vmatpush.bf16.msra.mxu0 %v379
  %504 = vmatpush.bf16.msra.mxu0 %v378
  %505 = vmatpush.bf16.msra.mxu0 %v377
  %506 = vmatpush.bf16.msra.mxu0 %v376
  %507 = vmatpush.bf16.msra.mxu0 %v375
  %508 = vmatpush.bf16.msra.mxu0 %v374
  %509 = vmatmul.bf16.gmra.mxu0 %v193
  %v510 = vpop.f32.mrf.mxu0
  %v511 = vadd.f32 %v482, %v510
  %v512 = vpop.f32.mrf.mxu0
  %v513 = vadd.f32 %v484, %v512
  %514 = vmatmul.bf16.gmra.mxu0 %v197
  %v515 = vpop.f32.mrf.mxu0
  %v516 = vadd.f32 %v487, %v515
  %v517 = vpop.f32.mrf.mxu0
  %v518 = vadd.f32 %v489, %v517
  %519 = vmatmul.bf16.gmra.mxu0 %v201
  %v520 = vpop.f32.mrf.mxu0
  %v521 = vadd.f32 %v492, %v520
  %v522 = vpop.f32.mrf.mxu0
  %v523 = vadd.f32 %v494, %v522
  %524 = vmatmul.bf16.gmra.mxu0 %v205
  %v525 = vpop.f32.mrf.mxu0
  %v526 = vadd.f32 %v497, %v525
  %v527 = vpop.f32.mrf.mxu0
  %v528 = vadd.f32 %v499, %v527
  %529 = vdwg.mxu0
  %v530 = vmax.f32 %v511, 0.0
  %v531 = vmax.f32 %v513, 0.0
  %v532 = vmax.f32 %v516, 0.0
  %v533 = vmax.f32 %v518, 0.0
  %v534 = vmax.f32 %v521, 0.0
  %v535 = vmax.f32 %v523, 0.0
  %v536 = vmax.f32 %v526, 0.0
  %v537 = vmax.f32 %v528, 0.0
  %v538 = vpack.c.bf16 %v530, %v530
  %v539 = vpack.c.bf16 %v531, %v531
  %v540 = vpack.c.bf16 %v532, %v532
  %v541 = vpack.c.bf16 %v533, %v533
  %v542 = vpack.c.bf16 %v534, %v534
  %v543 = vpack.c.bf16 %v535, %v535
  %v544 = vpack.c.bf16 %v536, %v536
  %v545 = vpack.c.bf16 %v537, %v537
  %546 = vst [vmem:[%s3] sm:$0xf] %v538
  %547 = vst [vmem:[%s3 + $0x4] sm:$0xf] %v539
  %548 = vst [vmem:[%s3 + $0x8] sm:$0xf] %v540
  %549 = vst [vmem:[%s3 + $0xc] sm:$0xf] %v541
  %550 = vst [vmem:[%s3 + $0x10] sm:$0xf] %v542
  %551 = vst [vmem:[%s3 + $0x14] sm:$0xf] %v543
  %552 = vst [vmem:[%s3 + $0x18] sm:$0xf] %v544
  %553 = vst [vmem:[%s3 + $0x1c] sm:$0xf] %v545
  // Predicated region
  $region14: #{vae_forward.10} parent=0 // pred_check
    _
  $region15: #{vae_forward.10} parent=0 // pred_check_branch
    %555 = sbr.rel (0) target = $region17
  $region16: #{vae_forward.10} parent=0 // pred_region
    _
  $region17: #{vae_forward.10} parent=0 // pred_fallthru
    _
  // Predicated region
  $region18: #{vae_forward.10} parent=0 // pred_check
    _
  $region19: #{vae_forward.10} parent=0 // pred_check_branch
    %557 = sbr.rel (0) target = $region21
  $region20: #{vae_forward.10} parent=0 // pred_region
    _
  $region21: #{vae_forward.10} parent=0 // pred_fallthru
    _

// kernel: vae_forward.11
$region0: #{vae_forward.11}
  #allocation0 [shape = 'u32[]', space=smem, size = 0x4, offset = 0x4, fixed_abs, tag = 'smem constant byte address 0x4 - core index']
  #allocation1 [shape = 'u32[72,128]{1,0:T(1,128)}', space=vmem, size = 0x9000, scoped, tag = 'internal scratch']
  %s0 = inlined_call_operand.vmem [shape: bf16[128,1024], index: 0, kind: input, shape index: {}]
  %s1 = inlined_call_operand.vmem [shape: bf16[1024,32], index: 1, kind: input, shape index: {}]
  %s2 = inlined_call_operand.vmem [shape: f32[128,1], index: 2, kind: input, shape index: {}]
  %s3 = inlined_call_operand.vmem [shape: bf16[128,32], index: 3, kind: output, shape index: {}]
  %s4 = sld [smem:[#allocation0]]
  $region22: #{vae_forward.11} parent=0
    _
  %s6 = ssub.s32 1, %s4
  %s7 = scalar_select 0, %s6, %s4
  // Predicated region
  $region2: #{vae_forward.11} parent=0 // pred_check
    _
  $region3: #{vae_forward.11} parent=0 // pred_check_branch
    %9 = sbr.rel (0) target = $region5
  $region4: #{vae_forward.11} parent=0 // pred_region
    _
  $region5: #{vae_forward.11} parent=0 // pred_fallthru
    _
  // Predicated region
  $region6: #{vae_forward.11} parent=0 // pred_check
    _
  $region7: #{vae_forward.11} parent=0 // pred_check_branch
    %11 = sbr.rel (0) target = $region9
  $region8: #{vae_forward.11} parent=0 // pred_region
    _
  $region9: #{vae_forward.11} parent=0 // pred_fallthru
    _
  // Predicated region
  $region10: #{vae_forward.11} parent=0 // pred_check
    _
  $region11: #{vae_forward.11} parent=0 // pred_check_branch
    %13 = sbr.rel (0) target = $region13
  $region12: #{vae_forward.11} parent=0 // pred_region
    _
  $region13: #{vae_forward.11} parent=0 // pred_fallthru
    _
  %v14 = vld [vmem:[%s0] sm:$0xff]
  %v15 = vld [vmem:[%s0 + $0x8] sm:$0xff]
  %v16 = vld [vmem:[%s0 + $0x10] sm:$0xff]
  %v17 = vld [vmem:[%s0 + $0x18] sm:$0xff]
  %v18 = vld [vmem:[%s0 + $0x20] sm:$0xff]
  %v19 = vld [vmem:[%s0 + $0x28] sm:$0xff]
  %v20 = vld [vmem:[%s0 + $0x30] sm:$0xff]
  %v21 = vld [vmem:[%s0 + $0x38] sm:$0xff]
  %v22 = vld [vmem:[%s0 + $0x40] sm:$0xff]
  %v23 = vld [vmem:[%s0 + $0x48] sm:$0xff]
  %v24 = vld [vmem:[%s0 + $0x50] sm:$0xff]
  %v25 = vld [vmem:[%s0 + $0x58] sm:$0xff]
  %v26 = vld [vmem:[%s0 + $0x60] sm:$0xff]
  %v27 = vld [vmem:[%s0 + $0x68] sm:$0xff]
  %v28 = vld [vmem:[%s0 + $0x70] sm:$0xff]
  %v29 = vld [vmem:[%s0 + $0x78] sm:$0xff]
  %v30 = vld [vmem:[%s0 + $0x80] sm:$0xff]
  %v31 = vld [vmem:[%s0 + $0x88] sm:$0xff]
  %v32 = vld [vmem:[%s0 + $0x90] sm:$0xff]
  %v33 = vld [vmem:[%s0 + $0x98] sm:$0xff]
  %v34 = vld [vmem:[%s0 + $0xa0] sm:$0xff]
  %v35 = vld [vmem:[%s0 + $0xa8] sm:$0xff]
  %v36 = vld [vmem:[%s0 + $0xb0] sm:$0xff]
  %v37 = vld [vmem:[%s0 + $0xb8] sm:$0xff]
  %v38 = vld [vmem:[%s0 + $0xc0] sm:$0xff]
  %v39 = vld [vmem:[%s0 + $0xc8] sm:$0xff]
  %v40 = vld [vmem:[%s0 + $0xd0] sm:$0xff]
  %v41 = vld [vmem:[%s0 + $0xd8] sm:$0xff]
  %v42 = vld [vmem:[%s0 + $0xe0] sm:$0xff]
  %v43 = vld [vmem:[%s0 + $0xe8] sm:$0xff]
  %v44 = vld [vmem:[%s0 + $0xf0] sm:$0xff]
  %v45 = vld [vmem:[%s0 + $0xf8] sm:$0xff]
  %v46 = vld [vmem:[%s0 + $0x100] sm:$0xff]
  %v47 = vld [vmem:[%s0 + $0x108] sm:$0xff]
  %v48 = vld [vmem:[%s0 + $0x110] sm:$0xff]
  %v49 = vld [vmem:[%s0 + $0x118] sm:$0xff]
  %v50 = vld [vmem:[%s0 + $0x120] sm:$0xff]
  %v51 = vld [vmem:[%s0 + $0x128] sm:$0xff]
  %v52 = vld [vmem:[%s0 + $0x130] sm:$0xff]
  %v53 = vld [vmem:[%s0 + $0x138] sm:$0xff]
  %v54 = vld [vmem:[%s0 + $0x140] sm:$0xff]
  %v55 = vld [vmem:[%s0 + $0x148] sm:$0xff]
  %v56 = vld [vmem:[%s0 + $0x150] sm:$0xff]
  %v57 = vld [vmem:[%s0 + $0x158] sm:$0xff]
  %v58 = vld [vmem:[%s0 + $0x160] sm:$0xff]
  %v59 = vld [vmem:[%s0 + $0x168] sm:$0xff]
  %v60 = vld [vmem:[%s0 + $0x170] sm:$0xff]
  %v61 = vld [vmem:[%s0 + $0x178] sm:$0xff]
  %v62 = vld [vmem:[%s0 + $0x180] sm:$0xff]
  %v63 = vld [vmem:[%s0 + $0x188] sm:$0xff]
  %v64 = vld [vmem:[%s0 + $0x190] sm:$0xff]
  %v65 = vld [vmem:[%s0 + $0x198] sm:$0xff]
  %v66 = vld [vmem:[%s0 + $0x1a0] sm:$0xff]
  %v67 = vld [vmem:[%s0 + $0x1a8] sm:$0xff]
  %v68 = vld [vmem:[%s0 + $0x1b0] sm:$0xff]
  %v69 = vld [vmem:[%s0 + $0x1b8] sm:$0xff]
  %v70 = vld [vmem:[%s0 + $0x1c0] sm:$0xff]
  %v71 = vld [vmem:[%s0 + $0x1c8] sm:$0xff]
  %v72 = vld [vmem:[%s0 + $0x1d0] sm:$0xff]
  %v73 = vld [vmem:[%s0 + $0x1d8] sm:$0xff]
  %v74 = vld [vmem:[%s0 + $0x1e0] sm:$0xff]
  %v75 = vld [vmem:[%s0 + $0x1e8] sm:$0xff]
  %v76 = vld [vmem:[%s0 + $0x1f0] sm:$0xff]
  %v77 = vld [vmem:[%s0 + $0x1f8] sm:$0xff]
  %v78 = vld [vmem:[%s1] sm:$0xf]
  %v79 = vld [vmem:[%s1 + $0x4] sm:$0xf]
  %v80 = vld [vmem:[%s1 + $0x8] sm:$0xf]
  %v81 = vld [vmem:[%s1 + $0xc] sm:$0xf]
  %v82 = vld [vmem:[%s1 + $0x10] sm:$0xf]
  %v83 = vld [vmem:[%s1 + $0x14] sm:$0xf]
  %v84 = vld [vmem:[%s1 + $0x18] sm:$0xf]
  %v85 = vld [vmem:[%s1 + $0x1c] sm:$0xf]
  %v86 = vld [vmem:[%s1 + $0x20] sm:$0xf]
  %v87 = vld [vmem:[%s1 + $0x24] sm:$0xf]
  %v88 = vld [vmem:[%s1 + $0x28] sm:$0xf]
  %v89 = vld [vmem:[%s1 + $0x2c] sm:$0xf]
  %v90 = vld [vmem:[%s1 + $0x30] sm:$0xf]
  %v91 = vld [vmem:[%s1 + $0x34] sm:$0xf]
  %v92 = vld [vmem:[%s1 + $0x38] sm:$0xf]
  %v93 = vld [vmem:[%s1 + $0x3c] sm:$0xf]
  %v94 = vld [vmem:[%s1 + $0x40] sm:$0xf]
  %v95 = vld [vmem:[%s1 + $0x44] sm:$0xf]
  %v96 = vld [vmem:[%s1 + $0x48] sm:$0xf]
  %v97 = vld [vmem:[%s1 + $0x4c] sm:$0xf]
  %v98 = vld [vmem:[%s1 + $0x50] sm:$0xf]
  %v99 = vld [vmem:[%s1 + $0x54] sm:$0xf]
  %v100 = vld [vmem:[%s1 + $0x58] sm:$0xf]
  %v101 = vld [vmem:[%s1 + $0x5c] sm:$0xf]
  %v102 = vld [vmem:[%s1 + $0x60] sm:$0xf]
  %v103 = vld [vmem:[%s1 + $0x64] sm:$0xf]
  %v104 = vld [vmem:[%s1 + $0x68] sm:$0xf]
  %v105 = vld [vmem:[%s1 + $0x6c] sm:$0xf]
  %v106 = vld [vmem:[%s1 + $0x70] sm:$0xf]
  %v107 = vld [vmem:[%s1 + $0x74] sm:$0xf]
  %v108 = vld [vmem:[%s1 + $0x78] sm:$0xf]
  %v109 = vld [vmem:[%s1 + $0x7c] sm:$0xf]
  %v110 = vld [vmem:[%s1 + $0x80] sm:$0xf]
  %v111 = vld [vmem:[%s1 + $0x84] sm:$0xf]
  %v112 = vld [vmem:[%s1 + $0x88] sm:$0xf]
  %v113 = vld [vmem:[%s1 + $0x8c] sm:$0xf]
  %v114 = vld [vmem:[%s1 + $0x90] sm:$0xf]
  %v115 = vld [vmem:[%s1 + $0x94] sm:$0xf]
  %v116 = vld [vmem:[%s1 + $0x98] sm:$0xf]
  %v117 = vld [vmem:[%s1 + $0x9c] sm:$0xf]
  %v118 = vld [vmem:[%s1 + $0xa0] sm:$0xf]
  %v119 = vld [vmem:[%s1 + $0xa4] sm:$0xf]
  %v120 = vld [vmem:[%s1 + $0xa8] sm:$0xf]
  %v121 = vld [vmem:[%s1 + $0xac] sm:$0xf]
  %v122 = vld [vmem:[%s1 + $0xb0] sm:$0xf]
  %v123 = vld [vmem:[%s1 + $0xb4] sm:$0xf]
  %v124 = vld [vmem:[%s1 + $0xb8] sm:$0xf]
  %v125 = vld [vmem:[%s1 + $0xbc] sm:$0xf]
  %v126 = vld [vmem:[%s1 + $0xc0] sm:$0xf]
  %v127 = vld [vmem:[%s1 + $0xc4] sm:$0xf]
  %v128 = vld [vmem:[%s1 + $0xc8] sm:$0xf]
  %v129 = vld [vmem:[%s1 + $0xcc] sm:$0xf]
  %v130 = vld [vmem:[%s1 + $0xd0] sm:$0xf]
  %v131 = vld [vmem:[%s1 + $0xd4] sm:$0xf]
  %v132 = vld [vmem:[%s1 + $0xd8] sm:$0xf]
  %v133 = vld [vmem:[%s1 + $0xdc] sm:$0xf]
  %v134 = vld [vmem:[%s1 + $0xe0] sm:$0xf]
  %v135 = vld [vmem:[%s1 + $0xe4] sm:$0xf]
  %v136 = vld [vmem:[%s1 + $0xe8] sm:$0xf]
  %v137 = vld [vmem:[%s1 + $0xec] sm:$0xf]
  %v138 = vld [vmem:[%s1 + $0xf0] sm:$0xf]
  %v139 = vld [vmem:[%s1 + $0xf4] sm:$0xf]
  %v140 = vld [vmem:[%s1 + $0xf8] sm:$0xf]
  %v141 = vld [vmem:[%s1 + $0xfc] sm:$0xf]
  %v142 = vld [vmem:[%s1 + $0x100] sm:$0xf]
  %v143 = vld [vmem:[%s1 + $0x104] sm:$0xf]
  %v144 = vld [vmem:[%s1 + $0x108] sm:$0xf]
  %v145 = vld [vmem:[%s1 + $0x10c] sm:$0xf]
  %v146 = vld [vmem:[%s1 + $0x110] sm:$0xf]
  %v147 = vld [vmem:[%s1 + $0x114] sm:$0xf]
  %v148 = vld [vmem:[%s1 + $0x118] sm:$0xf]
  %v149 = vld [vmem:[%s1 + $0x11c] sm:$0xf]
  %v150 = vld [vmem:[%s1 + $0x120] sm:$0xf]
  %v151 = vld [vmem:[%s1 + $0x124] sm:$0xf]
  %v152 = vld [vmem:[%s1 + $0x128] sm:$0xf]
  %v153 = vld [vmem:[%s1 + $0x12c] sm:$0xf]
  %v154 = vld [vmem:[%s1 + $0x130] sm:$0xf]
  %v155 = vld [vmem:[%s1 + $0x134] sm:$0xf]
  %v156 = vld [vmem:[%s1 + $0x138] sm:$0xf]
  %v157 = vld [vmem:[%s1 + $0x13c] sm:$0xf]
  %v158 = vld [vmem:[%s1 + $0x140] sm:$0xf]
  %v159 = vld [vmem:[%s1 + $0x144] sm:$0xf]
  %v160 = vld [vmem:[%s1 + $0x148] sm:$0xf]
  %v161 = vld [vmem:[%s1 + $0x14c] sm:$0xf]
  %v162 = vld [vmem:[%s1 + $0x150] sm:$0xf]
  %v163 = vld [vmem:[%s1 + $0x154] sm:$0xf]
  %v164 = vld [vmem:[%s1 + $0x158] sm:$0xf]
  %v165 = vld [vmem:[%s1 + $0x15c] sm:$0xf]
  %v166 = vld [vmem:[%s1 + $0x160] sm:$0xf]
  %v167 = vld [vmem:[%s1 + $0x164] sm:$0xf]
  %v168 = vld [vmem:[%s1 + $0x168] sm:$0xf]
  %v169 = vld [vmem:[%s1 + $0x16c] sm:$0xf]
  %v170 = vld [vmem:[%s1 + $0x170] sm:$0xf]
  %v171 = vld [vmem:[%s1 + $0x174] sm:$0xf]
  %v172 = vld [vmem:[%s1 + $0x178] sm:$0xf]
  %v173 = vld [vmem:[%s1 + $0x17c] sm:$0xf]
  %v174 = vld [vmem:[%s1 + $0x180] sm:$0xf]
  %v175 = vld [vmem:[%s1 + $0x184] sm:$0xf]
  %v176 = vld [vmem:[%s1 + $0x188] sm:$0xf]
  %v177 = vld [vmem:[%s1 + $0x18c] sm:$0xf]
  %v178 = vld [vmem:[%s1 + $0x190] sm:$0xf]
  %v179 = vld [vmem:[%s1 + $0x194] sm:$0xf]
  %v180 = vld [vmem:[%s1 + $0x198] sm:$0xf]
  %v181 = vld [vmem:[%s1 + $0x19c] sm:$0xf]
  %v182 = vld [vmem:[%s1 + $0x1a0] sm:$0xf]
  %v183 = vld [vmem:[%s1 + $0x1a4] sm:$0xf]
  %v184 = vld [vmem:[%s1 + $0x1a8] sm:$0xf]
  %v185 = vld [vmem:[%s1 + $0x1ac] sm:$0xf]
  %v186 = vld [vmem:[%s1 + $0x1b0] sm:$0xf]
  %v187 = vld [vmem:[%s1 + $0x1b4] sm:$0xf]
  %v188 = vld [vmem:[%s1 + $0x1b8] sm:$0xf]
  %v189 = vld [vmem:[%s1 + $0x1bc] sm:$0xf]
  %v190 = vld [vmem:[%s1 + $0x1c0] sm:$0xf]
  %v191 = vld [vmem:[%s1 + $0x1c4] sm:$0xf]
  %v192 = vld [vmem:[%s1 + $0x1c8] sm:$0xf]
  %v193 = vld [vmem:[%s1 + $0x1cc] sm:$0xf]
  %v194 = vld [vmem:[%s1 + $0x1d0] sm:$0xf]
  %v195 = vld [vmem:[%s1 + $0x1d4] sm:$0xf]
  %v196 = vld [vmem:[%s1 + $0x1d8] sm:$0xf]
  %v197 = vld [vmem:[%s1 + $0x1dc] sm:$0xf]
  %v198 = vld [vmem:[%s1 + $0x1e0] sm:$0xf]
  %v199 = vld [vmem:[%s1 + $0x1e4] sm:$0xf]
  %v200 = vld [vmem:[%s1 + $0x1e8] sm:$0xf]
  %v201 = vld [vmem:[%s1 + $0x1ec] sm:$0xf]
  %v202 = vld [vmem:[%s1 + $0x1f0] sm:$0xf]
  %v203 = vld [vmem:[%s1 + $0x1f4] sm:$0xf]
  %v204 = vld [vmem:[%s1 + $0x1f8] sm:$0xf]
  %v205 = vld [vmem:[%s1 + $0x1fc] sm:$0xf]
  %v206 = vld [vmem:[%s2] sm:$0xff]
  %v207 = vld [vmem:[%s2 + $0x8] sm:$0xff]
  %v208 = vld [vmem:[%s2 + $0x10] sm:$0xff]
  %v209 = vld [vmem:[%s2 + $0x18] sm:$0xff]
  %v210 = vld [vmem:[%s2 + $0x20] sm:$0xff]
  %v211 = vld [vmem:[%s2 + $0x28] sm:$0xff]
  %v212 = vld [vmem:[%s2 + $0x30] sm:$0xff]
  %v213 = vld [vmem:[%s2 + $0x38] sm:$0xff]
  %v214 = vld [vmem:[%s2 + $0x40] sm:$0xff]
  %v215 = vld [vmem:[%s2 + $0x48] sm:$0xff]
  %v216 = vld [vmem:[%s2 + $0x50] sm:$0xff]
  %v217 = vld [vmem:[%s2 + $0x58] sm:$0xff]
  %v218 = vld [vmem:[%s2 + $0x60] sm:$0xff]
  %v219 = vld [vmem:[%s2 + $0x68] sm:$0xff]
  %v220 = vld [vmem:[%s2 + $0x70] sm:$0xff]
  %v221 = vld [vmem:[%s2 + $0x78] sm:$0xff]
  %223 = vset.pattern.permute.xlu0 0
  %224 = vperm.xlu0 %223, %v206
  %v225 = vpop.permute.xlu0 %224
  %228 = vset.pattern.permute.xlu0 0
  %229 = vperm.xlu0 %228, %v207
  %v230 = vpop.permute.xlu0 %229
  %233 = vset.pattern.permute.xlu0 0
  %234 = vperm.xlu0 %233, %v208
  %v235 = vpop.permute.xlu0 %234
  %238 = vset.pattern.permute.xlu0 0
  %239 = vperm.xlu0 %238, %v209
  %v240 = vpop.permute.xlu0 %239
  %243 = vset.pattern.permute.xlu0 0
  %244 = vperm.xlu0 %243, %v210
  %v245 = vpop.permute.xlu0 %244
  %248 = vset.pattern.permute.xlu0 0
  %249 = vperm.xlu0 %248, %v211
  %v250 = vpop.permute.xlu0 %249
  %253 = vset.pattern.permute.xlu0 0
  %254 = vperm.xlu0 %253, %v212
  %v255 = vpop.permute.xlu0 %254
  %258 = vset.pattern.permute.xlu0 0
  %259 = vperm.xlu0 %258, %v213
  %v260 = vpop.permute.xlu0 %259
  %263 = vset.pattern.permute.xlu0 0
  %264 = vperm.xlu0 %263, %v214
  %v265 = vpop.permute.xlu0 %264
  %268 = vset.pattern.permute.xlu0 0
  %269 = vperm.xlu0 %268, %v215
  %v270 = vpop.permute.xlu0 %269
  %273 = vset.pattern.permute.xlu0 0
  %274 = vperm.xlu0 %273, %v216
  %v275 = vpop.permute.xlu0 %274
  %278 = vset.pattern.permute.xlu0 0
  %279 = vperm.xlu0 %278, %v217
  %v280 = vpop.permute.xlu0 %279
  %283 = vset.pattern.permute.xlu0 0
  %284 = vperm.xlu0 %283, %v218
  %v285 = vpop.permute.xlu0 %284
  %288 = vset.pattern.permute.xlu0 0
  %289 = vperm.xlu0 %288, %v219
  %v290 = vpop.permute.xlu0 %289
  %293 = vset.pattern.permute.xlu0 0
  %294 = vperm.xlu0 %293, %v220
  %v295 = vpop.permute.xlu0 %294
  %298 = vset.pattern.permute.xlu0 0
  %299 = vperm.xlu0 %298, %v221
  %v300 = vpop.permute.xlu0 %299
  %v366 = vunpack.c.l.b16 %v14
  %v367 = vunpack.c.h.b16 %v14
  %v368 = vunpack.c.l.b16 %v15
  %v369 = vunpack.c.h.b16 %v15
  %v370 = vunpack.c.l.b16 %v16
  %v371 = vunpack.c.h.b16 %v16
  %v372 = vunpack.c.l.b16 %v17
  %v373 = vunpack.c.h.b16 %v17
  %v374 = vunpack.c.l.b16 %v18
  %v375 = vunpack.c.h.b16 %v18
  %v376 = vunpack.c.l.b16 %v19
  %v377 = vunpack.c.h.b16 %v19
  %v378 = vunpack.c.l.b16 %v20
  %v379 = vunpack.c.h.b16 %v20
  %v380 = vunpack.c.l.b16 %v21
  %v381 = vunpack.c.h.b16 %v21
  %v382 = vunpack.c.l.b16 %v22
  %v383 = vunpack.c.h.b16 %v22
  %v384 = vunpack.c.l.b16 %v23
  %v385 = vunpack.c.h.b16 %v23
  %v386 = vunpack.c.l.b16 %v24
  %v387 = vunpack.c.h.b16 %v24
  %v388 = vunpack.c.l.b16 %v25
  %v389 = vunpack.c.h.b16 %v25
  %v390 = vunpack.c.l.b16 %v26
  %v391 = vunpack.c.h.b16 %v26
  %v392 = vunpack.c.l.b16 %v27
  %v393 = vunpack.c.h.b16 %v27
  %v394 = vunpack.c.l.b16 %v28
  %v395 = vunpack.c.h.b16 %v28
  %v396 = vunpack.c.l.b16 %v29
  %v397 = vunpack.c.h.b16 %v29
  %v398 = vunpack.c.l.b16 %v30
  %v399 = vunpack.c.h.b16 %v30
  %v400 = vunpack.c.l.b16 %v31
  %v401 = vunpack.c.h.b16 %v31
  %v402 = vunpack.c.l.b16 %v32
  %v403 = vunpack.c.h.b16 %v32
  %v404 = vunpack.c.l.b16 %v33
  %v405 = vunpack.c.h.b16 %v33
  %v406 = vunpack.c.l.b16 %v34
  %v407 = vunpack.c.h.b16 %v34
  %v408 = vunpack.c.l.b16 %v35
  %v409 = vunpack.c.h.b16 %v35
  %v410 = vunpack.c.l.b16 %v36
  %v411 = vunpack.c.h.b16 %v36
  %v412 = vunpack.c.l.b16 %v37
  %v413 = vunpack.c.h.b16 %v37
  %v414 = vunpack.c.l.b16 %v38
  %v415 = vunpack.c.h.b16 %v38
  %v416 = vunpack.c.l.b16 %v39
  %v417 = vunpack.c.h.b16 %v39
  %v418 = vunpack.c.l.b16 %v40
  %v419 = vunpack.c.h.b16 %v40
  %v420 = vunpack.c.l.b16 %v41
  %v421 = vunpack.c.h.b16 %v41
  %v422 = vunpack.c.l.b16 %v42
  %v423 = vunpack.c.h.b16 %v42
  %v424 = vunpack.c.l.b16 %v43
  %v425 = vunpack.c.h.b16 %v43
  %v426 = vunpack.c.l.b16 %v44
  %v427 = vunpack.c.h.b16 %v44
  %v428 = vunpack.c.l.b16 %v45
  %v429 = vunpack.c.h.b16 %v45
  %v430 = vunpack.c.l.b16 %v46
  %v431 = vunpack.c.h.b16 %v46
  %v432 = vunpack.c.l.b16 %v47
  %v433 = vunpack.c.h.b16 %v47
  %v434 = vunpack.c.l.b16 %v48
  %v435 = vunpack.c.h.b16 %v48
  %v436 = vunpack.c.l.b16 %v49
  %v437 = vunpack.c.h.b16 %v49
  %v438 = vunpack.c.l.b16 %v50
  %v439 = vunpack.c.h.b16 %v50
  %v440 = vunpack.c.l.b16 %v51
  %v441 = vunpack.c.h.b16 %v51
  %v442 = vunpack.c.l.b16 %v52
  %v443 = vunpack.c.h.b16 %v52
  %v444 = vunpack.c.l.b16 %v53
  %v445 = vunpack.c.h.b16 %v53
  %v446 = vunpack.c.l.b16 %v54
  %v447 = vunpack.c.h.b16 %v54
  %v448 = vunpack.c.l.b16 %v55
  %v449 = vunpack.c.h.b16 %v55
  %v450 = vunpack.c.l.b16 %v56
  %v451 = vunpack.c.h.b16 %v56
  %v452 = vunpack.c.l.b16 %v57
  %v453 = vunpack.c.h.b16 %v57
  %v454 = vunpack.c.l.b16 %v58
  %v455 = vunpack.c.h.b16 %v58
  %v456 = vunpack.c.l.b16 %v59
  %v457 = vunpack.c.h.b16 %v59
  %v458 = vunpack.c.l.b16 %v60
  %v459 = vunpack.c.h.b16 %v60
  %v460 = vunpack.c.l.b16 %v61
  %v461 = vunpack.c.h.b16 %v61
  %v462 = vunpack.c.l.b16 %v62
  %v463 = vunpack.c.h.b16 %v62
  %v464 = vunpack.c.l.b16 %v63
  %v465 = vunpack.c.h.b16 %v63
  %v466 = vunpack.c.l.b16 %v64
  %v467 = vunpack.c.h.b16 %v64
  %v468 = vunpack.c.l.b16 %v65
  %v469 = vunpack.c.h.b16 %v65
  %v470 = vunpack.c.l.b16 %v66
  %v471 = vunpack.c.h.b16 %v66
  %v472 = vunpack.c.l.b16 %v67
  %v473 = vunpack.c.h.b16 %v67
  %v474 = vunpack.c.l.b16 %v68
  %v475 = vunpack.c.h.b16 %v68
  %v476 = vunpack.c.l.b16 %v69
  %v477 = vunpack.c.h.b16 %v69
  %v478 = vunpack.c.l.b16 %v70
  %v479 = vunpack.c.h.b16 %v70
  %v480 = vunpack.c.l.b16 %v71
  %v481 = vunpack.c.h.b16 %v71
  %v482 = vunpack.c.l.b16 %v72
  %v483 = vunpack.c.h.b16 %v72
  %v484 = vunpack.c.l.b16 %v73
  %v485 = vunpack.c.h.b16 %v73
  %v486 = vunpack.c.l.b16 %v74
  %v487 = vunpack.c.h.b16 %v74
  %v488 = vunpack.c.l.b16 %v75
  %v489 = vunpack.c.h.b16 %v75
  %v490 = vunpack.c.l.b16 %v76
  %v491 = vunpack.c.h.b16 %v76
  %v492 = vunpack.c.l.b16 %v77
  %v493 = vunpack.c.h.b16 %v77
  %v494 = vpack.c.b16 %v374, %v366
  %v495 = vpack.c.b16 %v375, %v367
  %v496 = vpack.c.b16 %v376, %v368
  %v497 = vpack.c.b16 %v377, %v369
  %v498 = vpack.c.b16 %v378, %v370
  %v499 = vpack.c.b16 %v379, %v371
  %v500 = vpack.c.b16 %v380, %v372
  %v501 = vpack.c.b16 %v381, %v373
  %v502 = vpack.c.b16 %v390, %v382
  %v503 = vpack.c.b16 %v391, %v383
  %v504 = vpack.c.b16 %v392, %v384
  %v505 = vpack.c.b16 %v393, %v385
  %v506 = vpack.c.b16 %v394, %v386
  %v507 = vpack.c.b16 %v395, %v387
  %v508 = vpack.c.b16 %v396, %v388
  %v509 = vpack.c.b16 %v397, %v389
  %v510 = vpack.c.b16 %v406, %v398
  %v511 = vpack.c.b16 %v407, %v399
  %v512 = vpack.c.b16 %v408, %v400
  %v513 = vpack.c.b16 %v409, %v401
  %v514 = vpack.c.b16 %v410, %v402
  %v515 = vpack.c.b16 %v411, %v403
  %v516 = vpack.c.b16 %v412, %v404
  %v517 = vpack.c.b16 %v413, %v405
  %v518 = vpack.c.b16 %v422, %v414
  %v519 = vpack.c.b16 %v423, %v415
  %v520 = vpack.c.b16 %v424, %v416
  %v521 = vpack.c.b16 %v425, %v417
  %v522 = vpack.c.b16 %v426, %v418
  %v523 = vpack.c.b16 %v427, %v419
  %v524 = vpack.c.b16 %v428, %v420
  %v525 = vpack.c.b16 %v429, %v421
  %v526 = vpack.c.b16 %v438, %v430
  %v527 = vpack.c.b16 %v439, %v431
  %v528 = vpack.c.b16 %v440, %v432
  %v529 = vpack.c.b16 %v441, %v433
  %v530 = vpack.c.b16 %v442, %v434
  %v531 = vpack.c.b16 %v443, %v435
  %v532 = vpack.c.b16 %v444, %v436
  %v533 = vpack.c.b16 %v445, %v437
  %v534 = vpack.c.b16 %v454, %v446
  %v535 = vpack.c.b16 %v455, %v447
  %v536 = vpack.c.b16 %v456, %v448
  %v537 = vpack.c.b16 %v457, %v449
  %v538 = vpack.c.b16 %v458, %v450
  %v539 = vpack.c.b16 %v459, %v451
  %v540 = vpack.c.b16 %v460, %v452
  %v541 = vpack.c.b16 %v461, %v453
  %v542 = vpack.c.b16 %v470, %v462
  %v543 = vpack.c.b16 %v471, %v463
  %v544 = vpack.c.b16 %v472, %v464
  %v545 = vpack.c.b16 %v473, %v465
  %v546 = vpack.c.b16 %v474, %v466
  %v547 = vpack.c.b16 %v475, %v467
  %v548 = vpack.c.b16 %v476, %v468
  %v549 = vpack.c.b16 %v477, %v469
  %v550 = vpack.c.b16 %v486, %v478
  %v551 = vpack.c.b16 %v487, %v479
  %v552 = vpack.c.b16 %v488, %v480
  %v553 = vpack.c.b16 %v489, %v481
  %v554 = vpack.c.b16 %v490, %v482
  %v555 = vpack.c.b16 %v491, %v483
  %v556 = vpack.c.b16 %v492, %v484
  %v557 = vpack.c.b16 %v493, %v485
  %v750 = vunpack.c.l.b16 %v78
  %v751 = vunpack.c.l.b16 %v79
  %v752 = vunpack.c.l.b16 %v80
  %v753 = vunpack.c.l.b16 %v81
  %v754 = vunpack.c.l.b16 %v82
  %v755 = vunpack.c.l.b16 %v83
  %v756 = vunpack.c.l.b16 %v84
  %v757 = vunpack.c.l.b16 %v85
  %v758 = vunpack.c.l.b16 %v86
  %v759 = vunpack.c.l.b16 %v87
  %v760 = vunpack.c.l.b16 %v88
  %v761 = vunpack.c.l.b16 %v89
  %v762 = vunpack.c.l.b16 %v90
  %v763 = vunpack.c.l.b16 %v91
  %v764 = vunpack.c.l.b16 %v92
  %v765 = vunpack.c.l.b16 %v93
  %v766 = vunpack.c.l.b16 %v94
  %v767 = vunpack.c.l.b16 %v95
  %v768 = vunpack.c.l.b16 %v96
  %v769 = vunpack.c.l.b16 %v97
  %v770 = vunpack.c.l.b16 %v98
  %v771 = vunpack.c.l.b16 %v99
  %v772 = vunpack.c.l.b16 %v100
  %v773 = vunpack.c.l.b16 %v101
  %v774 = vunpack.c.l.b16 %v102
  %v775 = vunpack.c.l.b16 %v103
  %v776 = vunpack.c.l.b16 %v104
  %v777 = vunpack.c.l.b16 %v105
  %v778 = vunpack.c.l.b16 %v106
  %v779 = vunpack.c.l.b16 %v107
  %v780 = vunpack.c.l.b16 %v108
  %v781 = vunpack.c.l.b16 %v109
  %v782 = vunpack.c.l.b16 %v110
  %v783 = vunpack.c.l.b16 %v111
  %v784 = vunpack.c.l.b16 %v112
  %v785 = vunpack.c.l.b16 %v113
  %v786 = vunpack.c.l.b16 %v114
  %v787 = vunpack.c.l.b16 %v115
  %v788 = vunpack.c.l.b16 %v116
  %v789 = vunpack.c.l.b16 %v117
  %v790 = vunpack.c.l.b16 %v118
  %v791 = vunpack.c.l.b16 %v119
  %v792 = vunpack.c.l.b16 %v120
  %v793 = vunpack.c.l.b16 %v121
  %v794 = vunpack.c.l.b16 %v122
  %v795 = vunpack.c.l.b16 %v123
  %v796 = vunpack.c.l.b16 %v124
  %v797 = vunpack.c.l.b16 %v125
  %v798 = vunpack.c.l.b16 %v126
  %v799 = vunpack.c.l.b16 %v127
  %v800 = vunpack.c.l.b16 %v128
  %v801 = vunpack.c.l.b16 %v129
  %v802 = vunpack.c.l.b16 %v130
  %v803 = vunpack.c.l.b16 %v131
  %v804 = vunpack.c.l.b16 %v132
  %v805 = vunpack.c.l.b16 %v133
  %v806 = vunpack.c.l.b16 %v134
  %v807 = vunpack.c.l.b16 %v135
  %v808 = vunpack.c.l.b16 %v136
  %v809 = vunpack.c.l.b16 %v137
  %v810 = vunpack.c.l.b16 %v138
  %v811 = vunpack.c.l.b16 %v139
  %v812 = vunpack.c.l.b16 %v140
  %v813 = vunpack.c.l.b16 %v141
  %v814 = vunpack.c.l.b16 %v142
  %v815 = vunpack.c.l.b16 %v143
  %v816 = vunpack.c.l.b16 %v144
  %v817 = vunpack.c.l.b16 %v145
  %v818 = vunpack.c.l.b16 %v146
  %v819 = vunpack.c.l.b16 %v147
  %v820 = vunpack.c.l.b16 %v148
  %v821 = vunpack.c.l.b16 %v149
  %v822 = vunpack.c.l.b16 %v150
  %v823 = vunpack.c.l.b16 %v151
  %v824 = vunpack.c.l.b16 %v152
  %v825 = vunpack.c.l.b16 %v153
  %v826 = vunpack.c.l.b16 %v154
  %v827 = vunpack.c.l.b16 %v155
  %v828 = vunpack.c.l.b16 %v156
  %v829 = vunpack.c.l.b16 %v157
  %v830 = vunpack.c.l.b16 %v158
  %v831 = vunpack.c.l.b16 %v159
  %v832 = vunpack.c.l.b16 %v160
  %v833 = vunpack.c.l.b16 %v161
  %v834 = vunpack.c.l.b16 %v162
  %v835 = vunpack.c.l.b16 %v163
  %v836 = vunpack.c.l.b16 %v164
  %v837 = vunpack.c.l.b16 %v165
  %v838 = vunpack.c.l.b16 %v166
  %v839 = vunpack.c.l.b16 %v167
  %v840 = vunpack.c.l.b16 %v168
  %v841 = vunpack.c.l.b16 %v169
  %v842 = vunpack.c.l.b16 %v170
  %v843 = vunpack.c.l.b16 %v171
  %v844 = vunpack.c.l.b16 %v172
  %v845 = vunpack.c.l.b16 %v173
  %v846 = vunpack.c.l.b16 %v174
  %v847 = vunpack.c.l.b16 %v175
  %v848 = vunpack.c.l.b16 %v176
  %v849 = vunpack.c.l.b16 %v177
  %v850 = vunpack.c.l.b16 %v178
  %v851 = vunpack.c.l.b16 %v179
  %v852 = vunpack.c.l.b16 %v180
  %v853 = vunpack.c.l.b16 %v181
  %v854 = vunpack.c.l.b16 %v182
  %v855 = vunpack.c.l.b16 %v183
  %v856 = vunpack.c.l.b16 %v184
  %v857 = vunpack.c.l.b16 %v185
  %v858 = vunpack.c.l.b16 %v186
  %v859 = vunpack.c.l.b16 %v187
  %v860 = vunpack.c.l.b16 %v188
  %v861 = vunpack.c.l.b16 %v189
  %v862 = vunpack.c.l.b16 %v190
  %v863 = vunpack.c.l.b16 %v191
  %v864 = vunpack.c.l.b16 %v192
  %v865 = vunpack.c.l.b16 %v193
  %v866 = vunpack.c.l.b16 %v194
  %v867 = vunpack.c.l.b16 %v195
  %v868 = vunpack.c.l.b16 %v196
  %v869 = vunpack.c.l.b16 %v197
  %v870 = vunpack.c.l.b16 %v198
  %v871 = vunpack.c.l.b16 %v199
  %v872 = vunpack.c.l.b16 %v200
  %v873 = vunpack.c.l.b16 %v201
  %v874 = vunpack.c.l.b16 %v202
  %v875 = vunpack.c.l.b16 %v203
  %v876 = vunpack.c.l.b16 %v204
  %v877 = vunpack.c.l.b16 %v205
  %v878 = vpack.c.b16 %v751, %v750
  %v879 = vpack.c.b16 %v753, %v752
  %v880 = vpack.c.b16 %v755, %v754
  %v881 = vpack.c.b16 %v757, %v756
  %v882 = vpack.c.b16 %v759, %v758
  %v883 = vpack.c.b16 %v761, %v760
  %v884 = vpack.c.b16 %v763, %v762
  %v885 = vpack.c.b16 %v765, %v764
  %v886 = vpack.c.b16 %v767, %v766
  %v887 = vpack.c.b16 %v769, %v768
  %v888 = vpack.c.b16 %v771, %v770
  %v889 = vpack.c.b16 %v773, %v772
  %v890 = vpack.c.b16 %v775, %v774
  %v891 = vpack.c.b16 %v777, %v776
  %v892 = vpack.c.b16 %v779, %v778
  %v893 = vpack.c.b16 %v781, %v780
  %v894 = vpack.c.b16 %v783, %v782
  %v895 = vpack.c.b16 %v785, %v784
  %v896 = vpack.c.b16 %v787, %v786
  %v897 = vpack.c.b16 %v789, %v788
  %v898 = vpack.c.b16 %v791, %v790
  %v899 = vpack.c.b16 %v793, %v792
  %v900 = vpack.c.b16 %v795, %v794
  %v901 = vpack.c.b16 %v797, %v796
  %v902 = vpack.c.b16 %v799, %v798
  %v903 = vpack.c.b16 %v801, %v800
  %v904 = vpack.c.b16 %v803, %v802
  %v905 = vpack.c.b16 %v805, %v804
  %v906 = vpack.c.b16 %v807, %v806
  %v907 = vpack.c.b16 %v809, %v808
  %v908 = vpack.c.b16 %v811, %v810
  %v909 = vpack.c.b16 %v813, %v812
  %v910 = vpack.c.b16 %v815, %v814
  %v911 = vpack.c.b16 %v817, %v816
  %v912 = vpack.c.b16 %v819, %v818
  %v913 = vpack.c.b16 %v821, %v820
  %v914 = vpack.c.b16 %v823, %v822
  %v915 = vpack.c.b16 %v825, %v824
  %v916 = vpack.c.b16 %v827, %v826
  %v917 = vpack.c.b16 %v829, %v828
  %v918 = vpack.c.b16 %v831, %v830
  %v919 = vpack.c.b16 %v833, %v832
  %v920 = vpack.c.b16 %v835, %v834
  %v921 = vpack.c.b16 %v837, %v836
  %v922 = vpack.c.b16 %v839, %v838
  %v923 = vpack.c.b16 %v841, %v840
  %v924 = vpack.c.b16 %v843, %v842
  %v925 = vpack.c.b16 %v845, %v844
  %v926 = vpack.c.b16 %v847, %v846
  %v927 = vpack.c.b16 %v849, %v848
  %v928 = vpack.c.b16 %v851, %v850
  %v929 = vpack.c.b16 %v853, %v852
  %v930 = vpack.c.b16 %v855, %v854
  %v931 = vpack.c.b16 %v857, %v856
  %v932 = vpack.c.b16 %v859, %v858
  %v933 = vpack.c.b16 %v861, %v860
  %v934 = vpack.c.b16 %v863, %v862
  %v935 = vpack.c.b16 %v865, %v864
  %v936 = vpack.c.b16 %v867, %v866
  %v937 = vpack.c.b16 %v869, %v868
  %v938 = vpack.c.b16 %v871, %v870
  %v939 = vpack.c.b16 %v873, %v872
  %v940 = vpack.c.b16 %v875, %v874
  %v941 = vpack.c.b16 %v877, %v876
  %1006 = vmatpush.bf16.msra.mxu0 %v885
  %1007 = vmatpush.bf16.msra.mxu0 %v884
  %1008 = vmatpush.bf16.msra.mxu0 %v883
  %1009 = vmatpush.bf16.msra.mxu0 %v882
  %1010 = vmatpush.bf16.msra.mxu0 %v881
  %1011 = vmatpush.bf16.msra.mxu0 %v880
  %1012 = vmatpush.bf16.msra.mxu0 %v879
  %1013 = vmatpush.bf16.msra.mxu0 %v878
  %1014 = vmatmul.bf16.gmra.mxu0 %v494
  %v1015 = vpop.f32.mrf.mxu0
  %v1016 = vadd.f32 %v225, %v1015
  %v1017 = vpop.f32.mrf.mxu0
  %v1018 = vadd.f32 %v230, %v1017
  %1019 = vmatmul.bf16.gmra.mxu0 %v502
  %v1020 = vpop.f32.mrf.mxu0
  %v1021 = vadd.f32 %v235, %v1020
  %v1022 = vpop.f32.mrf.mxu0
  %v1023 = vadd.f32 %v240, %v1022
  %1024 = vmatmul.bf16.gmra.mxu0 %v510
  %v1025 = vpop.f32.mrf.mxu0
  %v1026 = vadd.f32 %v245, %v1025
  %v1027 = vpop.f32.mrf.mxu0
  %v1028 = vadd.f32 %v250, %v1027
  %1029 = vmatmul.bf16.gmra.mxu0 %v518
  %v1030 = vpop.f32.mrf.mxu0
  %v1031 = vadd.f32 %v255, %v1030
  %v1032 = vpop.f32.mrf.mxu0
  %v1033 = vadd.f32 %v260, %v1032
  %1034 = vmatmul.bf16.gmra.mxu0 %v526
  %v1035 = vpop.f32.mrf.mxu0
  %v1036 = vadd.f32 %v265, %v1035
  %v1037 = vpop.f32.mrf.mxu0
  %v1038 = vadd.f32 %v270, %v1037
  %1039 = vmatmul.bf16.gmra.mxu0 %v534
  %v1040 = vpop.f32.mrf.mxu0
  %v1041 = vadd.f32 %v275, %v1040
  %v1042 = vpop.f32.mrf.mxu0
  %v1043 = vadd.f32 %v280, %v1042
  %1044 = vmatmul.bf16.gmra.mxu0 %v542
  %v1045 = vpop.f32.mrf.mxu0
  %v1046 = vadd.f32 %v285, %v1045
  %v1047 = vpop.f32.mrf.mxu0
  %v1048 = vadd.f32 %v290, %v1047
  %1049 = vmatmul.bf16.gmra.mxu0 %v550
  %v1050 = vpop.f32.mrf.mxu0
  %v1051 = vadd.f32 %v295, %v1050
  %v1052 = vpop.f32.mrf.mxu0
  %v1053 = vadd.f32 %v300, %v1052
  %1054 = vdwg.mxu0
  %1055 = vmatpush.bf16.msra.mxu0 %v893
  %1056 = vmatpush.bf16.msra.mxu0 %v892
  %1057 = vmatpush.bf16.msra.mxu0 %v891
  %1058 = vmatpush.bf16.msra.mxu0 %v890
  %1059 = vmatpush.bf16.msra.mxu0 %v889
  %1060 = vmatpush.bf16.msra.mxu0 %v888
  %1061 = vmatpush.bf16.msra.mxu0 %v887
  %1062 = vmatpush.bf16.msra.mxu0 %v886
  %1063 = vmatmul.bf16.gmra.mxu0 %v495
  %v1064 = vpop.f32.mrf.mxu0
  %v1065 = vadd.f32 %v1016, %v1064
  %v1066 = vpop.f32.mrf.mxu0
  %v1067 = vadd.f32 %v1018, %v1066
  %1068 = vmatmul.bf16.gmra.mxu0 %v503
  %v1069 = vpop.f32.mrf.mxu0
  %v1070 = vadd.f32 %v1021, %v1069
  %v1071 = vpop.f32.mrf.mxu0
  %v1072 = vadd.f32 %v1023, %v1071
  %1073 = vmatmul.bf16.gmra.mxu0 %v511
  %v1074 = vpop.f32.mrf.mxu0
  %v1075 = vadd.f32 %v1026, %v1074
  %v1076 = vpop.f32.mrf.mxu0
  %v1077 = vadd.f32 %v1028, %v1076
  %1078 = vmatmul.bf16.gmra.mxu0 %v519
  %v1079 = vpop.f32.mrf.mxu0
  %v1080 = vadd.f32 %v1031, %v1079
  %v1081 = vpop.f32.mrf.mxu0
  %v1082 = vadd.f32 %v1033, %v1081
  %1083 = vmatmul.bf16.gmra.mxu0 %v527
  %v1084 = vpop.f32.mrf.mxu0
  %v1085 = vadd.f32 %v1036, %v1084
  %v1086 = vpop.f32.mrf.mxu0
  %v1087 = vadd.f32 %v1038, %v1086
  %1088 = vmatmul.bf16.gmra.mxu0 %v535
  %v1089 = vpop.f32.mrf.mxu0
  %v1090 = vadd.f32 %v1041, %v1089
  %v1091 = vpop.f32.mrf.mxu0
  %v1092 = vadd.f32 %v1043, %v1091
  %1093 = vmatmul.bf16.gmra.mxu0 %v543
  %v1094 = vpop.f32.mrf.mxu0
  %v1095 = vadd.f32 %v1046, %v1094
  %v1096 = vpop.f32.mrf.mxu0
  %v1097 = vadd.f32 %v1048, %v1096
  %1098 = vmatmul.bf16.gmra.mxu0 %v551
  %v1099 = vpop.f32.mrf.mxu0
  %v1100 = vadd.f32 %v1051, %v1099
  %v1101 = vpop.f32.mrf.mxu0
  %v1102 = vadd.f32 %v1053, %v1101
  %1103 = vdwg.mxu0
  %1104 = vmatpush.bf16.msra.mxu0 %v901
  %1105 = vmatpush.bf16.msra.mxu0 %v900
  %1106 = vmatpush.bf16.msra.mxu0 %v899
  %1107 = vmatpush.bf16.msra.mxu0 %v898
  %1108 = vmatpush.bf16.msra.mxu0 %v897
  %1109 = vmatpush.bf16.msra.mxu0 %v896
  %1110 = vmatpush.bf16.msra.mxu0 %v895
  %1111 = vmatpush.bf16.msra.mxu0 %v894
  %1112 = vmatmul.bf16.gmra.mxu0 %v496
  %v1113 = vpop.f32.mrf.mxu0
  %v1114 = vadd.f32 %v1065, %v1113
  %v1115 = vpop.f32.mrf.mxu0
  %v1116 = vadd.f32 %v1067, %v1115
  %1117 = vmatmul.bf16.gmra.mxu0 %v504
  %v1118 = vpop.f32.mrf.mxu0
  %v1119 = vadd.f32 %v1070, %v1118
  %v1120 = vpop.f32.mrf.mxu0
  %v1121 = vadd.f32 %v1072, %v1120
  %1122 = vmatmul.bf16.gmra.mxu0 %v512
  %v1123 = vpop.f32.mrf.mxu0
  %v1124 = vadd.f32 %v1075, %v1123
  %v1125 = vpop.f32.mrf.mxu0
  %v1126 = vadd.f32 %v1077, %v1125
  %1127 = vmatmul.bf16.gmra.mxu0 %v520
  %v1128 = vpop.f32.mrf.mxu0
  %v1129 = vadd.f32 %v1080, %v1128
  %v1130 = vpop.f32.mrf.mxu0
  %v1131 = vadd.f32 %v1082, %v1130
  %1132 = vmatmul.bf16.gmra.mxu0 %v528
  %v1133 = vpop.f32.mrf.mxu0
  %v1134 = vadd.f32 %v1085, %v1133
  %v1135 = vpop.f32.mrf.mxu0
  %v1136 = vadd.f32 %v1087, %v1135
  %1137 = vmatmul.bf16.gmra.mxu0 %v536
  %v1138 = vpop.f32.mrf.mxu0
  %v1139 = vadd.f32 %v1090, %v1138
  %v1140 = vpop.f32.mrf.mxu0
  %v1141 = vadd.f32 %v1092, %v1140
  %1142 = vmatmul.bf16.gmra.mxu0 %v544
  %v1143 = vpop.f32.mrf.mxu0
  %v1144 = vadd.f32 %v1095, %v1143
  %v1145 = vpop.f32.mrf.mxu0
  %v1146 = vadd.f32 %v1097, %v1145
  %1147 = vmatmul.bf16.gmra.mxu0 %v552
  %v1148 = vpop.f32.mrf.mxu0
  %v1149 = vadd.f32 %v1100, %v1148
  %v1150 = vpop.f32.mrf.mxu0
  %v1151 = vadd.f32 %v1102, %v1150
  %1152 = vdwg.mxu0
  %1153 = vmatpush.bf16.msra.mxu0 %v909
  %1154 = vmatpush.bf16.msra.mxu0 %v908
  %1155 = vmatpush.bf16.msra.mxu0 %v907
  %1156 = vmatpush.bf16.msra.mxu0 %v906
  %1157 = vmatpush.bf16.msra.mxu0 %v905
  %1158 = vmatpush.bf16.msra.mxu0 %v904
  %1159 = vmatpush.bf16.msra.mxu0 %v903
  %1160 = vmatpush.bf16.msra.mxu0 %v902
  %1161 = vmatmul.bf16.gmra.mxu0 %v497
  %v1162 = vpop.f32.mrf.mxu0
  %v1163 = vadd.f32 %v1114, %v1162
  %v1164 = vpop.f32.mrf.mxu0
  %v1165 = vadd.f32 %v1116, %v1164
  %1166 = vmatmul.bf16.gmra.mxu0 %v505
  %v1167 = vpop.f32.mrf.mxu0
  %v1168 = vadd.f32 %v1119, %v1167
  %v1169 = vpop.f32.mrf.mxu0
  %v1170 = vadd.f32 %v1121, %v1169
  %1171 = vmatmul.bf16.gmra.mxu0 %v513
  %v1172 = vpop.f32.mrf.mxu0
  %v1173 = vadd.f32 %v1124, %v1172
  %v1174 = vpop.f32.mrf.mxu0
  %v1175 = vadd.f32 %v1126, %v1174
  %1176 = vmatmul.bf16.gmra.mxu0 %v521
  %v1177 = vpop.f32.mrf.mxu0
  %v1178 = vadd.f32 %v1129, %v1177
  %v1179 = vpop.f32.mrf.mxu0
  %v1180 = vadd.f32 %v1131, %v1179
  %1181 = vmatmul.bf16.gmra.mxu0 %v529
  %v1182 = vpop.f32.mrf.mxu0
  %v1183 = vadd.f32 %v1134, %v1182
  %v1184 = vpop.f32.mrf.mxu0
  %v1185 = vadd.f32 %v1136, %v1184
  %1186 = vmatmul.bf16.gmra.mxu0 %v537
  %v1187 = vpop.f32.mrf.mxu0
  %v1188 = vadd.f32 %v1139, %v1187
  %v1189 = vpop.f32.mrf.mxu0
  %v1190 = vadd.f32 %v1141, %v1189
  %1191 = vmatmul.bf16.gmra.mxu0 %v545
  %v1192 = vpop.f32.mrf.mxu0
  %v1193 = vadd.f32 %v1144, %v1192
  %v1194 = vpop.f32.mrf.mxu0
  %v1195 = vadd.f32 %v1146, %v1194
  %1196 = vmatmul.bf16.gmra.mxu0 %v553
  %v1197 = vpop.f32.mrf.mxu0
  %v1198 = vadd.f32 %v1149, %v1197
  %v1199 = vpop.f32.mrf.mxu0
  %v1200 = vadd.f32 %v1151, %v1199
  %1201 = vdwg.mxu0
  %1202 = vmatpush.bf16.msra.mxu0 %v917
  %1203 = vmatpush.bf16.msra.mxu0 %v916
  %1204 = vmatpush.bf16.msra.mxu0 %v915
  %1205 = vmatpush.bf16.msra.mxu0 %v914
  %1206 = vmatpush.bf16.msra.mxu0 %v913
  %1207 = vmatpush.bf16.msra.mxu0 %v912
  %1208 = vmatpush.bf16.msra.mxu0 %v911
  %1209 = vmatpush.bf16.msra.mxu0 %v910
  %1210 = vmatmul.bf16.gmra.mxu0 %v498
  %v1211 = vpop.f32.mrf.mxu0
  %v1212 = vadd.f32 %v1163, %v1211
  %v1213 = vpop.f32.mrf.mxu0
  %v1214 = vadd.f32 %v1165, %v1213
  %1215 = vmatmul.bf16.gmra.mxu0 %v506
  %v1216 = vpop.f32.mrf.mxu0
  %v1217 = vadd.f32 %v1168, %v1216
  %v1218 = vpop.f32.mrf.mxu0
  %v1219 = vadd.f32 %v1170, %v1218
  %1220 = vmatmul.bf16.gmra.mxu0 %v514
  %v1221 = vpop.f32.mrf.mxu0
  %v1222 = vadd.f32 %v1173, %v1221
  %v1223 = vpop.f32.mrf.mxu0
  %v1224 = vadd.f32 %v1175, %v1223
  %1225 = vmatmul.bf16.gmra.mxu0 %v522
  %v1226 = vpop.f32.mrf.mxu0
  %v1227 = vadd.f32 %v1178, %v1226
  %v1228 = vpop.f32.mrf.mxu0
  %v1229 = vadd.f32 %v1180, %v1228
  %1230 = vmatmul.bf16.gmra.mxu0 %v530
  %v1231 = vpop.f32.mrf.mxu0
  %v1232 = vadd.f32 %v1183, %v1231
  %v1233 = vpop.f32.mrf.mxu0
  %v1234 = vadd.f32 %v1185, %v1233
  %1235 = vmatmul.bf16.gmra.mxu0 %v538
  %v1236 = vpop.f32.mrf.mxu0
  %v1237 = vadd.f32 %v1188, %v1236
  %v1238 = vpop.f32.mrf.mxu0
  %v1239 = vadd.f32 %v1190, %v1238
  %1240 = vmatmul.bf16.gmra.mxu0 %v546
  %v1241 = vpop.f32.mrf.mxu0
  %v1242 = vadd.f32 %v1193, %v1241
  %v1243 = vpop.f32.mrf.mxu0
  %v1244 = vadd.f32 %v1195, %v1243
  %1245 = vmatmul.bf16.gmra.mxu0 %v554
  %v1246 = vpop.f32.mrf.mxu0
  %v1247 = vadd.f32 %v1198, %v1246
  %v1248 = vpop.f32.mrf.mxu0
  %v1249 = vadd.f32 %v1200, %v1248
  %1250 = vdwg.mxu0
  %1251 = vmatpush.bf16.msra.mxu0 %v925
  %1252 = vmatpush.bf16.msra.mxu0 %v924
  %1253 = vmatpush.bf16.msra.mxu0 %v923
  %1254 = vmatpush.bf16.msra.mxu0 %v922
  %1255 = vmatpush.bf16.msra.mxu0 %v921
  %1256 = vmatpush.bf16.msra.mxu0 %v920
  %1257 = vmatpush.bf16.msra.mxu0 %v919
  %1258 = vmatpush.bf16.msra.mxu0 %v918
  %1259 = vmatmul.bf16.gmra.mxu0 %v499
  %v1260 = vpop.f32.mrf.mxu0
  %v1261 = vadd.f32 %v1212, %v1260
  %v1262 = vpop.f32.mrf.mxu0
  %v1263 = vadd.f32 %v1214, %v1262
  %1264 = vmatmul.bf16.gmra.mxu0 %v507
  %v1265 = vpop.f32.mrf.mxu0
  %v1266 = vadd.f32 %v1217, %v1265
  %v1267 = vpop.f32.mrf.mxu0
  %v1268 = vadd.f32 %v1219, %v1267
  %1269 = vmatmul.bf16.gmra.mxu0 %v515
  %v1270 = vpop.f32.mrf.mxu0
  %v1271 = vadd.f32 %v1222, %v1270
  %v1272 = vpop.f32.mrf.mxu0
  %v1273 = vadd.f32 %v1224, %v1272
  %1274 = vmatmul.bf16.gmra.mxu0 %v523
  %v1275 = vpop.f32.mrf.mxu0
  %v1276 = vadd.f32 %v1227, %v1275
  %v1277 = vpop.f32.mrf.mxu0
  %v1278 = vadd.f32 %v1229, %v1277
  %1279 = vmatmul.bf16.gmra.mxu0 %v531
  %v1280 = vpop.f32.mrf.mxu0
  %v1281 = vadd.f32 %v1232, %v1280
  %v1282 = vpop.f32.mrf.mxu0
  %v1283 = vadd.f32 %v1234, %v1282
  %1284 = vmatmul.bf16.gmra.mxu0 %v539
  %v1285 = vpop.f32.mrf.mxu0
  %v1286 = vadd.f32 %v1237, %v1285
  %v1287 = vpop.f32.mrf.mxu0
  %v1288 = vadd.f32 %v1239, %v1287
  %1289 = vmatmul.bf16.gmra.mxu0 %v547
  %v1290 = vpop.f32.mrf.mxu0
  %v1291 = vadd.f32 %v1242, %v1290
  %v1292 = vpop.f32.mrf.mxu0
  %v1293 = vadd.f32 %v1244, %v1292
  %1294 = vmatmul.bf16.gmra.mxu0 %v555
  %v1295 = vpop.f32.mrf.mxu0
  %v1296 = vadd.f32 %v1247, %v1295
  %v1297 = vpop.f32.mrf.mxu0
  %v1298 = vadd.f32 %v1249, %v1297
  %1299 = vdwg.mxu0
  %1300 = vmatpush.bf16.msra.mxu0 %v933
  %1301 = vmatpush.bf16.msra.mxu0 %v932
  %1302 = vmatpush.bf16.msra.mxu0 %v931
  %1303 = vmatpush.bf16.msra.mxu0 %v930
  %1304 = vmatpush.bf16.msra.mxu0 %v929
  %1305 = vmatpush.bf16.msra.mxu0 %v928
  %1306 = vmatpush.bf16.msra.mxu0 %v927
  %1307 = vmatpush.bf16.msra.mxu0 %v926
  %1308 = vmatmul.bf16.gmra.mxu0 %v500
  %v1309 = vpop.f32.mrf.mxu0
  %v1310 = vadd.f32 %v1261, %v1309
  %v1311 = vpop.f32.mrf.mxu0
  %v1312 = vadd.f32 %v1263, %v1311
  %1313 = vmatmul.bf16.gmra.mxu0 %v508
  %v1314 = vpop.f32.mrf.mxu0
  %v1315 = vadd.f32 %v1266, %v1314
  %v1316 = vpop.f32.mrf.mxu0
  %v1317 = vadd.f32 %v1268, %v1316
  %1318 = vmatmul.bf16.gmra.mxu0 %v516
  %v1319 = vpop.f32.mrf.mxu0
  %v1320 = vadd.f32 %v1271, %v1319
  %v1321 = vpop.f32.mrf.mxu0
  %v1322 = vadd.f32 %v1273, %v1321
  %1323 = vmatmul.bf16.gmra.mxu0 %v524
  %v1324 = vpop.f32.mrf.mxu0
  %v1325 = vadd.f32 %v1276, %v1324
  %v1326 = vpop.f32.mrf.mxu0
  %v1327 = vadd.f32 %v1278, %v1326
  %1328 = vmatmul.bf16.gmra.mxu0 %v532
  %v1329 = vpop.f32.mrf.mxu0
  %v1330 = vadd.f32 %v1281, %v1329
  %v1331 = vpop.f32.mrf.mxu0
  %v1332 = vadd.f32 %v1283, %v1331
  %1333 = vmatmul.bf16.gmra.mxu0 %v540
  %v1334 = vpop.f32.mrf.mxu0
  %v1335 = vadd.f32 %v1286, %v1334
  %v1336 = vpop.f32.mrf.mxu0
  %v1337 = vadd.f32 %v1288, %v1336
  %1338 = vmatmul.bf16.gmra.mxu0 %v548
  %v1339 = vpop.f32.mrf.mxu0
  %v1340 = vadd.f32 %v1291, %v1339
  %v1341 = vpop.f32.mrf.mxu0
  %v1342 = vadd.f32 %v1293, %v1341
  %1343 = vmatmul.bf16.gmra.mxu0 %v556
  %v1344 = vpop.f32.mrf.mxu0
  %v1345 = vadd.f32 %v1296, %v1344
  %v1346 = vpop.f32.mrf.mxu0
  %v1347 = vadd.f32 %v1298, %v1346
  %1348 = vdwg.mxu0
  %1349 = vmatpush.bf16.msra.mxu0 %v941
  %1350 = vmatpush.bf16.msra.mxu0 %v940
  %1351 = vmatpush.bf16.msra.mxu0 %v939
  %1352 = vmatpush.bf16.msra.mxu0 %v938
  %1353 = vmatpush.bf16.msra.mxu0 %v937
  %1354 = vmatpush.bf16.msra.mxu0 %v936
  %1355 = vmatpush.bf16.msra.mxu0 %v935
  %1356 = vmatpush.bf16.msra.mxu0 %v934
  %1357 = vmatmul.bf16.gmra.mxu0 %v501
  %v1358 = vpop.f32.mrf.mxu0
  %v1359 = vadd.f32 %v1310, %v1358
  %v1360 = vpop.f32.mrf.mxu0
  %v1361 = vadd.f32 %v1312, %v1360
  %1362 = vmatmul.bf16.gmra.mxu0 %v509
  %v1363 = vpop.f32.mrf.mxu0
  %v1364 = vadd.f32 %v1315, %v1363
  %v1365 = vpop.f32.mrf.mxu0
  %v1366 = vadd.f32 %v1317, %v1365
  %1367 = vmatmul.bf16.gmra.mxu0 %v517
  %v1368 = vpop.f32.mrf.mxu0
  %v1369 = vadd.f32 %v1320, %v1368
  %v1370 = vpop.f32.mrf.mxu0
  %v1371 = vadd.f32 %v1322, %v1370
  %1372 = vmatmul.bf16.gmra.mxu0 %v525
  %v1373 = vpop.f32.mrf.mxu0
  %v1374 = vadd.f32 %v1325, %v1373
  %v1375 = vpop.f32.mrf.mxu0
  %v1376 = vadd.f32 %v1327, %v1375
  %1377 = vmatmul.bf16.gmra.mxu0 %v533
  %v1378 = vpop.f32.mrf.mxu0
  %v1379 = vadd.f32 %v1330, %v1378
  %v1380 = vpop.f32.mrf.mxu0
  %v1381 = vadd.f32 %v1332, %v1380
  %1382 = vmatmul.bf16.gmra.mxu0 %v541
  %v1383 = vpop.f32.mrf.mxu0
  %v1384 = vadd.f32 %v1335, %v1383
  %v1385 = vpop.f32.mrf.mxu0
  %v1386 = vadd.f32 %v1337, %v1385
  %1387 = vmatmul.bf16.gmra.mxu0 %v549
  %v1388 = vpop.f32.mrf.mxu0
  %v1389 = vadd.f32 %v1340, %v1388
  %v1390 = vpop.f32.mrf.mxu0
  %v1391 = vadd.f32 %v1342, %v1390
  %1392 = vmatmul.bf16.gmra.mxu0 %v557
  %v1393 = vpop.f32.mrf.mxu0
  %v1394 = vadd.f32 %v1345, %v1393
  %v1395 = vpop.f32.mrf.mxu0
  %v1396 = vadd.f32 %v1347, %v1395
  %1397 = vdwg.mxu0
  %v1398 = vmax.f32 %v1359, 0.0
  %v1399 = vmax.f32 %v1361, 0.0
  %v1400 = vmax.f32 %v1364, 0.0
  %v1401 = vmax.f32 %v1366, 0.0
  %v1402 = vmax.f32 %v1369, 0.0
  %v1403 = vmax.f32 %v1371, 0.0
  %v1404 = vmax.f32 %v1374, 0.0
  %v1405 = vmax.f32 %v1376, 0.0
  %v1406 = vmax.f32 %v1379, 0.0
  %v1407 = vmax.f32 %v1381, 0.0
  %v1408 = vmax.f32 %v1384, 0.0
  %v1409 = vmax.f32 %v1386, 0.0
  %v1410 = vmax.f32 %v1389, 0.0
  %v1411 = vmax.f32 %v1391, 0.0
  %v1412 = vmax.f32 %v1394, 0.0
  %v1413 = vmax.f32 %v1396, 0.0
  %v1414 = vpack.c.bf16 %v1398, %v1398
  %v1415 = vpack.c.bf16 %v1399, %v1399
  %v1416 = vpack.c.bf16 %v1400, %v1400
  %v1417 = vpack.c.bf16 %v1401, %v1401
  %v1418 = vpack.c.bf16 %v1402, %v1402
  %v1419 = vpack.c.bf16 %v1403, %v1403
  %v1420 = vpack.c.bf16 %v1404, %v1404
  %v1421 = vpack.c.bf16 %v1405, %v1405
  %v1422 = vpack.c.bf16 %v1406, %v1406
  %v1423 = vpack.c.bf16 %v1407, %v1407
  %v1424 = vpack.c.bf16 %v1408, %v1408
  %v1425 = vpack.c.bf16 %v1409, %v1409
  %v1426 = vpack.c.bf16 %v1410, %v1410
  %v1427 = vpack.c.bf16 %v1411, %v1411
  %v1428 = vpack.c.bf16 %v1412, %v1412
  %v1429 = vpack.c.bf16 %v1413, %v1413
  %vm1430 = vcmask 257024
  %1431 = vst.msk [vmem:[%s3] sm:$0xf] %vm1430, %v1414
  %1432 = vst.msk [vmem:[%s3 + $0x4] sm:$0xf] %vm1430, %v1415
  %1433 = vst.msk [vmem:[%s3 + $0x8] sm:$0xf] %vm1430, %v1416
  %1434 = vst.msk [vmem:[%s3 + $0xc] sm:$0xf] %vm1430, %v1417
  %1435 = vst.msk [vmem:[%s3 + $0x10] sm:$0xf] %vm1430, %v1418
  %1436 = vst.msk [vmem:[%s3 + $0x14] sm:$0xf] %vm1430, %v1419
  %1437 = vst.msk [vmem:[%s3 + $0x18] sm:$0xf] %vm1430, %v1420
  %1438 = vst.msk [vmem:[%s3 + $0x1c] sm:$0xf] %vm1430, %v1421
  %1439 = vst.msk [vmem:[%s3 + $0x20] sm:$0xf] %vm1430, %v1422
  %1440 = vst.msk [vmem:[%s3 + $0x24] sm:$0xf] %vm1430, %v1423
  %1441 = vst.msk [vmem:[%s3 + $0x28] sm:$0xf] %vm1430, %v1424
  %1442 = vst.msk [vmem:[%s3 + $0x2c] sm:$0xf] %vm1430, %v1425
  %1443 = vst.msk [vmem:[%s3 + $0x30] sm:$0xf] %vm1430, %v1426
  %1444 = vst.msk [vmem:[%s3 + $0x34] sm:$0xf] %vm1430, %v1427
  %1445 = vst.msk [vmem:[%s3 + $0x38] sm:$0xf] %vm1430, %v1428
  %1446 = vst.msk [vmem:[%s3 + $0x3c] sm:$0xf] %vm1430, %v1429
  // Predicated region
  $region14: #{vae_forward.11} parent=0 // pred_check
    _
  $region15: #{vae_forward.11} parent=0 // pred_check_branch
    %1448 = sbr.rel (0) target = $region17
  $region16: #{vae_forward.11} parent=0 // pred_region
    _
  $region17: #{vae_forward.11} parent=0 // pred_fallthru
    _
  // Predicated region
  $region18: #{vae_forward.11} parent=0 // pred_check
    _
  $region19: #{vae_forward.11} parent=0 // pred_check_branch
    %1450 = sbr.rel (0) target = $region21
  $region20: #{vae_forward.11} parent=0 // pred_region
    _
  $region21: #{vae_forward.11} parent=0 // pred_fallthru
    _

// kernel: vae_forward.12
$region0: #{vae_forward.12}
  #allocation0 [shape = 'u32[]', space=smem, size = 0x4, offset = 0x4, fixed_abs, tag = 'smem constant byte address 0x4 - core index']
  #allocation1 [shape = 'u32[72,128]{1,0:T(1,128)}', space=vmem, size = 0x9000, scoped, tag = 'internal scratch']
  %s0 = inlined_call_operand.vmem [shape: bf16[256,2048], index: 0, kind: input, shape index: {}]
  %s1 = inlined_call_operand.vmem [shape: bf16[2048,8], index: 1, kind: input, shape index: {}]
  %s2 = inlined_call_operand.vmem [shape: f32[256,1], index: 2, kind: input, shape index: {}]
  %s3 = inlined_call_operand.vmem [shape: bf16[256,8], index: 3, kind: output, shape index: {}]
  %s4 = sld [smem:[#allocation0]]
  $region22: #{vae_forward.12} parent=0
    _
  %s6 = ssub.s32 1, %s4
  %s7 = scalar_select 0, %s6, %s4
  // Predicated region
  $region2: #{vae_forward.12} parent=0 // pred_check
    _
  $region3: #{vae_forward.12} parent=0 // pred_check_branch
    %9 = sbr.rel (0) target = $region5
  $region4: #{vae_forward.12} parent=0 // pred_region
    _
  $region5: #{vae_forward.12} parent=0 // pred_fallthru
    _
  // Predicated region
  $region6: #{vae_forward.12} parent=0 // pred_check
    _
  $region7: #{vae_forward.12} parent=0 // pred_check_branch
    %11 = sbr.rel (0) target = $region9
  $region8: #{vae_forward.12} parent=0 // pred_region
    _
  $region9: #{vae_forward.12} parent=0 // pred_fallthru
    _
  // Predicated region
  $region10: #{vae_forward.12} parent=0 // pred_check
    _
  $region11: #{vae_forward.12} parent=0 // pred_check_branch
    %13 = sbr.rel (0) target = $region13
  $region12: #{vae_forward.12} parent=0 // pred_region
    _
  $region13: #{vae_forward.12} parent=0 // pred_fallthru
    _
  %v14 = vld [vmem:[%s0] sm:$0xff]
  %v15 = vld [vmem:[%s0 + $0x8] sm:$0xff]
  %v16 = vld [vmem:[%s0 + $0x10] sm:$0xff]
  %v17 = vld [vmem:[%s0 + $0x18] sm:$0xff]
  %v18 = vld [vmem:[%s0 + $0x20] sm:$0xff]
  %v19 = vld [vmem:[%s0 + $0x28] sm:$0xff]
  %v20 = vld [vmem:[%s0 + $0x30] sm:$0xff]
  %v21 = vld [vmem:[%s0 + $0x38] sm:$0xff]
  %v22 = vld [vmem:[%s0 + $0x40] sm:$0xff]
  %v23 = vld [vmem:[%s0 + $0x48] sm:$0xff]
  %v24 = vld [vmem:[%s0 + $0x50] sm:$0xff]
  %v25 = vld [vmem:[%s0 + $0x58] sm:$0xff]
  %v26 = vld [vmem:[%s0 + $0x60] sm:$0xff]
  %v27 = vld [vmem:[%s0 + $0x68] sm:$0xff]
  %v28 = vld [vmem:[%s0 + $0x70] sm:$0xff]
  %v29 = vld [vmem:[%s0 + $0x78] sm:$0xff]
  %v30 = vld [vmem:[%s0 + $0x80] sm:$0xff]
  %v31 = vld [vmem:[%s0 + $0x88] sm:$0xff]
  %v32 = vld [vmem:[%s0 + $0x90] sm:$0xff]
  %v33 = vld [vmem:[%s0 + $0x98] sm:$0xff]
  %v34 = vld [vmem:[%s0 + $0xa0] sm:$0xff]
  %v35 = vld [vmem:[%s0 + $0xa8] sm:$0xff]
  %v36 = vld [vmem:[%s0 + $0xb0] sm:$0xff]
  %v37 = vld [vmem:[%s0 + $0xb8] sm:$0xff]
  %v38 = vld [vmem:[%s0 + $0xc0] sm:$0xff]
  %v39 = vld [vmem:[%s0 + $0xc8] sm:$0xff]
  %v40 = vld [vmem:[%s0 + $0xd0] sm:$0xff]
  %v41 = vld [vmem:[%s0 + $0xd8] sm:$0xff]
  %v42 = vld [vmem:[%s0 + $0xe0] sm:$0xff]
  %v43 = vld [vmem:[%s0 + $0xe8] sm:$0xff]
  %v44 = vld [vmem:[%s0 + $0xf0] sm:$0xff]
  %v45 = vld [vmem:[%s0 + $0xf8] sm:$0xff]
  %v46 = vld [vmem:[%s0 + $0x100] sm:$0xff]
  %v47 = vld [vmem:[%s0 + $0x108] sm:$0xff]
  %v48 = vld [vmem:[%s0 + $0x110] sm:$0xff]
  %v49 = vld [vmem:[%s0 + $0x118] sm:$0xff]
  %v50 = vld [vmem:[%s0 + $0x120] sm:$0xff]
  %v51 = vld [vmem:[%s0 + $0x128] sm:$0xff]
  %v52 = vld [vmem:[%s0 + $0x130] sm:$0xff]
  %v53 = vld [vmem:[%s0 + $0x138] sm:$0xff]
  %v54 = vld [vmem:[%s0 + $0x140] sm:$0xff]
  %v55 = vld [vmem:[%s0 + $0x148] sm:$0xff]
  %v56 = vld [vmem:[%s0 + $0x150] sm:$0xff]
  %v57 = vld [vmem:[%s0 + $0x158] sm:$0xff]
  %v58 = vld [vmem:[%s0 + $0x160] sm:$0xff]
  %v59 = vld [vmem:[%s0 + $0x168] sm:$0xff]
  %v60 = vld [vmem:[%s0 + $0x170] sm:$0xff]
  %v61 = vld [vmem:[%s0 + $0x178] sm:$0xff]
  %v62 = vld [vmem:[%s0 + $0x180] sm:$0xff]
  %v63 = vld [vmem:[%s0 + $0x188] sm:$0xff]
  %v64 = vld [vmem:[%s0 + $0x190] sm:$0xff]
  %v65 = vld [vmem:[%s0 + $0x198] sm:$0xff]
  %v66 = vld [vmem:[%s0 + $0x1a0] sm:$0xff]
  %v67 = vld [vmem:[%s0 + $0x1a8] sm:$0xff]
  %v68 = vld [vmem:[%s0 + $0x1b0] sm:$0xff]
  %v69 = vld [vmem:[%s0 + $0x1b8] sm:$0xff]
  %v70 = vld [vmem:[%s0 + $0x1c0] sm:$0xff]
  %v71 = vld [vmem:[%s0 + $0x1c8] sm:$0xff]
  %v72 = vld [vmem:[%s0 + $0x1d0] sm:$0xff]
  %v73 = vld [vmem:[%s0 + $0x1d8] sm:$0xff]
  %v74 = vld [vmem:[%s0 + $0x1e0] sm:$0xff]
  %v75 = vld [vmem:[%s0 + $0x1e8] sm:$0xff]
  %v76 = vld [vmem:[%s0 + $0x1f0] sm:$0xff]
  %v77 = vld [vmem:[%s0 + $0x1f8] sm:$0xff]
  %v78 = vld [vmem:[%s0 + $0x200] sm:$0xff]
  %v79 = vld [vmem:[%s0 + $0x208] sm:$0xff]
  %v80 = vld [vmem:[%s0 + $0x210] sm:$0xff]
  %v81 = vld [vmem:[%s0 + $0x218] sm:$0xff]
  %v82 = vld [vmem:[%s0 + $0x220] sm:$0xff]
  %v83 = vld [vmem:[%s0 + $0x228] sm:$0xff]
  %v84 = vld [vmem:[%s0 + $0x230] sm:$0xff]
  %v85 = vld [vmem:[%s0 + $0x238] sm:$0xff]
  %v86 = vld [vmem:[%s0 + $0x240] sm:$0xff]
  %v87 = vld [vmem:[%s0 + $0x248] sm:$0xff]
  %v88 = vld [vmem:[%s0 + $0x250] sm:$0xff]
  %v89 = vld [vmem:[%s0 + $0x258] sm:$0xff]
  %v90 = vld [vmem:[%s0 + $0x260] sm:$0xff]
  %v91 = vld [vmem:[%s0 + $0x268] sm:$0xff]
  %v92 = vld [vmem:[%s0 + $0x270] sm:$0xff]
  %v93 = vld [vmem:[%s0 + $0x278] sm:$0xff]
  %v94 = vld [vmem:[%s0 + $0x280] sm:$0xff]
  %v95 = vld [vmem:[%s0 + $0x288] sm:$0xff]
  %v96 = vld [vmem:[%s0 + $0x290] sm:$0xff]
  %v97 = vld [vmem:[%s0 + $0x298] sm:$0xff]
  %v98 = vld [vmem:[%s0 + $0x2a0] sm:$0xff]
  %v99 = vld [vmem:[%s0 + $0x2a8] sm:$0xff]
  %v100 = vld [vmem:[%s0 + $0x2b0] sm:$0xff]
  %v101 = vld [vmem:[%s0 + $0x2b8] sm:$0xff]
  %v102 = vld [vmem:[%s0 + $0x2c0] sm:$0xff]
  %v103 = vld [vmem:[%s0 + $0x2c8] sm:$0xff]
  %v104 = vld [vmem:[%s0 + $0x2d0] sm:$0xff]
  %v105 = vld [vmem:[%s0 + $0x2d8] sm:$0xff]
  %v106 = vld [vmem:[%s0 + $0x2e0] sm:$0xff]
  %v107 = vld [vmem:[%s0 + $0x2e8] sm:$0xff]
  %v108 = vld [vmem:[%s0 + $0x2f0] sm:$0xff]
  %v109 = vld [vmem:[%s0 + $0x2f8] sm:$0xff]
  %v110 = vld [vmem:[%s0 + $0x300] sm:$0xff]
  %v111 = vld [vmem:[%s0 + $0x308] sm:$0xff]
  %v112 = vld [vmem:[%s0 + $0x310] sm:$0xff]
  %v113 = vld [vmem:[%s0 + $0x318] sm:$0xff]
  %v114 = vld [vmem:[%s0 + $0x320] sm:$0xff]
  %v115 = vld [vmem:[%s0 + $0x328] sm:$0xff]
  %v116 = vld [vmem:[%s0 + $0x330] sm:$0xff]
  %v117 = vld [vmem:[%s0 + $0x338] sm:$0xff]
  %v118 = vld [vmem:[%s0 + $0x340] sm:$0xff]
  %v119 = vld [vmem:[%s0 + $0x348] sm:$0xff]
  %v120 = vld [vmem:[%s0 + $0x350] sm:$0xff]
  %v121 = vld [vmem:[%s0 + $0x358] sm:$0xff]
  %v122 = vld [vmem:[%s0 + $0x360] sm:$0xff]
  %v123 = vld [vmem:[%s0 + $0x368] sm:$0xff]
  %v124 = vld [vmem:[%s0 + $0x370] sm:$0xff]
  %v125 = vld [vmem:[%s0 + $0x378] sm:$0xff]
  %v126 = vld [vmem:[%s0 + $0x380] sm:$0xff]
  %v127 = vld [vmem:[%s0 + $0x388] sm:$0xff]
  %v128 = vld [vmem:[%s0 + $0x390] sm:$0xff]
  %v129 = vld [vmem:[%s0 + $0x398] sm:$0xff]
  %v130 = vld [vmem:[%s0 + $0x3a0] sm:$0xff]
  %v131 = vld [vmem:[%s0 + $0x3a8] sm:$0xff]
  %v132 = vld [vmem:[%s0 + $0x3b0] sm:$0xff]
  %v133 = vld [vmem:[%s0 + $0x3b8] sm:$0xff]
  %v134 = vld [vmem:[%s0 + $0x3c0] sm:$0xff]
  %v135 = vld [vmem:[%s0 + $0x3c8] sm:$0xff]
  %v136 = vld [vmem:[%s0 + $0x3d0] sm:$0xff]
  %v137 = vld [vmem:[%s0 + $0x3d8] sm:$0xff]
  %v138 = vld [vmem:[%s0 + $0x3e0] sm:$0xff]
  %v139 = vld [vmem:[%s0 + $0x3e8] sm:$0xff]
  %v140 = vld [vmem:[%s0 + $0x3f0] sm:$0xff]
  %v141 = vld [vmem:[%s0 + $0x3f8] sm:$0xff]
  %v142 = vld [vmem:[%s0 + $0x400] sm:$0xff]
  %v143 = vld [vmem:[%s0 + $0x408] sm:$0xff]
  %v144 = vld [vmem:[%s0 + $0x410] sm:$0xff]
  %v145 = vld [vmem:[%s0 + $0x418] sm:$0xff]
  %v146 = vld [vmem:[%s0 + $0x420] sm:$0xff]
  %v147 = vld [vmem:[%s0 + $0x428] sm:$0xff]
  %v148 = vld [vmem:[%s0 + $0x430] sm:$0xff]
  %v149 = vld [vmem:[%s0 + $0x438] sm:$0xff]
  %v150 = vld [vmem:[%s0 + $0x440] sm:$0xff]
  %v151 = vld [vmem:[%s0 + $0x448] sm:$0xff]
  %v152 = vld [vmem:[%s0 + $0x450] sm:$0xff]
  %v153 = vld [vmem:[%s0 + $0x458] sm:$0xff]
  %v154 = vld [vmem:[%s0 + $0x460] sm:$0xff]
  %v155 = vld [vmem:[%s0 + $0x468] sm:$0xff]
  %v156 = vld [vmem:[%s0 + $0x470] sm:$0xff]
  %v157 = vld [vmem:[%s0 + $0x478] sm:$0xff]
  %v158 = vld [vmem:[%s0 + $0x480] sm:$0xff]
  %v159 = vld [vmem:[%s0 + $0x488] sm:$0xff]
  %v160 = vld [vmem:[%s0 + $0x490] sm:$0xff]
  %v161 = vld [vmem:[%s0 + $0x498] sm:$0xff]
  %v162 = vld [vmem:[%s0 + $0x4a0] sm:$0xff]
  %v163 = vld [vmem:[%s0 + $0x4a8] sm:$0xff]
  %v164 = vld [vmem:[%s0 + $0x4b0] sm:$0xff]
  %v165 = vld [vmem:[%s0 + $0x4b8] sm:$0xff]
  %v166 = vld [vmem:[%s0 + $0x4c0] sm:$0xff]
  %v167 = vld [vmem:[%s0 + $0x4c8] sm:$0xff]
  %v168 = vld [vmem:[%s0 + $0x4d0] sm:$0xff]
  %v169 = vld [vmem:[%s0 + $0x4d8] sm:$0xff]
  %v170 = vld [vmem:[%s0 + $0x4e0] sm:$0xff]
  %v171 = vld [vmem:[%s0 + $0x4e8] sm:$0xff]
  %v172 = vld [vmem:[%s0 + $0x4f0] sm:$0xff]
  %v173 = vld [vmem:[%s0 + $0x4f8] sm:$0xff]
  %v174 = vld [vmem:[%s0 + $0x500] sm:$0xff]
  %v175 = vld [vmem:[%s0 + $0x508] sm:$0xff]
  %v176 = vld [vmem:[%s0 + $0x510] sm:$0xff]
  %v177 = vld [vmem:[%s0 + $0x518] sm:$0xff]
  %v178 = vld [vmem:[%s0 + $0x520] sm:$0xff]
  %v179 = vld [vmem:[%s0 + $0x528] sm:$0xff]
  %v180 = vld [vmem:[%s0 + $0x530] sm:$0xff]
  %v181 = vld [vmem:[%s0 + $0x538] sm:$0xff]
  %v182 = vld [vmem:[%s0 + $0x540] sm:$0xff]
  %v183 = vld [vmem:[%s0 + $0x548] sm:$0xff]
  %v184 = vld [vmem:[%s0 + $0x550] sm:$0xff]
  %v185 = vld [vmem:[%s0 + $0x558] sm:$0xff]
  %v186 = vld [vmem:[%s0 + $0x560] sm:$0xff]
  %v187 = vld [vmem:[%s0 + $0x568] sm:$0xff]
  %v188 = vld [vmem:[%s0 + $0x570] sm:$0xff]
  %v189 = vld [vmem:[%s0 + $0x578] sm:$0xff]
  %v190 = vld [vmem:[%s0 + $0x580] sm:$0xff]
  %v191 = vld [vmem:[%s0 + $0x588] sm:$0xff]
  %v192 = vld [vmem:[%s0 + $0x590] sm:$0xff]
  %v193 = vld [vmem:[%s0 + $0x598] sm:$0xff]
  %v194 = vld [vmem:[%s0 + $0x5a0] sm:$0xff]
  %v195 = vld [vmem:[%s0 + $0x5a8] sm:$0xff]
  %v196 = vld [vmem:[%s0 + $0x5b0] sm:$0xff]
  %v197 = vld [vmem:[%s0 + $0x5b8] sm:$0xff]
  %v198 = vld [vmem:[%s0 + $0x5c0] sm:$0xff]
  %v199 = vld [vmem:[%s0 + $0x5c8] sm:$0xff]
  %v200 = vld [vmem:[%s0 + $0x5d0] sm:$0xff]
  %v201 = vld [vmem:[%s0 + $0x5d8] sm:$0xff]
  %v202 = vld [vmem:[%s0 + $0x5e0] sm:$0xff]
  %v203 = vld [vmem:[%s0 + $0x5e8] sm:$0xff]
  %v204 = vld [vmem:[%s0 + $0x5f0] sm:$0xff]
  %v205 = vld [vmem:[%s0 + $0x5f8] sm:$0xff]
  %v206 = vld [vmem:[%s0 + $0x600] sm:$0xff]
  %v207 = vld [vmem:[%s0 + $0x608] sm:$0xff]
  %v208 = vld [vmem:[%s0 + $0x610] sm:$0xff]
  %v209 = vld [vmem:[%s0 + $0x618] sm:$0xff]
  %v210 = vld [vmem:[%s0 + $0x620] sm:$0xff]
  %v211 = vld [vmem:[%s0 + $0x628] sm:$0xff]
  %v212 = vld [vmem:[%s0 + $0x630] sm:$0xff]
  %v213 = vld [vmem:[%s0 + $0x638] sm:$0xff]
  %v214 = vld [vmem:[%s0 + $0x640] sm:$0xff]
  %v215 = vld [vmem:[%s0 + $0x648] sm:$0xff]
  %v216 = vld [vmem:[%s0 + $0x650] sm:$0xff]
  %v217 = vld [vmem:[%s0 + $0x658] sm:$0xff]
  %v218 = vld [vmem:[%s0 + $0x660] sm:$0xff]
  %v219 = vld [vmem:[%s0 + $0x668] sm:$0xff]
  %v220 = vld [vmem:[%s0 + $0x670] sm:$0xff]
  %v221 = vld [vmem:[%s0 + $0x678] sm:$0xff]
  %v222 = vld [vmem:[%s0 + $0x680] sm:$0xff]
  %v223 = vld [vmem:[%s0 + $0x688] sm:$0xff]
  %v224 = vld [vmem:[%s0 + $0x690] sm:$0xff]
  %v225 = vld [vmem:[%s0 + $0x698] sm:$0xff]
  %v226 = vld [vmem:[%s0 + $0x6a0] sm:$0xff]
  %v227 = vld [vmem:[%s0 + $0x6a8] sm:$0xff]
  %v228 = vld [vmem:[%s0 + $0x6b0] sm:$0xff]
  %v229 = vld [vmem:[%s0 + $0x6b8] sm:$0xff]
  %v230 = vld [vmem:[%s0 + $0x6c0] sm:$0xff]
  %v231 = vld [vmem:[%s0 + $0x6c8] sm:$0xff]
  %v232 = vld [vmem:[%s0 + $0x6d0] sm:$0xff]
  %v233 = vld [vmem:[%s0 + $0x6d8] sm:$0xff]
  %v234 = vld [vmem:[%s0 + $0x6e0] sm:$0xff]
  %v235 = vld [vmem:[%s0 + $0x6e8] sm:$0xff]
  %v236 = vld [vmem:[%s0 + $0x6f0] sm:$0xff]
  %v237 = vld [vmem:[%s0 + $0x6f8] sm:$0xff]
  %v238 = vld [vmem:[%s0 + $0x700] sm:$0xff]
  %v239 = vld [vmem:[%s0 + $0x708] sm:$0xff]
  %v240 = vld [vmem:[%s0 + $0x710] sm:$0xff]
  %v241 = vld [vmem:[%s0 + $0x718] sm:$0xff]
  %v242 = vld [vmem:[%s0 + $0x720] sm:$0xff]
  %v243 = vld [vmem:[%s0 + $0x728] sm:$0xff]
  %v244 = vld [vmem:[%s0 + $0x730] sm:$0xff]
  %v245 = vld [vmem:[%s0 + $0x738] sm:$0xff]
  %v246 = vld [vmem:[%s0 + $0x740] sm:$0xff]
  %v247 = vld [vmem:[%s0 + $0x748] sm:$0xff]
  %v248 = vld [vmem:[%s0 + $0x750] sm:$0xff]
  %v249 = vld [vmem:[%s0 + $0x758] sm:$0xff]
  %v250 = vld [vmem:[%s0 + $0x760] sm:$0xff]
  %v251 = vld [vmem:[%s0 + $0x768] sm:$0xff]
  %v252 = vld [vmem:[%s0 + $0x770] sm:$0xff]
  %v253 = vld [vmem:[%s0 + $0x778] sm:$0xff]
  %v254 = vld [vmem:[%s0 + $0x780] sm:$0xff]
  %v255 = vld [vmem:[%s0 + $0x788] sm:$0xff]
  %v256 = vld [vmem:[%s0 + $0x790] sm:$0xff]
  %v257 = vld [vmem:[%s0 + $0x798] sm:$0xff]
  %v258 = vld [vmem:[%s0 + $0x7a0] sm:$0xff]
  %v259 = vld [vmem:[%s0 + $0x7a8] sm:$0xff]
  %v260 = vld [vmem:[%s0 + $0x7b0] sm:$0xff]
  %v261 = vld [vmem:[%s0 + $0x7b8] sm:$0xff]
  %v262 = vld [vmem:[%s0 + $0x7c0] sm:$0xff]
  %v263 = vld [vmem:[%s0 + $0x7c8] sm:$0xff]
  %v264 = vld [vmem:[%s0 + $0x7d0] sm:$0xff]
  %v265 = vld [vmem:[%s0 + $0x7d8] sm:$0xff]
  %v266 = vld [vmem:[%s0 + $0x7e0] sm:$0xff]
  %v267 = vld [vmem:[%s0 + $0x7e8] sm:$0xff]
  %v268 = vld [vmem:[%s0 + $0x7f0] sm:$0xff]
  %v269 = vld [vmem:[%s0 + $0x7f8] sm:$0xff]
  %v270 = vld [vmem:[%s1] sm:$0xf]
  %v271 = vld [vmem:[%s1 + $0x4] sm:$0xf]
  %v272 = vld [vmem:[%s1 + $0x8] sm:$0xf]
  %v273 = vld [vmem:[%s1 + $0xc] sm:$0xf]
  %v274 = vld [vmem:[%s1 + $0x10] sm:$0xf]
  %v275 = vld [vmem:[%s1 + $0x14] sm:$0xf]
  %v276 = vld [vmem:[%s1 + $0x18] sm:$0xf]
  %v277 = vld [vmem:[%s1 + $0x1c] sm:$0xf]
  %v278 = vld [vmem:[%s1 + $0x20] sm:$0xf]
  %v279 = vld [vmem:[%s1 + $0x24] sm:$0xf]
  %v280 = vld [vmem:[%s1 + $0x28] sm:$0xf]
  %v281 = vld [vmem:[%s1 + $0x2c] sm:$0xf]
  %v282 = vld [vmem:[%s1 + $0x30] sm:$0xf]
  %v283 = vld [vmem:[%s1 + $0x34] sm:$0xf]
  %v284 = vld [vmem:[%s1 + $0x38] sm:$0xf]
  %v285 = vld [vmem:[%s1 + $0x3c] sm:$0xf]
  %v286 = vld [vmem:[%s1 + $0x40] sm:$0xf]
  %v287 = vld [vmem:[%s1 + $0x44] sm:$0xf]
  %v288 = vld [vmem:[%s1 + $0x48] sm:$0xf]
  %v289 = vld [vmem:[%s1 + $0x4c] sm:$0xf]
  %v290 = vld [vmem:[%s1 + $0x50] sm:$0xf]
  %v291 = vld [vmem:[%s1 + $0x54] sm:$0xf]
  %v292 = vld [vmem:[%s1 + $0x58] sm:$0xf]
  %v293 = vld [vmem:[%s1 + $0x5c] sm:$0xf]
  %v294 = vld [vmem:[%s1 + $0x60] sm:$0xf]
  %v295 = vld [vmem:[%s1 + $0x64] sm:$0xf]
  %v296 = vld [vmem:[%s1 + $0x68] sm:$0xf]
  %v297 = vld [vmem:[%s1 + $0x6c] sm:$0xf]
  %v298 = vld [vmem:[%s1 + $0x70] sm:$0xf]
  %v299 = vld [vmem:[%s1 + $0x74] sm:$0xf]
  %v300 = vld [vmem:[%s1 + $0x78] sm:$0xf]
  %v301 = vld [vmem:[%s1 + $0x7c] sm:$0xf]
  %v302 = vld [vmem:[%s1 + $0x80] sm:$0xf]
  %v303 = vld [vmem:[%s1 + $0x84] sm:$0xf]
  %v304 = vld [vmem:[%s1 + $0x88] sm:$0xf]
  %v305 = vld [vmem:[%s1 + $0x8c] sm:$0xf]
  %v306 = vld [vmem:[%s1 + $0x90] sm:$0xf]
  %v307 = vld [vmem:[%s1 + $0x94] sm:$0xf]
  %v308 = vld [vmem:[%s1 + $0x98] sm:$0xf]
  %v309 = vld [vmem:[%s1 + $0x9c] sm:$0xf]
  %v310 = vld [vmem:[%s1 + $0xa0] sm:$0xf]
  %v311 = vld [vmem:[%s1 + $0xa4] sm:$0xf]
  %v312 = vld [vmem:[%s1 + $0xa8] sm:$0xf]
  %v313 = vld [vmem:[%s1 + $0xac] sm:$0xf]
  %v314 = vld [vmem:[%s1 + $0xb0] sm:$0xf]
  %v315 = vld [vmem:[%s1 + $0xb4] sm:$0xf]
  %v316 = vld [vmem:[%s1 + $0xb8] sm:$0xf]
  %v317 = vld [vmem:[%s1 + $0xbc] sm:$0xf]
  %v318 = vld [vmem:[%s1 + $0xc0] sm:$0xf]
  %v319 = vld [vmem:[%s1 + $0xc4] sm:$0xf]
  %v320 = vld [vmem:[%s1 + $0xc8] sm:$0xf]
  %v321 = vld [vmem:[%s1 + $0xcc] sm:$0xf]
  %v322 = vld [vmem:[%s1 + $0xd0] sm:$0xf]
  %v323 = vld [vmem:[%s1 + $0xd4] sm:$0xf]
  %v324 = vld [vmem:[%s1 + $0xd8] sm:$0xf]
  %v325 = vld [vmem:[%s1 + $0xdc] sm:$0xf]
  %v326 = vld [vmem:[%s1 + $0xe0] sm:$0xf]
  %v327 = vld [vmem:[%s1 + $0xe4] sm:$0xf]
  %v328 = vld [vmem:[%s1 + $0xe8] sm:$0xf]
  %v329 = vld [vmem:[%s1 + $0xec] sm:$0xf]
  %v330 = vld [vmem:[%s1 + $0xf0] sm:$0xf]
  %v331 = vld [vmem:[%s1 + $0xf4] sm:$0xf]
  %v332 = vld [vmem:[%s1 + $0xf8] sm:$0xf]
  %v333 = vld [vmem:[%s1 + $0xfc] sm:$0xf]
  %v334 = vld [vmem:[%s1 + $0x100] sm:$0xf]
  %v335 = vld [vmem:[%s1 + $0x104] sm:$0xf]
  %v336 = vld [vmem:[%s1 + $0x108] sm:$0xf]
  %v337 = vld [vmem:[%s1 + $0x10c] sm:$0xf]
  %v338 = vld [vmem:[%s1 + $0x110] sm:$0xf]
  %v339 = vld [vmem:[%s1 + $0x114] sm:$0xf]
  %v340 = vld [vmem:[%s1 + $0x118] sm:$0xf]
  %v341 = vld [vmem:[%s1 + $0x11c] sm:$0xf]
  %v342 = vld [vmem:[%s1 + $0x120] sm:$0xf]
  %v343 = vld [vmem:[%s1 + $0x124] sm:$0xf]
  %v344 = vld [vmem:[%s1 + $0x128] sm:$0xf]
  %v345 = vld [vmem:[%s1 + $0x12c] sm:$0xf]
  %v346 = vld [vmem:[%s1 + $0x130] sm:$0xf]
  %v347 = vld [vmem:[%s1 + $0x134] sm:$0xf]
  %v348 = vld [vmem:[%s1 + $0x138] sm:$0xf]
  %v349 = vld [vmem:[%s1 + $0x13c] sm:$0xf]
  %v350 = vld [vmem:[%s1 + $0x140] sm:$0xf]
  %v351 = vld [vmem:[%s1 + $0x144] sm:$0xf]
  %v352 = vld [vmem:[%s1 + $0x148] sm:$0xf]
  %v353 = vld [vmem:[%s1 + $0x14c] sm:$0xf]
  %v354 = vld [vmem:[%s1 + $0x150] sm:$0xf]
  %v355 = vld [vmem:[%s1 + $0x154] sm:$0xf]
  %v356 = vld [vmem:[%s1 + $0x158] sm:$0xf]
  %v357 = vld [vmem:[%s1 + $0x15c] sm:$0xf]
  %v358 = vld [vmem:[%s1 + $0x160] sm:$0xf]
  %v359 = vld [vmem:[%s1 + $0x164] sm:$0xf]
  %v360 = vld [vmem:[%s1 + $0x168] sm:$0xf]
  %v361 = vld [vmem:[%s1 + $0x16c] sm:$0xf]
  %v362 = vld [vmem:[%s1 + $0x170] sm:$0xf]
  %v363 = vld [vmem:[%s1 + $0x174] sm:$0xf]
  %v364 = vld [vmem:[%s1 + $0x178] sm:$0xf]
  %v365 = vld [vmem:[%s1 + $0x17c] sm:$0xf]
  %v366 = vld [vmem:[%s1 + $0x180] sm:$0xf]
  %v367 = vld [vmem:[%s1 + $0x184] sm:$0xf]
  %v368 = vld [vmem:[%s1 + $0x188] sm:$0xf]
  %v369 = vld [vmem:[%s1 + $0x18c] sm:$0xf]
  %v370 = vld [vmem:[%s1 + $0x190] sm:$0xf]
  %v371 = vld [vmem:[%s1 + $0x194] sm:$0xf]
  %v372 = vld [vmem:[%s1 + $0x198] sm:$0xf]
  %v373 = vld [vmem:[%s1 + $0x19c] sm:$0xf]
  %v374 = vld [vmem:[%s1 + $0x1a0] sm:$0xf]
  %v375 = vld [vmem:[%s1 + $0x1a4] sm:$0xf]
  %v376 = vld [vmem:[%s1 + $0x1a8] sm:$0xf]
  %v377 = vld [vmem:[%s1 + $0x1ac] sm:$0xf]
  %v378 = vld [vmem:[%s1 + $0x1b0] sm:$0xf]
  %v379 = vld [vmem:[%s1 + $0x1b4] sm:$0xf]
  %v380 = vld [vmem:[%s1 + $0x1b8] sm:$0xf]
  %v381 = vld [vmem:[%s1 + $0x1bc] sm:$0xf]
  %v382 = vld [vmem:[%s1 + $0x1c0] sm:$0xf]
  %v383 = vld [vmem:[%s1 + $0x1c4] sm:$0xf]
  %v384 = vld [vmem:[%s1 + $0x1c8] sm:$0xf]
  %v385 = vld [vmem:[%s1 + $0x1cc] sm:$0xf]
  %v386 = vld [vmem:[%s1 + $0x1d0] sm:$0xf]
  %v387 = vld [vmem:[%s1 + $0x1d4] sm:$0xf]
  %v388 = vld [vmem:[%s1 + $0x1d8] sm:$0xf]
  %v389 = vld [vmem:[%s1 + $0x1dc] sm:$0xf]
  %v390 = vld [vmem:[%s1 + $0x1e0] sm:$0xf]
  %v391 = vld [vmem:[%s1 + $0x1e4] sm:$0xf]
  %v392 = vld [vmem:[%s1 + $0x1e8] sm:$0xf]
  %v393 = vld [vmem:[%s1 + $0x1ec] sm:$0xf]
  %v394 = vld [vmem:[%s1 + $0x1f0] sm:$0xf]
  %v395 = vld [vmem:[%s1 + $0x1f4] sm:$0xf]
  %v396 = vld [vmem:[%s1 + $0x1f8] sm:$0xf]
  %v397 = vld [vmem:[%s1 + $0x1fc] sm:$0xf]
  %v398 = vld [vmem:[%s1 + $0x200] sm:$0xf]
  %v399 = vld [vmem:[%s1 + $0x204] sm:$0xf]
  %v400 = vld [vmem:[%s1 + $0x208] sm:$0xf]
  %v401 = vld [vmem:[%s1 + $0x20c] sm:$0xf]
  %v402 = vld [vmem:[%s1 + $0x210] sm:$0xf]
  %v403 = vld [vmem:[%s1 + $0x214] sm:$0xf]
  %v404 = vld [vmem:[%s1 + $0x218] sm:$0xf]
  %v405 = vld [vmem:[%s1 + $0x21c] sm:$0xf]
  %v406 = vld [vmem:[%s1 + $0x220] sm:$0xf]
  %v407 = vld [vmem:[%s1 + $0x224] sm:$0xf]
  %v408 = vld [vmem:[%s1 + $0x228] sm:$0xf]
  %v409 = vld [vmem:[%s1 + $0x22c] sm:$0xf]
  %v410 = vld [vmem:[%s1 + $0x230] sm:$0xf]
  %v411 = vld [vmem:[%s1 + $0x234] sm:$0xf]
  %v412 = vld [vmem:[%s1 + $0x238] sm:$0xf]
  %v413 = vld [vmem:[%s1 + $0x23c] sm:$0xf]
  %v414 = vld [vmem:[%s1 + $0x240] sm:$0xf]
  %v415 = vld [vmem:[%s1 + $0x244] sm:$0xf]
  %v416 = vld [vmem:[%s1 + $0x248] sm:$0xf]
  %v417 = vld [vmem:[%s1 + $0x24c] sm:$0xf]
  %v418 = vld [vmem:[%s1 + $0x250] sm:$0xf]
  %v419 = vld [vmem:[%s1 + $0x254] sm:$0xf]
  %v420 = vld [vmem:[%s1 + $0x258] sm:$0xf]
  %v421 = vld [vmem:[%s1 + $0x25c] sm:$0xf]
  %v422 = vld [vmem:[%s1 + $0x260] sm:$0xf]
  %v423 = vld [vmem:[%s1 + $0x264] sm:$0xf]
  %v424 = vld [vmem:[%s1 + $0x268] sm:$0xf]
  %v425 = vld [vmem:[%s1 + $0x26c] sm:$0xf]
  %v426 = vld [vmem:[%s1 + $0x270] sm:$0xf]
  %v427 = vld [vmem:[%s1 + $0x274] sm:$0xf]
  %v428 = vld [vmem:[%s1 + $0x278] sm:$0xf]
  %v429 = vld [vmem:[%s1 + $0x27c] sm:$0xf]
  %v430 = vld [vmem:[%s1 + $0x280] sm:$0xf]
  %v431 = vld [vmem:[%s1 + $0x284] sm:$0xf]
  %v432 = vld [vmem:[%s1 + $0x288] sm:$0xf]
  %v433 = vld [vmem:[%s1 + $0x28c] sm:$0xf]
  %v434 = vld [vmem:[%s1 + $0x290] sm:$0xf]
  %v435 = vld [vmem:[%s1 + $0x294] sm:$0xf]
  %v436 = vld [vmem:[%s1 + $0x298] sm:$0xf]
  %v437 = vld [vmem:[%s1 + $0x29c] sm:$0xf]
  %v438 = vld [vmem:[%s1 + $0x2a0] sm:$0xf]
  %v439 = vld [vmem:[%s1 + $0x2a4] sm:$0xf]
  %v440 = vld [vmem:[%s1 + $0x2a8] sm:$0xf]
  %v441 = vld [vmem:[%s1 + $0x2ac] sm:$0xf]
  %v442 = vld [vmem:[%s1 + $0x2b0] sm:$0xf]
  %v443 = vld [vmem:[%s1 + $0x2b4] sm:$0xf]
  %v444 = vld [vmem:[%s1 + $0x2b8] sm:$0xf]
  %v445 = vld [vmem:[%s1 + $0x2bc] sm:$0xf]
  %v446 = vld [vmem:[%s1 + $0x2c0] sm:$0xf]
  %v447 = vld [vmem:[%s1 + $0x2c4] sm:$0xf]
  %v448 = vld [vmem:[%s1 + $0x2c8] sm:$0xf]
  %v449 = vld [vmem:[%s1 + $0x2cc] sm:$0xf]
  %v450 = vld [vmem:[%s1 + $0x2d0] sm:$0xf]
  %v451 = vld [vmem:[%s1 + $0x2d4] sm:$0xf]
  %v452 = vld [vmem:[%s1 + $0x2d8] sm:$0xf]
  %v453 = vld [vmem:[%s1 + $0x2dc] sm:$0xf]
  %v454 = vld [vmem:[%s1 + $0x2e0] sm:$0xf]
  %v455 = vld [vmem:[%s1 + $0x2e4] sm:$0xf]
  %v456 = vld [vmem:[%s1 + $0x2e8] sm:$0xf]
  %v457 = vld [vmem:[%s1 + $0x2ec] sm:$0xf]
  %v458 = vld [vmem:[%s1 + $0x2f0] sm:$0xf]
  %v459 = vld [vmem:[%s1 + $0x2f4] sm:$0xf]
  %v460 = vld [vmem:[%s1 + $0x2f8] sm:$0xf]
  %v461 = vld [vmem:[%s1 + $0x2fc] sm:$0xf]
  %v462 = vld [vmem:[%s1 + $0x300] sm:$0xf]
  %v463 = vld [vmem:[%s1 + $0x304] sm:$0xf]
  %v464 = vld [vmem:[%s1 + $0x308] sm:$0xf]
  %v465 = vld [vmem:[%s1 + $0x30c] sm:$0xf]
  %v466 = vld [vmem:[%s1 + $0x310] sm:$0xf]
  %v467 = vld [vmem:[%s1 + $0x314] sm:$0xf]
  %v468 = vld [vmem:[%s1 + $0x318] sm:$0xf]
  %v469 = vld [vmem:[%s1 + $0x31c] sm:$0xf]
  %v470 = vld [vmem:[%s1 + $0x320] sm:$0xf]
  %v471 = vld [vmem:[%s1 + $0x324] sm:$0xf]
  %v472 = vld [vmem:[%s1 + $0x328] sm:$0xf]
  %v473 = vld [vmem:[%s1 + $0x32c] sm:$0xf]
  %v474 = vld [vmem:[%s1 + $0x330] sm:$0xf]
  %v475 = vld [vmem:[%s1 + $0x334] sm:$0xf]
  %v476 = vld [vmem:[%s1 + $0x338] sm:$0xf]
  %v477 = vld [vmem:[%s1 + $0x33c] sm:$0xf]
  %v478 = vld [vmem:[%s1 + $0x340] sm:$0xf]
  %v479 = vld [vmem:[%s1 + $0x344] sm:$0xf]
  %v480 = vld [vmem:[%s1 + $0x348] sm:$0xf]
  %v481 = vld [vmem:[%s1 + $0x34c] sm:$0xf]
  %v482 = vld [vmem:[%s1 + $0x350] sm:$0xf]
  %v483 = vld [vmem:[%s1 + $0x354] sm:$0xf]
  %v484 = vld [vmem:[%s1 + $0x358] sm:$0xf]
  %v485 = vld [vmem:[%s1 + $0x35c] sm:$0xf]
  %v486 = vld [vmem:[%s1 + $0x360] sm:$0xf]
  %v487 = vld [vmem:[%s1 + $0x364] sm:$0xf]
  %v488 = vld [vmem:[%s1 + $0x368] sm:$0xf]
  %v489 = vld [vmem:[%s1 + $0x36c] sm:$0xf]
  %v490 = vld [vmem:[%s1 + $0x370] sm:$0xf]
  %v491 = vld [vmem:[%s1 + $0x374] sm:$0xf]
  %v492 = vld [vmem:[%s1 + $0x378] sm:$0xf]
  %v493 = vld [vmem:[%s1 + $0x37c] sm:$0xf]
  %v494 = vld [vmem:[%s1 + $0x380] sm:$0xf]
  %v495 = vld [vmem:[%s1 + $0x384] sm:$0xf]
  %v496 = vld [vmem:[%s1 + $0x388] sm:$0xf]
  %v497 = vld [vmem:[%s1 + $0x38c] sm:$0xf]
  %v498 = vld [vmem:[%s1 + $0x390] sm:$0xf]
  %v499 = vld [vmem:[%s1 + $0x394] sm:$0xf]
  %v500 = vld [vmem:[%s1 + $0x398] sm:$0xf]
  %v501 = vld [vmem:[%s1 + $0x39c] sm:$0xf]
  %v502 = vld [vmem:[%s1 + $0x3a0] sm:$0xf]
  %v503 = vld [vmem:[%s1 + $0x3a4] sm:$0xf]
  %v504 = vld [vmem:[%s1 + $0x3a8] sm:$0xf]
  %v505 = vld [vmem:[%s1 + $0x3ac] sm:$0xf]
  %v506 = vld [vmem:[%s1 + $0x3b0] sm:$0xf]
  %v507 = vld [vmem:[%s1 + $0x3b4] sm:$0xf]
  %v508 = vld [vmem:[%s1 + $0x3b8] sm:$0xf]
  %v509 = vld [vmem:[%s1 + $0x3bc] sm:$0xf]
  %v510 = vld [vmem:[%s1 + $0x3c0] sm:$0xf]
  %v511 = vld [vmem:[%s1 + $0x3c4] sm:$0xf]
  %v512 = vld [vmem:[%s1 + $0x3c8] sm:$0xf]
  %v513 = vld [vmem:[%s1 + $0x3cc] sm:$0xf]
  %v514 = vld [vmem:[%s1 + $0x3d0] sm:$0xf]
  %v515 = vld [vmem:[%s1 + $0x3d4] sm:$0xf]
  %v516 = vld [vmem:[%s1 + $0x3d8] sm:$0xf]
  %v517 = vld [vmem:[%s1 + $0x3dc] sm:$0xf]
  %v518 = vld [vmem:[%s1 + $0x3e0] sm:$0xf]
  %v519 = vld [vmem:[%s1 + $0x3e4] sm:$0xf]
  %v520 = vld [vmem:[%s1 + $0x3e8] sm:$0xf]
  %v521 = vld [vmem:[%s1 + $0x3ec] sm:$0xf]
  %v522 = vld [vmem:[%s1 + $0x3f0] sm:$0xf]
  %v523 = vld [vmem:[%s1 + $0x3f4] sm:$0xf]
  %v524 = vld [vmem:[%s1 + $0x3f8] sm:$0xf]
  %v525 = vld [vmem:[%s1 + $0x3fc] sm:$0xf]
  %v526 = vld [vmem:[%s2] sm:$0xff]
  %v527 = vld [vmem:[%s2 + $0x8] sm:$0xff]
  %v528 = vld [vmem:[%s2 + $0x10] sm:$0xff]
  %v529 = vld [vmem:[%s2 + $0x18] sm:$0xff]
  %v530 = vld [vmem:[%s2 + $0x20] sm:$0xff]
  %v531 = vld [vmem:[%s2 + $0x28] sm:$0xff]
  %v532 = vld [vmem:[%s2 + $0x30] sm:$0xff]
  %v533 = vld [vmem:[%s2 + $0x38] sm:$0xff]
  %v534 = vld [vmem:[%s2 + $0x40] sm:$0xff]
  %v535 = vld [vmem:[%s2 + $0x48] sm:$0xff]
  %v536 = vld [vmem:[%s2 + $0x50] sm:$0xff]
  %v537 = vld [vmem:[%s2 + $0x58] sm:$0xff]
  %v538 = vld [vmem:[%s2 + $0x60] sm:$0xff]
  %v539 = vld [vmem:[%s2 + $0x68] sm:$0xff]
  %v540 = vld [vmem:[%s2 + $0x70] sm:$0xff]
  %v541 = vld [vmem:[%s2 + $0x78] sm:$0xff]
  %v542 = vld [vmem:[%s2 + $0x80] sm:$0xff]
  %v543 = vld [vmem:[%s2 + $0x88] sm:$0xff]
  %v544 = vld [vmem:[%s2 + $0x90] sm:$0xff]
  %v545 = vld [vmem:[%s2 + $0x98] sm:$0xff]
  %v546 = vld [vmem:[%s2 + $0xa0] sm:$0xff]
  %v547 = vld [vmem:[%s2 + $0xa8] sm:$0xff]
  %v548 = vld [vmem:[%s2 + $0xb0] sm:$0xff]
  %v549 = vld [vmem:[%s2 + $0xb8] sm:$0xff]
  %v550 = vld [vmem:[%s2 + $0xc0] sm:$0xff]
  %v551 = vld [vmem:[%s2 + $0xc8] sm:$0xff]
  %v552 = vld [vmem:[%s2 + $0xd0] sm:$0xff]
  %v553 = vld [vmem:[%s2 + $0xd8] sm:$0xff]
  %v554 = vld [vmem:[%s2 + $0xe0] sm:$0xff]
  %v555 = vld [vmem:[%s2 + $0xe8] sm:$0xff]
  %v556 = vld [vmem:[%s2 + $0xf0] sm:$0xff]
  %v557 = vld [vmem:[%s2 + $0xf8] sm:$0xff]
  %559 = vset.pattern.permute.xlu0 0
  %560 = vperm.xlu0 %559, %v526
  %v561 = vpop.permute.xlu0 %560
  %564 = vset.pattern.permute.xlu0 0
  %565 = vperm.xlu0 %564, %v527
  %v566 = vpop.permute.xlu0 %565
  %569 = vset.pattern.permute.xlu0 0
  %570 = vperm.xlu0 %569, %v528
  %v571 = vpop.permute.xlu0 %570
  %574 = vset.pattern.permute.xlu0 0
  %575 = vperm.xlu0 %574, %v529
  %v576 = vpop.permute.xlu0 %575
  %579 = vset.pattern.permute.xlu0 0
  %580 = vperm.xlu0 %579, %v530
  %v581 = vpop.permute.xlu0 %580
  %584 = vset.pattern.permute.xlu0 0
  %585 = vperm.xlu0 %584, %v531
  %v586 = vpop.permute.xlu0 %585
  %589 = vset.pattern.permute.xlu0 0
  %590 = vperm.xlu0 %589, %v532
  %v591 = vpop.permute.xlu0 %590
  %594 = vset.pattern.permute.xlu0 0
  %595 = vperm.xlu0 %594, %v533
  %v596 = vpop.permute.xlu0 %595
  %599 = vset.pattern.permute.xlu0 0
  %600 = vperm.xlu0 %599, %v534
  %v601 = vpop.permute.xlu0 %600
  %604 = vset.pattern.permute.xlu0 0
  %605 = vperm.xlu0 %604, %v535
  %v606 = vpop.permute.xlu0 %605
  %609 = vset.pattern.permute.xlu0 0
  %610 = vperm.xlu0 %609, %v536
  %v611 = vpop.permute.xlu0 %610
  %614 = vset.pattern.permute.xlu0 0
  %615 = vperm.xlu0 %614, %v537
  %v616 = vpop.permute.xlu0 %615
  %619 = vset.pattern.permute.xlu0 0
  %620 = vperm.xlu0 %619, %v538
  %v621 = vpop.permute.xlu0 %620
  %624 = vset.pattern.permute.xlu0 0
  %625 = vperm.xlu0 %624, %v539
  %v626 = vpop.permute.xlu0 %625
  %629 = vset.pattern.permute.xlu0 0
  %630 = vperm.xlu0 %629, %v540
  %v631 = vpop.permute.xlu0 %630
  %634 = vset.pattern.permute.xlu0 0
  %635 = vperm.xlu0 %634, %v541
  %v636 = vpop.permute.xlu0 %635
  %639 = vset.pattern.permute.xlu0 0
  %640 = vperm.xlu0 %639, %v542
  %v641 = vpop.permute.xlu0 %640
  %644 = vset.pattern.permute.xlu0 0
  %645 = vperm.xlu0 %644, %v543
  %v646 = vpop.permute.xlu0 %645
  %649 = vset.pattern.permute.xlu0 0
  %650 = vperm.xlu0 %649, %v544
  %v651 = vpop.permute.xlu0 %650
  %654 = vset.pattern.permute.xlu0 0
  %655 = vperm.xlu0 %654, %v545
  %v656 = vpop.permute.xlu0 %655
  %659 = vset.pattern.permute.xlu0 0
  %660 = vperm.xlu0 %659, %v546
  %v661 = vpop.permute.xlu0 %660
  %664 = vset.pattern.permute.xlu0 0
  %665 = vperm.xlu0 %664, %v547
  %v666 = vpop.permute.xlu0 %665
  %669 = vset.pattern.permute.xlu0 0
  %670 = vperm.xlu0 %669, %v548
  %v671 = vpop.permute.xlu0 %670
  %674 = vset.pattern.permute.xlu0 0
  %675 = vperm.xlu0 %674, %v549
  %v676 = vpop.permute.xlu0 %675
  %679 = vset.pattern.permute.xlu0 0
  %680 = vperm.xlu0 %679, %v550
  %v681 = vpop.permute.xlu0 %680
  %684 = vset.pattern.permute.xlu0 0
  %685 = vperm.xlu0 %684, %v551
  %v686 = vpop.permute.xlu0 %685
  %689 = vset.pattern.permute.xlu0 0
  %690 = vperm.xlu0 %689, %v552
  %v691 = vpop.permute.xlu0 %690
  %694 = vset.pattern.permute.xlu0 0
  %695 = vperm.xlu0 %694, %v553
  %v696 = vpop.permute.xlu0 %695
  %699 = vset.pattern.permute.xlu0 0
  %700 = vperm.xlu0 %699, %v554
  %v701 = vpop.permute.xlu0 %700
  %704 = vset.pattern.permute.xlu0 0
  %705 = vperm.xlu0 %704, %v555
  %v706 = vpop.permute.xlu0 %705
  %709 = vset.pattern.permute.xlu0 0
  %710 = vperm.xlu0 %709, %v556
  %v711 = vpop.permute.xlu0 %710
  %714 = vset.pattern.permute.xlu0 0
  %715 = vperm.xlu0 %714, %v557
  %v716 = vpop.permute.xlu0 %715
  %v974 = vunpack.c.l.b16 %v14
  %v975 = vunpack.c.h.b16 %v14
  %v976 = vunpack.c.l.b16 %v15
  %v977 = vunpack.c.h.b16 %v15
  %v978 = vunpack.c.l.b16 %v16
  %v979 = vunpack.c.h.b16 %v16
  %v980 = vunpack.c.l.b16 %v17
  %v981 = vunpack.c.h.b16 %v17
  %v982 = vunpack.c.l.b16 %v18
  %v983 = vunpack.c.h.b16 %v18
  %v984 = vunpack.c.l.b16 %v19
  %v985 = vunpack.c.h.b16 %v19
  %v986 = vunpack.c.l.b16 %v20
  %v987 = vunpack.c.h.b16 %v20
  %v988 = vunpack.c.l.b16 %v21
  %v989 = vunpack.c.h.b16 %v21
  %v990 = vunpack.c.l.b16 %v22
  %v991 = vunpack.c.h.b16 %v22
  %v992 = vunpack.c.l.b16 %v23
  %v993 = vunpack.c.h.b16 %v23
  %v994 = vunpack.c.l.b16 %v24
  %v995 = vunpack.c.h.b16 %v24
  %v996 = vunpack.c.l.b16 %v25
  %v997 = vunpack.c.h.b16 %v25
  %v998 = vunpack.c.l.b16 %v26
  %v999 = vunpack.c.h.b16 %v26
  %v1000 = vunpack.c.l.b16 %v27
  %v1001 = vunpack.c.h.b16 %v27
  %v1002 = vunpack.c.l.b16 %v28
  %v1003 = vunpack.c.h.b16 %v28
  %v1004 = vunpack.c.l.b16 %v29
  %v1005 = vunpack.c.h.b16 %v29
  %v1006 = vunpack.c.l.b16 %v30
  %v1007 = vunpack.c.h.b16 %v30
  %v1008 = vunpack.c.l.b16 %v31
  %v1009 = vunpack.c.h.b16 %v31
  %v1010 = vunpack.c.l.b16 %v32
  %v1011 = vunpack.c.h.b16 %v32
  %v1012 = vunpack.c.l.b16 %v33
  %v1013 = vunpack.c.h.b16 %v33
  %v1014 = vunpack.c.l.b16 %v34
  %v1015 = vunpack.c.h.b16 %v34
  %v1016 = vunpack.c.l.b16 %v35
  %v1017 = vunpack.c.h.b16 %v35
  %v1018 = vunpack.c.l.b16 %v36
  %v1019 = vunpack.c.h.b16 %v36
  %v1020 = vunpack.c.l.b16 %v37
  %v1021 = vunpack.c.h.b16 %v37
  %v1022 = vunpack.c.l.b16 %v38
  %v1023 = vunpack.c.h.b16 %v38
  %v1024 = vunpack.c.l.b16 %v39
  %v1025 = vunpack.c.h.b16 %v39
  %v1026 = vunpack.c.l.b16 %v40
  %v1027 = vunpack.c.h.b16 %v40
  %v1028 = vunpack.c.l.b16 %v41
  %v1029 = vunpack.c.h.b16 %v41
  %v1030 = vunpack.c.l.b16 %v42
  %v1031 = vunpack.c.h.b16 %v42
  %v1032 = vunpack.c.l.b16 %v43
  %v1033 = vunpack.c.h.b16 %v43
  %v1034 = vunpack.c.l.b16 %v44
  %v1035 = vunpack.c.h.b16 %v44
  %v1036 = vunpack.c.l.b16 %v45
  %v1037 = vunpack.c.h.b16 %v45
  %v1038 = vunpack.c.l.b16 %v46
  %v1039 = vunpack.c.h.b16 %v46
  %v1040 = vunpack.c.l.b16 %v47
  %v1041 = vunpack.c.h.b16 %v47
  %v1042 = vunpack.c.l.b16 %v48
  %v1043 = vunpack.c.h.b16 %v48
  %v1044 = vunpack.c.l.b16 %v49
  %v1045 = vunpack.c.h.b16 %v49
  %v1046 = vunpack.c.l.b16 %v50
  %v1047 = vunpack.c.h.b16 %v50
  %v1048 = vunpack.c.l.b16 %v51
  %v1049 = vunpack.c.h.b16 %v51
  %v1050 = vunpack.c.l.b16 %v52
  %v1051 = vunpack.c.h.b16 %v52
  %v1052 = vunpack.c.l.b16 %v53
  %v1053 = vunpack.c.h.b16 %v53
  %v1054 = vunpack.c.l.b16 %v54
  %v1055 = vunpack.c.h.b16 %v54
  %v1056 = vunpack.c.l.b16 %v55
  %v1057 = vunpack.c.h.b16 %v55
  %v1058 = vunpack.c.l.b16 %v56
  %v1059 = vunpack.c.h.b16 %v56
  %v1060 = vunpack.c.l.b16 %v57
  %v1061 = vunpack.c.h.b16 %v57
  %v1062 = vunpack.c.l.b16 %v58
  %v1063 = vunpack.c.h.b16 %v58
  %v1064 = vunpack.c.l.b16 %v59
  %v1065 = vunpack.c.h.b16 %v59
  %v1066 = vunpack.c.l.b16 %v60
  %v1067 = vunpack.c.h.b16 %v60
  %v1068 = vunpack.c.l.b16 %v61
  %v1069 = vunpack.c.h.b16 %v61
  %v1070 = vunpack.c.l.b16 %v62
  %v1071 = vunpack.c.h.b16 %v62
  %v1072 = vunpack.c.l.b16 %v63
  %v1073 = vunpack.c.h.b16 %v63
  %v1074 = vunpack.c.l.b16 %v64
  %v1075 = vunpack.c.h.b16 %v64
  %v1076 = vunpack.c.l.b16 %v65
  %v1077 = vunpack.c.h.b16 %v65
  %v1078 = vunpack.c.l.b16 %v66
  %v1079 = vunpack.c.h.b16 %v66
  %v1080 = vunpack.c.l.b16 %v67
  %v1081 = vunpack.c.h.b16 %v67
  %v1082 = vunpack.c.l.b16 %v68
  %v1083 = vunpack.c.h.b16 %v68
  %v1084 = vunpack.c.l.b16 %v69
  %v1085 = vunpack.c.h.b16 %v69
  %v1086 = vunpack.c.l.b16 %v70
  %v1087 = vunpack.c.h.b16 %v70
  %v1088 = vunpack.c.l.b16 %v71
  %v1089 = vunpack.c.h.b16 %v71
  %v1090 = vunpack.c.l.b16 %v72
  %v1091 = vunpack.c.h.b16 %v72
  %v1092 = vunpack.c.l.b16 %v73
  %v1093 = vunpack.c.h.b16 %v73
  %v1094 = vunpack.c.l.b16 %v74
  %v1095 = vunpack.c.h.b16 %v74
  %v1096 = vunpack.c.l.b16 %v75
  %v1097 = vunpack.c.h.b16 %v75
  %v1098 = vunpack.c.l.b16 %v76
  %v1099 = vunpack.c.h.b16 %v76
  %v1100 = vunpack.c.l.b16 %v77
  %v1101 = vunpack.c.h.b16 %v77
  %v1102 = vunpack.c.l.b16 %v78
  %v1103 = vunpack.c.h.b16 %v78
  %v1104 = vunpack.c.l.b16 %v79
  %v1105 = vunpack.c.h.b16 %v79
  %v1106 = vunpack.c.l.b16 %v80
  %v1107 = vunpack.c.h.b16 %v80
  %v1108 = vunpack.c.l.b16 %v81
  %v1109 = vunpack.c.h.b16 %v81
  %v1110 = vunpack.c.l.b16 %v82
  %v1111 = vunpack.c.h.b16 %v82
  %v1112 = vunpack.c.l.b16 %v83
  %v1113 = vunpack.c.h.b16 %v83
  %v1114 = vunpack.c.l.b16 %v84
  %v1115 = vunpack.c.h.b16 %v84
  %v1116 = vunpack.c.l.b16 %v85
  %v1117 = vunpack.c.h.b16 %v85
  %v1118 = vunpack.c.l.b16 %v86
  %v1119 = vunpack.c.h.b16 %v86
  %v1120 = vunpack.c.l.b16 %v87
  %v1121 = vunpack.c.h.b16 %v87
  %v1122 = vunpack.c.l.b16 %v88
  %v1123 = vunpack.c.h.b16 %v88
  %v1124 = vunpack.c.l.b16 %v89
  %v1125 = vunpack.c.h.b16 %v89
  %v1126 = vunpack.c.l.b16 %v90
  %v1127 = vunpack.c.h.b16 %v90
  %v1128 = vunpack.c.l.b16 %v91
  %v1129 = vunpack.c.h.b16 %v91
  %v1130 = vunpack.c.l.b16 %v92
  %v1131 = vunpack.c.h.b16 %v92
  %v1132 = vunpack.c.l.b16 %v93
  %v1133 = vunpack.c.h.b16 %v93
  %v1134 = vunpack.c.l.b16 %v94
  %v1135 = vunpack.c.h.b16 %v94
  %v1136 = vunpack.c.l.b16 %v95
  %v1137 = vunpack.c.h.b16 %v95
  %v1138 = vunpack.c.l.b16 %v96
  %v1139 = vunpack.c.h.b16 %v96
  %v1140 = vunpack.c.l.b16 %v97
  %v1141 = vunpack.c.h.b16 %v97
  %v1142 = vunpack.c.l.b16 %v98
  %v1143 = vunpack.c.h.b16 %v98
  %v1144 = vunpack.c.l.b16 %v99
  %v1145 = vunpack.c.h.b16 %v99
  %v1146 = vunpack.c.l.b16 %v100
  %v1147 = vunpack.c.h.b16 %v100
  %v1148 = vunpack.c.l.b16 %v101
  %v1149 = vunpack.c.h.b16 %v101
  %v1150 = vunpack.c.l.b16 %v102
  %v1151 = vunpack.c.h.b16 %v102
  %v1152 = vunpack.c.l.b16 %v103
  %v1153 = vunpack.c.h.b16 %v103
  %v1154 = vunpack.c.l.b16 %v104
  %v1155 = vunpack.c.h.b16 %v104
  %v1156 = vunpack.c.l.b16 %v105
  %v1157 = vunpack.c.h.b16 %v105
  %v1158 = vunpack.c.l.b16 %v106
  %v1159 = vunpack.c.h.b16 %v106
  %v1160 = vunpack.c.l.b16 %v107
  %v1161 = vunpack.c.h.b16 %v107
  %v1162 = vunpack.c.l.b16 %v108
  %v1163 = vunpack.c.h.b16 %v108
  %v1164 = vunpack.c.l.b16 %v109
  %v1165 = vunpack.c.h.b16 %v109
  %v1166 = vunpack.c.l.b16 %v110
  %v1167 = vunpack.c.h.b16 %v110
  %v1168 = vunpack.c.l.b16 %v111
  %v1169 = vunpack.c.h.b16 %v111
  %v1170 = vunpack.c.l.b16 %v112
  %v1171 = vunpack.c.h.b16 %v112
  %v1172 = vunpack.c.l.b16 %v113
  %v1173 = vunpack.c.h.b16 %v113
  %v1174 = vunpack.c.l.b16 %v114
  %v1175 = vunpack.c.h.b16 %v114
  %v1176 = vunpack.c.l.b16 %v115
  %v1177 = vunpack.c.h.b16 %v115
  %v1178 = vunpack.c.l.b16 %v116
  %v1179 = vunpack.c.h.b16 %v116
  %v1180 = vunpack.c.l.b16 %v117
  %v1181 = vunpack.c.h.b16 %v117
  %v1182 = vunpack.c.l.b16 %v118
  %v1183 = vunpack.c.h.b16 %v118
  %v1184 = vunpack.c.l.b16 %v119
  %v1185 = vunpack.c.h.b16 %v119
  %v1186 = vunpack.c.l.b16 %v120
  %v1187 = vunpack.c.h.b16 %v120
  %v1188 = vunpack.c.l.b16 %v121
  %v1189 = vunpack.c.h.b16 %v121
  %v1190 = vunpack.c.l.b16 %v122
  %v1191 = vunpack.c.h.b16 %v122
  %v1192 = vunpack.c.l.b16 %v123
  %v1193 = vunpack.c.h.b16 %v123
  %v1194 = vunpack.c.l.b16 %v124
  %v1195 = vunpack.c.h.b16 %v124
  %v1196 = vunpack.c.l.b16 %v125
  %v1197 = vunpack.c.h.b16 %v125
  %v1198 = vunpack.c.l.b16 %v126
  %v1199 = vunpack.c.h.b16 %v126
  %v1200 = vunpack.c.l.b16 %v127
  %v1201 = vunpack.c.h.b16 %v127
  %v1202 = vunpack.c.l.b16 %v128
  %v1203 = vunpack.c.h.b16 %v128
  %v1204 = vunpack.c.l.b16 %v129
  %v1205 = vunpack.c.h.b16 %v129
  %v1206 = vunpack.c.l.b16 %v130
  %v1207 = vunpack.c.h.b16 %v130
  %v1208 = vunpack.c.l.b16 %v131
  %v1209 = vunpack.c.h.b16 %v131
  %v1210 = vunpack.c.l.b16 %v132
  %v1211 = vunpack.c.h.b16 %v132
  %v1212 = vunpack.c.l.b16 %v133
  %v1213 = vunpack.c.h.b16 %v133
  %v1214 = vunpack.c.l.b16 %v134
  %v1215 = vunpack.c.h.b16 %v134
  %v1216 = vunpack.c.l.b16 %v135
  %v1217 = vunpack.c.h.b16 %v135
  %v1218 = vunpack.c.l.b16 %v136
  %v1219 = vunpack.c.h.b16 %v136
  %v1220 = vunpack.c.l.b16 %v137
  %v1221 = vunpack.c.h.b16 %v137
  %v1222 = vunpack.c.l.b16 %v138
  %v1223 = vunpack.c.h.b16 %v138
  %v1224 = vunpack.c.l.b16 %v139
  %v1225 = vunpack.c.h.b16 %v139
  %v1226 = vunpack.c.l.b16 %v140
  %v1227 = vunpack.c.h.b16 %v140
  %v1228 = vunpack.c.l.b16 %v141
  %v1229 = vunpack.c.h.b16 %v141
  %v1230 = vunpack.c.l.b16 %v142
  %v1231 = vunpack.c.h.b16 %v142
  %v1232 = vunpack.c.l.b16 %v143
  %v1233 = vunpack.c.h.b16 %v143
  %v1234 = vunpack.c.l.b16 %v144
  %v1235 = vunpack.c.h.b16 %v144
  %v1236 = vunpack.c.l.b16 %v145
  %v1237 = vunpack.c.h.b16 %v145
  %v1238 = vunpack.c.l.b16 %v146
  %v1239 = vunpack.c.h.b16 %v146
  %v1240 = vunpack.c.l.b16 %v147
  %v1241 = vunpack.c.h.b16 %v147
  %v1242 = vunpack.c.l.b16 %v148
  %v1243 = vunpack.c.h.b16 %v148
  %v1244 = vunpack.c.l.b16 %v149
  %v1245 = vunpack.c.h.b16 %v149
  %v1246 = vunpack.c.l.b16 %v150
  %v1247 = vunpack.c.h.b16 %v150
  %v1248 = vunpack.c.l.b16 %v151
  %v1249 = vunpack.c.h.b16 %v151
  %v1250 = vunpack.c.l.b16 %v152
  %v1251 = vunpack.c.h.b16 %v152
  %v1252 = vunpack.c.l.b16 %v153
  %v1253 = vunpack.c.h.b16 %v153
  %v1254 = vunpack.c.l.b16 %v154
  %v1255 = vunpack.c.h.b16 %v154
  %v1256 = vunpack.c.l.b16 %v155
  %v1257 = vunpack.c.h.b16 %v155
  %v1258 = vunpack.c.l.b16 %v156
  %v1259 = vunpack.c.h.b16 %v156
  %v1260 = vunpack.c.l.b16 %v157
  %v1261 = vunpack.c.h.b16 %v157
  %v1262 = vunpack.c.l.b16 %v158
  %v1263 = vunpack.c.h.b16 %v158
  %v1264 = vunpack.c.l.b16 %v159
  %v1265 = vunpack.c.h.b16 %v159
  %v1266 = vunpack.c.l.b16 %v160
  %v1267 = vunpack.c.h.b16 %v160
  %v1268 = vunpack.c.l.b16 %v161
  %v1269 = vunpack.c.h.b16 %v161
  %v1270 = vunpack.c.l.b16 %v162
  %v1271 = vunpack.c.h.b16 %v162
  %v1272 = vunpack.c.l.b16 %v163
  %v1273 = vunpack.c.h.b16 %v163
  %v1274 = vunpack.c.l.b16 %v164
  %v1275 = vunpack.c.h.b16 %v164
  %v1276 = vunpack.c.l.b16 %v165
  %v1277 = vunpack.c.h.b16 %v165
  %v1278 = vunpack.c.l.b16 %v166
  %v1279 = vunpack.c.h.b16 %v166
  %v1280 = vunpack.c.l.b16 %v167
  %v1281 = vunpack.c.h.b16 %v167
  %v1282 = vunpack.c.l.b16 %v168
  %v1283 = vunpack.c.h.b16 %v168
  %v1284 = vunpack.c.l.b16 %v169
  %v1285 = vunpack.c.h.b16 %v169
  %v1286 = vunpack.c.l.b16 %v170
  %v1287 = vunpack.c.h.b16 %v170
  %v1288 = vunpack.c.l.b16 %v171
  %v1289 = vunpack.c.h.b16 %v171
  %v1290 = vunpack.c.l.b16 %v172
  %v1291 = vunpack.c.h.b16 %v172
  %v1292 = vunpack.c.l.b16 %v173
  %v1293 = vunpack.c.h.b16 %v173
  %v1294 = vunpack.c.l.b16 %v174
  %v1295 = vunpack.c.h.b16 %v174
  %v1296 = vunpack.c.l.b16 %v175
  %v1297 = vunpack.c.h.b16 %v175
  %v1298 = vunpack.c.l.b16 %v176
  %v1299 = vunpack.c.h.b16 %v176
  %v1300 = vunpack.c.l.b16 %v177
  %v1301 = vunpack.c.h.b16 %v177
  %v1302 = vunpack.c.l.b16 %v178
  %v1303 = vunpack.c.h.b16 %v178
  %v1304 = vunpack.c.l.b16 %v179
  %v1305 = vunpack.c.h.b16 %v179
  %v1306 = vunpack.c.l.b16 %v180
  %v1307 = vunpack.c.h.b16 %v180
  %v1308 = vunpack.c.l.b16 %v181
  %v1309 = vunpack.c.h.b16 %v181
  %v1310 = vunpack.c.l.b16 %v182
  %v1311 = vunpack.c.h.b16 %v182
  %v1312 = vunpack.c.l.b16 %v183
  %v1313 = vunpack.c.h.b16 %v183
  %v1314 = vunpack.c.l.b16 %v184
  %v1315 = vunpack.c.h.b16 %v184
  %v1316 = vunpack.c.l.b16 %v185
  %v1317 = vunpack.c.h.b16 %v185
  %v1318 = vunpack.c.l.b16 %v186
  %v1319 = vunpack.c.h.b16 %v186
  %v1320 = vunpack.c.l.b16 %v187
  %v1321 = vunpack.c.h.b16 %v187
  %v1322 = vunpack.c.l.b16 %v188
  %v1323 = vunpack.c.h.b16 %v188
  %v1324 = vunpack.c.l.b16 %v189
  %v1325 = vunpack.c.h.b16 %v189
  %v1326 = vunpack.c.l.b16 %v190
  %v1327 = vunpack.c.h.b16 %v190
  %v1328 = vunpack.c.l.b16 %v191
  %v1329 = vunpack.c.h.b16 %v191
  %v1330 = vunpack.c.l.b16 %v192
  %v1331 = vunpack.c.h.b16 %v192
  %v1332 = vunpack.c.l.b16 %v193
  %v1333 = vunpack.c.h.b16 %v193
  %v1334 = vunpack.c.l.b16 %v194
  %v1335 = vunpack.c.h.b16 %v194
  %v1336 = vunpack.c.l.b16 %v195
  %v1337 = vunpack.c.h.b16 %v195
  %v1338 = vunpack.c.l.b16 %v196
  %v1339 = vunpack.c.h.b16 %v196
  %v1340 = vunpack.c.l.b16 %v197
  %v1341 = vunpack.c.h.b16 %v197
  %v1342 = vunpack.c.l.b16 %v198
  %v1343 = vunpack.c.h.b16 %v198
  %v1344 = vunpack.c.l.b16 %v199
  %v1345 = vunpack.c.h.b16 %v199
  %v1346 = vunpack.c.l.b16 %v200
  %v1347 = vunpack.c.h.b16 %v200
  %v1348 = vunpack.c.l.b16 %v201
  %v1349 = vunpack.c.h.b16 %v201
  %v1350 = vunpack.c.l.b16 %v202
  %v1351 = vunpack.c.h.b16 %v202
  %v1352 = vunpack.c.l.b16 %v203
  %v1353 = vunpack.c.h.b16 %v203
  %v1354 = vunpack.c.l.b16 %v204
  %v1355 = vunpack.c.h.b16 %v204
  %v1356 = vunpack.c.l.b16 %v205
  %v1357 = vunpack.c.h.b16 %v205
  %v1358 = vunpack.c.l.b16 %v206
  %v1359 = vunpack.c.h.b16 %v206
  %v1360 = vunpack.c.l.b16 %v207
  %v1361 = vunpack.c.h.b16 %v207
  %v1362 = vunpack.c.l.b16 %v208
  %v1363 = vunpack.c.h.b16 %v208
  %v1364 = vunpack.c.l.b16 %v209
  %v1365 = vunpack.c.h.b16 %v209
  %v1366 = vunpack.c.l.b16 %v210
  %v1367 = vunpack.c.h.b16 %v210
  %v1368 = vunpack.c.l.b16 %v211
  %v1369 = vunpack.c.h.b16 %v211
  %v1370 = vunpack.c.l.b16 %v212
  %v1371 = vunpack.c.h.b16 %v212
  %v1372 = vunpack.c.l.b16 %v213
  %v1373 = vunpack.c.h.b16 %v213
  %v1374 = vunpack.c.l.b16 %v214
  %v1375 = vunpack.c.h.b16 %v214
  %v1376 = vunpack.c.l.b16 %v215
  %v1377 = vunpack.c.h.b16 %v215
  %v1378 = vunpack.c.l.b16 %v216
  %v1379 = vunpack.c.h.b16 %v216
  %v1380 = vunpack.c.l.b16 %v217
  %v1381 = vunpack.c.h.b16 %v217
  %v1382 = vunpack.c.l.b16 %v218
  %v1383 = vunpack.c.h.b16 %v218
  %v1384 = vunpack.c.l.b16 %v219
  %v1385 = vunpack.c.h.b16 %v219
  %v1386 = vunpack.c.l.b16 %v220
  %v1387 = vunpack.c.h.b16 %v220
  %v1388 = vunpack.c.l.b16 %v221
  %v1389 = vunpack.c.h.b16 %v221
  %v1390 = vunpack.c.l.b16 %v222
  %v1391 = vunpack.c.h.b16 %v222
  %v1392 = vunpack.c.l.b16 %v223
  %v1393 = vunpack.c.h.b16 %v223
  %v1394 = vunpack.c.l.b16 %v224
  %v1395 = vunpack.c.h.b16 %v224
  %v1396 = vunpack.c.l.b16 %v225
  %v1397 = vunpack.c.h.b16 %v225
  %v1398 = vunpack.c.l.b16 %v226
  %v1399 = vunpack.c.h.b16 %v226
  %v1400 = vunpack.c.l.b16 %v227
  %v1401 = vunpack.c.h.b16 %v227
  %v1402 = vunpack.c.l.b16 %v228
  %v1403 = vunpack.c.h.b16 %v228
  %v1404 = vunpack.c.l.b16 %v229
  %v1405 = vunpack.c.h.b16 %v229
  %v1406 = vunpack.c.l.b16 %v230
  %v1407 = vunpack.c.h.b16 %v230
  %v1408 = vunpack.c.l.b16 %v231
  %v1409 = vunpack.c.h.b16 %v231
  %v1410 = vunpack.c.l.b16 %v232
  %v1411 = vunpack.c.h.b16 %v232
  %v1412 = vunpack.c.l.b16 %v233
  %v1413 = vunpack.c.h.b16 %v233
  %v1414 = vunpack.c.l.b16 %v234
  %v1415 = vunpack.c.h.b16 %v234
  %v1416 = vunpack.c.l.b16 %v235
  %v1417 = vunpack.c.h.b16 %v235
  %v1418 = vunpack.c.l.b16 %v236
  %v1419 = vunpack.c.h.b16 %v236
  %v1420 = vunpack.c.l.b16 %v237
  %v1421 = vunpack.c.h.b16 %v237
  %v1422 = vunpack.c.l.b16 %v238
  %v1423 = vunpack.c.h.b16 %v238
  %v1424 = vunpack.c.l.b16 %v239
  %v1425 = vunpack.c.h.b16 %v239
  %v1426 = vunpack.c.l.b16 %v240
  %v1427 = vunpack.c.h.b16 %v240
  %v1428 = vunpack.c.l.b16 %v241
  %v1429 = vunpack.c.h.b16 %v241
  %v1430 = vunpack.c.l.b16 %v242
  %v1431 = vunpack.c.h.b16 %v242
  %v1432 = vunpack.c.l.b16 %v243
  %v1433 = vunpack.c.h.b16 %v243
  %v1434 = vunpack.c.l.b16 %v244
  %v1435 = vunpack.c.h.b16 %v244
  %v1436 = vunpack.c.l.b16 %v245
  %v1437 = vunpack.c.h.b16 %v245
  %v1438 = vunpack.c.l.b16 %v246
  %v1439 = vunpack.c.h.b16 %v246
  %v1440 = vunpack.c.l.b16 %v247
  %v1441 = vunpack.c.h.b16 %v247
  %v1442 = vunpack.c.l.b16 %v248
  %v1443 = vunpack.c.h.b16 %v248
  %v1444 = vunpack.c.l.b16 %v249
  %v1445 = vunpack.c.h.b16 %v249
  %v1446 = vunpack.c.l.b16 %v250
  %v1447 = vunpack.c.h.b16 %v250
  %v1448 = vunpack.c.l.b16 %v251
  %v1449 = vunpack.c.h.b16 %v251
  %v1450 = vunpack.c.l.b16 %v252
  %v1451 = vunpack.c.h.b16 %v252
  %v1452 = vunpack.c.l.b16 %v253
  %v1453 = vunpack.c.h.b16 %v253
  %v1454 = vunpack.c.l.b16 %v254
  %v1455 = vunpack.c.h.b16 %v254
  %v1456 = vunpack.c.l.b16 %v255
  %v1457 = vunpack.c.h.b16 %v255
  %v1458 = vunpack.c.l.b16 %v256
  %v1459 = vunpack.c.h.b16 %v256
  %v1460 = vunpack.c.l.b16 %v257
  %v1461 = vunpack.c.h.b16 %v257
  %v1462 = vunpack.c.l.b16 %v258
  %v1463 = vunpack.c.h.b16 %v258
  %v1464 = vunpack.c.l.b16 %v259
  %v1465 = vunpack.c.h.b16 %v259
  %v1466 = vunpack.c.l.b16 %v260
  %v1467 = vunpack.c.h.b16 %v260
  %v1468 = vunpack.c.l.b16 %v261
  %v1469 = vunpack.c.h.b16 %v261
  %v1470 = vunpack.c.l.b16 %v262
  %v1471 = vunpack.c.h.b16 %v262
  %v1472 = vunpack.c.l.b16 %v263
  %v1473 = vunpack.c.h.b16 %v263
  %v1474 = vunpack.c.l.b16 %v264
  %v1475 = vunpack.c.h.b16 %v264
  %v1476 = vunpack.c.l.b16 %v265
  %v1477 = vunpack.c.h.b16 %v265
  %v1478 = vunpack.c.l.b16 %v266
  %v1479 = vunpack.c.h.b16 %v266
  %v1480 = vunpack.c.l.b16 %v267
  %v1481 = vunpack.c.h.b16 %v267
  %v1482 = vunpack.c.l.b16 %v268
  %v1483 = vunpack.c.h.b16 %v268
  %v1484 = vunpack.c.l.b16 %v269
  %v1485 = vunpack.c.h.b16 %v269
  %v1486 = vpack.c.b16 %v990, %v974
  %v1487 = vpack.c.b16 %v991, %v975
  %v1488 = vpack.c.b16 %v992, %v976
  %v1489 = vpack.c.b16 %v993, %v977
  %v1490 = vpack.c.b16 %v994, %v978
  %v1491 = vpack.c.b16 %v995, %v979
  %v1492 = vpack.c.b16 %v996, %v980
  %v1493 = vpack.c.b16 %v997, %v981
  %v1494 = vpack.c.b16 %v998, %v982
  %v1495 = vpack.c.b16 %v999, %v983
  %v1496 = vpack.c.b16 %v1000, %v984
  %v1497 = vpack.c.b16 %v1001, %v985
  %v1498 = vpack.c.b16 %v1002, %v986
  %v1499 = vpack.c.b16 %v1003, %v987
  %v1500 = vpack.c.b16 %v1004, %v988
  %v1501 = vpack.c.b16 %v1005, %v989
  %v1502 = vpack.c.b16 %v1022, %v1006
  %v1503 = vpack.c.b16 %v1023, %v1007
  %v1504 = vpack.c.b16 %v1024, %v1008
  %v1505 = vpack.c.b16 %v1025, %v1009
  %v1506 = vpack.c.b16 %v1026, %v1010
  %v1507 = vpack.c.b16 %v1027, %v1011
  %v1508 = vpack.c.b16 %v1028, %v1012
  %v1509 = vpack.c.b16 %v1029, %v1013
  %v1510 = vpack.c.b16 %v1030, %v1014
  %v1511 = vpack.c.b16 %v1031, %v1015
  %v1512 = vpack.c.b16 %v1032, %v1016
  %v1513 = vpack.c.b16 %v1033, %v1017
  %v1514 = vpack.c.b16 %v1034, %v1018
  %v1515 = vpack.c.b16 %v1035, %v1019
  %v1516 = vpack.c.b16 %v1036, %v1020
  %v1517 = vpack.c.b16 %v1037, %v1021
  %v1518 = vpack.c.b16 %v1054, %v1038
  %v1519 = vpack.c.b16 %v1055, %v1039
  %v1520 = vpack.c.b16 %v1056, %v1040
  %v1521 = vpack.c.b16 %v1057, %v1041
  %v1522 = vpack.c.b16 %v1058, %v1042
  %v1523 = vpack.c.b16 %v1059, %v1043
  %v1524 = vpack.c.b16 %v1060, %v1044
  %v1525 = vpack.c.b16 %v1061, %v1045
  %v1526 = vpack.c.b16 %v1062, %v1046
  %v1527 = vpack.c.b16 %v1063, %v1047
  %v1528 = vpack.c.b16 %v1064, %v1048
  %v1529 = vpack.c.b16 %v1065, %v1049
  %v1530 = vpack.c.b16 %v1066, %v1050
  %v1531 = vpack.c.b16 %v1067, %v1051
  %v1532 = vpack.c.b16 %v1068, %v1052
  %v1533 = vpack.c.b16 %v1069, %v1053
  %v1534 = vpack.c.b16 %v1086, %v1070
  %v1535 = vpack.c.b16 %v1087, %v1071
  %v1536 = vpack.c.b16 %v1088, %v1072
  %v1537 = vpack.c.b16 %v1089, %v1073
  %v1538 = vpack.c.b16 %v1090, %v1074
  %v1539 = vpack.c.b16 %v1091, %v1075
  %v1540 = vpack.c.b16 %v1092, %v1076
  %v1541 = vpack.c.b16 %v1093, %v1077
  %v1542 = vpack.c.b16 %v1094, %v1078
  %v1543 = vpack.c.b16 %v1095, %v1079
  %v1544 = vpack.c.b16 %v1096, %v1080
  %v1545 = vpack.c.b16 %v1097, %v1081
  %v1546 = vpack.c.b16 %v1098, %v1082
  %v1547 = vpack.c.b16 %v1099, %v1083
  %v1548 = vpack.c.b16 %v1100, %v1084
  %v1549 = vpack.c.b16 %v1101, %v1085
  %v1550 = vpack.c.b16 %v1118, %v1102
  %v1551 = vpack.c.b16 %v1119, %v1103
  %v1552 = vpack.c.b16 %v1120, %v1104
  %v1553 = vpack.c.b16 %v1121, %v1105
  %v1554 = vpack.c.b16 %v1122, %v1106
  %v1555 = vpack.c.b16 %v1123, %v1107
  %v1556 = vpack.c.b16 %v1124, %v1108
  %v1557 = vpack.c.b16 %v1125, %v1109
  %v1558 = vpack.c.b16 %v1126, %v1110
  %v1559 = vpack.c.b16 %v1127, %v1111
  %v1560 = vpack.c.b16 %v1128, %v1112
  %v1561 = vpack.c.b16 %v1129, %v1113
  %v1562 = vpack.c.b16 %v1130, %v1114
  %v1563 = vpack.c.b16 %v1131, %v1115
  %v1564 = vpack.c.b16 %v1132, %v1116
  %v1565 = vpack.c.b16 %v1133, %v1117
  %v1566 = vpack.c.b16 %v1150, %v1134
  %v1567 = vpack.c.b16 %v1151, %v1135
  %v1568 = vpack.c.b16 %v1152, %v1136
  %v1569 = vpack.c.b16 %v1153, %v1137
  %v1570 = vpack.c.b16 %v1154, %v1138
  %v1571 = vpack.c.b16 %v1155, %v1139
  %v1572 = vpack.c.b16 %v1156, %v1140
  %v1573 = vpack.c.b16 %v1157, %v1141
  %v1574 = vpack.c.b16 %v1158, %v1142
  %v1575 = vpack.c.b16 %v1159, %v1143
  %v1576 = vpack.c.b16 %v1160, %v1144
  %v1577 = vpack.c.b16 %v1161, %v1145
  %v1578 = vpack.c.b16 %v1162, %v1146
  %v1579 = vpack.c.b16 %v1163, %v1147
  %v1580 = vpack.c.b16 %v1164, %v1148
  %v1581 = vpack.c.b16 %v1165, %v1149
  %v1582 = vpack.c.b16 %v1182, %v1166
  %v1583 = vpack.c.b16 %v1183, %v1167
  %v1584 = vpack.c.b16 %v1184, %v1168
  %v1585 = vpack.c.b16 %v1185, %v1169
  %v1586 = vpack.c.b16 %v1186, %v1170
  %v1587 = vpack.c.b16 %v1187, %v1171
  %v1588 = vpack.c.b16 %v1188, %v1172
  %v1589 = vpack.c.b16 %v1189, %v1173
  %v1590 = vpack.c.b16 %v1190, %v1174
  %v1591 = vpack.c.b16 %v1191, %v1175
  %v1592 = vpack.c.b16 %v1192, %v1176
  %v1593 = vpack.c.b16 %v1193, %v1177
  %v1594 = vpack.c.b16 %v1194, %v1178
  %v1595 = vpack.c.b16 %v1195, %v1179
  %v1596 = vpack.c.b16 %v1196, %v1180
  %v1597 = vpack.c.b16 %v1197, %v1181
  %v1598 = vpack.c.b16 %v1214, %v1198
  %v1599 = vpack.c.b16 %v1215, %v1199
  %v1600 = vpack.c.b16 %v1216, %v1200
  %v1601 = vpack.c.b16 %v1217, %v1201
  %v1602 = vpack.c.b16 %v1218, %v1202
  %v1603 = vpack.c.b16 %v1219, %v1203
  %v1604 = vpack.c.b16 %v1220, %v1204
  %v1605 = vpack.c.b16 %v1221, %v1205
  %v1606 = vpack.c.b16 %v1222, %v1206
  %v1607 = vpack.c.b16 %v1223, %v1207
  %v1608 = vpack.c.b16 %v1224, %v1208
  %v1609 = vpack.c.b16 %v1225, %v1209
  %v1610 = vpack.c.b16 %v1226, %v1210
  %v1611 = vpack.c.b16 %v1227, %v1211
  %v1612 = vpack.c.b16 %v1228, %v1212
  %v1613 = vpack.c.b16 %v1229, %v1213
  %v1614 = vpack.c.b16 %v1246, %v1230
  %v1615 = vpack.c.b16 %v1247, %v1231
  %v1616 = vpack.c.b16 %v1248, %v1232
  %v1617 = vpack.c.b16 %v1249, %v1233
  %v1618 = vpack.c.b16 %v1250, %v1234
  %v1619 = vpack.c.b16 %v1251, %v1235
  %v1620 = vpack.c.b16 %v1252, %v1236
  %v1621 = vpack.c.b16 %v1253, %v1237
  %v1622 = vpack.c.b16 %v1254, %v1238
  %v1623 = vpack.c.b16 %v1255, %v1239
  %v1624 = vpack.c.b16 %v1256, %v1240
  %v1625 = vpack.c.b16 %v1257, %v1241
  %v1626 = vpack.c.b16 %v1258, %v1242
  %v1627 = vpack.c.b16 %v1259, %v1243
  %v1628 = vpack.c.b16 %v1260, %v1244
  %v1629 = vpack.c.b16 %v1261, %v1245
  %v1630 = vpack.c.b16 %v1278, %v1262
  %v1631 = vpack.c.b16 %v1279, %v1263
  %v1632 = vpack.c.b16 %v1280, %v1264
  %v1633 = vpack.c.b16 %v1281, %v1265
  %v1634 = vpack.c.b16 %v1282, %v1266
  %v1635 = vpack.c.b16 %v1283, %v1267
  %v1636 = vpack.c.b16 %v1284, %v1268
  %v1637 = vpack.c.b16 %v1285, %v1269
  %v1638 = vpack.c.b16 %v1286, %v1270
  %v1639 = vpack.c.b16 %v1287, %v1271
  %v1640 = vpack.c.b16 %v1288, %v1272
  %v1641 = vpack.c.b16 %v1289, %v1273
  %v1642 = vpack.c.b16 %v1290, %v1274
  %v1643 = vpack.c.b16 %v1291, %v1275
  %v1644 = vpack.c.b16 %v1292, %v1276
  %v1645 = vpack.c.b16 %v1293, %v1277
  %v1646 = vpack.c.b16 %v1310, %v1294
  %v1647 = vpack.c.b16 %v1311, %v1295
  %v1648 = vpack.c.b16 %v1312, %v1296
  %v1649 = vpack.c.b16 %v1313, %v1297
  %v1650 = vpack.c.b16 %v1314, %v1298
  %v1651 = vpack.c.b16 %v1315, %v1299
  %v1652 = vpack.c.b16 %v1316, %v1300
  %v1653 = vpack.c.b16 %v1317, %v1301
  %v1654 = vpack.c.b16 %v1318, %v1302
  %v1655 = vpack.c.b16 %v1319, %v1303
  %v1656 = vpack.c.b16 %v1320, %v1304
  %v1657 = vpack.c.b16 %v1321, %v1305
  %v1658 = vpack.c.b16 %v1322, %v1306
  %v1659 = vpack.c.b16 %v1323, %v1307
  %v1660 = vpack.c.b16 %v1324, %v1308
  %v1661 = vpack.c.b16 %v1325, %v1309
  %v1662 = vpack.c.b16 %v1342, %v1326
  %v1663 = vpack.c.b16 %v1343, %v1327
  %v1664 = vpack.c.b16 %v1344, %v1328
  %v1665 = vpack.c.b16 %v1345, %v1329
  %v1666 = vpack.c.b16 %v1346, %v1330
  %v1667 = vpack.c.b16 %v1347, %v1331
  %v1668 = vpack.c.b16 %v1348, %v1332
  %v1669 = vpack.c.b16 %v1349, %v1333
  %v1670 = vpack.c.b16 %v1350, %v1334
  %v1671 = vpack.c.b16 %v1351, %v1335
  %v1672 = vpack.c.b16 %v1352, %v1336
  %v1673 = vpack.c.b16 %v1353, %v1337
  %v1674 = vpack.c.b16 %v1354, %v1338
  %v1675 = vpack.c.b16 %v1355, %v1339
  %v1676 = vpack.c.b16 %v1356, %v1340
  %v1677 = vpack.c.b16 %v1357, %v1341
  %v1678 = vpack.c.b16 %v1374, %v1358
  %v1679 = vpack.c.b16 %v1375, %v1359
  %v1680 = vpack.c.b16 %v1376, %v1360
  %v1681 = vpack.c.b16 %v1377, %v1361
  %v1682 = vpack.c.b16 %v1378, %v1362
  %v1683 = vpack.c.b16 %v1379, %v1363
  %v1684 = vpack.c.b16 %v1380, %v1364
  %v1685 = vpack.c.b16 %v1381, %v1365
  %v1686 = vpack.c.b16 %v1382, %v1366
  %v1687 = vpack.c.b16 %v1383, %v1367
  %v1688 = vpack.c.b16 %v1384, %v1368
  %v1689 = vpack.c.b16 %v1385, %v1369
  %v1690 = vpack.c.b16 %v1386, %v1370
  %v1691 = vpack.c.b16 %v1387, %v1371
  %v1692 = vpack.c.b16 %v1388, %v1372
  %v1693 = vpack.c.b16 %v1389, %v1373
  %v1694 = vpack.c.b16 %v1406, %v1390
  %v1695 = vpack.c.b16 %v1407, %v1391
  %v1696 = vpack.c.b16 %v1408, %v1392
  %v1697 = vpack.c.b16 %v1409, %v1393
  %v1698 = vpack.c.b16 %v1410, %v1394
  %v1699 = vpack.c.b16 %v1411, %v1395
  %v1700 = vpack.c.b16 %v1412, %v1396
  %v1701 = vpack.c.b16 %v1413, %v1397
  %v1702 = vpack.c.b16 %v1414, %v1398
  %v1703 = vpack.c.b16 %v1415, %v1399
  %v1704 = vpack.c.b16 %v1416, %v1400
  %v1705 = vpack.c.b16 %v1417, %v1401
  %v1706 = vpack.c.b16 %v1418, %v1402
  %v1707 = vpack.c.b16 %v1419, %v1403
  %v1708 = vpack.c.b16 %v1420, %v1404
  %v1709 = vpack.c.b16 %v1421, %v1405
  %v1710 = vpack.c.b16 %v1438, %v1422
  %v1711 = vpack.c.b16 %v1439, %v1423
  %v1712 = vpack.c.b16 %v1440, %v1424
  %v1713 = vpack.c.b16 %v1441, %v1425
  %v1714 = vpack.c.b16 %v1442, %v1426
  %v1715 = vpack.c.b16 %v1443, %v1427
  %v1716 = vpack.c.b16 %v1444, %v1428
  %v1717 = vpack.c.b16 %v1445, %v1429
  %v1718 = vpack.c.b16 %v1446, %v1430
  %v1719 = vpack.c.b16 %v1447, %v1431
  %v1720 = vpack.c.b16 %v1448, %v1432
  %v1721 = vpack.c.b16 %v1449, %v1433
  %v1722 = vpack.c.b16 %v1450, %v1434
  %v1723 = vpack.c.b16 %v1451, %v1435
  %v1724 = vpack.c.b16 %v1452, %v1436
  %v1725 = vpack.c.b16 %v1453, %v1437
  %v1726 = vpack.c.b16 %v1470, %v1454
  %v1727 = vpack.c.b16 %v1471, %v1455
  %v1728 = vpack.c.b16 %v1472, %v1456
  %v1729 = vpack.c.b16 %v1473, %v1457
  %v1730 = vpack.c.b16 %v1474, %v1458
  %v1731 = vpack.c.b16 %v1475, %v1459
  %v1732 = vpack.c.b16 %v1476, %v1460
  %v1733 = vpack.c.b16 %v1477, %v1461
  %v1734 = vpack.c.b16 %v1478, %v1462
  %v1735 = vpack.c.b16 %v1479, %v1463
  %v1736 = vpack.c.b16 %v1480, %v1464
  %v1737 = vpack.c.b16 %v1481, %v1465
  %v1738 = vpack.c.b16 %v1482, %v1466
  %v1739 = vpack.c.b16 %v1483, %v1467
  %v1740 = vpack.c.b16 %v1484, %v1468
  %v1741 = vpack.c.b16 %v1485, %v1469
  %v2254 = vunpack.c.l.b16 %v270
  %v2255 = vunpack.c.l.b16 %v271
  %v2256 = vunpack.c.l.b16 %v272
  %v2257 = vunpack.c.l.b16 %v273
  %v2258 = vunpack.c.l.b16 %v274
  %v2259 = vunpack.c.l.b16 %v275
  %v2260 = vunpack.c.l.b16 %v276
  %v2261 = vunpack.c.l.b16 %v277
  %v2262 = vunpack.c.l.b16 %v278
  %v2263 = vunpack.c.l.b16 %v279
  %v2264 = vunpack.c.l.b16 %v280
  %v2265 = vunpack.c.l.b16 %v281
  %v2266 = vunpack.c.l.b16 %v282
  %v2267 = vunpack.c.l.b16 %v283
  %v2268 = vunpack.c.l.b16 %v284
  %v2269 = vunpack.c.l.b16 %v285
  %v2270 = vunpack.c.l.b16 %v286
  %v2271 = vunpack.c.l.b16 %v287
  %v2272 = vunpack.c.l.b16 %v288
  %v2273 = vunpack.c.l.b16 %v289
  %v2274 = vunpack.c.l.b16 %v290
  %v2275 = vunpack.c.l.b16 %v291
  %v2276 = vunpack.c.l.b16 %v292
  %v2277 = vunpack.c.l.b16 %v293
  %v2278 = vunpack.c.l.b16 %v294
  %v2279 = vunpack.c.l.b16 %v295
  %v2280 = vunpack.c.l.b16 %v296
  %v2281 = vunpack.c.l.b16 %v297
  %v2282 = vunpack.c.l.b16 %v298
  %v2283 = vunpack.c.l.b16 %v299
  %v2284 = vunpack.c.l.b16 %v300
  %v2285 = vunpack.c.l.b16 %v301
  %v2286 = vunpack.c.l.b16 %v302
  %v2287 = vunpack.c.l.b16 %v303
  %v2288 = vunpack.c.l.b16 %v304
  %v2289 = vunpack.c.l.b16 %v305
  %v2290 = vunpack.c.l.b16 %v306
  %v2291 = vunpack.c.l.b16 %v307
  %v2292 = vunpack.c.l.b16 %v308
  %v2293 = vunpack.c.l.b16 %v309
  %v2294 = vunpack.c.l.b16 %v310
  %v2295 = vunpack.c.l.b16 %v311
  %v2296 = vunpack.c.l.b16 %v312
  %v2297 = vunpack.c.l.b16 %v313
  %v2298 = vunpack.c.l.b16 %v314
  %v2299 = vunpack.c.l.b16 %v315
  %v2300 = vunpack.c.l.b16 %v316
  %v2301 = vunpack.c.l.b16 %v317
  %v2302 = vunpack.c.l.b16 %v318
  %v2303 = vunpack.c.l.b16 %v319
  %v2304 = vunpack.c.l.b16 %v320
  %v2305 = vunpack.c.l.b16 %v321
  %v2306 = vunpack.c.l.b16 %v322
  %v2307 = vunpack.c.l.b16 %v323
  %v2308 = vunpack.c.l.b16 %v324
  %v2309 = vunpack.c.l.b16 %v325
  %v2310 = vunpack.c.l.b16 %v326
  %v2311 = vunpack.c.l.b16 %v327
  %v2312 = vunpack.c.l.b16 %v328
  %v2313 = vunpack.c.l.b16 %v329
  %v2314 = vunpack.c.l.b16 %v330
  %v2315 = vunpack.c.l.b16 %v331
  %v2316 = vunpack.c.l.b16 %v332
  %v2317 = vunpack.c.l.b16 %v333
  %v2318 = vunpack.c.l.b16 %v334
  %v2319 = vunpack.c.l.b16 %v335
  %v2320 = vunpack.c.l.b16 %v336
  %v2321 = vunpack.c.l.b16 %v337
  %v2322 = vunpack.c.l.b16 %v338
  %v2323 = vunpack.c.l.b16 %v339
  %v2324 = vunpack.c.l.b16 %v340
  %v2325 = vunpack.c.l.b16 %v341
  %v2326 = vunpack.c.l.b16 %v342
  %v2327 = vunpack.c.l.b16 %v343
  %v2328 = vunpack.c.l.b16 %v344
  %v2329 = vunpack.c.l.b16 %v345
  %v2330 = vunpack.c.l.b16 %v346
  %v2331 = vunpack.c.l.b16 %v347
  %v2332 = vunpack.c.l.b16 %v348
  %v2333 = vunpack.c.l.b16 %v349
  %v2334 = vunpack.c.l.b16 %v350
  %v2335 = vunpack.c.l.b16 %v351
  %v2336 = vunpack.c.l.b16 %v352
  %v2337 = vunpack.c.l.b16 %v353
  %v2338 = vunpack.c.l.b16 %v354
  %v2339 = vunpack.c.l.b16 %v355
  %v2340 = vunpack.c.l.b16 %v356
  %v2341 = vunpack.c.l.b16 %v357
  %v2342 = vunpack.c.l.b16 %v358
  %v2343 = vunpack.c.l.b16 %v359
  %v2344 = vunpack.c.l.b16 %v360
  %v2345 = vunpack.c.l.b16 %v361
  %v2346 = vunpack.c.l.b16 %v362
  %v2347 = vunpack.c.l.b16 %v363
  %v2348 = vunpack.c.l.b16 %v364
  %v2349 = vunpack.c.l.b16 %v365
  %v2350 = vunpack.c.l.b16 %v366
  %v2351 = vunpack.c.l.b16 %v367
  %v2352 = vunpack.c.l.b16 %v368
  %v2353 = vunpack.c.l.b16 %v369
  %v2354 = vunpack.c.l.b16 %v370
  %v2355 = vunpack.c.l.b16 %v371
  %v2356 = vunpack.c.l.b16 %v372
  %v2357 = vunpack.c.l.b16 %v373
  %v2358 = vunpack.c.l.b16 %v374
  %v2359 = vunpack.c.l.b16 %v375
  %v2360 = vunpack.c.l.b16 %v376
  %v2361 = vunpack.c.l.b16 %v377
  %v2362 = vunpack.c.l.b16 %v378
  %v2363 = vunpack.c.l.b16 %v379
  %v2364 = vunpack.c.l.b16 %v380
  %v2365 = vunpack.c.l.b16 %v381
  %v2366 = vunpack.c.l.b16 %v382
  %v2367 = vunpack.c.l.b16 %v383
  %v2368 = vunpack.c.l.b16 %v384
  %v2369 = vunpack.c.l.b16 %v385
  %v2370 = vunpack.c.l.b16 %v386
  %v2371 = vunpack.c.l.b16 %v387
  %v2372 = vunpack.c.l.b16 %v388
  %v2373 = vunpack.c.l.b16 %v389
  %v2374 = vunpack.c.l.b16 %v390
  %v2375 = vunpack.c.l.b16 %v391
  %v2376 = vunpack.c.l.b16 %v392
  %v2377 = vunpack.c.l.b16 %v393
  %v2378 = vunpack.c.l.b16 %v394
  %v2379 = vunpack.c.l.b16 %v395
  %v2380 = vunpack.c.l.b16 %v396
  %v2381 = vunpack.c.l.b16 %v397
  %v2382 = vunpack.c.l.b16 %v398
  %v2383 = vunpack.c.l.b16 %v399
  %v2384 = vunpack.c.l.b16 %v400
  %v2385 = vunpack.c.l.b16 %v401
  %v2386 = vunpack.c.l.b16 %v402
  %v2387 = vunpack.c.l.b16 %v403
  %v2388 = vunpack.c.l.b16 %v404
  %v2389 = vunpack.c.l.b16 %v405
  %v2390 = vunpack.c.l.b16 %v406
  %v2391 = vunpack.c.l.b16 %v407
  %v2392 = vunpack.c.l.b16 %v408
  %v2393 = vunpack.c.l.b16 %v409
  %v2394 = vunpack.c.l.b16 %v410
  %v2395 = vunpack.c.l.b16 %v411
  %v2396 = vunpack.c.l.b16 %v412
  %v2397 = vunpack.c.l.b16 %v413
  %v2398 = vunpack.c.l.b16 %v414
  %v2399 = vunpack.c.l.b16 %v415
  %v2400 = vunpack.c.l.b16 %v416
  %v2401 = vunpack.c.l.b16 %v417
  %v2402 = vunpack.c.l.b16 %v418
  %v2403 = vunpack.c.l.b16 %v419
  %v2404 = vunpack.c.l.b16 %v420
  %v2405 = vunpack.c.l.b16 %v421
  %v2406 = vunpack.c.l.b16 %v422
  %v2407 = vunpack.c.l.b16 %v423
  %v2408 = vunpack.c.l.b16 %v424
  %v2409 = vunpack.c.l.b16 %v425
  %v2410 = vunpack.c.l.b16 %v426
  %v2411 = vunpack.c.l.b16 %v427
  %v2412 = vunpack.c.l.b16 %v428
  %v2413 = vunpack.c.l.b16 %v429
  %v2414 = vunpack.c.l.b16 %v430
  %v2415 = vunpack.c.l.b16 %v431
  %v2416 = vunpack.c.l.b16 %v432
  %v2417 = vunpack.c.l.b16 %v433
  %v2418 = vunpack.c.l.b16 %v434
  %v2419 = vunpack.c.l.b16 %v435
  %v2420 = vunpack.c.l.b16 %v436
  %v2421 = vunpack.c.l.b16 %v437
  %v2422 = vunpack.c.l.b16 %v438
  %v2423 = vunpack.c.l.b16 %v439
  %v2424 = vunpack.c.l.b16 %v440
  %v2425 = vunpack.c.l.b16 %v441
  %v2426 = vunpack.c.l.b16 %v442
  %v2427 = vunpack.c.l.b16 %v443
  %v2428 = vunpack.c.l.b16 %v444
  %v2429 = vunpack.c.l.b16 %v445
  %v2430 = vunpack.c.l.b16 %v446
  %v2431 = vunpack.c.l.b16 %v447
  %v2432 = vunpack.c.l.b16 %v448
  %v2433 = vunpack.c.l.b16 %v449
  %v2434 = vunpack.c.l.b16 %v450
  %v2435 = vunpack.c.l.b16 %v451
  %v2436 = vunpack.c.l.b16 %v452
  %v2437 = vunpack.c.l.b16 %v453
  %v2438 = vunpack.c.l.b16 %v454
  %v2439 = vunpack.c.l.b16 %v455
  %v2440 = vunpack.c.l.b16 %v456
  %v2441 = vunpack.c.l.b16 %v457
  %v2442 = vunpack.c.l.b16 %v458
  %v2443 = vunpack.c.l.b16 %v459
  %v2444 = vunpack.c.l.b16 %v460
  %v2445 = vunpack.c.l.b16 %v461
  %v2446 = vunpack.c.l.b16 %v462
  %v2447 = vunpack.c.l.b16 %v463
  %v2448 = vunpack.c.l.b16 %v464
  %v2449 = vunpack.c.l.b16 %v465
  %v2450 = vunpack.c.l.b16 %v466
  %v2451 = vunpack.c.l.b16 %v467
  %v2452 = vunpack.c.l.b16 %v468
  %v2453 = vunpack.c.l.b16 %v469
  %v2454 = vunpack.c.l.b16 %v470
  %v2455 = vunpack.c.l.b16 %v471
  %v2456 = vunpack.c.l.b16 %v472
  %v2457 = vunpack.c.l.b16 %v473
  %v2458 = vunpack.c.l.b16 %v474
  %v2459 = vunpack.c.l.b16 %v475
  %v2460 = vunpack.c.l.b16 %v476
  %v2461 = vunpack.c.l.b16 %v477
  %v2462 = vunpack.c.l.b16 %v478
  %v2463 = vunpack.c.l.b16 %v479
  %v2464 = vunpack.c.l.b16 %v480
  %v2465 = vunpack.c.l.b16 %v481
  %v2466 = vunpack.c.l.b16 %v482
  %v2467 = vunpack.c.l.b16 %v483
  %v2468 = vunpack.c.l.b16 %v484
  %v2469 = vunpack.c.l.b16 %v485
  %v2470 = vunpack.c.l.b16 %v486
  %v2471 = vunpack.c.l.b16 %v487
  %v2472 = vunpack.c.l.b16 %v488
  %v2473 = vunpack.c.l.b16 %v489
  %v2474 = vunpack.c.l.b16 %v490
  %v2475 = vunpack.c.l.b16 %v491
  %v2476 = vunpack.c.l.b16 %v492
  %v2477 = vunpack.c.l.b16 %v493
  %v2478 = vunpack.c.l.b16 %v494
  %v2479 = vunpack.c.l.b16 %v495
  %v2480 = vunpack.c.l.b16 %v496
  %v2481 = vunpack.c.l.b16 %v497
  %v2482 = vunpack.c.l.b16 %v498
  %v2483 = vunpack.c.l.b16 %v499
  %v2484 = vunpack.c.l.b16 %v500
  %v2485 = vunpack.c.l.b16 %v501
  %v2486 = vunpack.c.l.b16 %v502
  %v2487 = vunpack.c.l.b16 %v503
  %v2488 = vunpack.c.l.b16 %v504
  %v2489 = vunpack.c.l.b16 %v505
  %v2490 = vunpack.c.l.b16 %v506
  %v2491 = vunpack.c.l.b16 %v507
  %v2492 = vunpack.c.l.b16 %v508
  %v2493 = vunpack.c.l.b16 %v509
  %v2494 = vunpack.c.l.b16 %v510
  %v2495 = vunpack.c.l.b16 %v511
  %v2496 = vunpack.c.l.b16 %v512
  %v2497 = vunpack.c.l.b16 %v513
  %v2498 = vunpack.c.l.b16 %v514
  %v2499 = vunpack.c.l.b16 %v515
  %v2500 = vunpack.c.l.b16 %v516
  %v2501 = vunpack.c.l.b16 %v517
  %v2502 = vunpack.c.l.b16 %v518
  %v2503 = vunpack.c.l.b16 %v519
  %v2504 = vunpack.c.l.b16 %v520
  %v2505 = vunpack.c.l.b16 %v521
  %v2506 = vunpack.c.l.b16 %v522
  %v2507 = vunpack.c.l.b16 %v523
  %v2508 = vunpack.c.l.b16 %v524
  %v2509 = vunpack.c.l.b16 %v525
  %v2510 = vpack.c.b16 %v2255, %v2254
  %v2511 = vpack.c.b16 %v2257, %v2256
  %v2512 = vpack.c.b16 %v2259, %v2258
  %v2513 = vpack.c.b16 %v2261, %v2260
  %v2514 = vpack.c.b16 %v2263, %v2262
  %v2515 = vpack.c.b16 %v2265, %v2264
  %v2516 = vpack.c.b16 %v2267, %v2266
  %v2517 = vpack.c.b16 %v2269, %v2268
  %v2518 = vpack.c.b16 %v2271, %v2270
  %v2519 = vpack.c.b16 %v2273, %v2272
  %v2520 = vpack.c.b16 %v2275, %v2274
  %v2521 = vpack.c.b16 %v2277, %v2276
  %v2522 = vpack.c.b16 %v2279, %v2278
  %v2523 = vpack.c.b16 %v2281, %v2280
  %v2524 = vpack.c.b16 %v2283, %v2282
  %v2525 = vpack.c.b16 %v2285, %v2284
  %v2526 = vpack.c.b16 %v2287, %v2286
  %v2527 = vpack.c.b16 %v2289, %v2288
  %v2528 = vpack.c.b16 %v2291, %v2290
  %v2529 = vpack.c.b16 %v2293, %v2292
  %v2530 = vpack.c.b16 %v2295, %v2294
  %v2531 = vpack.c.b16 %v2297, %v2296
  %v2532 = vpack.c.b16 %v2299, %v2298
  %v2533 = vpack.c.b16 %v2301, %v2300
  %v2534 = vpack.c.b16 %v2303, %v2302
  %v2535 = vpack.c.b16 %v2305, %v2304
  %v2536 = vpack.c.b16 %v2307, %v2306
  %v2537 = vpack.c.b16 %v2309, %v2308
  %v2538 = vpack.c.b16 %v2311, %v2310
  %v2539 = vpack.c.b16 %v2313, %v2312
  %v2540 = vpack.c.b16 %v2315, %v2314
  %v2541 = vpack.c.b16 %v2317, %v2316
  %v2542 = vpack.c.b16 %v2319, %v2318
  %v2543 = vpack.c.b16 %v2321, %v2320
  %v2544 = vpack.c.b16 %v2323, %v2322
  %v2545 = vpack.c.b16 %v2325, %v2324
  %v2546 = vpack.c.b16 %v2327, %v2326
  %v2547 = vpack.c.b16 %v2329, %v2328
  %v2548 = vpack.c.b16 %v2331, %v2330
  %v2549 = vpack.c.b16 %v2333, %v2332
  %v2550 = vpack.c.b16 %v2335, %v2334
  %v2551 = vpack.c.b16 %v2337, %v2336
  %v2552 = vpack.c.b16 %v2339, %v2338
  %v2553 = vpack.c.b16 %v2341, %v2340
  %v2554 = vpack.c.b16 %v2343, %v2342
  %v2555 = vpack.c.b16 %v2345, %v2344
  %v2556 = vpack.c.b16 %v2347, %v2346
  %v2557 = vpack.c.b16 %v2349, %v2348
  %v2558 = vpack.c.b16 %v2351, %v2350
  %v2559 = vpack.c.b16 %v2353, %v2352
  %v2560 = vpack.c.b16 %v2355, %v2354
  %v2561 = vpack.c.b16 %v2357, %v2356
  %v2562 = vpack.c.b16 %v2359, %v2358
  %v2563 = vpack.c.b16 %v2361, %v2360
  %v2564 = vpack.c.b16 %v2363, %v2362
  %v2565 = vpack.c.b16 %v2365, %v2364
  %v2566 = vpack.c.b16 %v2367, %v2366
  %v2567 = vpack.c.b16 %v2369, %v2368
  %v2568 = vpack.c.b16 %v2371, %v2370
  %v2569 = vpack.c.b16 %v2373, %v2372
  %v2570 = vpack.c.b16 %v2375, %v2374
  %v2571 = vpack.c.b16 %v2377, %v2376
  %v2572 = vpack.c.b16 %v2379, %v2378
  %v2573 = vpack.c.b16 %v2381, %v2380
  %v2574 = vpack.c.b16 %v2383, %v2382
  %v2575 = vpack.c.b16 %v2385, %v2384
  %v2576 = vpack.c.b16 %v2387, %v2386
  %v2577 = vpack.c.b16 %v2389, %v2388
  %v2578 = vpack.c.b16 %v2391, %v2390
  %v2579 = vpack.c.b16 %v2393, %v2392
  %v2580 = vpack.c.b16 %v2395, %v2394
  %v2581 = vpack.c.b16 %v2397, %v2396
  %v2582 = vpack.c.b16 %v2399, %v2398
  %v2583 = vpack.c.b16 %v2401, %v2400
  %v2584 = vpack.c.b16 %v2403, %v2402
  %v2585 = vpack.c.b16 %v2405, %v2404
  %v2586 = vpack.c.b16 %v2407, %v2406
  %v2587 = vpack.c.b16 %v2409, %v2408
  %v2588 = vpack.c.b16 %v2411, %v2410
  %v2589 = vpack.c.b16 %v2413, %v2412
  %v2590 = vpack.c.b16 %v2415, %v2414
  %v2591 = vpack.c.b16 %v2417, %v2416
  %v2592 = vpack.c.b16 %v2419, %v2418
  %v2593 = vpack.c.b16 %v2421, %v2420
  %v2594 = vpack.c.b16 %v2423, %v2422
  %v2595 = vpack.c.b16 %v2425, %v2424
  %v2596 = vpack.c.b16 %v2427, %v2426
  %v2597 = vpack.c.b16 %v2429, %v2428
  %v2598 = vpack.c.b16 %v2431, %v2430
  %v2599 = vpack.c.b16 %v2433, %v2432
  %v2600 = vpack.c.b16 %v2435, %v2434
  %v2601 = vpack.c.b16 %v2437, %v2436
  %v2602 = vpack.c.b16 %v2439, %v2438
  %v2603 = vpack.c.b16 %v2441, %v2440
  %v2604 = vpack.c.b16 %v2443, %v2442
  %v2605 = vpack.c.b16 %v2445, %v2444
  %v2606 = vpack.c.b16 %v2447, %v2446
  %v2607 = vpack.c.b16 %v2449, %v2448
  %v2608 = vpack.c.b16 %v2451, %v2450
  %v2609 = vpack.c.b16 %v2453, %v2452
  %v2610 = vpack.c.b16 %v2455, %v2454
  %v2611 = vpack.c.b16 %v2457, %v2456
  %v2612 = vpack.c.b16 %v2459, %v2458
  %v2613 = vpack.c.b16 %v2461, %v2460
  %v2614 = vpack.c.b16 %v2463, %v2462
  %v2615 = vpack.c.b16 %v2465, %v2464
  %v2616 = vpack.c.b16 %v2467, %v2466
  %v2617 = vpack.c.b16 %v2469, %v2468
  %v2618 = vpack.c.b16 %v2471, %v2470
  %v2619 = vpack.c.b16 %v2473, %v2472
  %v2620 = vpack.c.b16 %v2475, %v2474
  %v2621 = vpack.c.b16 %v2477, %v2476
  %v2622 = vpack.c.b16 %v2479, %v2478
  %v2623 = vpack.c.b16 %v2481, %v2480
  %v2624 = vpack.c.b16 %v2483, %v2482
  %v2625 = vpack.c.b16 %v2485, %v2484
  %v2626 = vpack.c.b16 %v2487, %v2486
  %v2627 = vpack.c.b16 %v2489, %v2488
  %v2628 = vpack.c.b16 %v2491, %v2490
  %v2629 = vpack.c.b16 %v2493, %v2492
  %v2630 = vpack.c.b16 %v2495, %v2494
  %v2631 = vpack.c.b16 %v2497, %v2496
  %v2632 = vpack.c.b16 %v2499, %v2498
  %v2633 = vpack.c.b16 %v2501, %v2500
  %v2634 = vpack.c.b16 %v2503, %v2502
  %v2635 = vpack.c.b16 %v2505, %v2504
  %v2636 = vpack.c.b16 %v2507, %v2506
  %v2637 = vpack.c.b16 %v2509, %v2508
  %2766 = vmatpush.bf16.msra.mxu0 %v2517
  %2767 = vmatpush.bf16.msra.mxu0 %v2516
  %2768 = vmatpush.bf16.msra.mxu0 %v2515
  %2769 = vmatpush.bf16.msra.mxu0 %v2514
  %2770 = vmatpush.bf16.msra.mxu0 %v2513
  %2771 = vmatpush.bf16.msra.mxu0 %v2512
  %2772 = vmatpush.bf16.msra.mxu0 %v2511
  %2773 = vmatpush.bf16.msra.mxu0 %v2510
  %2774 = vmatmul.bf16.gmra.mxu0 %v1486
  %v2775 = vpop.f32.mrf.mxu0
  %v2776 = vadd.f32 %v561, %v2775
  %v2777 = vpop.f32.mrf.mxu0
  %v2778 = vadd.f32 %v566, %v2777
  %2779 = vmatmul.bf16.gmra.mxu0 %v1502
  %v2780 = vpop.f32.mrf.mxu0
  %v2781 = vadd.f32 %v571, %v2780
  %v2782 = vpop.f32.mrf.mxu0
  %v2783 = vadd.f32 %v576, %v2782
  %2784 = vmatmul.bf16.gmra.mxu0 %v1518
  %v2785 = vpop.f32.mrf.mxu0
  %v2786 = vadd.f32 %v581, %v2785
  %v2787 = vpop.f32.mrf.mxu0
  %v2788 = vadd.f32 %v586, %v2787
  %2789 = vmatmul.bf16.gmra.mxu0 %v1534
  %v2790 = vpop.f32.mrf.mxu0
  %v2791 = vadd.f32 %v591, %v2790
  %v2792 = vpop.f32.mrf.mxu0
  %v2793 = vadd.f32 %v596, %v2792
  %2794 = vmatmul.bf16.gmra.mxu0 %v1550
  %v2795 = vpop.f32.mrf.mxu0
  %v2796 = vadd.f32 %v601, %v2795
  %v2797 = vpop.f32.mrf.mxu0
  %v2798 = vadd.f32 %v606, %v2797
  %2799 = vmatmul.bf16.gmra.mxu0 %v1566
  %v2800 = vpop.f32.mrf.mxu0
  %v2801 = vadd.f32 %v611, %v2800
  %v2802 = vpop.f32.mrf.mxu0
  %v2803 = vadd.f32 %v616, %v2802
  %2804 = vmatmul.bf16.gmra.mxu0 %v1582
  %v2805 = vpop.f32.mrf.mxu0
  %v2806 = vadd.f32 %v621, %v2805
  %v2807 = vpop.f32.mrf.mxu0
  %v2808 = vadd.f32 %v626, %v2807
  %2809 = vmatmul.bf16.gmra.mxu0 %v1598
  %v2810 = vpop.f32.mrf.mxu0
  %v2811 = vadd.f32 %v631, %v2810
  %v2812 = vpop.f32.mrf.mxu0
  %v2813 = vadd.f32 %v636, %v2812
  %2814 = vmatmul.bf16.gmra.mxu0 %v1614
  %v2815 = vpop.f32.mrf.mxu0
  %v2816 = vadd.f32 %v641, %v2815
  %v2817 = vpop.f32.mrf.mxu0
  %v2818 = vadd.f32 %v646, %v2817
  %2819 = vmatmul.bf16.gmra.mxu0 %v1630
  %v2820 = vpop.f32.mrf.mxu0
  %v2821 = vadd.f32 %v651, %v2820
  %v2822 = vpop.f32.mrf.mxu0
  %v2823 = vadd.f32 %v656, %v2822
  %2824 = vmatmul.bf16.gmra.mxu0 %v1646
  %v2825 = vpop.f32.mrf.mxu0
  %v2826 = vadd.f32 %v661, %v2825
  %v2827 = vpop.f32.mrf.mxu0
  %v2828 = vadd.f32 %v666, %v2827
  %2829 = vmatmul.bf16.gmra.mxu0 %v1662
  %v2830 = vpop.f32.mrf.mxu0
  %v2831 = vadd.f32 %v671, %v2830
  %v2832 = vpop.f32.mrf.mxu0
  %v2833 = vadd.f32 %v676, %v2832
  %2834 = vmatmul.bf16.gmra.mxu0 %v1678
  %v2835 = vpop.f32.mrf.mxu0
  %v2836 = vadd.f32 %v681, %v2835
  %v2837 = vpop.f32.mrf.mxu0
  %v2838 = vadd.f32 %v686, %v2837
  %2839 = vmatmul.bf16.gmra.mxu0 %v1694
  %v2840 = vpop.f32.mrf.mxu0
  %v2841 = vadd.f32 %v691, %v2840
  %v2842 = vpop.f32.mrf.mxu0
  %v2843 = vadd.f32 %v696, %v2842
  %2844 = vmatmul.bf16.gmra.mxu0 %v1710
  %v2845 = vpop.f32.mrf.mxu0
  %v2846 = vadd.f32 %v701, %v2845
  %v2847 = vpop.f32.mrf.mxu0
  %v2848 = vadd.f32 %v706, %v2847
  %2849 = vmatmul.bf16.gmra.mxu0 %v1726
  %v2850 = vpop.f32.mrf.mxu0
  %v2851 = vadd.f32 %v711, %v2850
  %v2852 = vpop.f32.mrf.mxu0
  %v2853 = vadd.f32 %v716, %v2852
  %2854 = vdwg.mxu0
  %2855 = vmatpush.bf16.msra.mxu0 %v2525
  %2856 = vmatpush.bf16.msra.mxu0 %v2524
  %2857 = vmatpush.bf16.msra.mxu0 %v2523
  %2858 = vmatpush.bf16.msra.mxu0 %v2522
  %2859 = vmatpush.bf16.msra.mxu0 %v2521
  %2860 = vmatpush.bf16.msra.mxu0 %v2520
  %2861 = vmatpush.bf16.msra.mxu0 %v2519
  %2862 = vmatpush.bf16.msra.mxu0 %v2518
  %2863 = vmatmul.bf16.gmra.mxu0 %v1487
  %v2864 = vpop.f32.mrf.mxu0
  %v2865 = vadd.f32 %v2776, %v2864
  %v2866 = vpop.f32.mrf.mxu0
  %v2867 = vadd.f32 %v2778, %v2866
  %2868 = vmatmul.bf16.gmra.mxu0 %v1503
  %v2869 = vpop.f32.mrf.mxu0
  %v2870 = vadd.f32 %v2781, %v2869
  %v2871 = vpop.f32.mrf.mxu0
  %v2872 = vadd.f32 %v2783, %v2871
  %2873 = vmatmul.bf16.gmra.mxu0 %v1519
  %v2874 = vpop.f32.mrf.mxu0
  %v2875 = vadd.f32 %v2786, %v2874
  %v2876 = vpop.f32.mrf.mxu0
  %v2877 = vadd.f32 %v2788, %v2876
  %2878 = vmatmul.bf16.gmra.mxu0 %v1535
  %v2879 = vpop.f32.mrf.mxu0
  %v2880 = vadd.f32 %v2791, %v2879
  %v2881 = vpop.f32.mrf.mxu0
  %v2882 = vadd.f32 %v2793, %v2881
  %2883 = vmatmul.bf16.gmra.mxu0 %v1551
  %v2884 = vpop.f32.mrf.mxu0
  %v2885 = vadd.f32 %v2796, %v2884
  %v2886 = vpop.f32.mrf.mxu0
  %v2887 = vadd.f32 %v2798, %v2886
  %2888 = vmatmul.bf16.gmra.mxu0 %v1567
  %v2889 = vpop.f32.mrf.mxu0
  %v2890 = vadd.f32 %v2801, %v2889
  %v2891 = vpop.f32.mrf.mxu0
  %v2892 = vadd.f32 %v2803, %v2891
  %2893 = vmatmul.bf16.gmra.mxu0 %v1583
  %v2894 = vpop.f32.mrf.mxu0
  %v2895 = vadd.f32 %v2806, %v2894
  %v2896 = vpop.f32.mrf.mxu0
  %v2897 = vadd.f32 %v2808, %v2896
  %2898 = vmatmul.bf16.gmra.mxu0 %v1599
  %v2899 = vpop.f32.mrf.mxu0
  %v2900 = vadd.f32 %v2811, %v2899
  %v2901 = vpop.f32.mrf.mxu0
  %v2902 = vadd.f32 %v2813, %v2901
  %2903 = vmatmul.bf16.gmra.mxu0 %v1615
  %v2904 = vpop.f32.mrf.mxu0
  %v2905 = vadd.f32 %v2816, %v2904
  %v2906 = vpop.f32.mrf.mxu0
  %v2907 = vadd.f32 %v2818, %v2906
  %2908 = vmatmul.bf16.gmra.mxu0 %v1631
  %v2909 = vpop.f32.mrf.mxu0
  %v2910 = vadd.f32 %v2821, %v2909
  %v2911 = vpop.f32.mrf.mxu0
  %v2912 = vadd.f32 %v2823, %v2911
  %2913 = vmatmul.bf16.gmra.mxu0 %v1647
  %v2914 = vpop.f32.mrf.mxu0
  %v2915 = vadd.f32 %v2826, %v2914
  %v2916 = vpop.f32.mrf.mxu0
  %v2917 = vadd.f32 %v2828, %v2916
  %2918 = vmatmul.bf16.gmra.mxu0 %v1663
  %v2919 = vpop.f32.mrf.mxu0
  %v2920 = vadd.f32 %v2831, %v2919
  %v2921 = vpop.f32.mrf.mxu0
  %v2922 = vadd.f32 %v2833, %v2921
  %2923 = vmatmul.bf16.gmra.mxu0 %v1679
  %v2924 = vpop.f32.mrf.mxu0
  %v2925 = vadd.f32 %v2836, %v2924
  %v2926 = vpop.f32.mrf.mxu0
  %v2927 = vadd.f32 %v2838, %v2926
  %2928 = vmatmul.bf16.gmra.mxu0 %v1695
  %v2929 = vpop.f32.mrf.mxu0
  %v2930 = vadd.f32 %v2841, %v2929
  %v2931 = vpop.f32.mrf.mxu0
  %v2932 = vadd.f32 %v2843, %v2931
  %2933 = vmatmul.bf16.gmra.mxu0 %v1711
  %v2934 = vpop.f32.mrf.mxu0
  %v2935 = vadd.f32 %v2846, %v2934
  %v2936 = vpop.f32.mrf.mxu0
  %v2937 = vadd.f32 %v2848, %v2936
  %2938 = vmatmul.bf16.gmra.mxu0 %v1727
  %v2939 = vpop.f32.mrf.mxu0
  %v2940 = vadd.f32 %v2851, %v2939
  %v2941 = vpop.f32.mrf.mxu0
  %v2942 = vadd.f32 %v2853, %v2941
  %2943 = vdwg.mxu0
  %2944 = vmatpush.bf16.msra.mxu0 %v2533
  %2945 = vmatpush.bf16.msra.mxu0 %v2532
  %2946 = vmatpush.bf16.msra.mxu0 %v2531
  %2947 = vmatpush.bf16.msra.mxu0 %v2530
  %2948 = vmatpush.bf16.msra.mxu0 %v2529
  %2949 = vmatpush.bf16.msra.mxu0 %v2528
  %2950 = vmatpush.bf16.msra.mxu0 %v2527
  %2951 = vmatpush.bf16.msra.mxu0 %v2526
  %2952 = vmatmul.bf16.gmra.mxu0 %v1488
  %v2953 = vpop.f32.mrf.mxu0
  %v2954 = vadd.f32 %v2865, %v2953
  %v2955 = vpop.f32.mrf.mxu0
  %v2956 = vadd.f32 %v2867, %v2955
  %2957 = vmatmul.bf16.gmra.mxu0 %v1504
  %v2958 = vpop.f32.mrf.mxu0
  %v2959 = vadd.f32 %v2870, %v2958
  %v2960 = vpop.f32.mrf.mxu0
  %v2961 = vadd.f32 %v2872, %v2960
  %2962 = vmatmul.bf16.gmra.mxu0 %v1520
  %v2963 = vpop.f32.mrf.mxu0
  %v2964 = vadd.f32 %v2875, %v2963
  %v2965 = vpop.f32.mrf.mxu0
  %v2966 = vadd.f32 %v2877, %v2965
  %2967 = vmatmul.bf16.gmra.mxu0 %v1536
  %v2968 = vpop.f32.mrf.mxu0
  %v2969 = vadd.f32 %v2880, %v2968
  %v2970 = vpop.f32.mrf.mxu0
  %v2971 = vadd.f32 %v2882, %v2970
  %2972 = vmatmul.bf16.gmra.mxu0 %v1552
  %v2973 = vpop.f32.mrf.mxu0
  %v2974 = vadd.f32 %v2885, %v2973
  %v2975 = vpop.f32.mrf.mxu0
  %v2976 = vadd.f32 %v2887, %v2975
  %2977 = vmatmul.bf16.gmra.mxu0 %v1568
  %v2978 = vpop.f32.mrf.mxu0
  %v2979 = vadd.f32 %v2890, %v2978
  %v2980 = vpop.f32.mrf.mxu0
  %v2981 = vadd.f32 %v2892, %v2980
  %2982 = vmatmul.bf16.gmra.mxu0 %v1584
  %v2983 = vpop.f32.mrf.mxu0
  %v2984 = vadd.f32 %v2895, %v2983
  %v2985 = vpop.f32.mrf.mxu0
  %v2986 = vadd.f32 %v2897, %v2985
  %2987 = vmatmul.bf16.gmra.mxu0 %v1600
  %v2988 = vpop.f32.mrf.mxu0
  %v2989 = vadd.f32 %v2900, %v2988
  %v2990 = vpop.f32.mrf.mxu0
  %v2991 = vadd.f32 %v2902, %v2990
  %2992 = vmatmul.bf16.gmra.mxu0 %v1616
  %v2993 = vpop.f32.mrf.mxu0
  %v2994 = vadd.f32 %v2905, %v2993
  %v2995 = vpop.f32.mrf.mxu0
  %v2996 = vadd.f32 %v2907, %v2995
  %2997 = vmatmul.bf16.gmra.mxu0 %v1632
  %v2998 = vpop.f32.mrf.mxu0
  %v2999 = vadd.f32 %v2910, %v2998
  %v3000 = vpop.f32.mrf.mxu0
  %v3001 = vadd.f32 %v2912, %v3000
  %3002 = vmatmul.bf16.gmra.mxu0 %v1648
  %v3003 = vpop.f32.mrf.mxu0
  %v3004 = vadd.f32 %v2915, %v3003
  %v3005 = vpop.f32.mrf.mxu0
  %v3006 = vadd.f32 %v2917, %v3005
  %3007 = vmatmul.bf16.gmra.mxu0 %v1664
  %v3008 = vpop.f32.mrf.mxu0
  %v3009 = vadd.f32 %v2920, %v3008
  %v3010 = vpop.f32.mrf.mxu0
  %v3011 = vadd.f32 %v2922, %v3010
  %3012 = vmatmul.bf16.gmra.mxu0 %v1680
  %v3013 = vpop.f32.mrf.mxu0
  %v3014 = vadd.f32 %v2925, %v3013
  %v3015 = vpop.f32.mrf.mxu0
  %v3016 = vadd.f32 %v2927, %v3015
  %3017 = vmatmul.bf16.gmra.mxu0 %v1696
  %v3018 = vpop.f32.mrf.mxu0
  %v3019 = vadd.f32 %v2930, %v3018
  %v3020 = vpop.f32.mrf.mxu0
  %v3021 = vadd.f32 %v2932, %v3020
  %3022 = vmatmul.bf16.gmra.mxu0 %v1712
  %v3023 = vpop.f32.mrf.mxu0
  %v3024 = vadd.f32 %v2935, %v3023
  %v3025 = vpop.f32.mrf.mxu0
  %v3026 = vadd.f32 %v2937, %v3025
  %3027 = vmatmul.bf16.gmra.mxu0 %v1728
  %v3028 = vpop.f32.mrf.mxu0
  %v3029 = vadd.f32 %v2940, %v3028
  %v3030 = vpop.f32.mrf.mxu0
  %v3031 = vadd.f32 %v2942, %v3030
  %3032 = vdwg.mxu0
  %3033 = vmatpush.bf16.msra.mxu0 %v2541
  %3034 = vmatpush.bf16.msra.mxu0 %v2540
  %3035 = vmatpush.bf16.msra.mxu0 %v2539
  %3036 = vmatpush.bf16.msra.mxu0 %v2538
  %3037 = vmatpush.bf16.msra.mxu0 %v2537
  %3038 = vmatpush.bf16.msra.mxu0 %v2536
  %3039 = vmatpush.bf16.msra.mxu0 %v2535
  %3040 = vmatpush.bf16.msra.mxu0 %v2534
  %3041 = vmatmul.bf16.gmra.mxu0 %v1489
  %v3042 = vpop.f32.mrf.mxu0
  %v3043 = vadd.f32 %v2954, %v3042
  %v3044 = vpop.f32.mrf.mxu0
  %v3045 = vadd.f32 %v2956, %v3044
  %3046 = vmatmul.bf16.gmra.mxu0 %v1505
  %v3047 = vpop.f32.mrf.mxu0
  %v3048 = vadd.f32 %v2959, %v3047
  %v3049 = vpop.f32.mrf.mxu0
  %v3050 = vadd.f32 %v2961, %v3049
  %3051 = vmatmul.bf16.gmra.mxu0 %v1521
  %v3052 = vpop.f32.mrf.mxu0
  %v3053 = vadd.f32 %v2964, %v3052
  %v3054 = vpop.f32.mrf.mxu0
  %v3055 = vadd.f32 %v2966, %v3054
  %3056 = vmatmul.bf16.gmra.mxu0 %v1537
  %v3057 = vpop.f32.mrf.mxu0
  %v3058 = vadd.f32 %v2969, %v3057
  %v3059 = vpop.f32.mrf.mxu0
  %v3060 = vadd.f32 %v2971, %v3059
  %3061 = vmatmul.bf16.gmra.mxu0 %v1553
  %v3062 = vpop.f32.mrf.mxu0
  %v3063 = vadd.f32 %v2974, %v3062
  %v3064 = vpop.f32.mrf.mxu0
  %v3065 = vadd.f32 %v2976, %v3064
  %3066 = vmatmul.bf16.gmra.mxu0 %v1569
  %v3067 = vpop.f32.mrf.mxu0
  %v3068 = vadd.f32 %v2979, %v3067
  %v3069 = vpop.f32.mrf.mxu0
  %v3070 = vadd.f32 %v2981, %v3069
  %3071 = vmatmul.bf16.gmra.mxu0 %v1585
  %v3072 = vpop.f32.mrf.mxu0
  %v3073 = vadd.f32 %v2984, %v3072
  %v3074 = vpop.f32.mrf.mxu0
  %v3075 = vadd.f32 %v2986, %v3074
  %3076 = vmatmul.bf16.gmra.mxu0 %v1601
  %v3077 = vpop.f32.mrf.mxu0
  %v3078 = vadd.f32 %v2989, %v3077
  %v3079 = vpop.f32.mrf.mxu0
  %v3080 = vadd.f32 %v2991, %v3079
  %3081 = vmatmul.bf16.gmra.mxu0 %v1617
  %v3082 = vpop.f32.mrf.mxu0
  %v3083 = vadd.f32 %v2994, %v3082
  %v3084 = vpop.f32.mrf.mxu0
  %v3085 = vadd.f32 %v2996, %v3084
  %3086 = vmatmul.bf16.gmra.mxu0 %v1633
  %v3087 = vpop.f32.mrf.mxu0
  %v3088 = vadd.f32 %v2999, %v3087
  %v3089 = vpop.f32.mrf.mxu0
  %v3090 = vadd.f32 %v3001, %v3089
  %3091 = vmatmul.bf16.gmra.mxu0 %v1649
  %v3092 = vpop.f32.mrf.mxu0
  %v3093 = vadd.f32 %v3004, %v3092
  %v3094 = vpop.f32.mrf.mxu0
  %v3095 = vadd.f32 %v3006, %v3094
  %3096 = vmatmul.bf16.gmra.mxu0 %v1665
  %v3097 = vpop.f32.mrf.mxu0
  %v3098 = vadd.f32 %v3009, %v3097
  %v3099 = vpop.f32.mrf.mxu0
  %v3100 = vadd.f32 %v3011, %v3099
  %3101 = vmatmul.bf16.gmra.mxu0 %v1681
  %v3102 = vpop.f32.mrf.mxu0
  %v3103 = vadd.f32 %v3014, %v3102
  %v3104 = vpop.f32.mrf.mxu0
  %v3105 = vadd.f32 %v3016, %v3104
  %3106 = vmatmul.bf16.gmra.mxu0 %v1697
  %v3107 = vpop.f32.mrf.mxu0
  %v3108 = vadd.f32 %v3019, %v3107
  %v3109 = vpop.f32.mrf.mxu0
  %v3110 = vadd.f32 %v3021, %v3109
  %3111 = vmatmul.bf16.gmra.mxu0 %v1713
  %v3112 = vpop.f32.mrf.mxu0
  %v3113 = vadd.f32 %v3024, %v3112
  %v3114 = vpop.f32.mrf.mxu0
  %v3115 = vadd.f32 %v3026, %v3114
  %3116 = vmatmul.bf16.gmra.mxu0 %v1729
  %v3117 = vpop.f32.mrf.mxu0
  %v3118 = vadd.f32 %v3029, %v3117
  %v3119 = vpop.f32.mrf.mxu0
  %v3120 = vadd.f32 %v3031, %v3119
  %3121 = vdwg.mxu0
  %3122 = vmatpush.bf16.msra.mxu0 %v2549
  %3123 = vmatpush.bf16.msra.mxu0 %v2548
  %3124 = vmatpush.bf16.msra.mxu0 %v2547
  %3125 = vmatpush.bf16.msra.mxu0 %v2546
  %3126 = vmatpush.bf16.msra.mxu0 %v2545
  %3127 = vmatpush.bf16.msra.mxu0 %v2544
  %3128 = vmatpush.bf16.msra.mxu0 %v2543
  %3129 = vmatpush.bf16.msra.mxu0 %v2542
  %3130 = vmatmul.bf16.gmra.mxu0 %v1490
  %v3131 = vpop.f32.mrf.mxu0
  %v3132 = vadd.f32 %v3043, %v3131
  %v3133 = vpop.f32.mrf.mxu0
  %v3134 = vadd.f32 %v3045, %v3133
  %3135 = vmatmul.bf16.gmra.mxu0 %v1506
  %v3136 = vpop.f32.mrf.mxu0
  %v3137 = vadd.f32 %v3048, %v3136
  %v3138 = vpop.f32.mrf.mxu0
  %v3139 = vadd.f32 %v3050, %v3138
  %3140 = vmatmul.bf16.gmra.mxu0 %v1522
  %v3141 = vpop.f32.mrf.mxu0
  %v3142 = vadd.f32 %v3053, %v3141
  %v3143 = vpop.f32.mrf.mxu0
  %v3144 = vadd.f32 %v3055, %v3143
  %3145 = vmatmul.bf16.gmra.mxu0 %v1538
  %v3146 = vpop.f32.mrf.mxu0
  %v3147 = vadd.f32 %v3058, %v3146
  %v3148 = vpop.f32.mrf.mxu0
  %v3149 = vadd.f32 %v3060, %v3148
  %3150 = vmatmul.bf16.gmra.mxu0 %v1554
  %v3151 = vpop.f32.mrf.mxu0
  %v3152 = vadd.f32 %v3063, %v3151
  %v3153 = vpop.f32.mrf.mxu0
  %v3154 = vadd.f32 %v3065, %v3153
  %3155 = vmatmul.bf16.gmra.mxu0 %v1570
  %v3156 = vpop.f32.mrf.mxu0
  %v3157 = vadd.f32 %v3068, %v3156
  %v3158 = vpop.f32.mrf.mxu0
  %v3159 = vadd.f32 %v3070, %v3158
  %3160 = vmatmul.bf16.gmra.mxu0 %v1586
  %v3161 = vpop.f32.mrf.mxu0
  %v3162 = vadd.f32 %v3073, %v3161
  %v3163 = vpop.f32.mrf.mxu0
  %v3164 = vadd.f32 %v3075, %v3163
  %3165 = vmatmul.bf16.gmra.mxu0 %v1602
  %v3166 = vpop.f32.mrf.mxu0
  %v3167 = vadd.f32 %v3078, %v3166
  %v3168 = vpop.f32.mrf.mxu0
  %v3169 = vadd.f32 %v3080, %v3168
  %3170 = vmatmul.bf16.gmra.mxu0 %v1618
  %v3171 = vpop.f32.mrf.mxu0
  %v3172 = vadd.f32 %v3083, %v3171
  %v3173 = vpop.f32.mrf.mxu0
  %v3174 = vadd.f32 %v3085, %v3173
  %3175 = vmatmul.bf16.gmra.mxu0 %v1634
  %v3176 = vpop.f32.mrf.mxu0
  %v3177 = vadd.f32 %v3088, %v3176
  %v3178 = vpop.f32.mrf.mxu0
  %v3179 = vadd.f32 %v3090, %v3178
  %3180 = vmatmul.bf16.gmra.mxu0 %v1650
  %v3181 = vpop.f32.mrf.mxu0
  %v3182 = vadd.f32 %v3093, %v3181
  %v3183 = vpop.f32.mrf.mxu0
  %v3184 = vadd.f32 %v3095, %v3183
  %3185 = vmatmul.bf16.gmra.mxu0 %v1666
  %v3186 = vpop.f32.mrf.mxu0
  %v3187 = vadd.f32 %v3098, %v3186
  %v3188 = vpop.f32.mrf.mxu0
  %v3189 = vadd.f32 %v3100, %v3188
  %3190 = vmatmul.bf16.gmra.mxu0 %v1682
  %v3191 = vpop.f32.mrf.mxu0
  %v3192 = vadd.f32 %v3103, %v3191
  %v3193 = vpop.f32.mrf.mxu0
  %v3194 = vadd.f32 %v3105, %v3193
  %3195 = vmatmul.bf16.gmra.mxu0 %v1698
  %v3196 = vpop.f32.mrf.mxu0
  %v3197 = vadd.f32 %v3108, %v3196
  %v3198 = vpop.f32.mrf.mxu0
  %v3199 = vadd.f32 %v3110, %v3198
  %3200 = vmatmul.bf16.gmra.mxu0 %v1714
  %v3201 = vpop.f32.mrf.mxu0
  %v3202 = vadd.f32 %v3113, %v3201
  %v3203 = vpop.f32.mrf.mxu0
  %v3204 = vadd.f32 %v3115, %v3203
  %3205 = vmatmul.bf16.gmra.mxu0 %v1730
  %v3206 = vpop.f32.mrf.mxu0
  %v3207 = vadd.f32 %v3118, %v3206
  %v3208 = vpop.f32.mrf.mxu0
  %v3209 = vadd.f32 %v3120, %v3208
  %3210 = vdwg.mxu0
  %3211 = vmatpush.bf16.msra.mxu0 %v2557
  %3212 = vmatpush.bf16.msra.mxu0 %v2556
  %3213 = vmatpush.bf16.msra.mxu0 %v2555
  %3214 = vmatpush.bf16.msra.mxu0 %v2554
  %3215 = vmatpush.bf16.msra.mxu0 %v2553
  %3216 = vmatpush.bf16.msra.mxu0 %v2552
  %3217 = vmatpush.bf16.msra.mxu0 %v2551
  %3218 = vmatpush.bf16.msra.mxu0 %v2550
  %3219 = vmatmul.bf16.gmra.mxu0 %v1491
  %v3220 = vpop.f32.mrf.mxu0
  %v3221 = vadd.f32 %v3132, %v3220
  %v3222 = vpop.f32.mrf.mxu0
  %v3223 = vadd.f32 %v3134, %v3222
  %3224 = vmatmul.bf16.gmra.mxu0 %v1507
  %v3225 = vpop.f32.mrf.mxu0
  %v3226 = vadd.f32 %v3137, %v3225
  %v3227 = vpop.f32.mrf.mxu0
  %v3228 = vadd.f32 %v3139, %v3227
  %3229 = vmatmul.bf16.gmra.mxu0 %v1523
  %v3230 = vpop.f32.mrf.mxu0
  %v3231 = vadd.f32 %v3142, %v3230
  %v3232 = vpop.f32.mrf.mxu0
  %v3233 = vadd.f32 %v3144, %v3232
  %3234 = vmatmul.bf16.gmra.mxu0 %v1539
  %v3235 = vpop.f32.mrf.mxu0
  %v3236 = vadd.f32 %v3147, %v3235
  %v3237 = vpop.f32.mrf.mxu0
  %v3238 = vadd.f32 %v3149, %v3237
  %3239 = vmatmul.bf16.gmra.mxu0 %v1555
  %v3240 = vpop.f32.mrf.mxu0
  %v3241 = vadd.f32 %v3152, %v3240
  %v3242 = vpop.f32.mrf.mxu0
  %v3243 = vadd.f32 %v3154, %v3242
  %3244 = vmatmul.bf16.gmra.mxu0 %v1571
  %v3245 = vpop.f32.mrf.mxu0
  %v3246 = vadd.f32 %v3157, %v3245
  %v3247 = vpop.f32.mrf.mxu0
  %v3248 = vadd.f32 %v3159, %v3247
  %3249 = vmatmul.bf16.gmra.mxu0 %v1587
  %v3250 = vpop.f32.mrf.mxu0
  %v3251 = vadd.f32 %v3162, %v3250
  %v3252 = vpop.f32.mrf.mxu0
  %v3253 = vadd.f32 %v3164, %v3252
  %3254 = vmatmul.bf16.gmra.mxu0 %v1603
  %v3255 = vpop.f32.mrf.mxu0
  %v3256 = vadd.f32 %v3167, %v3255
  %v3257 = vpop.f32.mrf.mxu0
  %v3258 = vadd.f32 %v3169, %v3257
  %3259 = vmatmul.bf16.gmra.mxu0 %v1619
  %v3260 = vpop.f32.mrf.mxu0
  %v3261 = vadd.f32 %v3172, %v3260
  %v3262 = vpop.f32.mrf.mxu0
  %v3263 = vadd.f32 %v3174, %v3262
  %3264 = vmatmul.bf16.gmra.mxu0 %v1635
  %v3265 = vpop.f32.mrf.mxu0
  %v3266 = vadd.f32 %v3177, %v3265
  %v3267 = vpop.f32.mrf.mxu0
  %v3268 = vadd.f32 %v3179, %v3267
  %3269 = vmatmul.bf16.gmra.mxu0 %v1651
  %v3270 = vpop.f32.mrf.mxu0
  %v3271 = vadd.f32 %v3182, %v3270
  %v3272 = vpop.f32.mrf.mxu0
  %v3273 = vadd.f32 %v3184, %v3272
  %3274 = vmatmul.bf16.gmra.mxu0 %v1667
  %v3275 = vpop.f32.mrf.mxu0
  %v3276 = vadd.f32 %v3187, %v3275
  %v3277 = vpop.f32.mrf.mxu0
  %v3278 = vadd.f32 %v3189, %v3277
  %3279 = vmatmul.bf16.gmra.mxu0 %v1683
  %v3280 = vpop.f32.mrf.mxu0
  %v3281 = vadd.f32 %v3192, %v3280
  %v3282 = vpop.f32.mrf.mxu0
  %v3283 = vadd.f32 %v3194, %v3282
  %3284 = vmatmul.bf16.gmra.mxu0 %v1699
  %v3285 = vpop.f32.mrf.mxu0
  %v3286 = vadd.f32 %v3197, %v3285
  %v3287 = vpop.f32.mrf.mxu0
  %v3288 = vadd.f32 %v3199, %v3287
  %3289 = vmatmul.bf16.gmra.mxu0 %v1715
  %v3290 = vpop.f32.mrf.mxu0
  %v3291 = vadd.f32 %v3202, %v3290
  %v3292 = vpop.f32.mrf.mxu0
  %v3293 = vadd.f32 %v3204, %v3292
  %3294 = vmatmul.bf16.gmra.mxu0 %v1731
  %v3295 = vpop.f32.mrf.mxu0
  %v3296 = vadd.f32 %v3207, %v3295
  %v3297 = vpop.f32.mrf.mxu0
  %v3298 = vadd.f32 %v3209, %v3297
  %3299 = vdwg.mxu0
  %3300 = vmatpush.bf16.msra.mxu0 %v2565
  %3301 = vmatpush.bf16.msra.mxu0 %v2564
  %3302 = vmatpush.bf16.msra.mxu0 %v2563
  %3303 = vmatpush.bf16.msra.mxu0 %v2562
  %3304 = vmatpush.bf16.msra.mxu0 %v2561
  %3305 = vmatpush.bf16.msra.mxu0 %v2560
  %3306 = vmatpush.bf16.msra.mxu0 %v2559
  %3307 = vmatpush.bf16.msra.mxu0 %v2558
  %3308 = vmatmul.bf16.gmra.mxu0 %v1492
  %v3309 = vpop.f32.mrf.mxu0
  %v3310 = vadd.f32 %v3221, %v3309
  %v3311 = vpop.f32.mrf.mxu0
  %v3312 = vadd.f32 %v3223, %v3311
  %3313 = vmatmul.bf16.gmra.mxu0 %v1508
  %v3314 = vpop.f32.mrf.mxu0
  %v3315 = vadd.f32 %v3226, %v3314
  %v3316 = vpop.f32.mrf.mxu0
  %v3317 = vadd.f32 %v3228, %v3316
  %3318 = vmatmul.bf16.gmra.mxu0 %v1524
  %v3319 = vpop.f32.mrf.mxu0
  %v3320 = vadd.f32 %v3231, %v3319
  %v3321 = vpop.f32.mrf.mxu0
  %v3322 = vadd.f32 %v3233, %v3321
  %3323 = vmatmul.bf16.gmra.mxu0 %v1540
  %v3324 = vpop.f32.mrf.mxu0
  %v3325 = vadd.f32 %v3236, %v3324
  %v3326 = vpop.f32.mrf.mxu0
  %v3327 = vadd.f32 %v3238, %v3326
  %3328 = vmatmul.bf16.gmra.mxu0 %v1556
  %v3329 = vpop.f32.mrf.mxu0
  %v3330 = vadd.f32 %v3241, %v3329
  %v3331 = vpop.f32.mrf.mxu0
  %v3332 = vadd.f32 %v3243, %v3331
  %3333 = vmatmul.bf16.gmra.mxu0 %v1572
  %v3334 = vpop.f32.mrf.mxu0
  %v3335 = vadd.f32 %v3246, %v3334
  %v3336 = vpop.f32.mrf.mxu0
  %v3337 = vadd.f32 %v3248, %v3336
  %3338 = vmatmul.bf16.gmra.mxu0 %v1588
  %v3339 = vpop.f32.mrf.mxu0
  %v3340 = vadd.f32 %v3251, %v3339
  %v3341 = vpop.f32.mrf.mxu0
  %v3342 = vadd.f32 %v3253, %v3341
  %3343 = vmatmul.bf16.gmra.mxu0 %v1604
  %v3344 = vpop.f32.mrf.mxu0
  %v3345 = vadd.f32 %v3256, %v3344
  %v3346 = vpop.f32.mrf.mxu0
  %v3347 = vadd.f32 %v3258, %v3346
  %3348 = vmatmul.bf16.gmra.mxu0 %v1620
  %v3349 = vpop.f32.mrf.mxu0
  %v3350 = vadd.f32 %v3261, %v3349
  %v3351 = vpop.f32.mrf.mxu0
  %v3352 = vadd.f32 %v3263, %v3351
  %3353 = vmatmul.bf16.gmra.mxu0 %v1636
  %v3354 = vpop.f32.mrf.mxu0
  %v3355 = vadd.f32 %v3266, %v3354
  %v3356 = vpop.f32.mrf.mxu0
  %v3357 = vadd.f32 %v3268, %v3356
  %3358 = vmatmul.bf16.gmra.mxu0 %v1652
  %v3359 = vpop.f32.mrf.mxu0
  %v3360 = vadd.f32 %v3271, %v3359
  %v3361 = vpop.f32.mrf.mxu0
  %v3362 = vadd.f32 %v3273, %v3361
  %3363 = vmatmul.bf16.gmra.mxu0 %v1668
  %v3364 = vpop.f32.mrf.mxu0
  %v3365 = vadd.f32 %v3276, %v3364
  %v3366 = vpop.f32.mrf.mxu0
  %v3367 = vadd.f32 %v3278, %v3366
  %3368 = vmatmul.bf16.gmra.mxu0 %v1684
  %v3369 = vpop.f32.mrf.mxu0
  %v3370 = vadd.f32 %v3281, %v3369
  %v3371 = vpop.f32.mrf.mxu0
  %v3372 = vadd.f32 %v3283, %v3371
  %3373 = vmatmul.bf16.gmra.mxu0 %v1700
  %v3374 = vpop.f32.mrf.mxu0
  %v3375 = vadd.f32 %v3286, %v3374
  %v3376 = vpop.f32.mrf.mxu0
  %v3377 = vadd.f32 %v3288, %v3376
  %3378 = vmatmul.bf16.gmra.mxu0 %v1716
  %v3379 = vpop.f32.mrf.mxu0
  %v3380 = vadd.f32 %v3291, %v3379
  %v3381 = vpop.f32.mrf.mxu0
  %v3382 = vadd.f32 %v3293, %v3381
  %3383 = vmatmul.bf16.gmra.mxu0 %v1732
  %v3384 = vpop.f32.mrf.mxu0
  %v3385 = vadd.f32 %v3296, %v3384
  %v3386 = vpop.f32.mrf.mxu0
  %v3387 = vadd.f32 %v3298, %v3386
  %3388 = vdwg.mxu0
  %3389 = vmatpush.bf16.msra.mxu0 %v2573
  %3390 = vmatpush.bf16.msra.mxu0 %v2572
  %3391 = vmatpush.bf16.msra.mxu0 %v2571
  %3392 = vmatpush.bf16.msra.mxu0 %v2570
  %3393 = vmatpush.bf16.msra.mxu0 %v2569
  %3394 = vmatpush.bf16.msra.mxu0 %v2568
  %3395 = vmatpush.bf16.msra.mxu0 %v2567
  %3396 = vmatpush.bf16.msra.mxu0 %v2566
  %3397 = vmatmul.bf16.gmra.mxu0 %v1493
  %v3398 = vpop.f32.mrf.mxu0
  %v3399 = vadd.f32 %v3310, %v3398
  %v3400 = vpop.f32.mrf.mxu0
  %v3401 = vadd.f32 %v3312, %v3400
  %3402 = vmatmul.bf16.gmra.mxu0 %v1509
  %v3403 = vpop.f32.mrf.mxu0
  %v3404 = vadd.f32 %v3315, %v3403
  %v3405 = vpop.f32.mrf.mxu0
  %v3406 = vadd.f32 %v3317, %v3405
  %3407 = vmatmul.bf16.gmra.mxu0 %v1525
  %v3408 = vpop.f32.mrf.mxu0
  %v3409 = vadd.f32 %v3320, %v3408
  %v3410 = vpop.f32.mrf.mxu0
  %v3411 = vadd.f32 %v3322, %v3410
  %3412 = vmatmul.bf16.gmra.mxu0 %v1541
  %v3413 = vpop.f32.mrf.mxu0
  %v3414 = vadd.f32 %v3325, %v3413
  %v3415 = vpop.f32.mrf.mxu0
  %v3416 = vadd.f32 %v3327, %v3415
  %3417 = vmatmul.bf16.gmra.mxu0 %v1557
  %v3418 = vpop.f32.mrf.mxu0
  %v3419 = vadd.f32 %v3330, %v3418
  %v3420 = vpop.f32.mrf.mxu0
  %v3421 = vadd.f32 %v3332, %v3420
  %3422 = vmatmul.bf16.gmra.mxu0 %v1573
  %v3423 = vpop.f32.mrf.mxu0
  %v3424 = vadd.f32 %v3335, %v3423
  %v3425 = vpop.f32.mrf.mxu0
  %v3426 = vadd.f32 %v3337, %v3425
  %3427 = vmatmul.bf16.gmra.mxu0 %v1589
  %v3428 = vpop.f32.mrf.mxu0
  %v3429 = vadd.f32 %v3340, %v3428
  %v3430 = vpop.f32.mrf.mxu0
  %v3431 = vadd.f32 %v3342, %v3430
  %3432 = vmatmul.bf16.gmra.mxu0 %v1605
  %v3433 = vpop.f32.mrf.mxu0
  %v3434 = vadd.f32 %v3345, %v3433
  %v3435 = vpop.f32.mrf.mxu0
  %v3436 = vadd.f32 %v3347, %v3435
  %3437 = vmatmul.bf16.gmra.mxu0 %v1621
  %v3438 = vpop.f32.mrf.mxu0
  %v3439 = vadd.f32 %v3350, %v3438
  %v3440 = vpop.f32.mrf.mxu0
  %v3441 = vadd.f32 %v3352, %v3440
  %3442 = vmatmul.bf16.gmra.mxu0 %v1637
  %v3443 = vpop.f32.mrf.mxu0
  %v3444 = vadd.f32 %v3355, %v3443
  %v3445 = vpop.f32.mrf.mxu0
  %v3446 = vadd.f32 %v3357, %v3445
  %3447 = vmatmul.bf16.gmra.mxu0 %v1653
  %v3448 = vpop.f32.mrf.mxu0
  %v3449 = vadd.f32 %v3360, %v3448
  %v3450 = vpop.f32.mrf.mxu0
  %v3451 = vadd.f32 %v3362, %v3450
  %3452 = vmatmul.bf16.gmra.mxu0 %v1669
  %v3453 = vpop.f32.mrf.mxu0
  %v3454 = vadd.f32 %v3365, %v3453
  %v3455 = vpop.f32.mrf.mxu0
  %v3456 = vadd.f32 %v3367, %v3455
  %3457 = vmatmul.bf16.gmra.mxu0 %v1685
  %v3458 = vpop.f32.mrf.mxu0
  %v3459 = vadd.f32 %v3370, %v3458
  %v3460 = vpop.f32.mrf.mxu0
  %v3461 = vadd.f32 %v3372, %v3460
  %3462 = vmatmul.bf16.gmra.mxu0 %v1701
  %v3463 = vpop.f32.mrf.mxu0
  %v3464 = vadd.f32 %v3375, %v3463
  %v3465 = vpop.f32.mrf.mxu0
  %v3466 = vadd.f32 %v3377, %v3465
  %3467 = vmatmul.bf16.gmra.mxu0 %v1717
  %v3468 = vpop.f32.mrf.mxu0
  %v3469 = vadd.f32 %v3380, %v3468
  %v3470 = vpop.f32.mrf.mxu0
  %v3471 = vadd.f32 %v3382, %v3470
  %3472 = vmatmul.bf16.gmra.mxu0 %v1733
  %v3473 = vpop.f32.mrf.mxu0
  %v3474 = vadd.f32 %v3385, %v3473
  %v3475 = vpop.f32.mrf.mxu0
  %v3476 = vadd.f32 %v3387, %v3475
  %3477 = vdwg.mxu0
  %3478 = vmatpush.bf16.msra.mxu0 %v2581
  %3479 = vmatpush.bf16.msra.mxu0 %v2580
  %3480 = vmatpush.bf16.msra.mxu0 %v2579
  %3481 = vmatpush.bf16.msra.mxu0 %v2578
  %3482 = vmatpush.bf16.msra.mxu0 %v2577
  %3483 = vmatpush.bf16.msra.mxu0 %v2576
  %3484 = vmatpush.bf16.msra.mxu0 %v2575
  %3485 = vmatpush.bf16.msra.mxu0 %v2574
  %3486 = vmatmul.bf16.gmra.mxu0 %v1494
  %v3487 = vpop.f32.mrf.mxu0
  %v3488 = vadd.f32 %v3399, %v3487
  %v3489 = vpop.f32.mrf.mxu0
  %v3490 = vadd.f32 %v3401, %v3489
  %3491 = vmatmul.bf16.gmra.mxu0 %v1510
  %v3492 = vpop.f32.mrf.mxu0
  %v3493 = vadd.f32 %v3404, %v3492
  %v3494 = vpop.f32.mrf.mxu0
  %v3495 = vadd.f32 %v3406, %v3494
  %3496 = vmatmul.bf16.gmra.mxu0 %v1526
  %v3497 = vpop.f32.mrf.mxu0
  %v3498 = vadd.f32 %v3409, %v3497
  %v3499 = vpop.f32.mrf.mxu0
  %v3500 = vadd.f32 %v3411, %v3499
  %3501 = vmatmul.bf16.gmra.mxu0 %v1542
  %v3502 = vpop.f32.mrf.mxu0
  %v3503 = vadd.f32 %v3414, %v3502
  %v3504 = vpop.f32.mrf.mxu0
  %v3505 = vadd.f32 %v3416, %v3504
  %3506 = vmatmul.bf16.gmra.mxu0 %v1558
  %v3507 = vpop.f32.mrf.mxu0
  %v3508 = vadd.f32 %v3419, %v3507
  %v3509 = vpop.f32.mrf.mxu0
  %v3510 = vadd.f32 %v3421, %v3509
  %3511 = vmatmul.bf16.gmra.mxu0 %v1574
  %v3512 = vpop.f32.mrf.mxu0
  %v3513 = vadd.f32 %v3424, %v3512
  %v3514 = vpop.f32.mrf.mxu0
  %v3515 = vadd.f32 %v3426, %v3514
  %3516 = vmatmul.bf16.gmra.mxu0 %v1590
  %v3517 = vpop.f32.mrf.mxu0
  %v3518 = vadd.f32 %v3429, %v3517
  %v3519 = vpop.f32.mrf.mxu0
  %v3520 = vadd.f32 %v3431, %v3519
  %3521 = vmatmul.bf16.gmra.mxu0 %v1606
  %v3522 = vpop.f32.mrf.mxu0
  %v3523 = vadd.f32 %v3434, %v3522
  %v3524 = vpop.f32.mrf.mxu0
  %v3525 = vadd.f32 %v3436, %v3524
  %3526 = vmatmul.bf16.gmra.mxu0 %v1622
  %v3527 = vpop.f32.mrf.mxu0
  %v3528 = vadd.f32 %v3439, %v3527
  %v3529 = vpop.f32.mrf.mxu0
  %v3530 = vadd.f32 %v3441, %v3529
  %3531 = vmatmul.bf16.gmra.mxu0 %v1638
  %v3532 = vpop.f32.mrf.mxu0
  %v3533 = vadd.f32 %v3444, %v3532
  %v3534 = vpop.f32.mrf.mxu0
  %v3535 = vadd.f32 %v3446, %v3534
  %3536 = vmatmul.bf16.gmra.mxu0 %v1654
  %v3537 = vpop.f32.mrf.mxu0
  %v3538 = vadd.f32 %v3449, %v3537
  %v3539 = vpop.f32.mrf.mxu0
  %v3540 = vadd.f32 %v3451, %v3539
  %3541 = vmatmul.bf16.gmra.mxu0 %v1670
  %v3542 = vpop.f32.mrf.mxu0
  %v3543 = vadd.f32 %v3454, %v3542
  %v3544 = vpop.f32.mrf.mxu0
  %v3545 = vadd.f32 %v3456, %v3544
  %3546 = vmatmul.bf16.gmra.mxu0 %v1686
  %v3547 = vpop.f32.mrf.mxu0
  %v3548 = vadd.f32 %v3459, %v3547
  %v3549 = vpop.f32.mrf.mxu0
  %v3550 = vadd.f32 %v3461, %v3549
  %3551 = vmatmul.bf16.gmra.mxu0 %v1702
  %v3552 = vpop.f32.mrf.mxu0
  %v3553 = vadd.f32 %v3464, %v3552
  %v3554 = vpop.f32.mrf.mxu0
  %v3555 = vadd.f32 %v3466, %v3554
  %3556 = vmatmul.bf16.gmra.mxu0 %v1718
  %v3557 = vpop.f32.mrf.mxu0
  %v3558 = vadd.f32 %v3469, %v3557
  %v3559 = vpop.f32.mrf.mxu0
  %v3560 = vadd.f32 %v3471, %v3559
  %3561 = vmatmul.bf16.gmra.mxu0 %v1734
  %v3562 = vpop.f32.mrf.mxu0
  %v3563 = vadd.f32 %v3474, %v3562
  %v3564 = vpop.f32.mrf.mxu0
  %v3565 = vadd.f32 %v3476, %v3564
  %3566 = vdwg.mxu0
  %3567 = vmatpush.bf16.msra.mxu0 %v2589
  %3568 = vmatpush.bf16.msra.mxu0 %v2588
  %3569 = vmatpush.bf16.msra.mxu0 %v2587
  %3570 = vmatpush.bf16.msra.mxu0 %v2586
  %3571 = vmatpush.bf16.msra.mxu0 %v2585
  %3572 = vmatpush.bf16.msra.mxu0 %v2584
  %3573 = vmatpush.bf16.msra.mxu0 %v2583
  %3574 = vmatpush.bf16.msra.mxu0 %v2582
  %3575 = vmatmul.bf16.gmra.mxu0 %v1495
  %v3576 = vpop.f32.mrf.mxu0
  %v3577 = vadd.f32 %v3488, %v3576
  %v3578 = vpop.f32.mrf.mxu0
  %v3579 = vadd.f32 %v3490, %v3578
  %3580 = vmatmul.bf16.gmra.mxu0 %v1511
  %v3581 = vpop.f32.mrf.mxu0
  %v3582 = vadd.f32 %v3493, %v3581
  %v3583 = vpop.f32.mrf.mxu0
  %v3584 = vadd.f32 %v3495, %v3583
  %3585 = vmatmul.bf16.gmra.mxu0 %v1527
  %v3586 = vpop.f32.mrf.mxu0
  %v3587 = vadd.f32 %v3498, %v3586
  %v3588 = vpop.f32.mrf.mxu0
  %v3589 = vadd.f32 %v3500, %v3588
  %3590 = vmatmul.bf16.gmra.mxu0 %v1543
  %v3591 = vpop.f32.mrf.mxu0
  %v3592 = vadd.f32 %v3503, %v3591
  %v3593 = vpop.f32.mrf.mxu0
  %v3594 = vadd.f32 %v3505, %v3593
  %3595 = vmatmul.bf16.gmra.mxu0 %v1559
  %v3596 = vpop.f32.mrf.mxu0
  %v3597 = vadd.f32 %v3508, %v3596
  %v3598 = vpop.f32.mrf.mxu0
  %v3599 = vadd.f32 %v3510, %v3598
  %3600 = vmatmul.bf16.gmra.mxu0 %v1575
  %v3601 = vpop.f32.mrf.mxu0
  %v3602 = vadd.f32 %v3513, %v3601
  %v3603 = vpop.f32.mrf.mxu0
  %v3604 = vadd.f32 %v3515, %v3603
  %3605 = vmatmul.bf16.gmra.mxu0 %v1591
  %v3606 = vpop.f32.mrf.mxu0
  %v3607 = vadd.f32 %v3518, %v3606
  %v3608 = vpop.f32.mrf.mxu0
  %v3609 = vadd.f32 %v3520, %v3608
  %3610 = vmatmul.bf16.gmra.mxu0 %v1607
  %v3611 = vpop.f32.mrf.mxu0
  %v3612 = vadd.f32 %v3523, %v3611
  %v3613 = vpop.f32.mrf.mxu0
  %v3614 = vadd.f32 %v3525, %v3613
  %3615 = vmatmul.bf16.gmra.mxu0 %v1623
  %v3616 = vpop.f32.mrf.mxu0
  %v3617 = vadd.f32 %v3528, %v3616
  %v3618 = vpop.f32.mrf.mxu0
  %v3619 = vadd.f32 %v3530, %v3618
  %3620 = vmatmul.bf16.gmra.mxu0 %v1639
  %v3621 = vpop.f32.mrf.mxu0
  %v3622 = vadd.f32 %v3533, %v3621
  %v3623 = vpop.f32.mrf.mxu0
  %v3624 = vadd.f32 %v3535, %v3623
  %3625 = vmatmul.bf16.gmra.mxu0 %v1655
  %v3626 = vpop.f32.mrf.mxu0
  %v3627 = vadd.f32 %v3538, %v3626
  %v3628 = vpop.f32.mrf.mxu0
  %v3629 = vadd.f32 %v3540, %v3628
  %3630 = vmatmul.bf16.gmra.mxu0 %v1671
  %v3631 = vpop.f32.mrf.mxu0
  %v3632 = vadd.f32 %v3543, %v3631
  %v3633 = vpop.f32.mrf.mxu0
  %v3634 = vadd.f32 %v3545, %v3633
  %3635 = vmatmul.bf16.gmra.mxu0 %v1687
  %v3636 = vpop.f32.mrf.mxu0
  %v3637 = vadd.f32 %v3548, %v3636
  %v3638 = vpop.f32.mrf.mxu0
  %v3639 = vadd.f32 %v3550, %v3638
  %3640 = vmatmul.bf16.gmra.mxu0 %v1703
  %v3641 = vpop.f32.mrf.mxu0
  %v3642 = vadd.f32 %v3553, %v3641
  %v3643 = vpop.f32.mrf.mxu0
  %v3644 = vadd.f32 %v3555, %v3643
  %3645 = vmatmul.bf16.gmra.mxu0 %v1719
  %v3646 = vpop.f32.mrf.mxu0
  %v3647 = vadd.f32 %v3558, %v3646
  %v3648 = vpop.f32.mrf.mxu0
  %v3649 = vadd.f32 %v3560, %v3648
  %3650 = vmatmul.bf16.gmra.mxu0 %v1735
  %v3651 = vpop.f32.mrf.mxu0
  %v3652 = vadd.f32 %v3563, %v3651
  %v3653 = vpop.f32.mrf.mxu0
  %v3654 = vadd.f32 %v3565, %v3653
  %3655 = vdwg.mxu0
  %3656 = vmatpush.bf16.msra.mxu0 %v2597
  %3657 = vmatpush.bf16.msra.mxu0 %v2596
  %3658 = vmatpush.bf16.msra.mxu0 %v2595
  %3659 = vmatpush.bf16.msra.mxu0 %v2594
  %3660 = vmatpush.bf16.msra.mxu0 %v2593
  %3661 = vmatpush.bf16.msra.mxu0 %v2592
  %3662 = vmatpush.bf16.msra.mxu0 %v2591
  %3663 = vmatpush.bf16.msra.mxu0 %v2590
  %3664 = vmatmul.bf16.gmra.mxu0 %v1496
  %v3665 = vpop.f32.mrf.mxu0
  %v3666 = vadd.f32 %v3577, %v3665
  %v3667 = vpop.f32.mrf.mxu0
  %v3668 = vadd.f32 %v3579, %v3667
  %3669 = vmatmul.bf16.gmra.mxu0 %v1512
  %v3670 = vpop.f32.mrf.mxu0
  %v3671 = vadd.f32 %v3582, %v3670
  %v3672 = vpop.f32.mrf.mxu0
  %v3673 = vadd.f32 %v3584, %v3672
  %3674 = vmatmul.bf16.gmra.mxu0 %v1528
  %v3675 = vpop.f32.mrf.mxu0
  %v3676 = vadd.f32 %v3587, %v3675
  %v3677 = vpop.f32.mrf.mxu0
  %v3678 = vadd.f32 %v3589, %v3677
  %3679 = vmatmul.bf16.gmra.mxu0 %v1544
  %v3680 = vpop.f32.mrf.mxu0
  %v3681 = vadd.f32 %v3592, %v3680
  %v3682 = vpop.f32.mrf.mxu0
  %v3683 = vadd.f32 %v3594, %v3682
  %3684 = vmatmul.bf16.gmra.mxu0 %v1560
  %v3685 = vpop.f32.mrf.mxu0
  %v3686 = vadd.f32 %v3597, %v3685
  %v3687 = vpop.f32.mrf.mxu0
  %v3688 = vadd.f32 %v3599, %v3687
  %3689 = vmatmul.bf16.gmra.mxu0 %v1576
  %v3690 = vpop.f32.mrf.mxu0
  %v3691 = vadd.f32 %v3602, %v3690
  %v3692 = vpop.f32.mrf.mxu0
  %v3693 = vadd.f32 %v3604, %v3692
  %3694 = vmatmul.bf16.gmra.mxu0 %v1592
  %v3695 = vpop.f32.mrf.mxu0
  %v3696 = vadd.f32 %v3607, %v3695
  %v3697 = vpop.f32.mrf.mxu0
  %v3698 = vadd.f32 %v3609, %v3697
  %3699 = vmatmul.bf16.gmra.mxu0 %v1608
  %v3700 = vpop.f32.mrf.mxu0
  %v3701 = vadd.f32 %v3612, %v3700
  %v3702 = vpop.f32.mrf.mxu0
  %v3703 = vadd.f32 %v3614, %v3702
  %3704 = vmatmul.bf16.gmra.mxu0 %v1624
  %v3705 = vpop.f32.mrf.mxu0
  %v3706 = vadd.f32 %v3617, %v3705
  %v3707 = vpop.f32.mrf.mxu0
  %v3708 = vadd.f32 %v3619, %v3707
  %3709 = vmatmul.bf16.gmra.mxu0 %v1640
  %v3710 = vpop.f32.mrf.mxu0
  %v3711 = vadd.f32 %v3622, %v3710
  %v3712 = vpop.f32.mrf.mxu0
  %v3713 = vadd.f32 %v3624, %v3712
  %3714 = vmatmul.bf16.gmra.mxu0 %v1656
  %v3715 = vpop.f32.mrf.mxu0
  %v3716 = vadd.f32 %v3627, %v3715
  %v3717 = vpop.f32.mrf.mxu0
  %v3718 = vadd.f32 %v3629, %v3717
  %3719 = vmatmul.bf16.gmra.mxu0 %v1672
  %v3720 = vpop.f32.mrf.mxu0
  %v3721 = vadd.f32 %v3632, %v3720
  %v3722 = vpop.f32.mrf.mxu0
  %v3723 = vadd.f32 %v3634, %v3722
  %3724 = vmatmul.bf16.gmra.mxu0 %v1688
  %v3725 = vpop.f32.mrf.mxu0
  %v3726 = vadd.f32 %v3637, %v3725
  %v3727 = vpop.f32.mrf.mxu0
  %v3728 = vadd.f32 %v3639, %v3727
  %3729 = vmatmul.bf16.gmra.mxu0 %v1704
  %v3730 = vpop.f32.mrf.mxu0
  %v3731 = vadd.f32 %v3642, %v3730
  %v3732 = vpop.f32.mrf.mxu0
  %v3733 = vadd.f32 %v3644, %v3732
  %3734 = vmatmul.bf16.gmra.mxu0 %v1720
  %v3735 = vpop.f32.mrf.mxu0
  %v3736 = vadd.f32 %v3647, %v3735
  %v3737 = vpop.f32.mrf.mxu0
  %v3738 = vadd.f32 %v3649, %v3737
  %3739 = vmatmul.bf16.gmra.mxu0 %v1736
  %v3740 = vpop.f32.mrf.mxu0
  %v3741 = vadd.f32 %v3652, %v3740
  %v3742 = vpop.f32.mrf.mxu0
  %v3743 = vadd.f32 %v3654, %v3742
  %3744 = vdwg.mxu0
  %3745 = vmatpush.bf16.msra.mxu0 %v2605
  %3746 = vmatpush.bf16.msra.mxu0 %v2604
  %3747 = vmatpush.bf16.msra.mxu0 %v2603
  %3748 = vmatpush.bf16.msra.mxu0 %v2602
  %3749 = vmatpush.bf16.msra.mxu0 %v2601
  %3750 = vmatpush.bf16.msra.mxu0 %v2600
  %3751 = vmatpush.bf16.msra.mxu0 %v2599
  %3752 = vmatpush.bf16.msra.mxu0 %v2598
  %3753 = vmatmul.bf16.gmra.mxu0 %v1497
  %v3754 = vpop.f32.mrf.mxu0
  %v3755 = vadd.f32 %v3666, %v3754
  %v3756 = vpop.f32.mrf.mxu0
  %v3757 = vadd.f32 %v3668, %v3756
  %3758 = vmatmul.bf16.gmra.mxu0 %v1513
  %v3759 = vpop.f32.mrf.mxu0
  %v3760 = vadd.f32 %v3671, %v3759
  %v3761 = vpop.f32.mrf.mxu0
  %v3762 = vadd.f32 %v3673, %v3761
  %3763 = vmatmul.bf16.gmra.mxu0 %v1529
  %v3764 = vpop.f32.mrf.mxu0
  %v3765 = vadd.f32 %v3676, %v3764
  %v3766 = vpop.f32.mrf.mxu0
  %v3767 = vadd.f32 %v3678, %v3766
  %3768 = vmatmul.bf16.gmra.mxu0 %v1545
  %v3769 = vpop.f32.mrf.mxu0
  %v3770 = vadd.f32 %v3681, %v3769
  %v3771 = vpop.f32.mrf.mxu0
  %v3772 = vadd.f32 %v3683, %v3771
  %3773 = vmatmul.bf16.gmra.mxu0 %v1561
  %v3774 = vpop.f32.mrf.mxu0
  %v3775 = vadd.f32 %v3686, %v3774
  %v3776 = vpop.f32.mrf.mxu0
  %v3777 = vadd.f32 %v3688, %v3776
  %3778 = vmatmul.bf16.gmra.mxu0 %v1577
  %v3779 = vpop.f32.mrf.mxu0
  %v3780 = vadd.f32 %v3691, %v3779
  %v3781 = vpop.f32.mrf.mxu0
  %v3782 = vadd.f32 %v3693, %v3781
  %3783 = vmatmul.bf16.gmra.mxu0 %v1593
  %v3784 = vpop.f32.mrf.mxu0
  %v3785 = vadd.f32 %v3696, %v3784
  %v3786 = vpop.f32.mrf.mxu0
  %v3787 = vadd.f32 %v3698, %v3786
  %3788 = vmatmul.bf16.gmra.mxu0 %v1609
  %v3789 = vpop.f32.mrf.mxu0
  %v3790 = vadd.f32 %v3701, %v3789
  %v3791 = vpop.f32.mrf.mxu0
  %v3792 = vadd.f32 %v3703, %v3791
  %3793 = vmatmul.bf16.gmra.mxu0 %v1625
  %v3794 = vpop.f32.mrf.mxu0
  %v3795 = vadd.f32 %v3706, %v3794
  %v3796 = vpop.f32.mrf.mxu0
  %v3797 = vadd.f32 %v3708, %v3796
  %3798 = vmatmul.bf16.gmra.mxu0 %v1641
  %v3799 = vpop.f32.mrf.mxu0
  %v3800 = vadd.f32 %v3711, %v3799
  %v3801 = vpop.f32.mrf.mxu0
  %v3802 = vadd.f32 %v3713, %v3801
  %3803 = vmatmul.bf16.gmra.mxu0 %v1657
  %v3804 = vpop.f32.mrf.mxu0
  %v3805 = vadd.f32 %v3716, %v3804
  %v3806 = vpop.f32.mrf.mxu0
  %v3807 = vadd.f32 %v3718, %v3806
  %3808 = vmatmul.bf16.gmra.mxu0 %v1673
  %v3809 = vpop.f32.mrf.mxu0
  %v3810 = vadd.f32 %v3721, %v3809
  %v3811 = vpop.f32.mrf.mxu0
  %v3812 = vadd.f32 %v3723, %v3811
  %3813 = vmatmul.bf16.gmra.mxu0 %v1689
  %v3814 = vpop.f32.mrf.mxu0
  %v3815 = vadd.f32 %v3726, %v3814
  %v3816 = vpop.f32.mrf.mxu0
  %v3817 = vadd.f32 %v3728, %v3816
  %3818 = vmatmul.bf16.gmra.mxu0 %v1705
  %v3819 = vpop.f32.mrf.mxu0
  %v3820 = vadd.f32 %v3731, %v3819
  %v3821 = vpop.f32.mrf.mxu0
  %v3822 = vadd.f32 %v3733, %v3821
  %3823 = vmatmul.bf16.gmra.mxu0 %v1721
  %v3824 = vpop.f32.mrf.mxu0
  %v3825 = vadd.f32 %v3736, %v3824
  %v3826 = vpop.f32.mrf.mxu0
  %v3827 = vadd.f32 %v3738, %v3826
  %3828 = vmatmul.bf16.gmra.mxu0 %v1737
  %v3829 = vpop.f32.mrf.mxu0
  %v3830 = vadd.f32 %v3741, %v3829
  %v3831 = vpop.f32.mrf.mxu0
  %v3832 = vadd.f32 %v3743, %v3831
  %3833 = vdwg.mxu0
  %3834 = vmatpush.bf16.msra.mxu0 %v2613
  %3835 = vmatpush.bf16.msra.mxu0 %v2612
  %3836 = vmatpush.bf16.msra.mxu0 %v2611
  %3837 = vmatpush.bf16.msra.mxu0 %v2610
  %3838 = vmatpush.bf16.msra.mxu0 %v2609
  %3839 = vmatpush.bf16.msra.mxu0 %v2608
  %3840 = vmatpush.bf16.msra.mxu0 %v2607
  %3841 = vmatpush.bf16.msra.mxu0 %v2606
  %3842 = vmatmul.bf16.gmra.mxu0 %v1498
  %v3843 = vpop.f32.mrf.mxu0
  %v3844 = vadd.f32 %v3755, %v3843
  %v3845 = vpop.f32.mrf.mxu0
  %v3846 = vadd.f32 %v3757, %v3845
  %3847 = vmatmul.bf16.gmra.mxu0 %v1514
  %v3848 = vpop.f32.mrf.mxu0
  %v3849 = vadd.f32 %v3760, %v3848
  %v3850 = vpop.f32.mrf.mxu0
  %v3851 = vadd.f32 %v3762, %v3850
  %3852 = vmatmul.bf16.gmra.mxu0 %v1530
  %v3853 = vpop.f32.mrf.mxu0
  %v3854 = vadd.f32 %v3765, %v3853
  %v3855 = vpop.f32.mrf.mxu0
  %v3856 = vadd.f32 %v3767, %v3855
  %3857 = vmatmul.bf16.gmra.mxu0 %v1546
  %v3858 = vpop.f32.mrf.mxu0
  %v3859 = vadd.f32 %v3770, %v3858
  %v3860 = vpop.f32.mrf.mxu0
  %v3861 = vadd.f32 %v3772, %v3860
  %3862 = vmatmul.bf16.gmra.mxu0 %v1562
  %v3863 = vpop.f32.mrf.mxu0
  %v3864 = vadd.f32 %v3775, %v3863
  %v3865 = vpop.f32.mrf.mxu0
  %v3866 = vadd.f32 %v3777, %v3865
  %3867 = vmatmul.bf16.gmra.mxu0 %v1578
  %v3868 = vpop.f32.mrf.mxu0
  %v3869 = vadd.f32 %v3780, %v3868
  %v3870 = vpop.f32.mrf.mxu0
  %v3871 = vadd.f32 %v3782, %v3870
  %3872 = vmatmul.bf16.gmra.mxu0 %v1594
  %v3873 = vpop.f32.mrf.mxu0
  %v3874 = vadd.f32 %v3785, %v3873
  %v3875 = vpop.f32.mrf.mxu0
  %v3876 = vadd.f32 %v3787, %v3875
  %3877 = vmatmul.bf16.gmra.mxu0 %v1610
  %v3878 = vpop.f32.mrf.mxu0
  %v3879 = vadd.f32 %v3790, %v3878
  %v3880 = vpop.f32.mrf.mxu0
  %v3881 = vadd.f32 %v3792, %v3880
  %3882 = vmatmul.bf16.gmra.mxu0 %v1626
  %v3883 = vpop.f32.mrf.mxu0
  %v3884 = vadd.f32 %v3795, %v3883
  %v3885 = vpop.f32.mrf.mxu0
  %v3886 = vadd.f32 %v3797, %v3885
  %3887 = vmatmul.bf16.gmra.mxu0 %v1642
  %v3888 = vpop.f32.mrf.mxu0
  %v3889 = vadd.f32 %v3800, %v3888
  %v3890 = vpop.f32.mrf.mxu0
  %v3891 = vadd.f32 %v3802, %v3890
  %3892 = vmatmul.bf16.gmra.mxu0 %v1658
  %v3893 = vpop.f32.mrf.mxu0
  %v3894 = vadd.f32 %v3805, %v3893
  %v3895 = vpop.f32.mrf.mxu0
  %v3896 = vadd.f32 %v3807, %v3895
  %3897 = vmatmul.bf16.gmra.mxu0 %v1674
  %v3898 = vpop.f32.mrf.mxu0
  %v3899 = vadd.f32 %v3810, %v3898
  %v3900 = vpop.f32.mrf.mxu0
  %v3901 = vadd.f32 %v3812, %v3900
  %3902 = vmatmul.bf16.gmra.mxu0 %v1690
  %v3903 = vpop.f32.mrf.mxu0
  %v3904 = vadd.f32 %v3815, %v3903
  %v3905 = vpop.f32.mrf.mxu0
  %v3906 = vadd.f32 %v3817, %v3905
  %3907 = vmatmul.bf16.gmra.mxu0 %v1706
  %v3908 = vpop.f32.mrf.mxu0
  %v3909 = vadd.f32 %v3820, %v3908
  %v3910 = vpop.f32.mrf.mxu0
  %v3911 = vadd.f32 %v3822, %v3910
  %3912 = vmatmul.bf16.gmra.mxu0 %v1722
  %v3913 = vpop.f32.mrf.mxu0
  %v3914 = vadd.f32 %v3825, %v3913
  %v3915 = vpop.f32.mrf.mxu0
  %v3916 = vadd.f32 %v3827, %v3915
  %3917 = vmatmul.bf16.gmra.mxu0 %v1738
  %v3918 = vpop.f32.mrf.mxu0
  %v3919 = vadd.f32 %v3830, %v3918
  %v3920 = vpop.f32.mrf.mxu0
  %v3921 = vadd.f32 %v3832, %v3920
  %3922 = vdwg.mxu0
  %3923 = vmatpush.bf16.msra.mxu0 %v2621
  %3924 = vmatpush.bf16.msra.mxu0 %v2620
  %3925 = vmatpush.bf16.msra.mxu0 %v2619
  %3926 = vmatpush.bf16.msra.mxu0 %v2618
  %3927 = vmatpush.bf16.msra.mxu0 %v2617
  %3928 = vmatpush.bf16.msra.mxu0 %v2616
  %3929 = vmatpush.bf16.msra.mxu0 %v2615
  %3930 = vmatpush.bf16.msra.mxu0 %v2614
  %3931 = vmatmul.bf16.gmra.mxu0 %v1499
  %v3932 = vpop.f32.mrf.mxu0
  %v3933 = vadd.f32 %v3844, %v3932
  %v3934 = vpop.f32.mrf.mxu0
  %v3935 = vadd.f32 %v3846, %v3934
  %3936 = vmatmul.bf16.gmra.mxu0 %v1515
  %v3937 = vpop.f32.mrf.mxu0
  %v3938 = vadd.f32 %v3849, %v3937
  %v3939 = vpop.f32.mrf.mxu0
  %v3940 = vadd.f32 %v3851, %v3939
  %3941 = vmatmul.bf16.gmra.mxu0 %v1531
  %v3942 = vpop.f32.mrf.mxu0
  %v3943 = vadd.f32 %v3854, %v3942
  %v3944 = vpop.f32.mrf.mxu0
  %v3945 = vadd.f32 %v3856, %v3944
  %3946 = vmatmul.bf16.gmra.mxu0 %v1547
  %v3947 = vpop.f32.mrf.mxu0
  %v3948 = vadd.f32 %v3859, %v3947
  %v3949 = vpop.f32.mrf.mxu0
  %v3950 = vadd.f32 %v3861, %v3949
  %3951 = vmatmul.bf16.gmra.mxu0 %v1563
  %v3952 = vpop.f32.mrf.mxu0
  %v3953 = vadd.f32 %v3864, %v3952
  %v3954 = vpop.f32.mrf.mxu0
  %v3955 = vadd.f32 %v3866, %v3954
  %3956 = vmatmul.bf16.gmra.mxu0 %v1579
  %v3957 = vpop.f32.mrf.mxu0
  %v3958 = vadd.f32 %v3869, %v3957
  %v3959 = vpop.f32.mrf.mxu0
  %v3960 = vadd.f32 %v3871, %v3959
  %3961 = vmatmul.bf16.gmra.mxu0 %v1595
  %v3962 = vpop.f32.mrf.mxu0
  %v3963 = vadd.f32 %v3874, %v3962
  %v3964 = vpop.f32.mrf.mxu0
  %v3965 = vadd.f32 %v3876, %v3964
  %3966 = vmatmul.bf16.gmra.mxu0 %v1611
  %v3967 = vpop.f32.mrf.mxu0
  %v3968 = vadd.f32 %v3879, %v3967
  %v3969 = vpop.f32.mrf.mxu0
  %v3970 = vadd.f32 %v3881, %v3969
  %3971 = vmatmul.bf16.gmra.mxu0 %v1627
  %v3972 = vpop.f32.mrf.mxu0
  %v3973 = vadd.f32 %v3884, %v3972
  %v3974 = vpop.f32.mrf.mxu0
  %v3975 = vadd.f32 %v3886, %v3974
  %3976 = vmatmul.bf16.gmra.mxu0 %v1643
  %v3977 = vpop.f32.mrf.mxu0
  %v3978 = vadd.f32 %v3889, %v3977
  %v3979 = vpop.f32.mrf.mxu0
  %v3980 = vadd.f32 %v3891, %v3979
  %3981 = vmatmul.bf16.gmra.mxu0 %v1659
  %v3982 = vpop.f32.mrf.mxu0
  %v3983 = vadd.f32 %v3894, %v3982
  %v3984 = vpop.f32.mrf.mxu0
  %v3985 = vadd.f32 %v3896, %v3984
  %3986 = vmatmul.bf16.gmra.mxu0 %v1675
  %v3987 = vpop.f32.mrf.mxu0
  %v3988 = vadd.f32 %v3899, %v3987
  %v3989 = vpop.f32.mrf.mxu0
  %v3990 = vadd.f32 %v3901, %v3989
  %3991 = vmatmul.bf16.gmra.mxu0 %v1691
  %v3992 = vpop.f32.mrf.mxu0
  %v3993 = vadd.f32 %v3904, %v3992
  %v3994 = vpop.f32.mrf.mxu0
  %v3995 = vadd.f32 %v3906, %v3994
  %3996 = vmatmul.bf16.gmra.mxu0 %v1707
  %v3997 = vpop.f32.mrf.mxu0
  %v3998 = vadd.f32 %v3909, %v3997
  %v3999 = vpop.f32.mrf.mxu0
  %v4000 = vadd.f32 %v3911, %v3999
  %4001 = vmatmul.bf16.gmra.mxu0 %v1723
  %v4002 = vpop.f32.mrf.mxu0
  %v4003 = vadd.f32 %v3914, %v4002
  %v4004 = vpop.f32.mrf.mxu0
  %v4005 = vadd.f32 %v3916, %v4004
  %4006 = vmatmul.bf16.gmra.mxu0 %v1739
  %v4007 = vpop.f32.mrf.mxu0
  %v4008 = vadd.f32 %v3919, %v4007
  %v4009 = vpop.f32.mrf.mxu0
  %v4010 = vadd.f32 %v3921, %v4009
  %4011 = vdwg.mxu0
  %4012 = vmatpush.bf16.msra.mxu0 %v2629
  %4013 = vmatpush.bf16.msra.mxu0 %v2628
  %4014 = vmatpush.bf16.msra.mxu0 %v2627
  %4015 = vmatpush.bf16.msra.mxu0 %v2626
  %4016 = vmatpush.bf16.msra.mxu0 %v2625
  %4017 = vmatpush.bf16.msra.mxu0 %v2624
  %4018 = vmatpush.bf16.msra.mxu0 %v2623
  %4019 = vmatpush.bf16.msra.mxu0 %v2622
  %4020 = vmatmul.bf16.gmra.mxu0 %v1500
  %v4021 = vpop.f32.mrf.mxu0
  %v4022 = vadd.f32 %v3933, %v4021
  %v4023 = vpop.f32.mrf.mxu0
  %v4024 = vadd.f32 %v3935, %v4023
  %4025 = vmatmul.bf16.gmra.mxu0 %v1516
  %v4026 = vpop.f32.mrf.mxu0
  %v4027 = vadd.f32 %v3938, %v4026
  %v4028 = vpop.f32.mrf.mxu0
  %v4029 = vadd.f32 %v3940, %v4028
  %4030 = vmatmul.bf16.gmra.mxu0 %v1532
  %v4031 = vpop.f32.mrf.mxu0
  %v4032 = vadd.f32 %v3943, %v4031
  %v4033 = vpop.f32.mrf.mxu0
  %v4034 = vadd.f32 %v3945, %v4033
  %4035 = vmatmul.bf16.gmra.mxu0 %v1548
  %v4036 = vpop.f32.mrf.mxu0
  %v4037 = vadd.f32 %v3948, %v4036
  %v4038 = vpop.f32.mrf.mxu0
  %v4039 = vadd.f32 %v3950, %v4038
  %4040 = vmatmul.bf16.gmra.mxu0 %v1564
  %v4041 = vpop.f32.mrf.mxu0
  %v4042 = vadd.f32 %v3953, %v4041
  %v4043 = vpop.f32.mrf.mxu0
  %v4044 = vadd.f32 %v3955, %v4043
  %4045 = vmatmul.bf16.gmra.mxu0 %v1580
  %v4046 = vpop.f32.mrf.mxu0
  %v4047 = vadd.f32 %v3958, %v4046
  %v4048 = vpop.f32.mrf.mxu0
  %v4049 = vadd.f32 %v3960, %v4048
  %4050 = vmatmul.bf16.gmra.mxu0 %v1596
  %v4051 = vpop.f32.mrf.mxu0
  %v4052 = vadd.f32 %v3963, %v4051
  %v4053 = vpop.f32.mrf.mxu0
  %v4054 = vadd.f32 %v3965, %v4053
  %4055 = vmatmul.bf16.gmra.mxu0 %v1612
  %v4056 = vpop.f32.mrf.mxu0
  %v4057 = vadd.f32 %v3968, %v4056
  %v4058 = vpop.f32.mrf.mxu0
  %v4059 = vadd.f32 %v3970, %v4058
  %4060 = vmatmul.bf16.gmra.mxu0 %v1628
  %v4061 = vpop.f32.mrf.mxu0
  %v4062 = vadd.f32 %v3973, %v4061
  %v4063 = vpop.f32.mrf.mxu0
  %v4064 = vadd.f32 %v3975, %v4063
  %4065 = vmatmul.bf16.gmra.mxu0 %v1644
  %v4066 = vpop.f32.mrf.mxu0
  %v4067 = vadd.f32 %v3978, %v4066
  %v4068 = vpop.f32.mrf.mxu0
  %v4069 = vadd.f32 %v3980, %v4068
  %4070 = vmatmul.bf16.gmra.mxu0 %v1660
  %v4071 = vpop.f32.mrf.mxu0
  %v4072 = vadd.f32 %v3983, %v4071
  %v4073 = vpop.f32.mrf.mxu0
  %v4074 = vadd.f32 %v3985, %v4073
  %4075 = vmatmul.bf16.gmra.mxu0 %v1676
  %v4076 = vpop.f32.mrf.mxu0
  %v4077 = vadd.f32 %v3988, %v4076
  %v4078 = vpop.f32.mrf.mxu0
  %v4079 = vadd.f32 %v3990, %v4078
  %4080 = vmatmul.bf16.gmra.mxu0 %v1692
  %v4081 = vpop.f32.mrf.mxu0
  %v4082 = vadd.f32 %v3993, %v4081
  %v4083 = vpop.f32.mrf.mxu0
  %v4084 = vadd.f32 %v3995, %v4083
  %4085 = vmatmul.bf16.gmra.mxu0 %v1708
  %v4086 = vpop.f32.mrf.mxu0
  %v4087 = vadd.f32 %v3998, %v4086
  %v4088 = vpop.f32.mrf.mxu0
  %v4089 = vadd.f32 %v4000, %v4088
  %4090 = vmatmul.bf16.gmra.mxu0 %v1724
  %v4091 = vpop.f32.mrf.mxu0
  %v4092 = vadd.f32 %v4003, %v4091
  %v4093 = vpop.f32.mrf.mxu0
  %v4094 = vadd.f32 %v4005, %v4093
  %4095 = vmatmul.bf16.gmra.mxu0 %v1740
  %v4096 = vpop.f32.mrf.mxu0
  %v4097 = vadd.f32 %v4008, %v4096
  %v4098 = vpop.f32.mrf.mxu0
  %v4099 = vadd.f32 %v4010, %v4098
  %4100 = vdwg.mxu0
  %4101 = vmatpush.bf16.msra.mxu0 %v2637
  %4102 = vmatpush.bf16.msra.mxu0 %v2636
  %4103 = vmatpush.bf16.msra.mxu0 %v2635
  %4104 = vmatpush.bf16.msra.mxu0 %v2634
  %4105 = vmatpush.bf16.msra.mxu0 %v2633
  %4106 = vmatpush.bf16.msra.mxu0 %v2632
  %4107 = vmatpush.bf16.msra.mxu0 %v2631
  %4108 = vmatpush.bf16.msra.mxu0 %v2630
  %4109 = vmatmul.bf16.gmra.mxu0 %v1501
  %v4110 = vpop.f32.mrf.mxu0
  %v4111 = vadd.f32 %v4022, %v4110
  %v4112 = vpop.f32.mrf.mxu0
  %v4113 = vadd.f32 %v4024, %v4112
  %4114 = vmatmul.bf16.gmra.mxu0 %v1517
  %v4115 = vpop.f32.mrf.mxu0
  %v4116 = vadd.f32 %v4027, %v4115
  %v4117 = vpop.f32.mrf.mxu0
  %v4118 = vadd.f32 %v4029, %v4117
  %4119 = vmatmul.bf16.gmra.mxu0 %v1533
  %v4120 = vpop.f32.mrf.mxu0
  %v4121 = vadd.f32 %v4032, %v4120
  %v4122 = vpop.f32.mrf.mxu0
  %v4123 = vadd.f32 %v4034, %v4122
  %4124 = vmatmul.bf16.gmra.mxu0 %v1549
  %v4125 = vpop.f32.mrf.mxu0
  %v4126 = vadd.f32 %v4037, %v4125
  %v4127 = vpop.f32.mrf.mxu0
  %v4128 = vadd.f32 %v4039, %v4127
  %4129 = vmatmul.bf16.gmra.mxu0 %v1565
  %v4130 = vpop.f32.mrf.mxu0
  %v4131 = vadd.f32 %v4042, %v4130
  %v4132 = vpop.f32.mrf.mxu0
  %v4133 = vadd.f32 %v4044, %v4132
  %4134 = vmatmul.bf16.gmra.mxu0 %v1581
  %v4135 = vpop.f32.mrf.mxu0
  %v4136 = vadd.f32 %v4047, %v4135
  %v4137 = vpop.f32.mrf.mxu0
  %v4138 = vadd.f32 %v4049, %v4137
  %4139 = vmatmul.bf16.gmra.mxu0 %v1597
  %v4140 = vpop.f32.mrf.mxu0
  %v4141 = vadd.f32 %v4052, %v4140
  %v4142 = vpop.f32.mrf.mxu0
  %v4143 = vadd.f32 %v4054, %v4142
  %4144 = vmatmul.bf16.gmra.mxu0 %v1613
  %v4145 = vpop.f32.mrf.mxu0
  %v4146 = vadd.f32 %v4057, %v4145
  %v4147 = vpop.f32.mrf.mxu0
  %v4148 = vadd.f32 %v4059, %v4147
  %4149 = vmatmul.bf16.gmra.mxu0 %v1629
  %v4150 = vpop.f32.mrf.mxu0
  %v4151 = vadd.f32 %v4062, %v4150
  %v4152 = vpop.f32.mrf.mxu0
  %v4153 = vadd.f32 %v4064, %v4152
  %4154 = vmatmul.bf16.gmra.mxu0 %v1645
  %v4155 = vpop.f32.mrf.mxu0
  %v4156 = vadd.f32 %v4067, %v4155
  %v4157 = vpop.f32.mrf.mxu0
  %v4158 = vadd.f32 %v4069, %v4157
  %4159 = vmatmul.bf16.gmra.mxu0 %v1661
  %v4160 = vpop.f32.mrf.mxu0
  %v4161 = vadd.f32 %v4072, %v4160
  %v4162 = vpop.f32.mrf.mxu0
  %v4163 = vadd.f32 %v4074, %v4162
  %4164 = vmatmul.bf16.gmra.mxu0 %v1677
  %v4165 = vpop.f32.mrf.mxu0
  %v4166 = vadd.f32 %v4077, %v4165
  %v4167 = vpop.f32.mrf.mxu0
  %v4168 = vadd.f32 %v4079, %v4167
  %4169 = vmatmul.bf16.gmra.mxu0 %v1693
  %v4170 = vpop.f32.mrf.mxu0
  %v4171 = vadd.f32 %v4082, %v4170
  %v4172 = vpop.f32.mrf.mxu0
  %v4173 = vadd.f32 %v4084, %v4172
  %4174 = vmatmul.bf16.gmra.mxu0 %v1709
  %v4175 = vpop.f32.mrf.mxu0
  %v4176 = vadd.f32 %v4087, %v4175
  %v4177 = vpop.f32.mrf.mxu0
  %v4178 = vadd.f32 %v4089, %v4177
  %4179 = vmatmul.bf16.gmra.mxu0 %v1725
  %v4180 = vpop.f32.mrf.mxu0
  %v4181 = vadd.f32 %v4092, %v4180
  %v4182 = vpop.f32.mrf.mxu0
  %v4183 = vadd.f32 %v4094, %v4182
  %4184 = vmatmul.bf16.gmra.mxu0 %v1741
  %v4185 = vpop.f32.mrf.mxu0
  %v4186 = vadd.f32 %v4097, %v4185
  %v4187 = vpop.f32.mrf.mxu0
  %v4188 = vadd.f32 %v4099, %v4187
  %4189 = vdwg.mxu0
  %v4190 = vmax.f32 %v4111, 0.0
  %v4191 = vmax.f32 %v4113, 0.0
  %v4192 = vmax.f32 %v4116, 0.0
  %v4193 = vmax.f32 %v4118, 0.0
  %v4194 = vmax.f32 %v4121, 0.0
  %v4195 = vmax.f32 %v4123, 0.0
  %v4196 = vmax.f32 %v4126, 0.0
  %v4197 = vmax.f32 %v4128, 0.0
  %v4198 = vmax.f32 %v4131, 0.0
  %v4199 = vmax.f32 %v4133, 0.0
  %v4200 = vmax.f32 %v4136, 0.0
  %v4201 = vmax.f32 %v4138, 0.0
  %v4202 = vmax.f32 %v4141, 0.0
  %v4203 = vmax.f32 %v4143, 0.0
  %v4204 = vmax.f32 %v4146, 0.0
  %v4205 = vmax.f32 %v4148, 0.0
  %v4206 = vmax.f32 %v4151, 0.0
  %v4207 = vmax.f32 %v4153, 0.0
  %v4208 = vmax.f32 %v4156, 0.0
  %v4209 = vmax.f32 %v4158, 0.0
  %v4210 = vmax.f32 %v4161, 0.0
  %v4211 = vmax.f32 %v4163, 0.0
  %v4212 = vmax.f32 %v4166, 0.0
  %v4213 = vmax.f32 %v4168, 0.0
  %v4214 = vmax.f32 %v4171, 0.0
  %v4215 = vmax.f32 %v4173, 0.0
  %v4216 = vmax.f32 %v4176, 0.0
  %v4217 = vmax.f32 %v4178, 0.0
  %v4218 = vmax.f32 %v4181, 0.0
  %v4219 = vmax.f32 %v4183, 0.0
  %v4220 = vmax.f32 %v4186, 0.0
  %v4221 = vmax.f32 %v4188, 0.0
  %v4222 = vpack.c.bf16 %v4190, %v4190
  %v4223 = vpack.c.bf16 %v4191, %v4191
  %v4224 = vpack.c.bf16 %v4192, %v4192
  %v4225 = vpack.c.bf16 %v4193, %v4193
  %v4226 = vpack.c.bf16 %v4194, %v4194
  %v4227 = vpack.c.bf16 %v4195, %v4195
  %v4228 = vpack.c.bf16 %v4196, %v4196
  %v4229 = vpack.c.bf16 %v4197, %v4197
  %v4230 = vpack.c.bf16 %v4198, %v4198
  %v4231 = vpack.c.bf16 %v4199, %v4199
  %v4232 = vpack.c.bf16 %v4200, %v4200
  %v4233 = vpack.c.bf16 %v4201, %v4201
  %v4234 = vpack.c.bf16 %v4202, %v4202
  %v4235 = vpack.c.bf16 %v4203, %v4203
  %v4236 = vpack.c.bf16 %v4204, %v4204
  %v4237 = vpack.c.bf16 %v4205, %v4205
  %v4238 = vpack.c.bf16 %v4206, %v4206
  %v4239 = vpack.c.bf16 %v4207, %v4207
  %v4240 = vpack.c.bf16 %v4208, %v4208
  %v4241 = vpack.c.bf16 %v4209, %v4209
  %v4242 = vpack.c.bf16 %v4210, %v4210
  %v4243 = vpack.c.bf16 %v4211, %v4211
  %v4244 = vpack.c.bf16 %v4212, %v4212
  %v4245 = vpack.c.bf16 %v4213, %v4213
  %v4246 = vpack.c.bf16 %v4214, %v4214
  %v4247 = vpack.c.bf16 %v4215, %v4215
  %v4248 = vpack.c.bf16 %v4216, %v4216
  %v4249 = vpack.c.bf16 %v4217, %v4217
  %v4250 = vpack.c.bf16 %v4218, %v4218
  %v4251 = vpack.c.bf16 %v4219, %v4219
  %v4252 = vpack.c.bf16 %v4220, %v4220
  %v4253 = vpack.c.bf16 %v4221, %v4221
  %vm4254 = vcmask 60416
  %4255 = vst.msk [vmem:[%s3] sm:$0xf] %vm4254, %v4222
  %4256 = vst.msk [vmem:[%s3 + $0x4] sm:$0xf] %vm4254, %v4223
  %4257 = vst.msk [vmem:[%s3 + $0x8] sm:$0xf] %vm4254, %v4224
  %4258 = vst.msk [vmem:[%s3 + $0xc] sm:$0xf] %vm4254, %v4225
  %4259 = vst.msk [vmem:[%s3 + $0x10] sm:$0xf] %vm4254, %v4226
  %4260 = vst.msk [vmem:[%s3 + $0x14] sm:$0xf] %vm4254, %v4227
  %4261 = vst.msk [vmem:[%s3 + $0x18] sm:$0xf] %vm4254, %v4228
  %4262 = vst.msk [vmem:[%s3 + $0x1c] sm:$0xf] %vm4254, %v4229
  %4263 = vst.msk [vmem:[%s3 + $0x20] sm:$0xf] %vm4254, %v4230
  %4264 = vst.msk [vmem:[%s3 + $0x24] sm:$0xf] %vm4254, %v4231
  %4265 = vst.msk [vmem:[%s3 + $0x28] sm:$0xf] %vm4254, %v4232
  %4266 = vst.msk [vmem:[%s3 + $0x2c] sm:$0xf] %vm4254, %v4233
  %4267 = vst.msk [vmem:[%s3 + $0x30] sm:$0xf] %vm4254, %v4234
  %4268 = vst.msk [vmem:[%s3 + $0x34] sm:$0xf] %vm4254, %v4235
  %4269 = vst.msk [vmem:[%s3 + $0x38] sm:$0xf] %vm4254, %v4236
  %4270 = vst.msk [vmem:[%s3 + $0x3c] sm:$0xf] %vm4254, %v4237
  %4271 = vst.msk [vmem:[%s3 + $0x40] sm:$0xf] %vm4254, %v4238
  %4272 = vst.msk [vmem:[%s3 + $0x44] sm:$0xf] %vm4254, %v4239
  %4273 = vst.msk [vmem:[%s3 + $0x48] sm:$0xf] %vm4254, %v4240
  %4274 = vst.msk [vmem:[%s3 + $0x4c] sm:$0xf] %vm4254, %v4241
  %4275 = vst.msk [vmem:[%s3 + $0x50] sm:$0xf] %vm4254, %v4242
  %4276 = vst.msk [vmem:[%s3 + $0x54] sm:$0xf] %vm4254, %v4243
  %4277 = vst.msk [vmem:[%s3 + $0x58] sm:$0xf] %vm4254, %v4244
  %4278 = vst.msk [vmem:[%s3 + $0x5c] sm:$0xf] %vm4254, %v4245
  %4279 = vst.msk [vmem:[%s3 + $0x60] sm:$0xf] %vm4254, %v4246
  %4280 = vst.msk [vmem:[%s3 + $0x64] sm:$0xf] %vm4254, %v4247
  %4281 = vst.msk [vmem:[%s3 + $0x68] sm:$0xf] %vm4254, %v4248
  %4282 = vst.msk [vmem:[%s3 + $0x6c] sm:$0xf] %vm4254, %v4249
  %4283 = vst.msk [vmem:[%s3 + $0x70] sm:$0xf] %vm4254, %v4250
  %4284 = vst.msk [vmem:[%s3 + $0x74] sm:$0xf] %vm4254, %v4251
  %4285 = vst.msk [vmem:[%s3 + $0x78] sm:$0xf] %vm4254, %v4252
  %4286 = vst.msk [vmem:[%s3 + $0x7c] sm:$0xf] %vm4254, %v4253
  // Predicated region
  $region14: #{vae_forward.12} parent=0 // pred_check
    _
  $region15: #{vae_forward.12} parent=0 // pred_check_branch
    %4288 = sbr.rel (0) target = $region17
  $region16: #{vae_forward.12} parent=0 // pred_region
    _
  $region17: #{vae_forward.12} parent=0 // pred_fallthru
    _
  // Predicated region
  $region18: #{vae_forward.12} parent=0 // pred_check
    _
  $region19: #{vae_forward.12} parent=0 // pred_check_branch
    %4290 = sbr.rel (0) target = $region21
  $region20: #{vae_forward.12} parent=0 // pred_region
    _
  $region21: #{vae_forward.12} parent=0 // pred_fallthru
    _

// kernel: vae_forward.13
$region0: #{vae_forward.13}
  #allocation0 [shape = 'u32[]', space=smem, size = 0x4, offset = 0x4, fixed_abs, tag = 'smem constant byte address 0x4 - core index']
  #allocation1 [shape = 'u32[72,128]{1,0:T(1,128)}', space=vmem, size = 0x9000, scoped, tag = 'internal scratch']
  %s0 = inlined_call_operand.vmem [shape: bf16[2,1024], index: 0, kind: input, shape index: {}]
  %s1 = inlined_call_operand.vmem [shape: bf16[1024,128], index: 1, kind: input, shape index: {}]
  %s2 = inlined_call_operand.vmem [shape: bf16[1024,128], index: 2, kind: input, shape index: {}]
  %s3 = inlined_call_operand.vmem [shape: bf16[128,1024], index: 3, kind: input, shape index: {}]
  %s4 = inlined_call_operand.vmem [shape: f32[1,128], index: 4, kind: input, shape index: {}]
  %s5 = inlined_call_operand.vmem [shape: f32[1,128], index: 5, kind: input, shape index: {}]
  %s6 = inlined_call_operand.vmem [shape: f32[1,1024], index: 6, kind: input, shape index: {}]
  %s7 = inlined_call_operand.vmem [shape: f32[2,128], index: 7, kind: input, shape index: {}]
  %s8 = inlined_call_operand.hbm [shape: f32[2,128], index: 8, kind: output, shape index: {0}]
  %s9 = inlined_call_operand.hbm [shape: f32[2,128], index: 9, kind: output, shape index: {1}]
  %s10 = inlined_call_operand.vmem [shape: bf16[2,1024], index: 10, kind: output, shape index: {2}]
  %11 = xla_tuple %s8, %s9, %s10
  %s12 = sld [smem:[#allocation0]]
  $region58: #{vae_forward.13} parent=0
    _
  %s14 = ssub.s32 1, %s12
  %s15 = scalar_select 0, %s14, %s12
  $region1: #{vae_forward.13} parent=0
    #allocation2 [shape = 'u8[1024]{0}', space=vmem, size = 0x400, scoped, tag = 'output window, operand 0, single buffered']
    #allocation3 [shape = 's32[1]{0}', space=sflag, size = 0x4, scoped, tag = 'scoped memory for vae_forward.13']
    #allocation4 [shape = 'u8[1024]{0}', space=vmem, size = 0x400, scoped, tag = 'output window, operand 1, single buffered']
    #allocation5 [shape = 's32[1]{0}', space=sflag, size = 0x4, scoped, tag = 'scoped memory for vae_forward.13']
    %16 = vsyncpa [#allocation3], 0
    %17 = vsyncpa [#allocation5], 0
    // Predicated region
    $region2: #{vae_forward.13} parent=1 // pred_check
      _
    $region3: #{vae_forward.13} parent=1 // pred_check_branch
      %19 = sbr.rel (0) target = $region5
    $region4: #{vae_forward.13} parent=1 // pred_region
      _
    $region5: #{vae_forward.13} parent=1 // pred_fallthru
      _
    // Predicated region
    $region6: #{vae_forward.13} parent=1 // pred_check
      _
    $region7: #{vae_forward.13} parent=1 // pred_check_branch
      %21 = sbr.rel (0) target = $region9
    $region8: #{vae_forward.13} parent=1 // pred_region
      _
    $region9: #{vae_forward.13} parent=1 // pred_fallthru
      _
    // Predicated region
    $region10: #{vae_forward.13} parent=1 // pred_check
      _
    $region11: #{vae_forward.13} parent=1 // pred_check_branch
      %23 = sbr.rel (0) target = $region13
    $region12: #{vae_forward.13} parent=1 // pred_region
      _
    $region13: #{vae_forward.13} parent=1 // pred_fallthru
      _
    // Predicated region
    $region14: #{vae_forward.13} parent=1 // pred_check
      _
    $region15: #{vae_forward.13} parent=1 // pred_check_branch
      %25 = sbr.rel (0) target = $region17
    $region16: #{vae_forward.13} parent=1 // pred_region
      _
    $region17: #{vae_forward.13} parent=1 // pred_fallthru
      _
    // Predicated region
    $region18: #{vae_forward.13} parent=1 // pred_check
      _
    $region19: #{vae_forward.13} parent=1 // pred_check_branch
      %27 = sbr.rel (0) target = $region21
    $region20: #{vae_forward.13} parent=1 // pred_region
      _
    $region21: #{vae_forward.13} parent=1 // pred_fallthru
      _
    // Predicated region
    $region22: #{vae_forward.13} parent=1 // pred_check
      _
    $region23: #{vae_forward.13} parent=1 // pred_check_branch
      %29 = sbr.rel (0) target = $region25
    $region24: #{vae_forward.13} parent=1 // pred_region
      _
    $region25: #{vae_forward.13} parent=1 // pred_fallthru
      _
    // Predicated region
    $region26: #{vae_forward.13} parent=1 // pred_check
      _
    $region27: #{vae_forward.13} parent=1 // pred_check_branch
      %31 = sbr.rel (0) target = $region29
    $region28: #{vae_forward.13} parent=1 // pred_region
      _
    $region29: #{vae_forward.13} parent=1 // pred_fallthru
      _
    // Predicated region
    $region30: #{vae_forward.13} parent=1 // pred_check
      _
    $region31: #{vae_forward.13} parent=1 // pred_check_branch
      %33 = sbr.rel (0) target = $region33
    $region32: #{vae_forward.13} parent=1 // pred_region
      _
    $region33: #{vae_forward.13} parent=1 // pred_fallthru
      _
    %v34 = vld [vmem:[%s0] sm:$0xff]
    %v35 = vld [vmem:[%s1] sm:$0xf]
    %v36 = vld [vmem:[%s1 + $0x4] sm:$0xf]
    %v37 = vld [vmem:[%s1 + $0x8] sm:$0xf]
    %v38 = vld [vmem:[%s1 + $0xc] sm:$0xf]
    %v39 = vld [vmem:[%s1 + $0x10] sm:$0xf]
    %v40 = vld [vmem:[%s1 + $0x14] sm:$0xf]
    %v41 = vld [vmem:[%s1 + $0x18] sm:$0xf]
    %v42 = vld [vmem:[%s1 + $0x1c] sm:$0xf]
    %v43 = vld [vmem:[%s1 + $0x20] sm:$0xf]
    %v44 = vld [vmem:[%s1 + $0x24] sm:$0xf]
    %v45 = vld [vmem:[%s1 + $0x28] sm:$0xf]
    %v46 = vld [vmem:[%s1 + $0x2c] sm:$0xf]
    %v47 = vld [vmem:[%s1 + $0x30] sm:$0xf]
    %v48 = vld [vmem:[%s1 + $0x34] sm:$0xf]
    %v49 = vld [vmem:[%s1 + $0x38] sm:$0xf]
    %v50 = vld [vmem:[%s1 + $0x3c] sm:$0xf]
    %v51 = vld [vmem:[%s1 + $0x40] sm:$0xf]
    %v52 = vld [vmem:[%s1 + $0x44] sm:$0xf]
    %v53 = vld [vmem:[%s1 + $0x48] sm:$0xf]
    %v54 = vld [vmem:[%s1 + $0x4c] sm:$0xf]
    %v55 = vld [vmem:[%s1 + $0x50] sm:$0xf]
    %v56 = vld [vmem:[%s1 + $0x54] sm:$0xf]
    %v57 = vld [vmem:[%s1 + $0x58] sm:$0xf]
    %v58 = vld [vmem:[%s1 + $0x5c] sm:$0xf]
    %v59 = vld [vmem:[%s1 + $0x60] sm:$0xf]
    %v60 = vld [vmem:[%s1 + $0x64] sm:$0xf]
    %v61 = vld [vmem:[%s1 + $0x68] sm:$0xf]
    %v62 = vld [vmem:[%s1 + $0x6c] sm:$0xf]
    %v63 = vld [vmem:[%s1 + $0x70] sm:$0xf]
    %v64 = vld [vmem:[%s1 + $0x74] sm:$0xf]
    %v65 = vld [vmem:[%s1 + $0x78] sm:$0xf]
    %v66 = vld [vmem:[%s1 + $0x7c] sm:$0xf]
    %v67 = vld [vmem:[%s1 + $0x80] sm:$0xf]
    %v68 = vld [vmem:[%s1 + $0x84] sm:$0xf]
    %v69 = vld [vmem:[%s1 + $0x88] sm:$0xf]
    %v70 = vld [vmem:[%s1 + $0x8c] sm:$0xf]
    %v71 = vld [vmem:[%s1 + $0x90] sm:$0xf]
    %v72 = vld [vmem:[%s1 + $0x94] sm:$0xf]
    %v73 = vld [vmem:[%s1 + $0x98] sm:$0xf]
    %v74 = vld [vmem:[%s1 + $0x9c] sm:$0xf]
    %v75 = vld [vmem:[%s1 + $0xa0] sm:$0xf]
    %v76 = vld [vmem:[%s1 + $0xa4] sm:$0xf]
    %v77 = vld [vmem:[%s1 + $0xa8] sm:$0xf]
    %v78 = vld [vmem:[%s1 + $0xac] sm:$0xf]
    %v79 = vld [vmem:[%s1 + $0xb0] sm:$0xf]
    %v80 = vld [vmem:[%s1 + $0xb4] sm:$0xf]
    %v81 = vld [vmem:[%s1 + $0xb8] sm:$0xf]
    %v82 = vld [vmem:[%s1 + $0xbc] sm:$0xf]
    %v83 = vld [vmem:[%s1 + $0xc0] sm:$0xf]
    %v84 = vld [vmem:[%s1 + $0xc4] sm:$0xf]
    %v85 = vld [vmem:[%s1 + $0xc8] sm:$0xf]
    %v86 = vld [vmem:[%s1 + $0xcc] sm:$0xf]
    %v87 = vld [vmem:[%s1 + $0xd0] sm:$0xf]
    %v88 = vld [vmem:[%s1 + $0xd4] sm:$0xf]
    %v89 = vld [vmem:[%s1 + $0xd8] sm:$0xf]
    %v90 = vld [vmem:[%s1 + $0xdc] sm:$0xf]
    %v91 = vld [vmem:[%s1 + $0xe0] sm:$0xf]
    %v92 = vld [vmem:[%s1 + $0xe4] sm:$0xf]
    %v93 = vld [vmem:[%s1 + $0xe8] sm:$0xf]
    %v94 = vld [vmem:[%s1 + $0xec] sm:$0xf]
    %v95 = vld [vmem:[%s1 + $0xf0] sm:$0xf]
    %v96 = vld [vmem:[%s1 + $0xf4] sm:$0xf]
    %v97 = vld [vmem:[%s1 + $0xf8] sm:$0xf]
    %v98 = vld [vmem:[%s1 + $0xfc] sm:$0xf]
    %v99 = vld [vmem:[%s1 + $0x100] sm:$0xf]
    %v100 = vld [vmem:[%s1 + $0x104] sm:$0xf]
    %v101 = vld [vmem:[%s1 + $0x108] sm:$0xf]
    %v102 = vld [vmem:[%s1 + $0x10c] sm:$0xf]
    %v103 = vld [vmem:[%s1 + $0x110] sm:$0xf]
    %v104 = vld [vmem:[%s1 + $0x114] sm:$0xf]
    %v105 = vld [vmem:[%s1 + $0x118] sm:$0xf]
    %v106 = vld [vmem:[%s1 + $0x11c] sm:$0xf]
    %v107 = vld [vmem:[%s1 + $0x120] sm:$0xf]
    %v108 = vld [vmem:[%s1 + $0x124] sm:$0xf]
    %v109 = vld [vmem:[%s1 + $0x128] sm:$0xf]
    %v110 = vld [vmem:[%s1 + $0x12c] sm:$0xf]
    %v111 = vld [vmem:[%s1 + $0x130] sm:$0xf]
    %v112 = vld [vmem:[%s1 + $0x134] sm:$0xf]
    %v113 = vld [vmem:[%s1 + $0x138] sm:$0xf]
    %v114 = vld [vmem:[%s1 + $0x13c] sm:$0xf]
    %v115 = vld [vmem:[%s1 + $0x140] sm:$0xf]
    %v116 = vld [vmem:[%s1 + $0x144] sm:$0xf]
    %v117 = vld [vmem:[%s1 + $0x148] sm:$0xf]
    %v118 = vld [vmem:[%s1 + $0x14c] sm:$0xf]
    %v119 = vld [vmem:[%s1 + $0x150] sm:$0xf]
    %v120 = vld [vmem:[%s1 + $0x154] sm:$0xf]
    %v121 = vld [vmem:[%s1 + $0x158] sm:$0xf]
    %v122 = vld [vmem:[%s1 + $0x15c] sm:$0xf]
    %v123 = vld [vmem:[%s1 + $0x160] sm:$0xf]
    %v124 = vld [vmem:[%s1 + $0x164] sm:$0xf]
    %v125 = vld [vmem:[%s1 + $0x168] sm:$0xf]
    %v126 = vld [vmem:[%s1 + $0x16c] sm:$0xf]
    %v127 = vld [vmem:[%s1 + $0x170] sm:$0xf]
    %v128 = vld [vmem:[%s1 + $0x174] sm:$0xf]
    %v129 = vld [vmem:[%s1 + $0x178] sm:$0xf]
    %v130 = vld [vmem:[%s1 + $0x17c] sm:$0xf]
    %v131 = vld [vmem:[%s1 + $0x180] sm:$0xf]
    %v132 = vld [vmem:[%s1 + $0x184] sm:$0xf]
    %v133 = vld [vmem:[%s1 + $0x188] sm:$0xf]
    %v134 = vld [vmem:[%s1 + $0x18c] sm:$0xf]
    %v135 = vld [vmem:[%s1 + $0x190] sm:$0xf]
    %v136 = vld [vmem:[%s1 + $0x194] sm:$0xf]
    %v137 = vld [vmem:[%s1 + $0x198] sm:$0xf]
    %v138 = vld [vmem:[%s1 + $0x19c] sm:$0xf]
    %v139 = vld [vmem:[%s1 + $0x1a0] sm:$0xf]
    %v140 = vld [vmem:[%s1 + $0x1a4] sm:$0xf]
    %v141 = vld [vmem:[%s1 + $0x1a8] sm:$0xf]
    %v142 = vld [vmem:[%s1 + $0x1ac] sm:$0xf]
    %v143 = vld [vmem:[%s1 + $0x1b0] sm:$0xf]
    %v144 = vld [vmem:[%s1 + $0x1b4] sm:$0xf]
    %v145 = vld [vmem:[%s1 + $0x1b8] sm:$0xf]
    %v146 = vld [vmem:[%s1 + $0x1bc] sm:$0xf]
    %v147 = vld [vmem:[%s1 + $0x1c0] sm:$0xf]
    %v148 = vld [vmem:[%s1 + $0x1c4] sm:$0xf]
    %v149 = vld [vmem:[%s1 + $0x1c8] sm:$0xf]
    %v150 = vld [vmem:[%s1 + $0x1cc] sm:$0xf]
    %v151 = vld [vmem:[%s1 + $0x1d0] sm:$0xf]
    %v152 = vld [vmem:[%s1 + $0x1d4] sm:$0xf]
    %v153 = vld [vmem:[%s1 + $0x1d8] sm:$0xf]
    %v154 = vld [vmem:[%s1 + $0x1dc] sm:$0xf]
    %v155 = vld [vmem:[%s1 + $0x1e0] sm:$0xf]
    %v156 = vld [vmem:[%s1 + $0x1e4] sm:$0xf]
    %v157 = vld [vmem:[%s1 + $0x1e8] sm:$0xf]
    %v158 = vld [vmem:[%s1 + $0x1ec] sm:$0xf]
    %v159 = vld [vmem:[%s1 + $0x1f0] sm:$0xf]
    %v160 = vld [vmem:[%s1 + $0x1f4] sm:$0xf]
    %v161 = vld [vmem:[%s1 + $0x1f8] sm:$0xf]
    %v162 = vld [vmem:[%s1 + $0x1fc] sm:$0xf]
    %v163 = vld [vmem:[%s4] sm:$0x1]
    %v165 = vperm.slane %v163, 0
    %168 = vst [vmem:[#allocation1] ss:$9 sm:$0xff] %v34
    %v169 = vld [vmem:[#allocation1] sm:$0xff]
    %v170 = vld [vmem:[#allocation1 + $0x9] sm:$0xff]
    %v171 = vld [vmem:[#allocation1 + $0x12] sm:$0xff]
    %v172 = vld [vmem:[#allocation1 + $0x1b] sm:$0xff]
    %v173 = vld [vmem:[#allocation1 + $0x24] sm:$0xff]
    %v174 = vld [vmem:[#allocation1 + $0x2d] sm:$0xff]
    %v175 = vld [vmem:[#allocation1 + $0x36] sm:$0xff]
    %v176 = vld [vmem:[#allocation1 + $0x3f] sm:$0xff]
    %v313 = vunpack.c.l.b16 %v35
    %v314 = vunpack.c.l.b16 %v36
    %v315 = vunpack.c.l.b16 %v37
    %v316 = vunpack.c.l.b16 %v38
    %v317 = vunpack.c.l.b16 %v39
    %v318 = vunpack.c.l.b16 %v40
    %v319 = vunpack.c.l.b16 %v41
    %v320 = vunpack.c.l.b16 %v42
    %v321 = vunpack.c.l.b16 %v43
    %v322 = vunpack.c.l.b16 %v44
    %v323 = vunpack.c.l.b16 %v45
    %v324 = vunpack.c.l.b16 %v46
    %v325 = vunpack.c.l.b16 %v47
    %v326 = vunpack.c.l.b16 %v48
    %v327 = vunpack.c.l.b16 %v49
    %v328 = vunpack.c.l.b16 %v50
    %v329 = vunpack.c.l.b16 %v51
    %v330 = vunpack.c.l.b16 %v52
    %v331 = vunpack.c.l.b16 %v53
    %v332 = vunpack.c.l.b16 %v54
    %v333 = vunpack.c.l.b16 %v55
    %v334 = vunpack.c.l.b16 %v56
    %v335 = vunpack.c.l.b16 %v57
    %v336 = vunpack.c.l.b16 %v58
    %v337 = vunpack.c.l.b16 %v59
    %v338 = vunpack.c.l.b16 %v60
    %v339 = vunpack.c.l.b16 %v61
    %v340 = vunpack.c.l.b16 %v62
    %v341 = vunpack.c.l.b16 %v63
    %v342 = vunpack.c.l.b16 %v64
    %v343 = vunpack.c.l.b16 %v65
    %v344 = vunpack.c.l.b16 %v66
    %v345 = vunpack.c.l.b16 %v67
    %v346 = vunpack.c.l.b16 %v68
    %v347 = vunpack.c.l.b16 %v69
    %v348 = vunpack.c.l.b16 %v70
    %v349 = vunpack.c.l.b16 %v71
    %v350 = vunpack.c.l.b16 %v72
    %v351 = vunpack.c.l.b16 %v73
    %v352 = vunpack.c.l.b16 %v74
    %v353 = vunpack.c.l.b16 %v75
    %v354 = vunpack.c.l.b16 %v76
    %v355 = vunpack.c.l.b16 %v77
    %v356 = vunpack.c.l.b16 %v78
    %v357 = vunpack.c.l.b16 %v79
    %v358 = vunpack.c.l.b16 %v80
    %v359 = vunpack.c.l.b16 %v81
    %v360 = vunpack.c.l.b16 %v82
    %v361 = vunpack.c.l.b16 %v83
    %v362 = vunpack.c.l.b16 %v84
    %v363 = vunpack.c.l.b16 %v85
    %v364 = vunpack.c.l.b16 %v86
    %v365 = vunpack.c.l.b16 %v87
    %v366 = vunpack.c.l.b16 %v88
    %v367 = vunpack.c.l.b16 %v89
    %v368 = vunpack.c.l.b16 %v90
    %v369 = vunpack.c.l.b16 %v91
    %v370 = vunpack.c.l.b16 %v92
    %v371 = vunpack.c.l.b16 %v93
    %v372 = vunpack.c.l.b16 %v94
    %v373 = vunpack.c.l.b16 %v95
    %v374 = vunpack.c.l.b16 %v96
    %v375 = vunpack.c.l.b16 %v97
    %v376 = vunpack.c.l.b16 %v98
    %v377 = vunpack.c.l.b16 %v99
    %v378 = vunpack.c.l.b16 %v100
    %v379 = vunpack.c.l.b16 %v101
    %v380 = vunpack.c.l.b16 %v102
    %v381 = vunpack.c.l.b16 %v103
    %v382 = vunpack.c.l.b16 %v104
    %v383 = vunpack.c.l.b16 %v105
    %v384 = vunpack.c.l.b16 %v106
    %v385 = vunpack.c.l.b16 %v107
    %v386 = vunpack.c.l.b16 %v108
    %v387 = vunpack.c.l.b16 %v109
    %v388 = vunpack.c.l.b16 %v110
    %v389 = vunpack.c.l.b16 %v111
    %v390 = vunpack.c.l.b16 %v112
    %v391 = vunpack.c.l.b16 %v113
    %v392 = vunpack.c.l.b16 %v114
    %v393 = vunpack.c.l.b16 %v115
    %v394 = vunpack.c.l.b16 %v116
    %v395 = vunpack.c.l.b16 %v117
    %v396 = vunpack.c.l.b16 %v118
    %v397 = vunpack.c.l.b16 %v119
    %v398 = vunpack.c.l.b16 %v120
    %v399 = vunpack.c.l.b16 %v121
    %v400 = vunpack.c.l.b16 %v122
    %v401 = vunpack.c.l.b16 %v123
    %v402 = vunpack.c.l.b16 %v124
    %v403 = vunpack.c.l.b16 %v125
    %v404 = vunpack.c.l.b16 %v126
    %v405 = vunpack.c.l.b16 %v127
    %v406 = vunpack.c.l.b16 %v128
    %v407 = vunpack.c.l.b16 %v129
    %v408 = vunpack.c.l.b16 %v130
    %v409 = vunpack.c.l.b16 %v131
    %v410 = vunpack.c.l.b16 %v132
    %v411 = vunpack.c.l.b16 %v133
    %v412 = vunpack.c.l.b16 %v134
    %v413 = vunpack.c.l.b16 %v135
    %v414 = vunpack.c.l.b16 %v136
    %v415 = vunpack.c.l.b16 %v137
    %v416 = vunpack.c.l.b16 %v138
    %v417 = vunpack.c.l.b16 %v139
    %v418 = vunpack.c.l.b16 %v140
    %v419 = vunpack.c.l.b16 %v141
    %v420 = vunpack.c.l.b16 %v142
    %v421 = vunpack.c.l.b16 %v143
    %v422 = vunpack.c.l.b16 %v144
    %v423 = vunpack.c.l.b16 %v145
    %v424 = vunpack.c.l.b16 %v146
    %v425 = vunpack.c.l.b16 %v147
    %v426 = vunpack.c.l.b16 %v148
    %v427 = vunpack.c.l.b16 %v149
    %v428 = vunpack.c.l.b16 %v150
    %v429 = vunpack.c.l.b16 %v151
    %v430 = vunpack.c.l.b16 %v152
    %v431 = vunpack.c.l.b16 %v153
    %v432 = vunpack.c.l.b16 %v154
    %v433 = vunpack.c.l.b16 %v155
    %v434 = vunpack.c.l.b16 %v156
    %v435 = vunpack.c.l.b16 %v157
    %v436 = vunpack.c.l.b16 %v158
    %v437 = vunpack.c.l.b16 %v159
    %v438 = vunpack.c.l.b16 %v160
    %v439 = vunpack.c.l.b16 %v161
    %v440 = vunpack.c.l.b16 %v162
    %v441 = vpack.c.b16 %v314, %v313
    %v442 = vpack.c.b16 %v316, %v315
    %v443 = vpack.c.b16 %v318, %v317
    %v444 = vpack.c.b16 %v320, %v319
    %v445 = vpack.c.b16 %v322, %v321
    %v446 = vpack.c.b16 %v324, %v323
    %v447 = vpack.c.b16 %v326, %v325
    %v448 = vpack.c.b16 %v328, %v327
    %v449 = vpack.c.b16 %v330, %v329
    %v450 = vpack.c.b16 %v332, %v331
    %v451 = vpack.c.b16 %v334, %v333
    %v452 = vpack.c.b16 %v336, %v335
    %v453 = vpack.c.b16 %v338, %v337
    %v454 = vpack.c.b16 %v340, %v339
    %v455 = vpack.c.b16 %v342, %v341
    %v456 = vpack.c.b16 %v344, %v343
    %v457 = vpack.c.b16 %v346, %v345
    %v458 = vpack.c.b16 %v348, %v347
    %v459 = vpack.c.b16 %v350, %v349
    %v460 = vpack.c.b16 %v352, %v351
    %v461 = vpack.c.b16 %v354, %v353
    %v462 = vpack.c.b16 %v356, %v355
    %v463 = vpack.c.b16 %v358, %v357
    %v464 = vpack.c.b16 %v360, %v359
    %v465 = vpack.c.b16 %v362, %v361
    %v466 = vpack.c.b16 %v364, %v363
    %v467 = vpack.c.b16 %v366, %v365
    %v468 = vpack.c.b16 %v368, %v367
    %v469 = vpack.c.b16 %v370, %v369
    %v470 = vpack.c.b16 %v372, %v371
    %v471 = vpack.c.b16 %v374, %v373
    %v472 = vpack.c.b16 %v376, %v375
    %v473 = vpack.c.b16 %v378, %v377
    %v474 = vpack.c.b16 %v380, %v379
    %v475 = vpack.c.b16 %v382, %v381
    %v476 = vpack.c.b16 %v384, %v383
    %v477 = vpack.c.b16 %v386, %v385
    %v478 = vpack.c.b16 %v388, %v387
    %v479 = vpack.c.b16 %v390, %v389
    %v480 = vpack.c.b16 %v392, %v391
    %v481 = vpack.c.b16 %v394, %v393
    %v482 = vpack.c.b16 %v396, %v395
    %v483 = vpack.c.b16 %v398, %v397
    %v484 = vpack.c.b16 %v400, %v399
    %v485 = vpack.c.b16 %v402, %v401
    %v486 = vpack.c.b16 %v404, %v403
    %v487 = vpack.c.b16 %v406, %v405
    %v488 = vpack.c.b16 %v408, %v407
    %v489 = vpack.c.b16 %v410, %v409
    %v490 = vpack.c.b16 %v412, %v411
    %v491 = vpack.c.b16 %v414, %v413
    %v492 = vpack.c.b16 %v416, %v415
    %v493 = vpack.c.b16 %v418, %v417
    %v494 = vpack.c.b16 %v420, %v419
    %v495 = vpack.c.b16 %v422, %v421
    %v496 = vpack.c.b16 %v424, %v423
    %v497 = vpack.c.b16 %v426, %v425
    %v498 = vpack.c.b16 %v428, %v427
    %v499 = vpack.c.b16 %v430, %v429
    %v500 = vpack.c.b16 %v432, %v431
    %v501 = vpack.c.b16 %v434, %v433
    %v502 = vpack.c.b16 %v436, %v435
    %v503 = vpack.c.b16 %v438, %v437
    %v504 = vpack.c.b16 %v440, %v439
    %569 = vmatpush.bf16.msra.mxu0 %v448
    %570 = vmatpush.bf16.msra.mxu0 %v447
    %571 = vmatpush.bf16.msra.mxu0 %v446
    %572 = vmatpush.bf16.msra.mxu0 %v445
    %573 = vmatpush.bf16.msra.mxu0 %v444
    %574 = vmatpush.bf16.msra.mxu0 %v443
    %575 = vmatpush.bf16.msra.mxu0 %v442
    %576 = vmatpush.bf16.msra.mxu0 %v441
    %577 = vmatmul.bf16.gmra.mxu0 %v169
    %v578 = vpop.f32.mrf.mxu0
    %v579 = vadd.f32 %v165, %v578
    %v580 = vpop.f32.mrf.mxu0
    %581 = vdwg.mxu0
    %582 = vmatpush.bf16.msra.mxu0 %v456
    %583 = vmatpush.bf16.msra.mxu0 %v455
    %584 = vmatpush.bf16.msra.mxu0 %v454
    %585 = vmatpush.bf16.msra.mxu0 %v453
    %586 = vmatpush.bf16.msra.mxu0 %v452
    %587 = vmatpush.bf16.msra.mxu0 %v451
    %588 = vmatpush.bf16.msra.mxu0 %v450
    %589 = vmatpush.bf16.msra.mxu0 %v449
    %590 = vmatmul.bf16.gmra.mxu0 %v170
    %v591 = vpop.f32.mrf.mxu0
    %v592 = vadd.f32 %v579, %v591
    %v593 = vpop.f32.mrf.mxu0
    %594 = vdwg.mxu0
    %595 = vmatpush.bf16.msra.mxu0 %v464
    %596 = vmatpush.bf16.msra.mxu0 %v463
    %597 = vmatpush.bf16.msra.mxu0 %v462
    %598 = vmatpush.bf16.msra.mxu0 %v461
    %599 = vmatpush.bf16.msra.mxu0 %v460
    %600 = vmatpush.bf16.msra.mxu0 %v459
    %601 = vmatpush.bf16.msra.mxu0 %v458
    %602 = vmatpush.bf16.msra.mxu0 %v457
    %603 = vmatmul.bf16.gmra.mxu0 %v171
    %v604 = vpop.f32.mrf.mxu0
    %v605 = vadd.f32 %v592, %v604
    %v606 = vpop.f32.mrf.mxu0
    %607 = vdwg.mxu0
    %608 = vmatpush.bf16.msra.mxu0 %v472
    %609 = vmatpush.bf16.msra.mxu0 %v471
    %610 = vmatpush.bf16.msra.mxu0 %v470
    %611 = vmatpush.bf16.msra.mxu0 %v469
    %612 = vmatpush.bf16.msra.mxu0 %v468
    %613 = vmatpush.bf16.msra.mxu0 %v467
    %614 = vmatpush.bf16.msra.mxu0 %v466
    %615 = vmatpush.bf16.msra.mxu0 %v465
    %616 = vmatmul.bf16.gmra.mxu0 %v172
    %v617 = vpop.f32.mrf.mxu0
    %v618 = vadd.f32 %v605, %v617
    %v619 = vpop.f32.mrf.mxu0
    %620 = vdwg.mxu0
    %621 = vmatpush.bf16.msra.mxu0 %v480
    %622 = vmatpush.bf16.msra.mxu0 %v479
    %623 = vmatpush.bf16.msra.mxu0 %v478
    %624 = vmatpush.bf16.msra.mxu0 %v477
    %625 = vmatpush.bf16.msra.mxu0 %v476
    %626 = vmatpush.bf16.msra.mxu0 %v475
    %627 = vmatpush.bf16.msra.mxu0 %v474
    %628 = vmatpush.bf16.msra.mxu0 %v473
    %629 = vmatmul.bf16.gmra.mxu0 %v173
    %v630 = vpop.f32.mrf.mxu0
    %v631 = vadd.f32 %v618, %v630
    %v632 = vpop.f32.mrf.mxu0
    %633 = vdwg.mxu0
    %634 = vmatpush.bf16.msra.mxu0 %v488
    %635 = vmatpush.bf16.msra.mxu0 %v487
    %636 = vmatpush.bf16.msra.mxu0 %v486
    %637 = vmatpush.bf16.msra.mxu0 %v485
    %638 = vmatpush.bf16.msra.mxu0 %v484
    %639 = vmatpush.bf16.msra.mxu0 %v483
    %640 = vmatpush.bf16.msra.mxu0 %v482
    %641 = vmatpush.bf16.msra.mxu0 %v481
    %642 = vmatmul.bf16.gmra.mxu0 %v174
    %v643 = vpop.f32.mrf.mxu0
    %v644 = vadd.f32 %v631, %v643
    %v645 = vpop.f32.mrf.mxu0
    %646 = vdwg.mxu0
    %647 = vmatpush.bf16.msra.mxu0 %v496
    %648 = vmatpush.bf16.msra.mxu0 %v495
    %649 = vmatpush.bf16.msra.mxu0 %v494
    %650 = vmatpush.bf16.msra.mxu0 %v493
    %651 = vmatpush.bf16.msra.mxu0 %v492
    %652 = vmatpush.bf16.msra.mxu0 %v491
    %653 = vmatpush.bf16.msra.mxu0 %v490
    %654 = vmatpush.bf16.msra.mxu0 %v489
    %655 = vmatmul.bf16.gmra.mxu0 %v175
    %v656 = vpop.f32.mrf.mxu0
    %v657 = vadd.f32 %v644, %v656
    %v658 = vpop.f32.mrf.mxu0
    %659 = vdwg.mxu0
    %660 = vmatpush.bf16.msra.mxu0 %v504
    %661 = vmatpush.bf16.msra.mxu0 %v503
    %662 = vmatpush.bf16.msra.mxu0 %v502
    %663 = vmatpush.bf16.msra.mxu0 %v501
    %664 = vmatpush.bf16.msra.mxu0 %v500
    %665 = vmatpush.bf16.msra.mxu0 %v499
    %666 = vmatpush.bf16.msra.mxu0 %v498
    %667 = vmatpush.bf16.msra.mxu0 %v497
    %668 = vmatmul.bf16.gmra.mxu0 %v176
    %v669 = vpop.f32.mrf.mxu0
    %v670 = vadd.f32 %v657, %v669
    %v671 = vpop.f32.mrf.mxu0
    %672 = vdwg.mxu0
    %v673 = vld [vmem:[%s2] sm:$0xf]
    %v674 = vld [vmem:[%s2 + $0x4] sm:$0xf]
    %v675 = vld [vmem:[%s2 + $0x8] sm:$0xf]
    %v676 = vld [vmem:[%s2 + $0xc] sm:$0xf]
    %v677 = vld [vmem:[%s2 + $0x10] sm:$0xf]
    %v678 = vld [vmem:[%s2 + $0x14] sm:$0xf]
    %v679 = vld [vmem:[%s2 + $0x18] sm:$0xf]
    %v680 = vld [vmem:[%s2 + $0x1c] sm:$0xf]
    %v681 = vld [vmem:[%s2 + $0x20] sm:$0xf]
    %v682 = vld [vmem:[%s2 + $0x24] sm:$0xf]
    %v683 = vld [vmem:[%s2 + $0x28] sm:$0xf]
    %v684 = vld [vmem:[%s2 + $0x2c] sm:$0xf]
    %v685 = vld [vmem:[%s2 + $0x30] sm:$0xf]
    %v686 = vld [vmem:[%s2 + $0x34] sm:$0xf]
    %v687 = vld [vmem:[%s2 + $0x38] sm:$0xf]
    %v688 = vld [vmem:[%s2 + $0x3c] sm:$0xf]
    %v689 = vld [vmem:[%s2 + $0x40] sm:$0xf]
    %v690 = vld [vmem:[%s2 + $0x44] sm:$0xf]
    %v691 = vld [vmem:[%s2 + $0x48] sm:$0xf]
    %v692 = vld [vmem:[%s2 + $0x4c] sm:$0xf]
    %v693 = vld [vmem:[%s2 + $0x50] sm:$0xf]
    %v694 = vld [vmem:[%s2 + $0x54] sm:$0xf]
    %v695 = vld [vmem:[%s2 + $0x58] sm:$0xf]
    %v696 = vld [vmem:[%s2 + $0x5c] sm:$0xf]
    %v697 = vld [vmem:[%s2 + $0x60] sm:$0xf]
    %v698 = vld [vmem:[%s2 + $0x64] sm:$0xf]
    %v699 = vld [vmem:[%s2 + $0x68] sm:$0xf]
    %v700 = vld [vmem:[%s2 + $0x6c] sm:$0xf]
    %v701 = vld [vmem:[%s2 + $0x70] sm:$0xf]
    %v702 = vld [vmem:[%s2 + $0x74] sm:$0xf]
    %v703 = vld [vmem:[%s2 + $0x78] sm:$0xf]
    %v704 = vld [vmem:[%s2 + $0x7c] sm:$0xf]
    %v705 = vld [vmem:[%s2 + $0x80] sm:$0xf]
    %v706 = vld [vmem:[%s2 + $0x84] sm:$0xf]
    %v707 = vld [vmem:[%s2 + $0x88] sm:$0xf]
    %v708 = vld [vmem:[%s2 + $0x8c] sm:$0xf]
    %v709 = vld [vmem:[%s2 + $0x90] sm:$0xf]
    %v710 = vld [vmem:[%s2 + $0x94] sm:$0xf]
    %v711 = vld [vmem:[%s2 + $0x98] sm:$0xf]
    %v712 = vld [vmem:[%s2 + $0x9c] sm:$0xf]
    %v713 = vld [vmem:[%s2 + $0xa0] sm:$0xf]
    %v714 = vld [vmem:[%s2 + $0xa4] sm:$0xf]
    %v715 = vld [vmem:[%s2 + $0xa8] sm:$0xf]
    %v716 = vld [vmem:[%s2 + $0xac] sm:$0xf]
    %v717 = vld [vmem:[%s2 + $0xb0] sm:$0xf]
    %v718 = vld [vmem:[%s2 + $0xb4] sm:$0xf]
    %v719 = vld [vmem:[%s2 + $0xb8] sm:$0xf]
    %v720 = vld [vmem:[%s2 + $0xbc] sm:$0xf]
    %v721 = vld [vmem:[%s2 + $0xc0] sm:$0xf]
    %v722 = vld [vmem:[%s2 + $0xc4] sm:$0xf]
    %v723 = vld [vmem:[%s2 + $0xc8] sm:$0xf]
    %v724 = vld [vmem:[%s2 + $0xcc] sm:$0xf]
    %v725 = vld [vmem:[%s2 + $0xd0] sm:$0xf]
    %v726 = vld [vmem:[%s2 + $0xd4] sm:$0xf]
    %v727 = vld [vmem:[%s2 + $0xd8] sm:$0xf]
    %v728 = vld [vmem:[%s2 + $0xdc] sm:$0xf]
    %v729 = vld [vmem:[%s2 + $0xe0] sm:$0xf]
    %v730 = vld [vmem:[%s2 + $0xe4] sm:$0xf]
    %v731 = vld [vmem:[%s2 + $0xe8] sm:$0xf]
    %v732 = vld [vmem:[%s2 + $0xec] sm:$0xf]
    %v733 = vld [vmem:[%s2 + $0xf0] sm:$0xf]
    %v734 = vld [vmem:[%s2 + $0xf4] sm:$0xf]
    %v735 = vld [vmem:[%s2 + $0xf8] sm:$0xf]
    %v736 = vld [vmem:[%s2 + $0xfc] sm:$0xf]
    %v737 = vld [vmem:[%s2 + $0x100] sm:$0xf]
    %v738 = vld [vmem:[%s2 + $0x104] sm:$0xf]
    %v739 = vld [vmem:[%s2 + $0x108] sm:$0xf]
    %v740 = vld [vmem:[%s2 + $0x10c] sm:$0xf]
    %v741 = vld [vmem:[%s2 + $0x110] sm:$0xf]
    %v742 = vld [vmem:[%s2 + $0x114] sm:$0xf]
    %v743 = vld [vmem:[%s2 + $0x118] sm:$0xf]
    %v744 = vld [vmem:[%s2 + $0x11c] sm:$0xf]
    %v745 = vld [vmem:[%s2 + $0x120] sm:$0xf]
    %v746 = vld [vmem:[%s2 + $0x124] sm:$0xf]
    %v747 = vld [vmem:[%s2 + $0x128] sm:$0xf]
    %v748 = vld [vmem:[%s2 + $0x12c] sm:$0xf]
    %v749 = vld [vmem:[%s2 + $0x130] sm:$0xf]
    %v750 = vld [vmem:[%s2 + $0x134] sm:$0xf]
    %v751 = vld [vmem:[%s2 + $0x138] sm:$0xf]
    %v752 = vld [vmem:[%s2 + $0x13c] sm:$0xf]
    %v753 = vld [vmem:[%s2 + $0x140] sm:$0xf]
    %v754 = vld [vmem:[%s2 + $0x144] sm:$0xf]
    %v755 = vld [vmem:[%s2 + $0x148] sm:$0xf]
    %v756 = vld [vmem:[%s2 + $0x14c] sm:$0xf]
    %v757 = vld [vmem:[%s2 + $0x150] sm:$0xf]
    %v758 = vld [vmem:[%s2 + $0x154] sm:$0xf]
    %v759 = vld [vmem:[%s2 + $0x158] sm:$0xf]
    %v760 = vld [vmem:[%s2 + $0x15c] sm:$0xf]
    %v761 = vld [vmem:[%s2 + $0x160] sm:$0xf]
    %v762 = vld [vmem:[%s2 + $0x164] sm:$0xf]
    %v763 = vld [vmem:[%s2 + $0x168] sm:$0xf]
    %v764 = vld [vmem:[%s2 + $0x16c] sm:$0xf]
    %v765 = vld [vmem:[%s2 + $0x170] sm:$0xf]
    %v766 = vld [vmem:[%s2 + $0x174] sm:$0xf]
    %v767 = vld [vmem:[%s2 + $0x178] sm:$0xf]
    %v768 = vld [vmem:[%s2 + $0x17c] sm:$0xf]
    %v769 = vld [vmem:[%s2 + $0x180] sm:$0xf]
    %v770 = vld [vmem:[%s2 + $0x184] sm:$0xf]
    %v771 = vld [vmem:[%s2 + $0x188] sm:$0xf]
    %v772 = vld [vmem:[%s2 + $0x18c] sm:$0xf]
    %v773 = vld [vmem:[%s2 + $0x190] sm:$0xf]
    %v774 = vld [vmem:[%s2 + $0x194] sm:$0xf]
    %v775 = vld [vmem:[%s2 + $0x198] sm:$0xf]
    %v776 = vld [vmem:[%s2 + $0x19c] sm:$0xf]
    %v777 = vld [vmem:[%s2 + $0x1a0] sm:$0xf]
    %v778 = vld [vmem:[%s2 + $0x1a4] sm:$0xf]
    %v779 = vld [vmem:[%s2 + $0x1a8] sm:$0xf]
    %v780 = vld [vmem:[%s2 + $0x1ac] sm:$0xf]
    %v781 = vld [vmem:[%s2 + $0x1b0] sm:$0xf]
    %v782 = vld [vmem:[%s2 + $0x1b4] sm:$0xf]
    %v783 = vld [vmem:[%s2 + $0x1b8] sm:$0xf]
    %v784 = vld [vmem:[%s2 + $0x1bc] sm:$0xf]
    %v785 = vld [vmem:[%s2 + $0x1c0] sm:$0xf]
    %v786 = vld [vmem:[%s2 + $0x1c4] sm:$0xf]
    %v787 = vld [vmem:[%s2 + $0x1c8] sm:$0xf]
    %v788 = vld [vmem:[%s2 + $0x1cc] sm:$0xf]
    %v789 = vld [vmem:[%s2 + $0x1d0] sm:$0xf]
    %v790 = vld [vmem:[%s2 + $0x1d4] sm:$0xf]
    %v791 = vld [vmem:[%s2 + $0x1d8] sm:$0xf]
    %v792 = vld [vmem:[%s2 + $0x1dc] sm:$0xf]
    %v793 = vld [vmem:[%s2 + $0x1e0] sm:$0xf]
    %v794 = vld [vmem:[%s2 + $0x1e4] sm:$0xf]
    %v795 = vld [vmem:[%s2 + $0x1e8] sm:$0xf]
    %v796 = vld [vmem:[%s2 + $0x1ec] sm:$0xf]
    %v797 = vld [vmem:[%s2 + $0x1f0] sm:$0xf]
    %v798 = vld [vmem:[%s2 + $0x1f4] sm:$0xf]
    %v799 = vld [vmem:[%s2 + $0x1f8] sm:$0xf]
    %v800 = vld [vmem:[%s2 + $0x1fc] sm:$0xf]
    %v801 = vld [vmem:[%s5] sm:$0x1]
    %v803 = vperm.slane %v801, 0
    %805 = vst [vmem:[#allocation1] ss:$9 sm:$0xff] %v34
    %v806 = vld [vmem:[#allocation1] sm:$0xff]
    %v807 = vld [vmem:[#allocation1 + $0x9] sm:$0xff]
    %v808 = vld [vmem:[#allocation1 + $0x12] sm:$0xff]
    %v809 = vld [vmem:[#allocation1 + $0x1b] sm:$0xff]
    %v810 = vld [vmem:[#allocation1 + $0x24] sm:$0xff]
    %v811 = vld [vmem:[#allocation1 + $0x2d] sm:$0xff]
    %v812 = vld [vmem:[#allocation1 + $0x36] sm:$0xff]
    %v813 = vld [vmem:[#allocation1 + $0x3f] sm:$0xff]
    %v950 = vunpack.c.l.b16 %v673
    %v951 = vunpack.c.l.b16 %v674
    %v952 = vunpack.c.l.b16 %v675
    %v953 = vunpack.c.l.b16 %v676
    %v954 = vunpack.c.l.b16 %v677
    %v955 = vunpack.c.l.b16 %v678
    %v956 = vunpack.c.l.b16 %v679
    %v957 = vunpack.c.l.b16 %v680
    %v958 = vunpack.c.l.b16 %v681
    %v959 = vunpack.c.l.b16 %v682
    %v960 = vunpack.c.l.b16 %v683
    %v961 = vunpack.c.l.b16 %v684
    %v962 = vunpack.c.l.b16 %v685
    %v963 = vunpack.c.l.b16 %v686
    %v964 = vunpack.c.l.b16 %v687
    %v965 = vunpack.c.l.b16 %v688
    %v966 = vunpack.c.l.b16 %v689
    %v967 = vunpack.c.l.b16 %v690
    %v968 = vunpack.c.l.b16 %v691
    %v969 = vunpack.c.l.b16 %v692
    %v970 = vunpack.c.l.b16 %v693
    %v971 = vunpack.c.l.b16 %v694
    %v972 = vunpack.c.l.b16 %v695
    %v973 = vunpack.c.l.b16 %v696
    %v974 = vunpack.c.l.b16 %v697
    %v975 = vunpack.c.l.b16 %v698
    %v976 = vunpack.c.l.b16 %v699
    %v977 = vunpack.c.l.b16 %v700
    %v978 = vunpack.c.l.b16 %v701
    %v979 = vunpack.c.l.b16 %v702
    %v980 = vunpack.c.l.b16 %v703
    %v981 = vunpack.c.l.b16 %v704
    %v982 = vunpack.c.l.b16 %v705
    %v983 = vunpack.c.l.b16 %v706
    %v984 = vunpack.c.l.b16 %v707
    %v985 = vunpack.c.l.b16 %v708
    %v986 = vunpack.c.l.b16 %v709
    %v987 = vunpack.c.l.b16 %v710
    %v988 = vunpack.c.l.b16 %v711
    %v989 = vunpack.c.l.b16 %v712
    %v990 = vunpack.c.l.b16 %v713
    %v991 = vunpack.c.l.b16 %v714
    %v992 = vunpack.c.l.b16 %v715
    %v993 = vunpack.c.l.b16 %v716
    %v994 = vunpack.c.l.b16 %v717
    %v995 = vunpack.c.l.b16 %v718
    %v996 = vunpack.c.l.b16 %v719
    %v997 = vunpack.c.l.b16 %v720
    %v998 = vunpack.c.l.b16 %v721
    %v999 = vunpack.c.l.b16 %v722
    %v1000 = vunpack.c.l.b16 %v723
    %v1001 = vunpack.c.l.b16 %v724
    %v1002 = vunpack.c.l.b16 %v725
    %v1003 = vunpack.c.l.b16 %v726
    %v1004 = vunpack.c.l.b16 %v727
    %v1005 = vunpack.c.l.b16 %v728
    %v1006 = vunpack.c.l.b16 %v729
    %v1007 = vunpack.c.l.b16 %v730
    %v1008 = vunpack.c.l.b16 %v731
    %v1009 = vunpack.c.l.b16 %v732
    %v1010 = vunpack.c.l.b16 %v733
    %v1011 = vunpack.c.l.b16 %v734
    %v1012 = vunpack.c.l.b16 %v735
    %v1013 = vunpack.c.l.b16 %v736
    %v1014 = vunpack.c.l.b16 %v737
    %v1015 = vunpack.c.l.b16 %v738
    %v1016 = vunpack.c.l.b16 %v739
    %v1017 = vunpack.c.l.b16 %v740
    %v1018 = vunpack.c.l.b16 %v741
    %v1019 = vunpack.c.l.b16 %v742
    %v1020 = vunpack.c.l.b16 %v743
    %v1021 = vunpack.c.l.b16 %v744
    %v1022 = vunpack.c.l.b16 %v745
    %v1023 = vunpack.c.l.b16 %v746
    %v1024 = vunpack.c.l.b16 %v747
    %v1025 = vunpack.c.l.b16 %v748
    %v1026 = vunpack.c.l.b16 %v749
    %v1027 = vunpack.c.l.b16 %v750
    %v1028 = vunpack.c.l.b16 %v751
    %v1029 = vunpack.c.l.b16 %v752
    %v1030 = vunpack.c.l.b16 %v753
    %v1031 = vunpack.c.l.b16 %v754
    %v1032 = vunpack.c.l.b16 %v755
    %v1033 = vunpack.c.l.b16 %v756
    %v1034 = vunpack.c.l.b16 %v757
    %v1035 = vunpack.c.l.b16 %v758
    %v1036 = vunpack.c.l.b16 %v759
    %v1037 = vunpack.c.l.b16 %v760
    %v1038 = vunpack.c.l.b16 %v761
    %v1039 = vunpack.c.l.b16 %v762
    %v1040 = vunpack.c.l.b16 %v763
    %v1041 = vunpack.c.l.b16 %v764
    %v1042 = vunpack.c.l.b16 %v765
    %v1043 = vunpack.c.l.b16 %v766
    %v1044 = vunpack.c.l.b16 %v767
    %v1045 = vunpack.c.l.b16 %v768
    %v1046 = vunpack.c.l.b16 %v769
    %v1047 = vunpack.c.l.b16 %v770
    %v1048 = vunpack.c.l.b16 %v771
    %v1049 = vunpack.c.l.b16 %v772
    %v1050 = vunpack.c.l.b16 %v773
    %v1051 = vunpack.c.l.b16 %v774
    %v1052 = vunpack.c.l.b16 %v775
    %v1053 = vunpack.c.l.b16 %v776
    %v1054 = vunpack.c.l.b16 %v777
    %v1055 = vunpack.c.l.b16 %v778
    %v1056 = vunpack.c.l.b16 %v779
    %v1057 = vunpack.c.l.b16 %v780
    %v1058 = vunpack.c.l.b16 %v781
    %v1059 = vunpack.c.l.b16 %v782
    %v1060 = vunpack.c.l.b16 %v783
    %v1061 = vunpack.c.l.b16 %v784
    %v1062 = vunpack.c.l.b16 %v785
    %v1063 = vunpack.c.l.b16 %v786
    %v1064 = vunpack.c.l.b16 %v787
    %v1065 = vunpack.c.l.b16 %v788
    %v1066 = vunpack.c.l.b16 %v789
    %v1067 = vunpack.c.l.b16 %v790
    %v1068 = vunpack.c.l.b16 %v791
    %v1069 = vunpack.c.l.b16 %v792
    %v1070 = vunpack.c.l.b16 %v793
    %v1071 = vunpack.c.l.b16 %v794
    %v1072 = vunpack.c.l.b16 %v795
    %v1073 = vunpack.c.l.b16 %v796
    %v1074 = vunpack.c.l.b16 %v797
    %v1075 = vunpack.c.l.b16 %v798
    %v1076 = vunpack.c.l.b16 %v799
    %v1077 = vunpack.c.l.b16 %v800
    %v1078 = vpack.c.b16 %v951, %v950
    %v1079 = vpack.c.b16 %v953, %v952
    %v1080 = vpack.c.b16 %v955, %v954
    %v1081 = vpack.c.b16 %v957, %v956
    %v1082 = vpack.c.b16 %v959, %v958
    %v1083 = vpack.c.b16 %v961, %v960
    %v1084 = vpack.c.b16 %v963, %v962
    %v1085 = vpack.c.b16 %v965, %v964
    %v1086 = vpack.c.b16 %v967, %v966
    %v1087 = vpack.c.b16 %v969, %v968
    %v1088 = vpack.c.b16 %v971, %v970
    %v1089 = vpack.c.b16 %v973, %v972
    %v1090 = vpack.c.b16 %v975, %v974
    %v1091 = vpack.c.b16 %v977, %v976
    %v1092 = vpack.c.b16 %v979, %v978
    %v1093 = vpack.c.b16 %v981, %v980
    %v1094 = vpack.c.b16 %v983, %v982
    %v1095 = vpack.c.b16 %v985, %v984
    %v1096 = vpack.c.b16 %v987, %v986
    %v1097 = vpack.c.b16 %v989, %v988
    %v1098 = vpack.c.b16 %v991, %v990
    %v1099 = vpack.c.b16 %v993, %v992
    %v1100 = vpack.c.b16 %v995, %v994
    %v1101 = vpack.c.b16 %v997, %v996
    %v1102 = vpack.c.b16 %v999, %v998
    %v1103 = vpack.c.b16 %v1001, %v1000
    %v1104 = vpack.c.b16 %v1003, %v1002
    %v1105 = vpack.c.b16 %v1005, %v1004
    %v1106 = vpack.c.b16 %v1007, %v1006
    %v1107 = vpack.c.b16 %v1009, %v1008
    %v1108 = vpack.c.b16 %v1011, %v1010
    %v1109 = vpack.c.b16 %v1013, %v1012
    %v1110 = vpack.c.b16 %v1015, %v1014
    %v1111 = vpack.c.b16 %v1017, %v1016
    %v1112 = vpack.c.b16 %v1019, %v1018
    %v1113 = vpack.c.b16 %v1021, %v1020
    %v1114 = vpack.c.b16 %v1023, %v1022
    %v1115 = vpack.c.b16 %v1025, %v1024
    %v1116 = vpack.c.b16 %v1027, %v1026
    %v1117 = vpack.c.b16 %v1029, %v1028
    %v1118 = vpack.c.b16 %v1031, %v1030
    %v1119 = vpack.c.b16 %v1033, %v1032
    %v1120 = vpack.c.b16 %v1035, %v1034
    %v1121 = vpack.c.b16 %v1037, %v1036
    %v1122 = vpack.c.b16 %v1039, %v1038
    %v1123 = vpack.c.b16 %v1041, %v1040
    %v1124 = vpack.c.b16 %v1043, %v1042
    %v1125 = vpack.c.b16 %v1045, %v1044
    %v1126 = vpack.c.b16 %v1047, %v1046
    %v1127 = vpack.c.b16 %v1049, %v1048
    %v1128 = vpack.c.b16 %v1051, %v1050
    %v1129 = vpack.c.b16 %v1053, %v1052
    %v1130 = vpack.c.b16 %v1055, %v1054
    %v1131 = vpack.c.b16 %v1057, %v1056
    %v1132 = vpack.c.b16 %v1059, %v1058
    %v1133 = vpack.c.b16 %v1061, %v1060
    %v1134 = vpack.c.b16 %v1063, %v1062
    %v1135 = vpack.c.b16 %v1065, %v1064
    %v1136 = vpack.c.b16 %v1067, %v1066
    %v1137 = vpack.c.b16 %v1069, %v1068
    %v1138 = vpack.c.b16 %v1071, %v1070
    %v1139 = vpack.c.b16 %v1073, %v1072
    %v1140 = vpack.c.b16 %v1075, %v1074
    %v1141 = vpack.c.b16 %v1077, %v1076
    %1206 = vmatpush.bf16.msra.mxu0 %v1085
    %1207 = vmatpush.bf16.msra.mxu0 %v1084
    %1208 = vmatpush.bf16.msra.mxu0 %v1083
    %1209 = vmatpush.bf16.msra.mxu0 %v1082
    %1210 = vmatpush.bf16.msra.mxu0 %v1081
    %1211 = vmatpush.bf16.msra.mxu0 %v1080
    %1212 = vmatpush.bf16.msra.mxu0 %v1079
    %1213 = vmatpush.bf16.msra.mxu0 %v1078
    %1214 = vmatmul.bf16.gmra.mxu0 %v806
    %v1215 = vpop.f32.mrf.mxu0
    %v1216 = vadd.f32 %v803, %v1215
    %v1217 = vpop.f32.mrf.mxu0
    %1218 = vdwg.mxu0
    %1219 = vmatpush.bf16.msra.mxu0 %v1093
    %1220 = vmatpush.bf16.msra.mxu0 %v1092
    %1221 = vmatpush.bf16.msra.mxu0 %v1091
    %1222 = vmatpush.bf16.msra.mxu0 %v1090
    %1223 = vmatpush.bf16.msra.mxu0 %v1089
    %1224 = vmatpush.bf16.msra.mxu0 %v1088
    %1225 = vmatpush.bf16.msra.mxu0 %v1087
    %1226 = vmatpush.bf16.msra.mxu0 %v1086
    %1227 = vmatmul.bf16.gmra.mxu0 %v807
    %v1228 = vpop.f32.mrf.mxu0
    %v1229 = vadd.f32 %v1216, %v1228
    %v1230 = vpop.f32.mrf.mxu0
    %1231 = vdwg.mxu0
    %1232 = vmatpush.bf16.msra.mxu0 %v1101
    %1233 = vmatpush.bf16.msra.mxu0 %v1100
    %1234 = vmatpush.bf16.msra.mxu0 %v1099
    %1235 = vmatpush.bf16.msra.mxu0 %v1098
    %1236 = vmatpush.bf16.msra.mxu0 %v1097
    %1237 = vmatpush.bf16.msra.mxu0 %v1096
    %1238 = vmatpush.bf16.msra.mxu0 %v1095
    %1239 = vmatpush.bf16.msra.mxu0 %v1094
    %1240 = vmatmul.bf16.gmra.mxu0 %v808
    %v1241 = vpop.f32.mrf.mxu0
    %v1242 = vadd.f32 %v1229, %v1241
    %v1243 = vpop.f32.mrf.mxu0
    %1244 = vdwg.mxu0
    %1245 = vmatpush.bf16.msra.mxu0 %v1109
    %1246 = vmatpush.bf16.msra.mxu0 %v1108
    %1247 = vmatpush.bf16.msra.mxu0 %v1107
    %1248 = vmatpush.bf16.msra.mxu0 %v1106
    %1249 = vmatpush.bf16.msra.mxu0 %v1105
    %1250 = vmatpush.bf16.msra.mxu0 %v1104
    %1251 = vmatpush.bf16.msra.mxu0 %v1103
    %1252 = vmatpush.bf16.msra.mxu0 %v1102
    %1253 = vmatmul.bf16.gmra.mxu0 %v809
    %v1254 = vpop.f32.mrf.mxu0
    %v1255 = vadd.f32 %v1242, %v1254
    %v1256 = vpop.f32.mrf.mxu0
    %1257 = vdwg.mxu0
    %1258 = vmatpush.bf16.msra.mxu0 %v1117
    %1259 = vmatpush.bf16.msra.mxu0 %v1116
    %1260 = vmatpush.bf16.msra.mxu0 %v1115
    %1261 = vmatpush.bf16.msra.mxu0 %v1114
    %1262 = vmatpush.bf16.msra.mxu0 %v1113
    %1263 = vmatpush.bf16.msra.mxu0 %v1112
    %1264 = vmatpush.bf16.msra.mxu0 %v1111
    %1265 = vmatpush.bf16.msra.mxu0 %v1110
    %1266 = vmatmul.bf16.gmra.mxu0 %v810
    %v1267 = vpop.f32.mrf.mxu0
    %v1268 = vadd.f32 %v1255, %v1267
    %v1269 = vpop.f32.mrf.mxu0
    %1270 = vdwg.mxu0
    %1271 = vmatpush.bf16.msra.mxu0 %v1125
    %1272 = vmatpush.bf16.msra.mxu0 %v1124
    %1273 = vmatpush.bf16.msra.mxu0 %v1123
    %1274 = vmatpush.bf16.msra.mxu0 %v1122
    %1275 = vmatpush.bf16.msra.mxu0 %v1121
    %1276 = vmatpush.bf16.msra.mxu0 %v1120
    %1277 = vmatpush.bf16.msra.mxu0 %v1119
    %1278 = vmatpush.bf16.msra.mxu0 %v1118
    %1279 = vmatmul.bf16.gmra.mxu0 %v811
    %v1280 = vpop.f32.mrf.mxu0
    %v1281 = vadd.f32 %v1268, %v1280
    %v1282 = vpop.f32.mrf.mxu0
    %1283 = vdwg.mxu0
    %1284 = vmatpush.bf16.msra.mxu0 %v1133
    %1285 = vmatpush.bf16.msra.mxu0 %v1132
    %1286 = vmatpush.bf16.msra.mxu0 %v1131
    %1287 = vmatpush.bf16.msra.mxu0 %v1130
    %1288 = vmatpush.bf16.msra.mxu0 %v1129
    %1289 = vmatpush.bf16.msra.mxu0 %v1128
    %1290 = vmatpush.bf16.msra.mxu0 %v1127
    %1291 = vmatpush.bf16.msra.mxu0 %v1126
    %1292 = vmatmul.bf16.gmra.mxu0 %v812
    %v1293 = vpop.f32.mrf.mxu0
    %v1294 = vadd.f32 %v1281, %v1293
    %v1295 = vpop.f32.mrf.mxu0
    %1296 = vdwg.mxu0
    %1297 = vmatpush.bf16.msra.mxu0 %v1141
    %1298 = vmatpush.bf16.msra.mxu0 %v1140
    %1299 = vmatpush.bf16.msra.mxu0 %v1139
    %1300 = vmatpush.bf16.msra.mxu0 %v1138
    %1301 = vmatpush.bf16.msra.mxu0 %v1137
    %1302 = vmatpush.bf16.msra.mxu0 %v1136
    %1303 = vmatpush.bf16.msra.mxu0 %v1135
    %1304 = vmatpush.bf16.msra.mxu0 %v1134
    %1305 = vmatmul.bf16.gmra.mxu0 %v813
    %v1306 = vpop.f32.mrf.mxu0
    %v1307 = vadd.f32 %v1294, %v1306
    %v1308 = vpop.f32.mrf.mxu0
    %1309 = vdwg.mxu0
    %v1310 = vld [vmem:[%s7] sm:$0x3]
    %v1311 = vmul.f32 %v1307, 0.5
    %v1312 = vmul.f32 %v1311, 1.442695
    %v1313 = vpow.pop %v1312
    %v1314 = vmul.f32 %v1310, %v1313
    %v1315 = vadd.f32 %v670, %v1314
    %v1316 = vpack.c.bf16 %v1315, %v1315
    %v1317 = vld [vmem:[%s3] sm:$0xff]
    %v1318 = vld [vmem:[%s3 + $0x8] sm:$0xff]
    %v1319 = vld [vmem:[%s3 + $0x10] sm:$0xff]
    %v1320 = vld [vmem:[%s3 + $0x18] sm:$0xff]
    %v1321 = vld [vmem:[%s3 + $0x20] sm:$0xff]
    %v1322 = vld [vmem:[%s3 + $0x28] sm:$0xff]
    %v1323 = vld [vmem:[%s3 + $0x30] sm:$0xff]
    %v1324 = vld [vmem:[%s3 + $0x38] sm:$0xff]
    %v1325 = vld [vmem:[%s3 + $0x40] sm:$0xff]
    %v1326 = vld [vmem:[%s3 + $0x48] sm:$0xff]
    %v1327 = vld [vmem:[%s3 + $0x50] sm:$0xff]
    %v1328 = vld [vmem:[%s3 + $0x58] sm:$0xff]
    %v1329 = vld [vmem:[%s3 + $0x60] sm:$0xff]
    %v1330 = vld [vmem:[%s3 + $0x68] sm:$0xff]
    %v1331 = vld [vmem:[%s3 + $0x70] sm:$0xff]
    %v1332 = vld [vmem:[%s3 + $0x78] sm:$0xff]
    %v1333 = vld [vmem:[%s3 + $0x80] sm:$0xff]
    %v1334 = vld [vmem:[%s3 + $0x88] sm:$0xff]
    %v1335 = vld [vmem:[%s3 + $0x90] sm:$0xff]
    %v1336 = vld [vmem:[%s3 + $0x98] sm:$0xff]
    %v1337 = vld [vmem:[%s3 + $0xa0] sm:$0xff]
    %v1338 = vld [vmem:[%s3 + $0xa8] sm:$0xff]
    %v1339 = vld [vmem:[%s3 + $0xb0] sm:$0xff]
    %v1340 = vld [vmem:[%s3 + $0xb8] sm:$0xff]
    %v1341 = vld [vmem:[%s3 + $0xc0] sm:$0xff]
    %v1342 = vld [vmem:[%s3 + $0xc8] sm:$0xff]
    %v1343 = vld [vmem:[%s3 + $0xd0] sm:$0xff]
    %v1344 = vld [vmem:[%s3 + $0xd8] sm:$0xff]
    %v1345 = vld [vmem:[%s3 + $0xe0] sm:$0xff]
    %v1346 = vld [vmem:[%s3 + $0xe8] sm:$0xff]
    %v1347 = vld [vmem:[%s3 + $0xf0] sm:$0xff]
    %v1348 = vld [vmem:[%s3 + $0xf8] sm:$0xff]
    %v1349 = vld [vmem:[%s3 + $0x100] sm:$0xff]
    %v1350 = vld [vmem:[%s3 + $0x108] sm:$0xff]
    %v1351 = vld [vmem:[%s3 + $0x110] sm:$0xff]
    %v1352 = vld [vmem:[%s3 + $0x118] sm:$0xff]
    %v1353 = vld [vmem:[%s3 + $0x120] sm:$0xff]
    %v1354 = vld [vmem:[%s3 + $0x128] sm:$0xff]
    %v1355 = vld [vmem:[%s3 + $0x130] sm:$0xff]
    %v1356 = vld [vmem:[%s3 + $0x138] sm:$0xff]
    %v1357 = vld [vmem:[%s3 + $0x140] sm:$0xff]
    %v1358 = vld [vmem:[%s3 + $0x148] sm:$0xff]
    %v1359 = vld [vmem:[%s3 + $0x150] sm:$0xff]
    %v1360 = vld [vmem:[%s3 + $0x158] sm:$0xff]
    %v1361 = vld [vmem:[%s3 + $0x160] sm:$0xff]
    %v1362 = vld [vmem:[%s3 + $0x168] sm:$0xff]
    %v1363 = vld [vmem:[%s3 + $0x170] sm:$0xff]
    %v1364 = vld [vmem:[%s3 + $0x178] sm:$0xff]
    %v1365 = vld [vmem:[%s3 + $0x180] sm:$0xff]
    %v1366 = vld [vmem:[%s3 + $0x188] sm:$0xff]
    %v1367 = vld [vmem:[%s3 + $0x190] sm:$0xff]
    %v1368 = vld [vmem:[%s3 + $0x198] sm:$0xff]
    %v1369 = vld [vmem:[%s3 + $0x1a0] sm:$0xff]
    %v1370 = vld [vmem:[%s3 + $0x1a8] sm:$0xff]
    %v1371 = vld [vmem:[%s3 + $0x1b0] sm:$0xff]
    %v1372 = vld [vmem:[%s3 + $0x1b8] sm:$0xff]
    %v1373 = vld [vmem:[%s3 + $0x1c0] sm:$0xff]
    %v1374 = vld [vmem:[%s3 + $0x1c8] sm:$0xff]
    %v1375 = vld [vmem:[%s3 + $0x1d0] sm:$0xff]
    %v1376 = vld [vmem:[%s3 + $0x1d8] sm:$0xff]
    %v1377 = vld [vmem:[%s3 + $0x1e0] sm:$0xff]
    %v1378 = vld [vmem:[%s3 + $0x1e8] sm:$0xff]
    %v1379 = vld [vmem:[%s3 + $0x1f0] sm:$0xff]
    %v1380 = vld [vmem:[%s3 + $0x1f8] sm:$0xff]
    %v1381 = vld [vmem:[%s6] sm:$0xff]
    %v1383 = vperm.slane %v1381, 0
    %v1384 = vperm.slane %v1381, 1
    %v1385 = vperm.slane %v1381, 2
    %v1386 = vperm.slane %v1381, 3
    %v1387 = vperm.slane %v1381, 4
    %v1388 = vperm.slane %v1381, 5
    %v1389 = vperm.slane %v1381, 6
    %v1390 = vperm.slane %v1381, 7
    %v1463 = vunpack.c.l.b16 %v1317
    %v1464 = vunpack.c.h.b16 %v1317
    %v1465 = vunpack.c.l.b16 %v1318
    %v1466 = vunpack.c.h.b16 %v1318
    %v1467 = vunpack.c.l.b16 %v1319
    %v1468 = vunpack.c.h.b16 %v1319
    %v1469 = vunpack.c.l.b16 %v1320
    %v1470 = vunpack.c.h.b16 %v1320
    %v1471 = vunpack.c.l.b16 %v1321
    %v1472 = vunpack.c.h.b16 %v1321
    %v1473 = vunpack.c.l.b16 %v1322
    %v1474 = vunpack.c.h.b16 %v1322
    %v1475 = vunpack.c.l.b16 %v1323
    %v1476 = vunpack.c.h.b16 %v1323
    %v1477 = vunpack.c.l.b16 %v1324
    %v1478 = vunpack.c.h.b16 %v1324
    %v1479 = vunpack.c.l.b16 %v1325
    %v1480 = vunpack.c.h.b16 %v1325
    %v1481 = vunpack.c.l.b16 %v1326
    %v1482 = vunpack.c.h.b16 %v1326
    %v1483 = vunpack.c.l.b16 %v1327
    %v1484 = vunpack.c.h.b16 %v1327
    %v1485 = vunpack.c.l.b16 %v1328
    %v1486 = vunpack.c.h.b16 %v1328
    %v1487 = vunpack.c.l.b16 %v1329
    %v1488 = vunpack.c.h.b16 %v1329
    %v1489 = vunpack.c.l.b16 %v1330
    %v1490 = vunpack.c.h.b16 %v1330
    %v1491 = vunpack.c.l.b16 %v1331
    %v1492 = vunpack.c.h.b16 %v1331
    %v1493 = vunpack.c.l.b16 %v1332
    %v1494 = vunpack.c.h.b16 %v1332
    %v1495 = vunpack.c.l.b16 %v1333
    %v1496 = vunpack.c.h.b16 %v1333
    %v1497 = vunpack.c.l.b16 %v1334
    %v1498 = vunpack.c.h.b16 %v1334
    %v1499 = vunpack.c.l.b16 %v1335
    %v1500 = vunpack.c.h.b16 %v1335
    %v1501 = vunpack.c.l.b16 %v1336
    %v1502 = vunpack.c.h.b16 %v1336
    %v1503 = vunpack.c.l.b16 %v1337
    %v1504 = vunpack.c.h.b16 %v1337
    %v1505 = vunpack.c.l.b16 %v1338
    %v1506 = vunpack.c.h.b16 %v1338
    %v1507 = vunpack.c.l.b16 %v1339
    %v1508 = vunpack.c.h.b16 %v1339
    %v1509 = vunpack.c.l.b16 %v1340
    %v1510 = vunpack.c.h.b16 %v1340
    %v1511 = vunpack.c.l.b16 %v1341
    %v1512 = vunpack.c.h.b16 %v1341
    %v1513 = vunpack.c.l.b16 %v1342
    %v1514 = vunpack.c.h.b16 %v1342
    %v1515 = vunpack.c.l.b16 %v1343
    %v1516 = vunpack.c.h.b16 %v1343
    %v1517 = vunpack.c.l.b16 %v1344
    %v1518 = vunpack.c.h.b16 %v1344
    %v1519 = vunpack.c.l.b16 %v1345
    %v1520 = vunpack.c.h.b16 %v1345
    %v1521 = vunpack.c.l.b16 %v1346
    %v1522 = vunpack.c.h.b16 %v1346
    %v1523 = vunpack.c.l.b16 %v1347
    %v1524 = vunpack.c.h.b16 %v1347
    %v1525 = vunpack.c.l.b16 %v1348
    %v1526 = vunpack.c.h.b16 %v1348
    %v1527 = vunpack.c.l.b16 %v1349
    %v1528 = vunpack.c.h.b16 %v1349
    %v1529 = vunpack.c.l.b16 %v1350
    %v1530 = vunpack.c.h.b16 %v1350
    %v1531 = vunpack.c.l.b16 %v1351
    %v1532 = vunpack.c.h.b16 %v1351
    %v1533 = vunpack.c.l.b16 %v1352
    %v1534 = vunpack.c.h.b16 %v1352
    %v1535 = vunpack.c.l.b16 %v1353
    %v1536 = vunpack.c.h.b16 %v1353
    %v1537 = vunpack.c.l.b16 %v1354
    %v1538 = vunpack.c.h.b16 %v1354
    %v1539 = vunpack.c.l.b16 %v1355
    %v1540 = vunpack.c.h.b16 %v1355
    %v1541 = vunpack.c.l.b16 %v1356
    %v1542 = vunpack.c.h.b16 %v1356
    %v1543 = vunpack.c.l.b16 %v1357
    %v1544 = vunpack.c.h.b16 %v1357
    %v1545 = vunpack.c.l.b16 %v1358
    %v1546 = vunpack.c.h.b16 %v1358
    %v1547 = vunpack.c.l.b16 %v1359
    %v1548 = vunpack.c.h.b16 %v1359
    %v1549 = vunpack.c.l.b16 %v1360
    %v1550 = vunpack.c.h.b16 %v1360
    %v1551 = vunpack.c.l.b16 %v1361
    %v1552 = vunpack.c.h.b16 %v1361
    %v1553 = vunpack.c.l.b16 %v1362
    %v1554 = vunpack.c.h.b16 %v1362
    %v1555 = vunpack.c.l.b16 %v1363
    %v1556 = vunpack.c.h.b16 %v1363
    %v1557 = vunpack.c.l.b16 %v1364
    %v1558 = vunpack.c.h.b16 %v1364
    %v1559 = vunpack.c.l.b16 %v1365
    %v1560 = vunpack.c.h.b16 %v1365
    %v1561 = vunpack.c.l.b16 %v1366
    %v1562 = vunpack.c.h.b16 %v1366
    %v1563 = vunpack.c.l.b16 %v1367
    %v1564 = vunpack.c.h.b16 %v1367
    %v1565 = vunpack.c.l.b16 %v1368
    %v1566 = vunpack.c.h.b16 %v1368
    %v1567 = vunpack.c.l.b16 %v1369
    %v1568 = vunpack.c.h.b16 %v1369
    %v1569 = vunpack.c.l.b16 %v1370
    %v1570 = vunpack.c.h.b16 %v1370
    %v1571 = vunpack.c.l.b16 %v1371
    %v1572 = vunpack.c.h.b16 %v1371
    %v1573 = vunpack.c.l.b16 %v1372
    %v1574 = vunpack.c.h.b16 %v1372
    %v1575 = vunpack.c.l.b16 %v1373
    %v1576 = vunpack.c.h.b16 %v1373
    %v1577 = vunpack.c.l.b16 %v1374
    %v1578 = vunpack.c.h.b16 %v1374
    %v1579 = vunpack.c.l.b16 %v1375
    %v1580 = vunpack.c.h.b16 %v1375
    %v1581 = vunpack.c.l.b16 %v1376
    %v1582 = vunpack.c.h.b16 %v1376
    %v1583 = vunpack.c.l.b16 %v1377
    %v1584 = vunpack.c.h.b16 %v1377
    %v1585 = vunpack.c.l.b16 %v1378
    %v1586 = vunpack.c.h.b16 %v1378
    %v1587 = vunpack.c.l.b16 %v1379
    %v1588 = vunpack.c.h.b16 %v1379
    %v1589 = vunpack.c.l.b16 %v1380
    %v1590 = vunpack.c.h.b16 %v1380
    %v1591 = vpack.c.b16 %v1471, %v1463
    %v1592 = vpack.c.b16 %v1472, %v1464
    %v1593 = vpack.c.b16 %v1473, %v1465
    %v1594 = vpack.c.b16 %v1474, %v1466
    %v1595 = vpack.c.b16 %v1475, %v1467
    %v1596 = vpack.c.b16 %v1476, %v1468
    %v1597 = vpack.c.b16 %v1477, %v1469
    %v1598 = vpack.c.b16 %v1478, %v1470
    %v1599 = vpack.c.b16 %v1487, %v1479
    %v1600 = vpack.c.b16 %v1488, %v1480
    %v1601 = vpack.c.b16 %v1489, %v1481
    %v1602 = vpack.c.b16 %v1490, %v1482
    %v1603 = vpack.c.b16 %v1491, %v1483
    %v1604 = vpack.c.b16 %v1492, %v1484
    %v1605 = vpack.c.b16 %v1493, %v1485
    %v1606 = vpack.c.b16 %v1494, %v1486
    %v1607 = vpack.c.b16 %v1503, %v1495
    %v1608 = vpack.c.b16 %v1504, %v1496
    %v1609 = vpack.c.b16 %v1505, %v1497
    %v1610 = vpack.c.b16 %v1506, %v1498
    %v1611 = vpack.c.b16 %v1507, %v1499
    %v1612 = vpack.c.b16 %v1508, %v1500
    %v1613 = vpack.c.b16 %v1509, %v1501
    %v1614 = vpack.c.b16 %v1510, %v1502
    %v1615 = vpack.c.b16 %v1519, %v1511
    %v1616 = vpack.c.b16 %v1520, %v1512
    %v1617 = vpack.c.b16 %v1521, %v1513
    %v1618 = vpack.c.b16 %v1522, %v1514
    %v1619 = vpack.c.b16 %v1523, %v1515
    %v1620 = vpack.c.b16 %v1524, %v1516
    %v1621 = vpack.c.b16 %v1525, %v1517
    %v1622 = vpack.c.b16 %v1526, %v1518
    %v1623 = vpack.c.b16 %v1535, %v1527
    %v1624 = vpack.c.b16 %v1536, %v1528
    %v1625 = vpack.c.b16 %v1537, %v1529
    %v1626 = vpack.c.b16 %v1538, %v1530
    %v1627 = vpack.c.b16 %v1539, %v1531
    %v1628 = vpack.c.b16 %v1540, %v1532
    %v1629 = vpack.c.b16 %v1541, %v1533
    %v1630 = vpack.c.b16 %v1542, %v1534
    %v1631 = vpack.c.b16 %v1551, %v1543
    %v1632 = vpack.c.b16 %v1552, %v1544
    %v1633 = vpack.c.b16 %v1553, %v1545
    %v1634 = vpack.c.b16 %v1554, %v1546
    %v1635 = vpack.c.b16 %v1555, %v1547
    %v1636 = vpack.c.b16 %v1556, %v1548
    %v1637 = vpack.c.b16 %v1557, %v1549
    %v1638 = vpack.c.b16 %v1558, %v1550
    %v1639 = vpack.c.b16 %v1567, %v1559
    %v1640 = vpack.c.b16 %v1568, %v1560
    %v1641 = vpack.c.b16 %v1569, %v1561
    %v1642 = vpack.c.b16 %v1570, %v1562
    %v1643 = vpack.c.b16 %v1571, %v1563
    %v1644 = vpack.c.b16 %v1572, %v1564
    %v1645 = vpack.c.b16 %v1573, %v1565
    %v1646 = vpack.c.b16 %v1574, %v1566
    %v1647 = vpack.c.b16 %v1583, %v1575
    %v1648 = vpack.c.b16 %v1584, %v1576
    %v1649 = vpack.c.b16 %v1585, %v1577
    %v1650 = vpack.c.b16 %v1586, %v1578
    %v1651 = vpack.c.b16 %v1587, %v1579
    %v1652 = vpack.c.b16 %v1588, %v1580
    %v1653 = vpack.c.b16 %v1589, %v1581
    %v1654 = vpack.c.b16 %v1590, %v1582
    %1719 = vmatpush.bf16.msra.mxu0 %v1647
    %1720 = vmatpush.bf16.msra.mxu0 %v1639
    %1721 = vmatpush.bf16.msra.mxu0 %v1631
    %1722 = vmatpush.bf16.msra.mxu0 %v1623
    %1723 = vmatpush.bf16.msra.mxu0 %v1615
    %1724 = vmatpush.bf16.msra.mxu0 %v1607
    %1725 = vmatpush.bf16.msra.mxu0 %v1599
    %1726 = vmatpush.bf16.msra.mxu0 %v1591
    %1727 = vmatmul.bf16.gmra.mxu0 %v1316
    %v1728 = vpop.f32.mrf.mxu0
    %v1729 = vadd.f32 %v1383, %v1728
    %v1730 = vpop.f32.mrf.mxu0
    %1731 = vdwg.mxu0
    %1732 = vmatpush.bf16.msra.mxu0 %v1648
    %1733 = vmatpush.bf16.msra.mxu0 %v1640
    %1734 = vmatpush.bf16.msra.mxu0 %v1632
    %1735 = vmatpush.bf16.msra.mxu0 %v1624
    %1736 = vmatpush.bf16.msra.mxu0 %v1616
    %1737 = vmatpush.bf16.msra.mxu0 %v1608
    %1738 = vmatpush.bf16.msra.mxu0 %v1600
    %1739 = vmatpush.bf16.msra.mxu0 %v1592
    %1740 = vmatmul.bf16.gmra.mxu0 %v1316
    %v1741 = vpop.f32.mrf.mxu0
    %v1742 = vadd.f32 %v1384, %v1741
    %v1743 = vpop.f32.mrf.mxu0
    %1744 = vdwg.mxu0
    %1745 = vmatpush.bf16.msra.mxu0 %v1649
    %1746 = vmatpush.bf16.msra.mxu0 %v1641
    %1747 = vmatpush.bf16.msra.mxu0 %v1633
    %1748 = vmatpush.bf16.msra.mxu0 %v1625
    %1749 = vmatpush.bf16.msra.mxu0 %v1617
    %1750 = vmatpush.bf16.msra.mxu0 %v1609
    %1751 = vmatpush.bf16.msra.mxu0 %v1601
    %1752 = vmatpush.bf16.msra.mxu0 %v1593
    %1753 = vmatmul.bf16.gmra.mxu0 %v1316
    %v1754 = vpop.f32.mrf.mxu0
    %v1755 = vadd.f32 %v1385, %v1754
    %v1756 = vpop.f32.mrf.mxu0
    %1757 = vdwg.mxu0
    %1758 = vmatpush.bf16.msra.mxu0 %v1650
    %1759 = vmatpush.bf16.msra.mxu0 %v1642
    %1760 = vmatpush.bf16.msra.mxu0 %v1634
    %1761 = vmatpush.bf16.msra.mxu0 %v1626
    %1762 = vmatpush.bf16.msra.mxu0 %v1618
    %1763 = vmatpush.bf16.msra.mxu0 %v1610
    %1764 = vmatpush.bf16.msra.mxu0 %v1602
    %1765 = vmatpush.bf16.msra.mxu0 %v1594
    %1766 = vmatmul.bf16.gmra.mxu0 %v1316
    %v1767 = vpop.f32.mrf.mxu0
    %v1768 = vadd.f32 %v1386, %v1767
    %v1769 = vpop.f32.mrf.mxu0
    %1770 = vdwg.mxu0
    %1771 = vmatpush.bf16.msra.mxu0 %v1651
    %1772 = vmatpush.bf16.msra.mxu0 %v1643
    %1773 = vmatpush.bf16.msra.mxu0 %v1635
    %1774 = vmatpush.bf16.msra.mxu0 %v1627
    %1775 = vmatpush.bf16.msra.mxu0 %v1619
    %1776 = vmatpush.bf16.msra.mxu0 %v1611
    %1777 = vmatpush.bf16.msra.mxu0 %v1603
    %1778 = vmatpush.bf16.msra.mxu0 %v1595
    %1779 = vmatmul.bf16.gmra.mxu0 %v1316
    %v1780 = vpop.f32.mrf.mxu0
    %v1781 = vadd.f32 %v1387, %v1780
    %v1782 = vpop.f32.mrf.mxu0
    %1783 = vdwg.mxu0
    %1784 = vmatpush.bf16.msra.mxu0 %v1652
    %1785 = vmatpush.bf16.msra.mxu0 %v1644
    %1786 = vmatpush.bf16.msra.mxu0 %v1636
    %1787 = vmatpush.bf16.msra.mxu0 %v1628
    %1788 = vmatpush.bf16.msra.mxu0 %v1620
    %1789 = vmatpush.bf16.msra.mxu0 %v1612
    %1790 = vmatpush.bf16.msra.mxu0 %v1604
    %1791 = vmatpush.bf16.msra.mxu0 %v1596
    %1792 = vmatmul.bf16.gmra.mxu0 %v1316
    %v1793 = vpop.f32.mrf.mxu0
    %v1794 = vadd.f32 %v1388, %v1793
    %v1795 = vpop.f32.mrf.mxu0
    %1796 = vdwg.mxu0
    %1797 = vmatpush.bf16.msra.mxu0 %v1653
    %1798 = vmatpush.bf16.msra.mxu0 %v1645
    %1799 = vmatpush.bf16.msra.mxu0 %v1637
    %1800 = vmatpush.bf16.msra.mxu0 %v1629
    %1801 = vmatpush.bf16.msra.mxu0 %v1621
    %1802 = vmatpush.bf16.msra.mxu0 %v1613
    %1803 = vmatpush.bf16.msra.mxu0 %v1605
    %1804 = vmatpush.bf16.msra.mxu0 %v1597
    %1805 = vmatmul.bf16.gmra.mxu0 %v1316
    %v1806 = vpop.f32.mrf.mxu0
    %v1807 = vadd.f32 %v1389, %v1806
    %v1808 = vpop.f32.mrf.mxu0
    %1809 = vdwg.mxu0
    %1810 = vmatpush.bf16.msra.mxu0 %v1654
    %1811 = vmatpush.bf16.msra.mxu0 %v1646
    %1812 = vmatpush.bf16.msra.mxu0 %v1638
    %1813 = vmatpush.bf16.msra.mxu0 %v1630
    %1814 = vmatpush.bf16.msra.mxu0 %v1622
    %1815 = vmatpush.bf16.msra.mxu0 %v1614
    %1816 = vmatpush.bf16.msra.mxu0 %v1606
    %1817 = vmatpush.bf16.msra.mxu0 %v1598
    %1818 = vmatmul.bf16.gmra.mxu0 %v1316
    %v1819 = vpop.f32.mrf.mxu0
    %v1820 = vadd.f32 %v1390, %v1819
    %v1821 = vpop.f32.mrf.mxu0
    %1822 = vdwg.mxu0
    %1823 = vst [vmem:[#allocation2] sm:$0x3] %v670
    %1824 = vst [vmem:[#allocation4] sm:$0x3] %v1307
    %v1825 = vpack.c.bf16 %v1742, %v1729
    %v1826 = vpack.c.bf16 %v1768, %v1755
    %v1827 = vpack.c.bf16 %v1794, %v1781
    %v1828 = vpack.c.bf16 %v1820, %v1807
    %v1833 = vrot.slane %v1825, 3
    %v1834 = vrot.slane %v1826, 6
    %v1835 = vrot.slane %v1826, 1
    %v1836 = vrot.slane %v1827, 4
    %v1837 = vrot.slane %v1827, 7
    %v1838 = vrot.slane %v1828, 2
    %v1839 = vrot.slane %v1828, 5
    %vm1840 = vcmask 1040384
    %v1843 = vsel %vm1840, %v1825, %v1833
    %vm1844 = vcmask 1042434
    %v1847 = vsel %vm1844, %v1834, %v1835
    %vm1848 = vcmask 1041408
    %v1849 = vsel %vm1848, %v1843, %v1847
    %vm1850 = vcmask 1044484
    %v1853 = vsel %vm1850, %v1836, %v1837
    %vm1854 = vcmask 1046534
    %v1857 = vsel %vm1854, %v1838, %v1839
    %vm1858 = vcmask 1045508
    %v1859 = vsel %vm1858, %v1853, %v1857
    %vm1860 = vcmask 1043456
    %v1861 = vsel %vm1860, %v1849, %v1859
    %1863 = vst [vmem:[%s10] sm:$0xff] %v1861
    // Predicated region
    $region34: #{vae_forward.13} parent=1 // pred_check
      _
    $region35: #{vae_forward.13} parent=1 // pred_check_branch
      %1865 = sbr.rel (0) target = $region37
    $region36: #{vae_forward.13} parent=1 // pred_region
      %1867 = vsyncadd [#allocation3], 0
      %s1869 = sshll.u32 [#allocation2], 4
      %s1870 = int_to_ptr.vmem [resolvable:$true] %s1869
      %s1871 = sshll.u32 %s8, 4
      %s1872 = int_to_ptr.hbm [resolvable:$true] %s1871
      %1874 = dma.vmem_to_hbm [thread:$0]  %s1870, 32, %s1872, [#allocation3]
    $region37: #{vae_forward.13} parent=1 // pred_fallthru
      _
    // Predicated region
    $region38: #{vae_forward.13} parent=1 // pred_check
      _
    $region39: #{vae_forward.13} parent=1 // pred_check_branch
      %1876 = sbr.rel (0) target = $region41
    $region40: #{vae_forward.13} parent=1 // pred_region
      %1878 = vsyncadd [#allocation5], 0
      %s1880 = sshll.u32 [#allocation4], 4
      %s1881 = int_to_ptr.vmem [resolvable:$true] %s1880
      %s1882 = sshll.u32 %s9, 4
      %s1883 = int_to_ptr.hbm [resolvable:$true] %s1882
      %1885 = dma.vmem_to_hbm [thread:$0]  %s1881, 32, %s1883, [#allocation5]
    $region41: #{vae_forward.13} parent=1 // pred_fallthru
      _
    // Predicated region
    $region42: #{vae_forward.13} parent=1 // pred_check
      _
    $region43: #{vae_forward.13} parent=1 // pred_check_branch
      %1887 = sbr.rel (0) target = $region45
    $region44: #{vae_forward.13} parent=1 // pred_region
      _
    $region45: #{vae_forward.13} parent=1 // pred_fallthru
      _
    // Predicated region
    $region46: #{vae_forward.13} parent=1 // pred_check
      _
    $region47: #{vae_forward.13} parent=1 // pred_check_branch
      %1889 = sbr.rel (0) target = $region49
    $region48: #{vae_forward.13} parent=1 // pred_region
      %1891 = dma.done [#allocation3], 32
    $region49: #{vae_forward.13} parent=1 // pred_fallthru
      _
    // Predicated region
    $region50: #{vae_forward.13} parent=1 // pred_check
      _
    $region51: #{vae_forward.13} parent=1 // pred_check_branch
      %1893 = sbr.rel (0) target = $region53
    $region52: #{vae_forward.13} parent=1 // pred_region
      %1895 = dma.done [#allocation5], 32
    $region53: #{vae_forward.13} parent=1 // pred_fallthru
      _
    // Predicated region
    $region54: #{vae_forward.13} parent=1 // pred_check
      _
    $region55: #{vae_forward.13} parent=1 // pred_check_branch
      %1897 = sbr.rel (0) target = $region57
    $region56: #{vae_forward.13} parent=1 // pred_region
      _
    $region57: #{vae_forward.13} parent=1 // pred_fallthru
      _
    %1898 = vsyncpa [#allocation3], 1
    %1899 = vsyncpa [#allocation5], 1

// kernel: vae_forward.14
$region0: #{vae_forward.14}
  #allocation0 [shape = 'u32[]', space=smem, size = 0x4, offset = 0x4, fixed_abs, tag = 'smem constant byte address 0x4 - core index']
  #allocation1 [shape = 'u32[72,128]{1,0:T(1,128)}', space=vmem, size = 0x9000, scoped, tag = 'internal scratch']
  %s0 = inlined_call_operand.vmem [shape: bf16[4,128,1024], index: 0, kind: input, shape index: {}]
  %s1 = inlined_call_operand.vmem [shape: bf16[4,1024,8], index: 1, kind: input, shape index: {}]
  %s2 = inlined_call_operand.vmem [shape: f32[128,1], index: 2, kind: input, shape index: {}]
  %s3 = inlined_call_operand.vmem [shape: bf16[4,128,8], index: 3, kind: output, shape index: {}]
  %s4 = sld [smem:[#allocation0]]
  $region45: #{vae_forward.14} parent=0
    _
  %s6 = ssub.s32 1, %s4
  %s7 = scalar_select 0, %s6, %s4
  loop: start=0, step=1, limit=6
  $region2: #{vae_forward.14} parent=0 // loop_pre_header
    _
  $region3: #{vae_forward.14} parent=0 // loop_header
    %s9 = sphi 0, %s13
    %p10 = scmp.ge.s32.totalorder %s9, 6
    %s16 = sphi 0, %s28
    %s17 = sphi 0, %s24
    %s18 = sphi 0, %s16
    %s19 = sphi 0, %s17
    %s20 = sphi 0, %s18
    %s21 = sphi 0, %s19
    %s31 = sphi 0, %s33
    %s34 = sphi 0, %s31
    %s35 = sphi 0, %s34
    %s51 = sphi 0, %s35
    %s59 = sphi 0, %s61
    %s62 = sphi 0, %s59
    %s63 = sphi 0, %s62
    %s79 = sphi 0, %s63
    %s83 = sphi 0, %s83
    %s85 = sphi 0, %s83
    %s86 = sphi 0, %s85
    %s100 = sphi 0, %s86
    %s108 = sphi 0, %s110
    %s111 = sphi 0, %s108
    %s112 = sphi 0, %s111
    %s128 = sphi 0, %s112
  $region4: #{vae_forward.14} parent=0 // loop_header_branch
    %12 = sbr.rel (%p10) target = $region8
  $region5: #{vae_forward.14} parent=0 // loop_body
    %s14 = ssub.s32 %s9, 1
    %s15 = ssub.s32 %s9, 2
    %s22 = sadd.s32 1, %s17
    %p23 = scmp.ge.s32.totalorder %s22, 1
    %s24 = scalar_select %p23, 0, %s22
    %s25 = sadd.s32 1, %s16
    %s26 = scalar_select %p23, %s25, %s16
    %p27 = scmp.ge.s32.totalorder %s26, 4
    %s28 = scalar_select %p27, 0, %s26
    %s29 = ssub.s32 %s16, %s28
    %p30 = scmp.eq.s32.totalorder %s29, 0
    %s32 = sadd.s32 %s31, 1
    %s33 = scalar_select %p30, %s31, %s32
    %p36 = pneg %p30
    %p37 = scmp.eq.s32.totalorder %s9, 3
    %p38 = por %p36, %p37
    %p39 = scmp.ne.s32.totalorder %s31, %s34
    %p40 = scmp.eq.s32.totalorder %s9, 0
    %p41 = por %p39, %p40
    %p42 = scmp.ne.s32.totalorder %s31, %s34
    %p43 = scmp.eq.s32.totalorder %s14, 3
    %p44 = por %p42, %p43
    %p45 = scmp.ne.s32.totalorder %s34, %s35
    %p46 = scmp.eq.s32.totalorder %s14, 0
    %p47 = por %p45, %p46
    %p48 = scmp.ne.s32.totalorder %s34, %s35
    %p49 = scmp.eq.s32.totalorder %s15, 3
    %p50 = por %p48, %p49
    %p52 = scmp.ne.s32.totalorder %s35, %s51
    %p53 = scmp.eq.s32.totalorder %s15, 0
    %p54 = por %p52, %p53
    %s55 = ssub.s32 %s16, %s28
    %s56 = ssub.s32 %s17, %s24
    %s57 = sor.u32 %s55, %s56
    %p58 = scmp.eq.s32.totalorder %s57, 0
    %s60 = sadd.s32 %s59, 1
    %s61 = scalar_select %p58, %s59, %s60
    %p64 = pneg %p58
    %p65 = scmp.eq.s32.totalorder %s9, 3
    %p66 = por %p64, %p65
    %p67 = scmp.ne.s32.totalorder %s59, %s62
    %p68 = scmp.eq.s32.totalorder %s9, 0
    %p69 = por %p67, %p68
    %p70 = scmp.ne.s32.totalorder %s59, %s62
    %p71 = scmp.eq.s32.totalorder %s14, 3
    %p72 = por %p70, %p71
    %p73 = scmp.ne.s32.totalorder %s62, %s63
    %p74 = scmp.eq.s32.totalorder %s14, 0
    %p75 = por %p73, %p74
    %p76 = scmp.ne.s32.totalorder %s62, %s63
    %p77 = scmp.eq.s32.totalorder %s15, 3
    %p78 = por %p76, %p77
    %p80 = scmp.ne.s32.totalorder %s63, %s79
    %p81 = scmp.eq.s32.totalorder %s15, 0
    %p82 = por %p80, %p81
    %s84 = sadd.s32 %s83, 1
    %p87 = scmp.eq.s32.totalorder %s9, 3
    %p88 = scmp.ne.s32.totalorder %s83, %s85
    %p89 = scmp.eq.s32.totalorder %s9, 0
    %p90 = por %p88, %p89
    %p91 = scmp.ne.s32.totalorder %s83, %s85
    %p92 = scmp.eq.s32.totalorder %s14, 3
    %p93 = por %p91, %p92
    %p94 = scmp.ne.s32.totalorder %s85, %s86
    %p95 = scmp.eq.s32.totalorder %s14, 0
    %p96 = por %p94, %p95
    %p97 = scmp.ne.s32.totalorder %s85, %s86
    %p98 = scmp.eq.s32.totalorder %s15, 3
    %p99 = por %p97, %p98
    %p101 = scmp.ne.s32.totalorder %s86, %s100
    %p102 = scmp.eq.s32.totalorder %s15, 0
    %p103 = por %p101, %p102
    %s104 = ssub.s32 %s16, %s28
    %s105 = ssub.s32 %s17, %s24
    %s106 = sor.u32 %s104, %s105
    %p107 = scmp.eq.s32.totalorder %s106, 0
    %s109 = sadd.s32 %s108, 1
    %s110 = scalar_select %p107, %s108, %s109
    %p113 = pneg %p107
    %p114 = scmp.eq.s32.totalorder %s9, 3
    %p115 = por %p113, %p114
    %p116 = scmp.ne.s32.totalorder %s108, %s111
    %p117 = scmp.eq.s32.totalorder %s9, 0
    %p118 = por %p116, %p117
    %p119 = scmp.ne.s32.totalorder %s108, %s111
    %p120 = scmp.eq.s32.totalorder %s14, 3
    %p121 = por %p119, %p120
    %p122 = scmp.ne.s32.totalorder %s111, %s112
    %p123 = scmp.eq.s32.totalorder %s14, 0
    %p124 = por %p122, %p123
    %p125 = scmp.ne.s32.totalorder %s111, %s112
    %p126 = scmp.eq.s32.totalorder %s15, 3
    %p127 = por %p125, %p126
    %p129 = scmp.ne.s32.totalorder %s112, %s128
    %p130 = scmp.eq.s32.totalorder %s15, 0
    %p131 = por %p129, %p130
    %p132 = scmp.le.s32.totalorder 1, %s9
    %p133 = scmp.lt.s32.totalorder %s9, 5
    %p134 = pnand %p132, %p133
    %p135 = pneg %p134
    // Predicated region
    $region9: #{vae_forward.14} parent=5 // pred_check
      _
    $region10: #{vae_forward.14} parent=5 // pred_check_branch
      %137 = sbr.rel (%p134) target = $region12
    $region11: #{vae_forward.14} parent=5 // pred_region
      %s138 = ssub.s32 %s9, 1
      // Predicated region
      $region13: #{vae_forward.14} parent=11 // pred_check
        %p139 = pneg %p96
      $region14: #{vae_forward.14} parent=11 // pred_check_branch
        %141 = sbr.rel (%p139) target = $region16
      $region15: #{vae_forward.14} parent=11 // pred_region
        _
      $region16: #{vae_forward.14} parent=11 // pred_fallthru
        _
    $region12: #{vae_forward.14} parent=5 // pred_fallthru
      _
    %p142 = scmp.lt.s32.totalorder %s9, 4
    // Predicated region
    $region17: #{vae_forward.14} parent=5 // pred_check
      %p143 = pneg %p142
    $region18: #{vae_forward.14} parent=5 // pred_check_branch
      %145 = sbr.rel (%p143) target = $region20
    $region19: #{vae_forward.14} parent=5 // pred_region
      // Predicated region
      $region21: #{vae_forward.14} parent=19 // pred_check
        %p146 = pneg %p41
      $region22: #{vae_forward.14} parent=19 // pred_check_branch
        %148 = sbr.rel (%p146) target = $region24
      $region23: #{vae_forward.14} parent=19 // pred_region
        %p149 = scmp.lt.s32.totalorder %s16, 3
        %s150 = scalar_select %p149, %s16, 3
        %s151 = smul.addr %s150, 128
        %s152 = smul.addr %s151, 4
        %s153 = scalar_lea.vmem %s0, %s152
      $region24: #{vae_forward.14} parent=19 // pred_fallthru
        _
      // Predicated region
      $region25: #{vae_forward.14} parent=19 // pred_check
        %p154 = pneg %p69
      $region26: #{vae_forward.14} parent=19 // pred_check_branch
        %156 = sbr.rel (%p154) target = $region28
      $region27: #{vae_forward.14} parent=19 // pred_region
        %p157 = scmp.lt.s32.totalorder %s16, 3
        %s158 = scalar_select %p157, %s16, 3
        %p159 = scmp.lt.s32.totalorder %s17, 0
        %s160 = scalar_select %p159, %s17, 0
        %s161 = smul.addr %s158, 128
        %s162 = sadd.s32 %s160, %s161
        %s163 = smul.addr %s162, 4
        %s164 = scalar_lea.vmem %s1, %s163
      $region28: #{vae_forward.14} parent=19 // pred_fallthru
        _
    $region20: #{vae_forward.14} parent=5 // pred_fallthru
      _
    %p165 = scmp.le.s32.totalorder 1, %s9
    %p166 = scmp.lt.s32.totalorder %s9, 5
    %p167 = pnand %p165, %p166
    %p168 = pneg %p167
    // Predicated region
    $region29: #{vae_forward.14} parent=5 // pred_check
      _
    $region30: #{vae_forward.14} parent=5 // pred_check_branch
      %170 = sbr.rel (%p167) target = $region32
    $region31: #{vae_forward.14} parent=5 // pred_region
      %s171 = ssub.s32 %s9, 1
      %p172 = scmp.lt.s32.totalorder %s18, 3
      %s173 = scalar_select %p172, %s18, 3
      %s174 = smul.addr %s173, 128
      %s175 = smul.addr %s174, 4
      %s176 = scalar_lea.vmem %s0, %s175
      %p177 = pneg %p47
      %p178 = pneg %p44
      %p179 = scmp.lt.s32.totalorder %s18, 3
      %s180 = scalar_select %p179, %s18, 3
      %p181 = scmp.lt.s32.totalorder %s19, 0
      %s182 = scalar_select %p181, %s19, 0
      %s183 = smul.addr %s180, 128
      %s184 = sadd.s32 %s182, %s183
      %s185 = smul.addr %s184, 4
      %s186 = scalar_lea.vmem %s1, %s185
      %p187 = pneg %p75
      %p188 = pneg %p72
      %p189 = pneg %p96
      %p190 = pneg %p93
      %p191 = pneg %p124
      %p192 = pneg %p121
      %p193 = scmp.lt.s32.totalorder %s18, 3
      %s194 = scalar_select %p193, %s18, 3
      %p195 = scmp.lt.s32.totalorder %s19, 0
      %s196 = scalar_select %p195, %s19, 0
      %s197 = smul.addr %s194, 16
      %s198 = sadd.s32 %s196, %s197
      %s199 = smul.addr %s198, 4
      %s200 = scalar_lea.vmem %s3, %s199
      %p201 = scmp.lt.s32.totalorder %s18, 3
      %s202 = scalar_select %p201, %s18, 3
      %s203 = smul.addr %s202, 128
      %s204 = smul.addr %s203, 4
      %s205 = scalar_lea.vmem %s0, %s204
      %p206 = scmp.lt.s32.totalorder %s18, 3
      %s207 = scalar_select %p206, %s18, 3
      %p208 = scmp.lt.s32.totalorder %s19, 0
      %s209 = scalar_select %p208, %s19, 0
      %s210 = smul.addr %s207, 128
      %s211 = sadd.s32 %s209, %s210
      %s212 = smul.addr %s211, 4
      %s213 = scalar_lea.vmem %s1, %s212
      %p214 = scmp.lt.s32.totalorder %s18, 3
      %s215 = scalar_select %p214, %s18, 3
      %p216 = scmp.lt.s32.totalorder %s19, 0
      %s217 = scalar_select %p216, %s19, 0
      %s218 = smul.addr %s215, 16
      %s219 = sadd.s32 %s217, %s218
      %s220 = smul.addr %s219, 4
      %s221 = scalar_lea.vmem %s3, %s220
      %v222 = vld [vmem:[%s205] sm:$0xff]
      %v223 = vld [vmem:[%s205 + $0x8] sm:$0xff]
      %v224 = vld [vmem:[%s205 + $0x10] sm:$0xff]
      %v225 = vld [vmem:[%s205 + $0x18] sm:$0xff]
      %v226 = vld [vmem:[%s205 + $0x20] sm:$0xff]
      %v227 = vld [vmem:[%s205 + $0x28] sm:$0xff]
      %v228 = vld [vmem:[%s205 + $0x30] sm:$0xff]
      %v229 = vld [vmem:[%s205 + $0x38] sm:$0xff]
      %v230 = vld [vmem:[%s205 + $0x40] sm:$0xff]
      %v231 = vld [vmem:[%s205 + $0x48] sm:$0xff]
      %v232 = vld [vmem:[%s205 + $0x50] sm:$0xff]
      %v233 = vld [vmem:[%s205 + $0x58] sm:$0xff]
      %v234 = vld [vmem:[%s205 + $0x60] sm:$0xff]
      %v235 = vld [vmem:[%s205 + $0x68] sm:$0xff]
      %v236 = vld [vmem:[%s205 + $0x70] sm:$0xff]
      %v237 = vld [vmem:[%s205 + $0x78] sm:$0xff]
      %v238 = vld [vmem:[%s205 + $0x80] sm:$0xff]
      %v239 = vld [vmem:[%s205 + $0x88] sm:$0xff]
      %v240 = vld [vmem:[%s205 + $0x90] sm:$0xff]
      %v241 = vld [vmem:[%s205 + $0x98] sm:$0xff]
      %v242 = vld [vmem:[%s205 + $0xa0] sm:$0xff]
      %v243 = vld [vmem:[%s205 + $0xa8] sm:$0xff]
      %v244 = vld [vmem:[%s205 + $0xb0] sm:$0xff]
      %v245 = vld [vmem:[%s205 + $0xb8] sm:$0xff]
      %v246 = vld [vmem:[%s205 + $0xc0] sm:$0xff]
      %v247 = vld [vmem:[%s205 + $0xc8] sm:$0xff]
      %v248 = vld [vmem:[%s205 + $0xd0] sm:$0xff]
      %v249 = vld [vmem:[%s205 + $0xd8] sm:$0xff]
      %v250 = vld [vmem:[%s205 + $0xe0] sm:$0xff]
      %v251 = vld [vmem:[%s205 + $0xe8] sm:$0xff]
      %v252 = vld [vmem:[%s205 + $0xf0] sm:$0xff]
      %v253 = vld [vmem:[%s205 + $0xf8] sm:$0xff]
      %v254 = vld [vmem:[%s205 + $0x100] sm:$0xff]
      %v255 = vld [vmem:[%s205 + $0x108] sm:$0xff]
      %v256 = vld [vmem:[%s205 + $0x110] sm:$0xff]
      %v257 = vld [vmem:[%s205 + $0x118] sm:$0xff]
      %v258 = vld [vmem:[%s205 + $0x120] sm:$0xff]
      %v259 = vld [vmem:[%s205 + $0x128] sm:$0xff]
      %v260 = vld [vmem:[%s205 + $0x130] sm:$0xff]
      %v261 = vld [vmem:[%s205 + $0x138] sm:$0xff]
      %v262 = vld [vmem:[%s205 + $0x140] sm:$0xff]
      %v263 = vld [vmem:[%s205 + $0x148] sm:$0xff]
      %v264 = vld [vmem:[%s205 + $0x150] sm:$0xff]
      %v265 = vld [vmem:[%s205 + $0x158] sm:$0xff]
      %v266 = vld [vmem:[%s205 + $0x160] sm:$0xff]
      %v267 = vld [vmem:[%s205 + $0x168] sm:$0xff]
      %v268 = vld [vmem:[%s205 + $0x170] sm:$0xff]
      %v269 = vld [vmem:[%s205 + $0x178] sm:$0xff]
      %v270 = vld [vmem:[%s205 + $0x180] sm:$0xff]
      %v271 = vld [vmem:[%s205 + $0x188] sm:$0xff]
      %v272 = vld [vmem:[%s205 + $0x190] sm:$0xff]
      %v273 = vld [vmem:[%s205 + $0x198] sm:$0xff]
      %v274 = vld [vmem:[%s205 + $0x1a0] sm:$0xff]
      %v275 = vld [vmem:[%s205 + $0x1a8] sm:$0xff]
      %v276 = vld [vmem:[%s205 + $0x1b0] sm:$0xff]
      %v277 = vld [vmem:[%s205 + $0x1b8] sm:$0xff]
      %v278 = vld [vmem:[%s205 + $0x1c0] sm:$0xff]
      %v279 = vld [vmem:[%s205 + $0x1c8] sm:$0xff]
      %v280 = vld [vmem:[%s205 + $0x1d0] sm:$0xff]
      %v281 = vld [vmem:[%s205 + $0x1d8] sm:$0xff]
      %v282 = vld [vmem:[%s205 + $0x1e0] sm:$0xff]
      %v283 = vld [vmem:[%s205 + $0x1e8] sm:$0xff]
      %v284 = vld [vmem:[%s205 + $0x1f0] sm:$0xff]
      %v285 = vld [vmem:[%s205 + $0x1f8] sm:$0xff]
      %v286 = vld [vmem:[%s213] sm:$0xf]
      %v287 = vld [vmem:[%s213 + $0x4] sm:$0xf]
      %v288 = vld [vmem:[%s213 + $0x8] sm:$0xf]
      %v289 = vld [vmem:[%s213 + $0xc] sm:$0xf]
      %v290 = vld [vmem:[%s213 + $0x10] sm:$0xf]
      %v291 = vld [vmem:[%s213 + $0x14] sm:$0xf]
      %v292 = vld [vmem:[%s213 + $0x18] sm:$0xf]
      %v293 = vld [vmem:[%s213 + $0x1c] sm:$0xf]
      %v294 = vld [vmem:[%s213 + $0x20] sm:$0xf]
      %v295 = vld [vmem:[%s213 + $0x24] sm:$0xf]
      %v296 = vld [vmem:[%s213 + $0x28] sm:$0xf]
      %v297 = vld [vmem:[%s213 + $0x2c] sm:$0xf]
      %v298 = vld [vmem:[%s213 + $0x30] sm:$0xf]
      %v299 = vld [vmem:[%s213 + $0x34] sm:$0xf]
      %v300 = vld [vmem:[%s213 + $0x38] sm:$0xf]
      %v301 = vld [vmem:[%s213 + $0x3c] sm:$0xf]
      %v302 = vld [vmem:[%s213 + $0x40] sm:$0xf]
      %v303 = vld [vmem:[%s213 + $0x44] sm:$0xf]
      %v304 = vld [vmem:[%s213 + $0x48] sm:$0xf]
      %v305 = vld [vmem:[%s213 + $0x4c] sm:$0xf]
      %v306 = vld [vmem:[%s213 + $0x50] sm:$0xf]
      %v307 = vld [vmem:[%s213 + $0x54] sm:$0xf]
      %v308 = vld [vmem:[%s213 + $0x58] sm:$0xf]
      %v309 = vld [vmem:[%s213 + $0x5c] sm:$0xf]
      %v310 = vld [vmem:[%s213 + $0x60] sm:$0xf]
      %v311 = vld [vmem:[%s213 + $0x64] sm:$0xf]
      %v312 = vld [vmem:[%s213 + $0x68] sm:$0xf]
      %v313 = vld [vmem:[%s213 + $0x6c] sm:$0xf]
      %v314 = vld [vmem:[%s213 + $0x70] sm:$0xf]
      %v315 = vld [vmem:[%s213 + $0x74] sm:$0xf]
      %v316 = vld [vmem:[%s213 + $0x78] sm:$0xf]
      %v317 = vld [vmem:[%s213 + $0x7c] sm:$0xf]
      %v318 = vld [vmem:[%s213 + $0x80] sm:$0xf]
      %v319 = vld [vmem:[%s213 + $0x84] sm:$0xf]
      %v320 = vld [vmem:[%s213 + $0x88] sm:$0xf]
      %v321 = vld [vmem:[%s213 + $0x8c] sm:$0xf]
      %v322 = vld [vmem:[%s213 + $0x90] sm:$0xf]
      %v323 = vld [vmem:[%s213 + $0x94] sm:$0xf]
      %v324 = vld [vmem:[%s213 + $0x98] sm:$0xf]
      %v325 = vld [vmem:[%s213 + $0x9c] sm:$0xf]
      %v326 = vld [vmem:[%s213 + $0xa0] sm:$0xf]
      %v327 = vld [vmem:[%s213 + $0xa4] sm:$0xf]
      %v328 = vld [vmem:[%s213 + $0xa8] sm:$0xf]
      %v329 = vld [vmem:[%s213 + $0xac] sm:$0xf]
      %v330 = vld [vmem:[%s213 + $0xb0] sm:$0xf]
      %v331 = vld [vmem:[%s213 + $0xb4] sm:$0xf]
      %v332 = vld [vmem:[%s213 + $0xb8] sm:$0xf]
      %v333 = vld [vmem:[%s213 + $0xbc] sm:$0xf]
      %v334 = vld [vmem:[%s213 + $0xc0] sm:$0xf]
      %v335 = vld [vmem:[%s213 + $0xc4] sm:$0xf]
      %v336 = vld [vmem:[%s213 + $0xc8] sm:$0xf]
      %v337 = vld [vmem:[%s213 + $0xcc] sm:$0xf]
      %v338 = vld [vmem:[%s213 + $0xd0] sm:$0xf]
      %v339 = vld [vmem:[%s213 + $0xd4] sm:$0xf]
      %v340 = vld [vmem:[%s213 + $0xd8] sm:$0xf]
      %v341 = vld [vmem:[%s213 + $0xdc] sm:$0xf]
      %v342 = vld [vmem:[%s213 + $0xe0] sm:$0xf]
      %v343 = vld [vmem:[%s213 + $0xe4] sm:$0xf]
      %v344 = vld [vmem:[%s213 + $0xe8] sm:$0xf]
      %v345 = vld [vmem:[%s213 + $0xec] sm:$0xf]
      %v346 = vld [vmem:[%s213 + $0xf0] sm:$0xf]
      %v347 = vld [vmem:[%s213 + $0xf4] sm:$0xf]
      %v348 = vld [vmem:[%s213 + $0xf8] sm:$0xf]
      %v349 = vld [vmem:[%s213 + $0xfc] sm:$0xf]
      %v350 = vld [vmem:[%s213 + $0x100] sm:$0xf]
      %v351 = vld [vmem:[%s213 + $0x104] sm:$0xf]
      %v352 = vld [vmem:[%s213 + $0x108] sm:$0xf]
      %v353 = vld [vmem:[%s213 + $0x10c] sm:$0xf]
      %v354 = vld [vmem:[%s213 + $0x110] sm:$0xf]
      %v355 = vld [vmem:[%s213 + $0x114] sm:$0xf]
      %v356 = vld [vmem:[%s213 + $0x118] sm:$0xf]
      %v357 = vld [vmem:[%s213 + $0x11c] sm:$0xf]
      %v358 = vld [vmem:[%s213 + $0x120] sm:$0xf]
      %v359 = vld [vmem:[%s213 + $0x124] sm:$0xf]
      %v360 = vld [vmem:[%s213 + $0x128] sm:$0xf]
      %v361 = vld [vmem:[%s213 + $0x12c] sm:$0xf]
      %v362 = vld [vmem:[%s213 + $0x130] sm:$0xf]
      %v363 = vld [vmem:[%s213 + $0x134] sm:$0xf]
      %v364 = vld [vmem:[%s213 + $0x138] sm:$0xf]
      %v365 = vld [vmem:[%s213 + $0x13c] sm:$0xf]
      %v366 = vld [vmem:[%s213 + $0x140] sm:$0xf]
      %v367 = vld [vmem:[%s213 + $0x144] sm:$0xf]
      %v368 = vld [vmem:[%s213 + $0x148] sm:$0xf]
      %v369 = vld [vmem:[%s213 + $0x14c] sm:$0xf]
      %v370 = vld [vmem:[%s213 + $0x150] sm:$0xf]
      %v371 = vld [vmem:[%s213 + $0x154] sm:$0xf]
      %v372 = vld [vmem:[%s213 + $0x158] sm:$0xf]
      %v373 = vld [vmem:[%s213 + $0x15c] sm:$0xf]
      %v374 = vld [vmem:[%s213 + $0x160] sm:$0xf]
      %v375 = vld [vmem:[%s213 + $0x164] sm:$0xf]
      %v376 = vld [vmem:[%s213 + $0x168] sm:$0xf]
      %v377 = vld [vmem:[%s213 + $0x16c] sm:$0xf]
      %v378 = vld [vmem:[%s213 + $0x170] sm:$0xf]
      %v379 = vld [vmem:[%s213 + $0x174] sm:$0xf]
      %v380 = vld [vmem:[%s213 + $0x178] sm:$0xf]
      %v381 = vld [vmem:[%s213 + $0x17c] sm:$0xf]
      %v382 = vld [vmem:[%s213 + $0x180] sm:$0xf]
      %v383 = vld [vmem:[%s213 + $0x184] sm:$0xf]
      %v384 = vld [vmem:[%s213 + $0x188] sm:$0xf]
      %v385 = vld [vmem:[%s213 + $0x18c] sm:$0xf]
      %v386 = vld [vmem:[%s213 + $0x190] sm:$0xf]
      %v387 = vld [vmem:[%s213 + $0x194] sm:$0xf]
      %v388 = vld [vmem:[%s213 + $0x198] sm:$0xf]
      %v389 = vld [vmem:[%s213 + $0x19c] sm:$0xf]
      %v390 = vld [vmem:[%s213 + $0x1a0] sm:$0xf]
      %v391 = vld [vmem:[%s213 + $0x1a4] sm:$0xf]
      %v392 = vld [vmem:[%s213 + $0x1a8] sm:$0xf]
      %v393 = vld [vmem:[%s213 + $0x1ac] sm:$0xf]
      %v394 = vld [vmem:[%s213 + $0x1b0] sm:$0xf]
      %v395 = vld [vmem:[%s213 + $0x1b4] sm:$0xf]
      %v396 = vld [vmem:[%s213 + $0x1b8] sm:$0xf]
      %v397 = vld [vmem:[%s213 + $0x1bc] sm:$0xf]
      %v398 = vld [vmem:[%s213 + $0x1c0] sm:$0xf]
      %v399 = vld [vmem:[%s213 + $0x1c4] sm:$0xf]
      %v400 = vld [vmem:[%s213 + $0x1c8] sm:$0xf]
      %v401 = vld [vmem:[%s213 + $0x1cc] sm:$0xf]
      %v402 = vld [vmem:[%s213 + $0x1d0] sm:$0xf]
      %v403 = vld [vmem:[%s213 + $0x1d4] sm:$0xf]
      %v404 = vld [vmem:[%s213 + $0x1d8] sm:$0xf]
      %v405 = vld [vmem:[%s213 + $0x1dc] sm:$0xf]
      %v406 = vld [vmem:[%s213 + $0x1e0] sm:$0xf]
      %v407 = vld [vmem:[%s213 + $0x1e4] sm:$0xf]
      %v408 = vld [vmem:[%s213 + $0x1e8] sm:$0xf]
      %v409 = vld [vmem:[%s213 + $0x1ec] sm:$0xf]
      %v410 = vld [vmem:[%s213 + $0x1f0] sm:$0xf]
      %v411 = vld [vmem:[%s213 + $0x1f4] sm:$0xf]
      %v412 = vld [vmem:[%s213 + $0x1f8] sm:$0xf]
      %v413 = vld [vmem:[%s213 + $0x1fc] sm:$0xf]
      %v414 = vld [vmem:[%s2] sm:$0xff]
      %v415 = vld [vmem:[%s2 + $0x8] sm:$0xff]
      %v416 = vld [vmem:[%s2 + $0x10] sm:$0xff]
      %v417 = vld [vmem:[%s2 + $0x18] sm:$0xff]
      %v418 = vld [vmem:[%s2 + $0x20] sm:$0xff]
      %v419 = vld [vmem:[%s2 + $0x28] sm:$0xff]
      %v420 = vld [vmem:[%s2 + $0x30] sm:$0xff]
      %v421 = vld [vmem:[%s2 + $0x38] sm:$0xff]
      %v422 = vld [vmem:[%s2 + $0x40] sm:$0xff]
      %v423 = vld [vmem:[%s2 + $0x48] sm:$0xff]
      %v424 = vld [vmem:[%s2 + $0x50] sm:$0xff]
      %v425 = vld [vmem:[%s2 + $0x58] sm:$0xff]
      %v426 = vld [vmem:[%s2 + $0x60] sm:$0xff]
      %v427 = vld [vmem:[%s2 + $0x68] sm:$0xff]
      %v428 = vld [vmem:[%s2 + $0x70] sm:$0xff]
      %v429 = vld [vmem:[%s2 + $0x78] sm:$0xff]
      %431 = vset.pattern.permute.xlu0 0
      %432 = vperm.xlu0 %431, %v414
      %v433 = vpop.permute.xlu0 %432
      %436 = vset.pattern.permute.xlu0 0
      %437 = vperm.xlu0 %436, %v415
      %v438 = vpop.permute.xlu0 %437
      %441 = vset.pattern.permute.xlu0 0
      %442 = vperm.xlu0 %441, %v416
      %v443 = vpop.permute.xlu0 %442
      %446 = vset.pattern.permute.xlu0 0
      %447 = vperm.xlu0 %446, %v417
      %v448 = vpop.permute.xlu0 %447
      %451 = vset.pattern.permute.xlu0 0
      %452 = vperm.xlu0 %451, %v418
      %v453 = vpop.permute.xlu0 %452
      %456 = vset.pattern.permute.xlu0 0
      %457 = vperm.xlu0 %456, %v419
      %v458 = vpop.permute.xlu0 %457
      %461 = vset.pattern.permute.xlu0 0
      %462 = vperm.xlu0 %461, %v420
      %v463 = vpop.permute.xlu0 %462
      %466 = vset.pattern.permute.xlu0 0
      %467 = vperm.xlu0 %466, %v421
      %v468 = vpop.permute.xlu0 %467
      %471 = vset.pattern.permute.xlu0 0
      %472 = vperm.xlu0 %471, %v422
      %v473 = vpop.permute.xlu0 %472
      %476 = vset.pattern.permute.xlu0 0
      %477 = vperm.xlu0 %476, %v423
      %v478 = vpop.permute.xlu0 %477
      %481 = vset.pattern.permute.xlu0 0
      %482 = vperm.xlu0 %481, %v424
      %v483 = vpop.permute.xlu0 %482
      %486 = vset.pattern.permute.xlu0 0
      %487 = vperm.xlu0 %486, %v425
      %v488 = vpop.permute.xlu0 %487
      %491 = vset.pattern.permute.xlu0 0
      %492 = vperm.xlu0 %491, %v426
      %v493 = vpop.permute.xlu0 %492
      %496 = vset.pattern.permute.xlu0 0
      %497 = vperm.xlu0 %496, %v427
      %v498 = vpop.permute.xlu0 %497
      %501 = vset.pattern.permute.xlu0 0
      %502 = vperm.xlu0 %501, %v428
      %v503 = vpop.permute.xlu0 %502
      %506 = vset.pattern.permute.xlu0 0
      %507 = vperm.xlu0 %506, %v429
      %v508 = vpop.permute.xlu0 %507
      %v574 = vunpack.c.l.b16 %v222
      %v575 = vunpack.c.h.b16 %v222
      %v576 = vunpack.c.l.b16 %v223
      %v577 = vunpack.c.h.b16 %v223
      %v578 = vunpack.c.l.b16 %v224
      %v579 = vunpack.c.h.b16 %v224
      %v580 = vunpack.c.l.b16 %v225
      %v581 = vunpack.c.h.b16 %v225
      %v582 = vunpack.c.l.b16 %v226
      %v583 = vunpack.c.h.b16 %v226
      %v584 = vunpack.c.l.b16 %v227
      %v585 = vunpack.c.h.b16 %v227
      %v586 = vunpack.c.l.b16 %v228
      %v587 = vunpack.c.h.b16 %v228
      %v588 = vunpack.c.l.b16 %v229
      %v589 = vunpack.c.h.b16 %v229
      %v590 = vunpack.c.l.b16 %v230
      %v591 = vunpack.c.h.b16 %v230
      %v592 = vunpack.c.l.b16 %v231
      %v593 = vunpack.c.h.b16 %v231
      %v594 = vunpack.c.l.b16 %v232
      %v595 = vunpack.c.h.b16 %v232
      %v596 = vunpack.c.l.b16 %v233
      %v597 = vunpack.c.h.b16 %v233
      %v598 = vunpack.c.l.b16 %v234
      %v599 = vunpack.c.h.b16 %v234
      %v600 = vunpack.c.l.b16 %v235
      %v601 = vunpack.c.h.b16 %v235
      %v602 = vunpack.c.l.b16 %v236
      %v603 = vunpack.c.h.b16 %v236
      %v604 = vunpack.c.l.b16 %v237
      %v605 = vunpack.c.h.b16 %v237
      %v606 = vunpack.c.l.b16 %v238
      %v607 = vunpack.c.h.b16 %v238
      %v608 = vunpack.c.l.b16 %v239
      %v609 = vunpack.c.h.b16 %v239
      %v610 = vunpack.c.l.b16 %v240
      %v611 = vunpack.c.h.b16 %v240
      %v612 = vunpack.c.l.b16 %v241
      %v613 = vunpack.c.h.b16 %v241
      %v614 = vunpack.c.l.b16 %v242
      %v615 = vunpack.c.h.b16 %v242
      %v616 = vunpack.c.l.b16 %v243
      %v617 = vunpack.c.h.b16 %v243
      %v618 = vunpack.c.l.b16 %v244
      %v619 = vunpack.c.h.b16 %v244
      %v620 = vunpack.c.l.b16 %v245
      %v621 = vunpack.c.h.b16 %v245
      %v622 = vunpack.c.l.b16 %v246
      %v623 = vunpack.c.h.b16 %v246
      %v624 = vunpack.c.l.b16 %v247
      %v625 = vunpack.c.h.b16 %v247
      %v626 = vunpack.c.l.b16 %v248
      %v627 = vunpack.c.h.b16 %v248
      %v628 = vunpack.c.l.b16 %v249
      %v629 = vunpack.c.h.b16 %v249
      %v630 = vunpack.c.l.b16 %v250
      %v631 = vunpack.c.h.b16 %v250
      %v632 = vunpack.c.l.b16 %v251
      %v633 = vunpack.c.h.b16 %v251
      %v634 = vunpack.c.l.b16 %v252
      %v635 = vunpack.c.h.b16 %v252
      %v636 = vunpack.c.l.b16 %v253
      %v637 = vunpack.c.h.b16 %v253
      %v638 = vunpack.c.l.b16 %v254
      %v639 = vunpack.c.h.b16 %v254
      %v640 = vunpack.c.l.b16 %v255
      %v641 = vunpack.c.h.b16 %v255
      %v642 = vunpack.c.l.b16 %v256
      %v643 = vunpack.c.h.b16 %v256
      %v644 = vunpack.c.l.b16 %v257
      %v645 = vunpack.c.h.b16 %v257
      %v646 = vunpack.c.l.b16 %v258
      %v647 = vunpack.c.h.b16 %v258
      %v648 = vunpack.c.l.b16 %v259
      %v649 = vunpack.c.h.b16 %v259
      %v650 = vunpack.c.l.b16 %v260
      %v651 = vunpack.c.h.b16 %v260
      %v652 = vunpack.c.l.b16 %v261
      %v653 = vunpack.c.h.b16 %v261
      %v654 = vunpack.c.l.b16 %v262
      %v655 = vunpack.c.h.b16 %v262
      %v656 = vunpack.c.l.b16 %v263
      %v657 = vunpack.c.h.b16 %v263
      %v658 = vunpack.c.l.b16 %v264
      %v659 = vunpack.c.h.b16 %v264
      %v660 = vunpack.c.l.b16 %v265
      %v661 = vunpack.c.h.b16 %v265
      %v662 = vunpack.c.l.b16 %v266
      %v663 = vunpack.c.h.b16 %v266
      %v664 = vunpack.c.l.b16 %v267
      %v665 = vunpack.c.h.b16 %v267
      %v666 = vunpack.c.l.b16 %v268
      %v667 = vunpack.c.h.b16 %v268
      %v668 = vunpack.c.l.b16 %v269
      %v669 = vunpack.c.h.b16 %v269
      %v670 = vunpack.c.l.b16 %v270
      %v671 = vunpack.c.h.b16 %v270
      %v672 = vunpack.c.l.b16 %v271
      %v673 = vunpack.c.h.b16 %v271
      %v674 = vunpack.c.l.b16 %v272
      %v675 = vunpack.c.h.b16 %v272
      %v676 = vunpack.c.l.b16 %v273
      %v677 = vunpack.c.h.b16 %v273
      %v678 = vunpack.c.l.b16 %v274
      %v679 = vunpack.c.h.b16 %v274
      %v680 = vunpack.c.l.b16 %v275
      %v681 = vunpack.c.h.b16 %v275
      %v682 = vunpack.c.l.b16 %v276
      %v683 = vunpack.c.h.b16 %v276
      %v684 = vunpack.c.l.b16 %v277
      %v685 = vunpack.c.h.b16 %v277
      %v686 = vunpack.c.l.b16 %v278
      %v687 = vunpack.c.h.b16 %v278
      %v688 = vunpack.c.l.b16 %v279
      %v689 = vunpack.c.h.b16 %v279
      %v690 = vunpack.c.l.b16 %v280
      %v691 = vunpack.c.h.b16 %v280
      %v692 = vunpack.c.l.b16 %v281
      %v693 = vunpack.c.h.b16 %v281
      %v694 = vunpack.c.l.b16 %v282
      %v695 = vunpack.c.h.b16 %v282
      %v696 = vunpack.c.l.b16 %v283
      %v697 = vunpack.c.h.b16 %v283
      %v698 = vunpack.c.l.b16 %v284
      %v699 = vunpack.c.h.b16 %v284
      %v700 = vunpack.c.l.b16 %v285
      %v701 = vunpack.c.h.b16 %v285
      %v702 = vpack.c.b16 %v582, %v574
      %v703 = vpack.c.b16 %v583, %v575
      %v704 = vpack.c.b16 %v584, %v576
      %v705 = vpack.c.b16 %v585, %v577
      %v706 = vpack.c.b16 %v586, %v578
      %v707 = vpack.c.b16 %v587, %v579
      %v708 = vpack.c.b16 %v588, %v580
      %v709 = vpack.c.b16 %v589, %v581
      %v710 = vpack.c.b16 %v598, %v590
      %v711 = vpack.c.b16 %v599, %v591
      %v712 = vpack.c.b16 %v600, %v592
      %v713 = vpack.c.b16 %v601, %v593
      %v714 = vpack.c.b16 %v602, %v594
      %v715 = vpack.c.b16 %v603, %v595
      %v716 = vpack.c.b16 %v604, %v596
      %v717 = vpack.c.b16 %v605, %v597
      %v718 = vpack.c.b16 %v614, %v606
      %v719 = vpack.c.b16 %v615, %v607
      %v720 = vpack.c.b16 %v616, %v608
      %v721 = vpack.c.b16 %v617, %v609
      %v722 = vpack.c.b16 %v618, %v610
      %v723 = vpack.c.b16 %v619, %v611
      %v724 = vpack.c.b16 %v620, %v612
      %v725 = vpack.c.b16 %v621, %v613
      %v726 = vpack.c.b16 %v630, %v622
      %v727 = vpack.c.b16 %v631, %v623
      %v728 = vpack.c.b16 %v632, %v624
      %v729 = vpack.c.b16 %v633, %v625
      %v730 = vpack.c.b16 %v634, %v626
      %v731 = vpack.c.b16 %v635, %v627
      %v732 = vpack.c.b16 %v636, %v628
      %v733 = vpack.c.b16 %v637, %v629
      %v734 = vpack.c.b16 %v646, %v638
      %v735 = vpack.c.b16 %v647, %v639
      %v736 = vpack.c.b16 %v648, %v640
      %v737 = vpack.c.b16 %v649, %v641
      %v738 = vpack.c.b16 %v650, %v642
      %v739 = vpack.c.b16 %v651, %v643
      %v740 = vpack.c.b16 %v652, %v644
      %v741 = vpack.c.b16 %v653, %v645
      %v742 = vpack.c.b16 %v662, %v654
      %v743 = vpack.c.b16 %v663, %v655
      %v744 = vpack.c.b16 %v664, %v656
      %v745 = vpack.c.b16 %v665, %v657
      %v746 = vpack.c.b16 %v666, %v658
      %v747 = vpack.c.b16 %v667, %v659
      %v748 = vpack.c.b16 %v668, %v660
      %v749 = vpack.c.b16 %v669, %v661
      %v750 = vpack.c.b16 %v678, %v670
      %v751 = vpack.c.b16 %v679, %v671
      %v752 = vpack.c.b16 %v680, %v672
      %v753 = vpack.c.b16 %v681, %v673
      %v754 = vpack.c.b16 %v682, %v674
      %v755 = vpack.c.b16 %v683, %v675
      %v756 = vpack.c.b16 %v684, %v676
      %v757 = vpack.c.b16 %v685, %v677
      %v758 = vpack.c.b16 %v694, %v686
      %v759 = vpack.c.b16 %v695, %v687
      %v760 = vpack.c.b16 %v696, %v688
      %v761 = vpack.c.b16 %v697, %v689
      %v762 = vpack.c.b16 %v698, %v690
      %v763 = vpack.c.b16 %v699, %v691
      %v764 = vpack.c.b16 %v700, %v692
      %v765 = vpack.c.b16 %v701, %v693
      %v958 = vunpack.c.l.b16 %v286
      %v959 = vunpack.c.l.b16 %v287
      %v960 = vunpack.c.l.b16 %v288
      %v961 = vunpack.c.l.b16 %v289
      %v962 = vunpack.c.l.b16 %v290
      %v963 = vunpack.c.l.b16 %v291
      %v964 = vunpack.c.l.b16 %v292
      %v965 = vunpack.c.l.b16 %v293
      %v966 = vunpack.c.l.b16 %v294
      %v967 = vunpack.c.l.b16 %v295
      %v968 = vunpack.c.l.b16 %v296
      %v969 = vunpack.c.l.b16 %v297
      %v970 = vunpack.c.l.b16 %v298
      %v971 = vunpack.c.l.b16 %v299
      %v972 = vunpack.c.l.b16 %v300
      %v973 = vunpack.c.l.b16 %v301
      %v974 = vunpack.c.l.b16 %v302
      %v975 = vunpack.c.l.b16 %v303
      %v976 = vunpack.c.l.b16 %v304
      %v977 = vunpack.c.l.b16 %v305
      %v978 = vunpack.c.l.b16 %v306
      %v979 = vunpack.c.l.b16 %v307
      %v980 = vunpack.c.l.b16 %v308
      %v981 = vunpack.c.l.b16 %v309
      %v982 = vunpack.c.l.b16 %v310
      %v983 = vunpack.c.l.b16 %v311
      %v984 = vunpack.c.l.b16 %v312
      %v985 = vunpack.c.l.b16 %v313
      %v986 = vunpack.c.l.b16 %v314
      %v987 = vunpack.c.l.b16 %v315
      %v988 = vunpack.c.l.b16 %v316
      %v989 = vunpack.c.l.b16 %v317
      %v990 = vunpack.c.l.b16 %v318
      %v991 = vunpack.c.l.b16 %v319
      %v992 = vunpack.c.l.b16 %v320
      %v993 = vunpack.c.l.b16 %v321
      %v994 = vunpack.c.l.b16 %v322
      %v995 = vunpack.c.l.b16 %v323
      %v996 = vunpack.c.l.b16 %v324
      %v997 = vunpack.c.l.b16 %v325
      %v998 = vunpack.c.l.b16 %v326
      %v999 = vunpack.c.l.b16 %v327
      %v1000 = vunpack.c.l.b16 %v328
      %v1001 = vunpack.c.l.b16 %v329
      %v1002 = vunpack.c.l.b16 %v330
      %v1003 = vunpack.c.l.b16 %v331
      %v1004 = vunpack.c.l.b16 %v332
      %v1005 = vunpack.c.l.b16 %v333
      %v1006 = vunpack.c.l.b16 %v334
      %v1007 = vunpack.c.l.b16 %v335
      %v1008 = vunpack.c.l.b16 %v336
      %v1009 = vunpack.c.l.b16 %v337
      %v1010 = vunpack.c.l.b16 %v338
      %v1011 = vunpack.c.l.b16 %v339
      %v1012 = vunpack.c.l.b16 %v340
      %v1013 = vunpack.c.l.b16 %v341
      %v1014 = vunpack.c.l.b16 %v342
      %v1015 = vunpack.c.l.b16 %v343
      %v1016 = vunpack.c.l.b16 %v344
      %v1017 = vunpack.c.l.b16 %v345
      %v1018 = vunpack.c.l.b16 %v346
      %v1019 = vunpack.c.l.b16 %v347
      %v1020 = vunpack.c.l.b16 %v348
      %v1021 = vunpack.c.l.b16 %v349
      %v1022 = vunpack.c.l.b16 %v350
      %v1023 = vunpack.c.l.b16 %v351
      %v1024 = vunpack.c.l.b16 %v352
      %v1025 = vunpack.c.l.b16 %v353
      %v1026 = vunpack.c.l.b16 %v354
      %v1027 = vunpack.c.l.b16 %v355
      %v1028 = vunpack.c.l.b16 %v356
      %v1029 = vunpack.c.l.b16 %v357
      %v1030 = vunpack.c.l.b16 %v358
      %v1031 = vunpack.c.l.b16 %v359
      %v1032 = vunpack.c.l.b16 %v360
      %v1033 = vunpack.c.l.b16 %v361
      %v1034 = vunpack.c.l.b16 %v362
      %v1035 = vunpack.c.l.b16 %v363
      %v1036 = vunpack.c.l.b16 %v364
      %v1037 = vunpack.c.l.b16 %v365
      %v1038 = vunpack.c.l.b16 %v366
      %v1039 = vunpack.c.l.b16 %v367
      %v1040 = vunpack.c.l.b16 %v368
      %v1041 = vunpack.c.l.b16 %v369
      %v1042 = vunpack.c.l.b16 %v370
      %v1043 = vunpack.c.l.b16 %v371
      %v1044 = vunpack.c.l.b16 %v372
      %v1045 = vunpack.c.l.b16 %v373
      %v1046 = vunpack.c.l.b16 %v374
      %v1047 = vunpack.c.l.b16 %v375
      %v1048 = vunpack.c.l.b16 %v376
      %v1049 = vunpack.c.l.b16 %v377
      %v1050 = vunpack.c.l.b16 %v378
      %v1051 = vunpack.c.l.b16 %v379
      %v1052 = vunpack.c.l.b16 %v380
      %v1053 = vunpack.c.l.b16 %v381
      %v1054 = vunpack.c.l.b16 %v382
      %v1055 = vunpack.c.l.b16 %v383
      %v1056 = vunpack.c.l.b16 %v384
      %v1057 = vunpack.c.l.b16 %v385
      %v1058 = vunpack.c.l.b16 %v386
      %v1059 = vunpack.c.l.b16 %v387
      %v1060 = vunpack.c.l.b16 %v388
      %v1061 = vunpack.c.l.b16 %v389
      %v1062 = vunpack.c.l.b16 %v390
      %v1063 = vunpack.c.l.b16 %v391
      %v1064 = vunpack.c.l.b16 %v392
      %v1065 = vunpack.c.l.b16 %v393
      %v1066 = vunpack.c.l.b16 %v394
      %v1067 = vunpack.c.l.b16 %v395
      %v1068 = vunpack.c.l.b16 %v396
      %v1069 = vunpack.c.l.b16 %v397
      %v1070 = vunpack.c.l.b16 %v398
      %v1071 = vunpack.c.l.b16 %v399
      %v1072 = vunpack.c.l.b16 %v400
      %v1073 = vunpack.c.l.b16 %v401
      %v1074 = vunpack.c.l.b16 %v402
      %v1075 = vunpack.c.l.b16 %v403
      %v1076 = vunpack.c.l.b16 %v404
      %v1077 = vunpack.c.l.b16 %v405
      %v1078 = vunpack.c.l.b16 %v406
      %v1079 = vunpack.c.l.b16 %v407
      %v1080 = vunpack.c.l.b16 %v408
      %v1081 = vunpack.c.l.b16 %v409
      %v1082 = vunpack.c.l.b16 %v410
      %v1083 = vunpack.c.l.b16 %v411
      %v1084 = vunpack.c.l.b16 %v412
      %v1085 = vunpack.c.l.b16 %v413
      %v1086 = vpack.c.b16 %v959, %v958
      %v1087 = vpack.c.b16 %v961, %v960
      %v1088 = vpack.c.b16 %v963, %v962
      %v1089 = vpack.c.b16 %v965, %v964
      %v1090 = vpack.c.b16 %v967, %v966
      %v1091 = vpack.c.b16 %v969, %v968
      %v1092 = vpack.c.b16 %v971, %v970
      %v1093 = vpack.c.b16 %v973, %v972
      %v1094 = vpack.c.b16 %v975, %v974
      %v1095 = vpack.c.b16 %v977, %v976
      %v1096 = vpack.c.b16 %v979, %v978
      %v1097 = vpack.c.b16 %v981, %v980
      %v1098 = vpack.c.b16 %v983, %v982
      %v1099 = vpack.c.b16 %v985, %v984
      %v1100 = vpack.c.b16 %v987, %v986
      %v1101 = vpack.c.b16 %v989, %v988
      %v1102 = vpack.c.b16 %v991, %v990
      %v1103 = vpack.c.b16 %v993, %v992
      %v1104 = vpack.c.b16 %v995, %v994
      %v1105 = vpack.c.b16 %v997, %v996
      %v1106 = vpack.c.b16 %v999, %v998
      %v1107 = vpack.c.b16 %v1001, %v1000
      %v1108 = vpack.c.b16 %v1003, %v1002
      %v1109 = vpack.c.b16 %v1005, %v1004
      %v1110 = vpack.c.b16 %v1007, %v1006
      %v1111 = vpack.c.b16 %v1009, %v1008
      %v1112 = vpack.c.b16 %v1011, %v1010
      %v1113 = vpack.c.b16 %v1013, %v1012
      %v1114 = vpack.c.b16 %v1015, %v1014
      %v1115 = vpack.c.b16 %v1017, %v1016
      %v1116 = vpack.c.b16 %v1019, %v1018
      %v1117 = vpack.c.b16 %v1021, %v1020
      %v1118 = vpack.c.b16 %v1023, %v1022
      %v1119 = vpack.c.b16 %v1025, %v1024
      %v1120 = vpack.c.b16 %v1027, %v1026
      %v1121 = vpack.c.b16 %v1029, %v1028
      %v1122 = vpack.c.b16 %v1031, %v1030
      %v1123 = vpack.c.b16 %v1033, %v1032
      %v1124 = vpack.c.b16 %v1035, %v1034
      %v1125 = vpack.c.b16 %v1037, %v1036
      %v1126 = vpack.c.b16 %v1039, %v1038
      %v1127 = vpack.c.b16 %v1041, %v1040
      %v1128 = vpack.c.b16 %v1043, %v1042
      %v1129 = vpack.c.b16 %v1045, %v1044
      %v1130 = vpack.c.b16 %v1047, %v1046
      %v1131 = vpack.c.b16 %v1049, %v1048
      %v1132 = vpack.c.b16 %v1051, %v1050
      %v1133 = vpack.c.b16 %v1053, %v1052
      %v1134 = vpack.c.b16 %v1055, %v1054
      %v1135 = vpack.c.b16 %v1057, %v1056
      %v1136 = vpack.c.b16 %v1059, %v1058
      %v1137 = vpack.c.b16 %v1061, %v1060
      %v1138 = vpack.c.b16 %v1063, %v1062
      %v1139 = vpack.c.b16 %v1065, %v1064
      %v1140 = vpack.c.b16 %v1067, %v1066
      %v1141 = vpack.c.b16 %v1069, %v1068
      %v1142 = vpack.c.b16 %v1071, %v1070
      %v1143 = vpack.c.b16 %v1073, %v1072
      %v1144 = vpack.c.b16 %v1075, %v1074
      %v1145 = vpack.c.b16 %v1077, %v1076
      %v1146 = vpack.c.b16 %v1079, %v1078
      %v1147 = vpack.c.b16 %v1081, %v1080
      %v1148 = vpack.c.b16 %v1083, %v1082
      %v1149 = vpack.c.b16 %v1085, %v1084
      %1214 = vmatpush.bf16.msra.mxu0 %v1093
      %1215 = vmatpush.bf16.msra.mxu0 %v1092
      %1216 = vmatpush.bf16.msra.mxu0 %v1091
      %1217 = vmatpush.bf16.msra.mxu0 %v1090
      %1218 = vmatpush.bf16.msra.mxu0 %v1089
      %1219 = vmatpush.bf16.msra.mxu0 %v1088
      %1220 = vmatpush.bf16.msra.mxu0 %v1087
      %1221 = vmatpush.bf16.msra.mxu0 %v1086
      %1222 = vmatmul.bf16.gmra.mxu0 %v702
      %v1223 = vpop.f32.mrf.mxu0
      %v1224 = vadd.f32 %v433, %v1223
      %v1225 = vpop.f32.mrf.mxu0
      %v1226 = vadd.f32 %v438, %v1225
      %1227 = vmatmul.bf16.gmra.mxu0 %v710
      %v1228 = vpop.f32.mrf.mxu0
      %v1229 = vadd.f32 %v443, %v1228
      %v1230 = vpop.f32.mrf.mxu0
      %v1231 = vadd.f32 %v448, %v1230
      %1232 = vmatmul.bf16.gmra.mxu0 %v718
      %v1233 = vpop.f32.mrf.mxu0
      %v1234 = vadd.f32 %v453, %v1233
      %v1235 = vpop.f32.mrf.mxu0
      %v1236 = vadd.f32 %v458, %v1235
      %1237 = vmatmul.bf16.gmra.mxu0 %v726
      %v1238 = vpop.f32.mrf.mxu0
      %v1239 = vadd.f32 %v463, %v1238
      %v1240 = vpop.f32.mrf.mxu0
      %v1241 = vadd.f32 %v468, %v1240
      %1242 = vmatmul.bf16.gmra.mxu0 %v734
      %v1243 = vpop.f32.mrf.mxu0
      %v1244 = vadd.f32 %v473, %v1243
      %v1245 = vpop.f32.mrf.mxu0
      %v1246 = vadd.f32 %v478, %v1245
      %1247 = vmatmul.bf16.gmra.mxu0 %v742
      %v1248 = vpop.f32.mrf.mxu0
      %v1249 = vadd.f32 %v483, %v1248
      %v1250 = vpop.f32.mrf.mxu0
      %v1251 = vadd.f32 %v488, %v1250
      %1252 = vmatmul.bf16.gmra.mxu0 %v750
      %v1253 = vpop.f32.mrf.mxu0
      %v1254 = vadd.f32 %v493, %v1253
      %v1255 = vpop.f32.mrf.mxu0
      %v1256 = vadd.f32 %v498, %v1255
      %1257 = vmatmul.bf16.gmra.mxu0 %v758
      %v1258 = vpop.f32.mrf.mxu0
      %v1259 = vadd.f32 %v503, %v1258
      %v1260 = vpop.f32.mrf.mxu0
      %v1261 = vadd.f32 %v508, %v1260
      %1262 = vdwg.mxu0
      %1263 = vmatpush.bf16.msra.mxu0 %v1101
      %1264 = vmatpush.bf16.msra.mxu0 %v1100
      %1265 = vmatpush.bf16.msra.mxu0 %v1099
      %1266 = vmatpush.bf16.msra.mxu0 %v1098
      %1267 = vmatpush.bf16.msra.mxu0 %v1097
      %1268 = vmatpush.bf16.msra.mxu0 %v1096
      %1269 = vmatpush.bf16.msra.mxu0 %v1095
      %1270 = vmatpush.bf16.msra.mxu0 %v1094
      %1271 = vmatmul.bf16.gmra.mxu0 %v703
      %v1272 = vpop.f32.mrf.mxu0
      %v1273 = vadd.f32 %v1224, %v1272
      %v1274 = vpop.f32.mrf.mxu0
      %v1275 = vadd.f32 %v1226, %v1274
      %1276 = vmatmul.bf16.gmra.mxu0 %v711
      %v1277 = vpop.f32.mrf.mxu0
      %v1278 = vadd.f32 %v1229, %v1277
      %v1279 = vpop.f32.mrf.mxu0
      %v1280 = vadd.f32 %v1231, %v1279
      %1281 = vmatmul.bf16.gmra.mxu0 %v719
      %v1282 = vpop.f32.mrf.mxu0
      %v1283 = vadd.f32 %v1234, %v1282
      %v1284 = vpop.f32.mrf.mxu0
      %v1285 = vadd.f32 %v1236, %v1284
      %1286 = vmatmul.bf16.gmra.mxu0 %v727
      %v1287 = vpop.f32.mrf.mxu0
      %v1288 = vadd.f32 %v1239, %v1287
      %v1289 = vpop.f32.mrf.mxu0
      %v1290 = vadd.f32 %v1241, %v1289
      %1291 = vmatmul.bf16.gmra.mxu0 %v735
      %v1292 = vpop.f32.mrf.mxu0
      %v1293 = vadd.f32 %v1244, %v1292
      %v1294 = vpop.f32.mrf.mxu0
      %v1295 = vadd.f32 %v1246, %v1294
      %1296 = vmatmul.bf16.gmra.mxu0 %v743
      %v1297 = vpop.f32.mrf.mxu0
      %v1298 = vadd.f32 %v1249, %v1297
      %v1299 = vpop.f32.mrf.mxu0
      %v1300 = vadd.f32 %v1251, %v1299
      %1301 = vmatmul.bf16.gmra.mxu0 %v751
      %v1302 = vpop.f32.mrf.mxu0
      %v1303 = vadd.f32 %v1254, %v1302
      %v1304 = vpop.f32.mrf.mxu0
      %v1305 = vadd.f32 %v1256, %v1304
      %1306 = vmatmul.bf16.gmra.mxu0 %v759
      %v1307 = vpop.f32.mrf.mxu0
      %v1308 = vadd.f32 %v1259, %v1307
      %v1309 = vpop.f32.mrf.mxu0
      %v1310 = vadd.f32 %v1261, %v1309
      %1311 = vdwg.mxu0
      %1312 = vmatpush.bf16.msra.mxu0 %v1109
      %1313 = vmatpush.bf16.msra.mxu0 %v1108
      %1314 = vmatpush.bf16.msra.mxu0 %v1107
      %1315 = vmatpush.bf16.msra.mxu0 %v1106
      %1316 = vmatpush.bf16.msra.mxu0 %v1105
      %1317 = vmatpush.bf16.msra.mxu0 %v1104
      %1318 = vmatpush.bf16.msra.mxu0 %v1103
      %1319 = vmatpush.bf16.msra.mxu0 %v1102
      %1320 = vmatmul.bf16.gmra.mxu0 %v704
      %v1321 = vpop.f32.mrf.mxu0
      %v1322 = vadd.f32 %v1273, %v1321
      %v1323 = vpop.f32.mrf.mxu0
      %v1324 = vadd.f32 %v1275, %v1323
      %1325 = vmatmul.bf16.gmra.mxu0 %v712
      %v1326 = vpop.f32.mrf.mxu0
      %v1327 = vadd.f32 %v1278, %v1326
      %v1328 = vpop.f32.mrf.mxu0
      %v1329 = vadd.f32 %v1280, %v1328
      %1330 = vmatmul.bf16.gmra.mxu0 %v720
      %v1331 = vpop.f32.mrf.mxu0
      %v1332 = vadd.f32 %v1283, %v1331
      %v1333 = vpop.f32.mrf.mxu0
      %v1334 = vadd.f32 %v1285, %v1333
      %1335 = vmatmul.bf16.gmra.mxu0 %v728
      %v1336 = vpop.f32.mrf.mxu0
      %v1337 = vadd.f32 %v1288, %v1336
      %v1338 = vpop.f32.mrf.mxu0
      %v1339 = vadd.f32 %v1290, %v1338
      %1340 = vmatmul.bf16.gmra.mxu0 %v736
      %v1341 = vpop.f32.mrf.mxu0
      %v1342 = vadd.f32 %v1293, %v1341
      %v1343 = vpop.f32.mrf.mxu0
      %v1344 = vadd.f32 %v1295, %v1343
      %1345 = vmatmul.bf16.gmra.mxu0 %v744
      %v1346 = vpop.f32.mrf.mxu0
      %v1347 = vadd.f32 %v1298, %v1346
      %v1348 = vpop.f32.mrf.mxu0
      %v1349 = vadd.f32 %v1300, %v1348
      %1350 = vmatmul.bf16.gmra.mxu0 %v752
      %v1351 = vpop.f32.mrf.mxu0
      %v1352 = vadd.f32 %v1303, %v1351
      %v1353 = vpop.f32.mrf.mxu0
      %v1354 = vadd.f32 %v1305, %v1353
      %1355 = vmatmul.bf16.gmra.mxu0 %v760
      %v1356 = vpop.f32.mrf.mxu0
      %v1357 = vadd.f32 %v1308, %v1356
      %v1358 = vpop.f32.mrf.mxu0
      %v1359 = vadd.f32 %v1310, %v1358
      %1360 = vdwg.mxu0
      %1361 = vmatpush.bf16.msra.mxu0 %v1117
      %1362 = vmatpush.bf16.msra.mxu0 %v1116
      %1363 = vmatpush.bf16.msra.mxu0 %v1115
      %1364 = vmatpush.bf16.msra.mxu0 %v1114
      %1365 = vmatpush.bf16.msra.mxu0 %v1113
      %1366 = vmatpush.bf16.msra.mxu0 %v1112
      %1367 = vmatpush.bf16.msra.mxu0 %v1111
      %1368 = vmatpush.bf16.msra.mxu0 %v1110
      %1369 = vmatmul.bf16.gmra.mxu0 %v705
      %v1370 = vpop.f32.mrf.mxu0
      %v1371 = vadd.f32 %v1322, %v1370
      %v1372 = vpop.f32.mrf.mxu0
      %v1373 = vadd.f32 %v1324, %v1372
      %1374 = vmatmul.bf16.gmra.mxu0 %v713
      %v1375 = vpop.f32.mrf.mxu0
      %v1376 = vadd.f32 %v1327, %v1375
      %v1377 = vpop.f32.mrf.mxu0
      %v1378 = vadd.f32 %v1329, %v1377
      %1379 = vmatmul.bf16.gmra.mxu0 %v721
      %v1380 = vpop.f32.mrf.mxu0
      %v1381 = vadd.f32 %v1332, %v1380
      %v1382 = vpop.f32.mrf.mxu0
      %v1383 = vadd.f32 %v1334, %v1382
      %1384 = vmatmul.bf16.gmra.mxu0 %v729
      %v1385 = vpop.f32.mrf.mxu0
      %v1386 = vadd.f32 %v1337, %v1385
      %v1387 = vpop.f32.mrf.mxu0
      %v1388 = vadd.f32 %v1339, %v1387
      %1389 = vmatmul.bf16.gmra.mxu0 %v737
      %v1390 = vpop.f32.mrf.mxu0
      %v1391 = vadd.f32 %v1342, %v1390
      %v1392 = vpop.f32.mrf.mxu0
      %v1393 = vadd.f32 %v1344, %v1392
      %1394 = vmatmul.bf16.gmra.mxu0 %v745
      %v1395 = vpop.f32.mrf.mxu0
      %v1396 = vadd.f32 %v1347, %v1395
      %v1397 = vpop.f32.mrf.mxu0
      %v1398 = vadd.f32 %v1349, %v1397
      %1399 = vmatmul.bf16.gmra.mxu0 %v753
      %v1400 = vpop.f32.mrf.mxu0
      %v1401 = vadd.f32 %v1352, %v1400
      %v1402 = vpop.f32.mrf.mxu0
      %v1403 = vadd.f32 %v1354, %v1402
      %1404 = vmatmul.bf16.gmra.mxu0 %v761
      %v1405 = vpop.f32.mrf.mxu0
      %v1406 = vadd.f32 %v1357, %v1405
      %v1407 = vpop.f32.mrf.mxu0
      %v1408 = vadd.f32 %v1359, %v1407
      %1409 = vdwg.mxu0
      %1410 = vmatpush.bf16.msra.mxu0 %v1125
      %1411 = vmatpush.bf16.msra.mxu0 %v1124
      %1412 = vmatpush.bf16.msra.mxu0 %v1123
      %1413 = vmatpush.bf16.msra.mxu0 %v1122
      %1414 = vmatpush.bf16.msra.mxu0 %v1121
      %1415 = vmatpush.bf16.msra.mxu0 %v1120
      %1416 = vmatpush.bf16.msra.mxu0 %v1119
      %1417 = vmatpush.bf16.msra.mxu0 %v1118
      %1418 = vmatmul.bf16.gmra.mxu0 %v706
      %v1419 = vpop.f32.mrf.mxu0
      %v1420 = vadd.f32 %v1371, %v1419
      %v1421 = vpop.f32.mrf.mxu0
      %v1422 = vadd.f32 %v1373, %v1421
      %1423 = vmatmul.bf16.gmra.mxu0 %v714
      %v1424 = vpop.f32.mrf.mxu0
      %v1425 = vadd.f32 %v1376, %v1424
      %v1426 = vpop.f32.mrf.mxu0
      %v1427 = vadd.f32 %v1378, %v1426
      %1428 = vmatmul.bf16.gmra.mxu0 %v722
      %v1429 = vpop.f32.mrf.mxu0
      %v1430 = vadd.f32 %v1381, %v1429
      %v1431 = vpop.f32.mrf.mxu0
      %v1432 = vadd.f32 %v1383, %v1431
      %1433 = vmatmul.bf16.gmra.mxu0 %v730
      %v1434 = vpop.f32.mrf.mxu0
      %v1435 = vadd.f32 %v1386, %v1434
      %v1436 = vpop.f32.mrf.mxu0
      %v1437 = vadd.f32 %v1388, %v1436
      %1438 = vmatmul.bf16.gmra.mxu0 %v738
      %v1439 = vpop.f32.mrf.mxu0
      %v1440 = vadd.f32 %v1391, %v1439
      %v1441 = vpop.f32.mrf.mxu0
      %v1442 = vadd.f32 %v1393, %v1441
      %1443 = vmatmul.bf16.gmra.mxu0 %v746
      %v1444 = vpop.f32.mrf.mxu0
      %v1445 = vadd.f32 %v1396, %v1444
      %v1446 = vpop.f32.mrf.mxu0
      %v1447 = vadd.f32 %v1398, %v1446
      %1448 = vmatmul.bf16.gmra.mxu0 %v754
      %v1449 = vpop.f32.mrf.mxu0
      %v1450 = vadd.f32 %v1401, %v1449
      %v1451 = vpop.f32.mrf.mxu0
      %v1452 = vadd.f32 %v1403, %v1451
      %1453 = vmatmul.bf16.gmra.mxu0 %v762
      %v1454 = vpop.f32.mrf.mxu0
      %v1455 = vadd.f32 %v1406, %v1454
      %v1456 = vpop.f32.mrf.mxu0
      %v1457 = vadd.f32 %v1408, %v1456
      %1458 = vdwg.mxu0
      %1459 = vmatpush.bf16.msra.mxu0 %v1133
      %1460 = vmatpush.bf16.msra.mxu0 %v1132
      %1461 = vmatpush.bf16.msra.mxu0 %v1131
      %1462 = vmatpush.bf16.msra.mxu0 %v1130
      %1463 = vmatpush.bf16.msra.mxu0 %v1129
      %1464 = vmatpush.bf16.msra.mxu0 %v1128
      %1465 = vmatpush.bf16.msra.mxu0 %v1127
      %1466 = vmatpush.bf16.msra.mxu0 %v1126
      %1467 = vmatmul.bf16.gmra.mxu0 %v707
      %v1468 = vpop.f32.mrf.mxu0
      %v1469 = vadd.f32 %v1420, %v1468
      %v1470 = vpop.f32.mrf.mxu0
      %v1471 = vadd.f32 %v1422, %v1470
      %1472 = vmatmul.bf16.gmra.mxu0 %v715
      %v1473 = vpop.f32.mrf.mxu0
      %v1474 = vadd.f32 %v1425, %v1473
      %v1475 = vpop.f32.mrf.mxu0
      %v1476 = vadd.f32 %v1427, %v1475
      %1477 = vmatmul.bf16.gmra.mxu0 %v723
      %v1478 = vpop.f32.mrf.mxu0
      %v1479 = vadd.f32 %v1430, %v1478
      %v1480 = vpop.f32.mrf.mxu0
      %v1481 = vadd.f32 %v1432, %v1480
      %1482 = vmatmul.bf16.gmra.mxu0 %v731
      %v1483 = vpop.f32.mrf.mxu0
      %v1484 = vadd.f32 %v1435, %v1483
      %v1485 = vpop.f32.mrf.mxu0
      %v1486 = vadd.f32 %v1437, %v1485
      %1487 = vmatmul.bf16.gmra.mxu0 %v739
      %v1488 = vpop.f32.mrf.mxu0
      %v1489 = vadd.f32 %v1440, %v1488
      %v1490 = vpop.f32.mrf.mxu0
      %v1491 = vadd.f32 %v1442, %v1490
      %1492 = vmatmul.bf16.gmra.mxu0 %v747
      %v1493 = vpop.f32.mrf.mxu0
      %v1494 = vadd.f32 %v1445, %v1493
      %v1495 = vpop.f32.mrf.mxu0
      %v1496 = vadd.f32 %v1447, %v1495
      %1497 = vmatmul.bf16.gmra.mxu0 %v755
      %v1498 = vpop.f32.mrf.mxu0
      %v1499 = vadd.f32 %v1450, %v1498
      %v1500 = vpop.f32.mrf.mxu0
      %v1501 = vadd.f32 %v1452, %v1500
      %1502 = vmatmul.bf16.gmra.mxu0 %v763
      %v1503 = vpop.f32.mrf.mxu0
      %v1504 = vadd.f32 %v1455, %v1503
      %v1505 = vpop.f32.mrf.mxu0
      %v1506 = vadd.f32 %v1457, %v1505
      %1507 = vdwg.mxu0
      %1508 = vmatpush.bf16.msra.mxu0 %v1141
      %1509 = vmatpush.bf16.msra.mxu0 %v1140
      %1510 = vmatpush.bf16.msra.mxu0 %v1139
      %1511 = vmatpush.bf16.msra.mxu0 %v1138
      %1512 = vmatpush.bf16.msra.mxu0 %v1137
      %1513 = vmatpush.bf16.msra.mxu0 %v1136
      %1514 = vmatpush.bf16.msra.mxu0 %v1135
      %1515 = vmatpush.bf16.msra.mxu0 %v1134
      %1516 = vmatmul.bf16.gmra.mxu0 %v708
      %v1517 = vpop.f32.mrf.mxu0
      %v1518 = vadd.f32 %v1469, %v1517
      %v1519 = vpop.f32.mrf.mxu0
      %v1520 = vadd.f32 %v1471, %v1519
      %1521 = vmatmul.bf16.gmra.mxu0 %v716
      %v1522 = vpop.f32.mrf.mxu0
      %v1523 = vadd.f32 %v1474, %v1522
      %v1524 = vpop.f32.mrf.mxu0
      %v1525 = vadd.f32 %v1476, %v1524
      %1526 = vmatmul.bf16.gmra.mxu0 %v724
      %v1527 = vpop.f32.mrf.mxu0
      %v1528 = vadd.f32 %v1479, %v1527
      %v1529 = vpop.f32.mrf.mxu0
      %v1530 = vadd.f32 %v1481, %v1529
      %1531 = vmatmul.bf16.gmra.mxu0 %v732
      %v1532 = vpop.f32.mrf.mxu0
      %v1533 = vadd.f32 %v1484, %v1532
      %v1534 = vpop.f32.mrf.mxu0
      %v1535 = vadd.f32 %v1486, %v1534
      %1536 = vmatmul.bf16.gmra.mxu0 %v740
      %v1537 = vpop.f32.mrf.mxu0
      %v1538 = vadd.f32 %v1489, %v1537
      %v1539 = vpop.f32.mrf.mxu0
      %v1540 = vadd.f32 %v1491, %v1539
      %1541 = vmatmul.bf16.gmra.mxu0 %v748
      %v1542 = vpop.f32.mrf.mxu0
      %v1543 = vadd.f32 %v1494, %v1542
      %v1544 = vpop.f32.mrf.mxu0
      %v1545 = vadd.f32 %v1496, %v1544
      %1546 = vmatmul.bf16.gmra.mxu0 %v756
      %v1547 = vpop.f32.mrf.mxu0
      %v1548 = vadd.f32 %v1499, %v1547
      %v1549 = vpop.f32.mrf.mxu0
      %v1550 = vadd.f32 %v1501, %v1549
      %1551 = vmatmul.bf16.gmra.mxu0 %v764
      %v1552 = vpop.f32.mrf.mxu0
      %v1553 = vadd.f32 %v1504, %v1552
      %v1554 = vpop.f32.mrf.mxu0
      %v1555 = vadd.f32 %v1506, %v1554
      %1556 = vdwg.mxu0
      %1557 = vmatpush.bf16.msra.mxu0 %v1149
      %1558 = vmatpush.bf16.msra.mxu0 %v1148
      %1559 = vmatpush.bf16.msra.mxu0 %v1147
      %1560 = vmatpush.bf16.msra.mxu0 %v1146
      %1561 = vmatpush.bf16.msra.mxu0 %v1145
      %1562 = vmatpush.bf16.msra.mxu0 %v1144
      %1563 = vmatpush.bf16.msra.mxu0 %v1143
      %1564 = vmatpush.bf16.msra.mxu0 %v1142
      %1565 = vmatmul.bf16.gmra.mxu0 %v709
      %v1566 = vpop.f32.mrf.mxu0
      %v1567 = vadd.f32 %v1518, %v1566
      %v1568 = vpop.f32.mrf.mxu0
      %v1569 = vadd.f32 %v1520, %v1568
      %1570 = vmatmul.bf16.gmra.mxu0 %v717
      %v1571 = vpop.f32.mrf.mxu0
      %v1572 = vadd.f32 %v1523, %v1571
      %v1573 = vpop.f32.mrf.mxu0
      %v1574 = vadd.f32 %v1525, %v1573
      %1575 = vmatmul.bf16.gmra.mxu0 %v725
      %v1576 = vpop.f32.mrf.mxu0
      %v1577 = vadd.f32 %v1528, %v1576
      %v1578 = vpop.f32.mrf.mxu0
      %v1579 = vadd.f32 %v1530, %v1578
      %1580 = vmatmul.bf16.gmra.mxu0 %v733
      %v1581 = vpop.f32.mrf.mxu0
      %v1582 = vadd.f32 %v1533, %v1581
      %v1583 = vpop.f32.mrf.mxu0
      %v1584 = vadd.f32 %v1535, %v1583
      %1585 = vmatmul.bf16.gmra.mxu0 %v741
      %v1586 = vpop.f32.mrf.mxu0
      %v1587 = vadd.f32 %v1538, %v1586
      %v1588 = vpop.f32.mrf.mxu0
      %v1589 = vadd.f32 %v1540, %v1588
      %1590 = vmatmul.bf16.gmra.mxu0 %v749
      %v1591 = vpop.f32.mrf.mxu0
      %v1592 = vadd.f32 %v1543, %v1591
      %v1593 = vpop.f32.mrf.mxu0
      %v1594 = vadd.f32 %v1545, %v1593
      %1595 = vmatmul.bf16.gmra.mxu0 %v757
      %v1596 = vpop.f32.mrf.mxu0
      %v1597 = vadd.f32 %v1548, %v1596
      %v1598 = vpop.f32.mrf.mxu0
      %v1599 = vadd.f32 %v1550, %v1598
      %1600 = vmatmul.bf16.gmra.mxu0 %v765
      %v1601 = vpop.f32.mrf.mxu0
      %v1602 = vadd.f32 %v1553, %v1601
      %v1603 = vpop.f32.mrf.mxu0
      %v1604 = vadd.f32 %v1555, %v1603
      %1605 = vdwg.mxu0
      %v1606 = vmax.f32 %v1567, 0.0
      %v1607 = vmax.f32 %v1569, 0.0
      %v1608 = vmax.f32 %v1572, 0.0
      %v1609 = vmax.f32 %v1574, 0.0
      %v1610 = vmax.f32 %v1577, 0.0
      %v1611 = vmax.f32 %v1579, 0.0
      %v1612 = vmax.f32 %v1582, 0.0
      %v1613 = vmax.f32 %v1584, 0.0
      %v1614 = vmax.f32 %v1587, 0.0
      %v1615 = vmax.f32 %v1589, 0.0
      %v1616 = vmax.f32 %v1592, 0.0
      %v1617 = vmax.f32 %v1594, 0.0
      %v1618 = vmax.f32 %v1597, 0.0
      %v1619 = vmax.f32 %v1599, 0.0
      %v1620 = vmax.f32 %v1602, 0.0
      %v1621 = vmax.f32 %v1604, 0.0
      %v1622 = vpack.c.bf16 %v1606, %v1606
      %v1623 = vpack.c.bf16 %v1607, %v1607
      %v1624 = vpack.c.bf16 %v1608, %v1608
      %v1625 = vpack.c.bf16 %v1609, %v1609
      %v1626 = vpack.c.bf16 %v1610, %v1610
      %v1627 = vpack.c.bf16 %v1611, %v1611
      %v1628 = vpack.c.bf16 %v1612, %v1612
      %v1629 = vpack.c.bf16 %v1613, %v1613
      %v1630 = vpack.c.bf16 %v1614, %v1614
      %v1631 = vpack.c.bf16 %v1615, %v1615
      %v1632 = vpack.c.bf16 %v1616, %v1616
      %v1633 = vpack.c.bf16 %v1617, %v1617
      %v1634 = vpack.c.bf16 %v1618, %v1618
      %v1635 = vpack.c.bf16 %v1619, %v1619
      %v1636 = vpack.c.bf16 %v1620, %v1620
      %v1637 = vpack.c.bf16 %v1621, %v1621
      %vm1638 = vcmask 60416
      %1639 = vst.msk [vmem:[%s221] sm:$0xf] %vm1638, %v1622
      %1640 = vst.msk [vmem:[%s221 + $0x4] sm:$0xf] %vm1638, %v1623
      %1641 = vst.msk [vmem:[%s221 + $0x8] sm:$0xf] %vm1638, %v1624
      %1642 = vst.msk [vmem:[%s221 + $0xc] sm:$0xf] %vm1638, %v1625
      %1643 = vst.msk [vmem:[%s221 + $0x10] sm:$0xf] %vm1638, %v1626
      %1644 = vst.msk [vmem:[%s221 + $0x14] sm:$0xf] %vm1638, %v1627
      %1645 = vst.msk [vmem:[%s221 + $0x18] sm:$0xf] %vm1638, %v1628
      %1646 = vst.msk [vmem:[%s221 + $0x1c] sm:$0xf] %vm1638, %v1629
      %1647 = vst.msk [vmem:[%s221 + $0x20] sm:$0xf] %vm1638, %v1630
      %1648 = vst.msk [vmem:[%s221 + $0x24] sm:$0xf] %vm1638, %v1631
      %1649 = vst.msk [vmem:[%s221 + $0x28] sm:$0xf] %vm1638, %v1632
      %1650 = vst.msk [vmem:[%s221 + $0x2c] sm:$0xf] %vm1638, %v1633
      %1651 = vst.msk [vmem:[%s221 + $0x30] sm:$0xf] %vm1638, %v1634
      %1652 = vst.msk [vmem:[%s221 + $0x34] sm:$0xf] %vm1638, %v1635
      %1653 = vst.msk [vmem:[%s221 + $0x38] sm:$0xf] %vm1638, %v1636
      %1654 = vst.msk [vmem:[%s221 + $0x3c] sm:$0xf] %vm1638, %v1637
      %p1655 = scmp.lt.s32.totalorder %s18, 3
      %s1656 = scalar_select %p1655, %s18, 3
      %p1657 = scmp.lt.s32.totalorder %s19, 0
      %s1658 = scalar_select %p1657, %s19, 0
      %s1659 = smul.addr %s1656, 16
      %s1660 = sadd.s32 %s1658, %s1659
      %s1661 = smul.addr %s1660, 4
      %s1662 = scalar_lea.vmem %s3, %s1661
      // Predicated region
      $region33: #{vae_forward.14} parent=31 // pred_check
        %p1663 = pneg %p121
      $region34: #{vae_forward.14} parent=31 // pred_check_branch
        %1665 = sbr.rel (%p1663) target = $region36
      $region35: #{vae_forward.14} parent=31 // pred_region
        _
      $region36: #{vae_forward.14} parent=31 // pred_fallthru
        _
    $region32: #{vae_forward.14} parent=5 // pred_fallthru
      _
    %p1666 = scmp.le.s32.totalorder 2, %s9
    // Predicated region
    $region37: #{vae_forward.14} parent=5 // pred_check
      %p1667 = pneg %p1666
    $region38: #{vae_forward.14} parent=5 // pred_check_branch
      %1669 = sbr.rel (%p1667) target = $region40
    $region39: #{vae_forward.14} parent=5 // pred_region
      %s1670 = ssub.s32 %s9, 2
      // Predicated region
      $region41: #{vae_forward.14} parent=39 // pred_check
        %p1671 = pneg %p127
      $region42: #{vae_forward.14} parent=39 // pred_check_branch
        %1673 = sbr.rel (%p1671) target = $region44
      $region43: #{vae_forward.14} parent=39 // pred_region
        %p1674 = scmp.lt.s32.totalorder %s20, 3
        %s1675 = scalar_select %p1674, %s20, 3
        %p1676 = scmp.lt.s32.totalorder %s21, 0
        %s1677 = scalar_select %p1676, %s21, 0
        %s1678 = smul.addr %s1675, 16
        %s1679 = sadd.s32 %s1677, %s1678
        %s1680 = smul.addr %s1679, 4
        %s1681 = scalar_lea.vmem %s3, %s1680
      $region44: #{vae_forward.14} parent=39 // pred_fallthru
        _
    $region40: #{vae_forward.14} parent=5 // pred_fallthru
      _
  $region6: #{vae_forward.14} parent=0 // loop_footer
    %s13 = sadd.s32 1, %s9
  $region7: #{vae_forward.14} parent=0 // loop_footer_branch
    %8 = sbr.rel target = $region3
  $region8: #{vae_forward.14} parent=0 // loop_exit
    _

// kernel: vae_forward.15
$region0: #{vae_forward.15}
  #allocation0 [shape = 'u32[]', space=smem, size = 0x4, offset = 0x4, fixed_abs, tag = 'smem constant byte address 0x4 - core index']
  #allocation1 [shape = 'u32[72,128]{1,0:T(1,128)}', space=vmem, size = 0x9000, scoped, tag = 'internal scratch']
  %s0 = inlined_call_operand.vmem [shape: bf16[4,64,512], index: 0, kind: input, shape index: {}]
  %s1 = inlined_call_operand.vmem [shape: bf16[4,512,32], index: 1, kind: input, shape index: {}]
  %s2 = inlined_call_operand.vmem [shape: f32[64,1], index: 2, kind: input, shape index: {}]
  %s3 = inlined_call_operand.vmem [shape: bf16[4,64,32], index: 3, kind: output, shape index: {}]
  %s4 = sld [smem:[#allocation0]]
  $region45: #{vae_forward.15} parent=0
    _
  %s6 = ssub.s32 1, %s4
  %s7 = scalar_select 0, %s6, %s4
  loop: start=0, step=1, limit=6
  $region2: #{vae_forward.15} parent=0 // loop_pre_header
    _
  $region3: #{vae_forward.15} parent=0 // loop_header
    %s9 = sphi 0, %s13
    %p10 = scmp.ge.s32.totalorder %s9, 6
    %s16 = sphi 0, %s28
    %s17 = sphi 0, %s24
    %s18 = sphi 0, %s16
    %s19 = sphi 0, %s17
    %s20 = sphi 0, %s18
    %s21 = sphi 0, %s19
    %s31 = sphi 0, %s33
    %s34 = sphi 0, %s31
    %s35 = sphi 0, %s34
    %s51 = sphi 0, %s35
    %s59 = sphi 0, %s61
    %s62 = sphi 0, %s59
    %s63 = sphi 0, %s62
    %s79 = sphi 0, %s63
    %s83 = sphi 0, %s83
    %s85 = sphi 0, %s83
    %s86 = sphi 0, %s85
    %s100 = sphi 0, %s86
    %s108 = sphi 0, %s110
    %s111 = sphi 0, %s108
    %s112 = sphi 0, %s111
    %s128 = sphi 0, %s112
  $region4: #{vae_forward.15} parent=0 // loop_header_branch
    %12 = sbr.rel (%p10) target = $region8
  $region5: #{vae_forward.15} parent=0 // loop_body
    %s14 = ssub.s32 %s9, 1
    %s15 = ssub.s32 %s9, 2
    %s22 = sadd.s32 1, %s17
    %p23 = scmp.ge.s32.totalorder %s22, 1
    %s24 = scalar_select %p23, 0, %s22
    %s25 = sadd.s32 1, %s16
    %s26 = scalar_select %p23, %s25, %s16
    %p27 = scmp.ge.s32.totalorder %s26, 4
    %s28 = scalar_select %p27, 0, %s26
    %s29 = ssub.s32 %s16, %s28
    %p30 = scmp.eq.s32.totalorder %s29, 0
    %s32 = sadd.s32 %s31, 1
    %s33 = scalar_select %p30, %s31, %s32
    %p36 = pneg %p30
    %p37 = scmp.eq.s32.totalorder %s9, 3
    %p38 = por %p36, %p37
    %p39 = scmp.ne.s32.totalorder %s31, %s34
    %p40 = scmp.eq.s32.totalorder %s9, 0
    %p41 = por %p39, %p40
    %p42 = scmp.ne.s32.totalorder %s31, %s34
    %p43 = scmp.eq.s32.totalorder %s14, 3
    %p44 = por %p42, %p43
    %p45 = scmp.ne.s32.totalorder %s34, %s35
    %p46 = scmp.eq.s32.totalorder %s14, 0
    %p47 = por %p45, %p46
    %p48 = scmp.ne.s32.totalorder %s34, %s35
    %p49 = scmp.eq.s32.totalorder %s15, 3
    %p50 = por %p48, %p49
    %p52 = scmp.ne.s32.totalorder %s35, %s51
    %p53 = scmp.eq.s32.totalorder %s15, 0
    %p54 = por %p52, %p53
    %s55 = ssub.s32 %s16, %s28
    %s56 = ssub.s32 %s17, %s24
    %s57 = sor.u32 %s55, %s56
    %p58 = scmp.eq.s32.totalorder %s57, 0
    %s60 = sadd.s32 %s59, 1
    %s61 = scalar_select %p58, %s59, %s60
    %p64 = pneg %p58
    %p65 = scmp.eq.s32.totalorder %s9, 3
    %p66 = por %p64, %p65
    %p67 = scmp.ne.s32.totalorder %s59, %s62
    %p68 = scmp.eq.s32.totalorder %s9, 0
    %p69 = por %p67, %p68
    %p70 = scmp.ne.s32.totalorder %s59, %s62
    %p71 = scmp.eq.s32.totalorder %s14, 3
    %p72 = por %p70, %p71
    %p73 = scmp.ne.s32.totalorder %s62, %s63
    %p74 = scmp.eq.s32.totalorder %s14, 0
    %p75 = por %p73, %p74
    %p76 = scmp.ne.s32.totalorder %s62, %s63
    %p77 = scmp.eq.s32.totalorder %s15, 3
    %p78 = por %p76, %p77
    %p80 = scmp.ne.s32.totalorder %s63, %s79
    %p81 = scmp.eq.s32.totalorder %s15, 0
    %p82 = por %p80, %p81
    %s84 = sadd.s32 %s83, 1
    %p87 = scmp.eq.s32.totalorder %s9, 3
    %p88 = scmp.ne.s32.totalorder %s83, %s85
    %p89 = scmp.eq.s32.totalorder %s9, 0
    %p90 = por %p88, %p89
    %p91 = scmp.ne.s32.totalorder %s83, %s85
    %p92 = scmp.eq.s32.totalorder %s14, 3
    %p93 = por %p91, %p92
    %p94 = scmp.ne.s32.totalorder %s85, %s86
    %p95 = scmp.eq.s32.totalorder %s14, 0
    %p96 = por %p94, %p95
    %p97 = scmp.ne.s32.totalorder %s85, %s86
    %p98 = scmp.eq.s32.totalorder %s15, 3
    %p99 = por %p97, %p98
    %p101 = scmp.ne.s32.totalorder %s86, %s100
    %p102 = scmp.eq.s32.totalorder %s15, 0
    %p103 = por %p101, %p102
    %s104 = ssub.s32 %s16, %s28
    %s105 = ssub.s32 %s17, %s24
    %s106 = sor.u32 %s104, %s105
    %p107 = scmp.eq.s32.totalorder %s106, 0
    %s109 = sadd.s32 %s108, 1
    %s110 = scalar_select %p107, %s108, %s109
    %p113 = pneg %p107
    %p114 = scmp.eq.s32.totalorder %s9, 3
    %p115 = por %p113, %p114
    %p116 = scmp.ne.s32.totalorder %s108, %s111
    %p117 = scmp.eq.s32.totalorder %s9, 0
    %p118 = por %p116, %p117
    %p119 = scmp.ne.s32.totalorder %s108, %s111
    %p120 = scmp.eq.s32.totalorder %s14, 3
    %p121 = por %p119, %p120
    %p122 = scmp.ne.s32.totalorder %s111, %s112
    %p123 = scmp.eq.s32.totalorder %s14, 0
    %p124 = por %p122, %p123
    %p125 = scmp.ne.s32.totalorder %s111, %s112
    %p126 = scmp.eq.s32.totalorder %s15, 3
    %p127 = por %p125, %p126
    %p129 = scmp.ne.s32.totalorder %s112, %s128
    %p130 = scmp.eq.s32.totalorder %s15, 0
    %p131 = por %p129, %p130
    %p132 = scmp.le.s32.totalorder 1, %s9
    %p133 = scmp.lt.s32.totalorder %s9, 5
    %p134 = pnand %p132, %p133
    %p135 = pneg %p134
    // Predicated region
    $region9: #{vae_forward.15} parent=5 // pred_check
      _
    $region10: #{vae_forward.15} parent=5 // pred_check_branch
      %137 = sbr.rel (%p134) target = $region12
    $region11: #{vae_forward.15} parent=5 // pred_region
      %s138 = ssub.s32 %s9, 1
      // Predicated region
      $region13: #{vae_forward.15} parent=11 // pred_check
        %p139 = pneg %p96
      $region14: #{vae_forward.15} parent=11 // pred_check_branch
        %141 = sbr.rel (%p139) target = $region16
      $region15: #{vae_forward.15} parent=11 // pred_region
        _
      $region16: #{vae_forward.15} parent=11 // pred_fallthru
        _
    $region12: #{vae_forward.15} parent=5 // pred_fallthru
      _
    %p142 = scmp.lt.s32.totalorder %s9, 4
    // Predicated region
    $region17: #{vae_forward.15} parent=5 // pred_check
      %p143 = pneg %p142
    $region18: #{vae_forward.15} parent=5 // pred_check_branch
      %145 = sbr.rel (%p143) target = $region20
    $region19: #{vae_forward.15} parent=5 // pred_region
      // Predicated region
      $region21: #{vae_forward.15} parent=19 // pred_check
        %p146 = pneg %p41
      $region22: #{vae_forward.15} parent=19 // pred_check_branch
        %148 = sbr.rel (%p146) target = $region24
      $region23: #{vae_forward.15} parent=19 // pred_region
        %p149 = scmp.lt.s32.totalorder %s16, 3
        %s150 = scalar_select %p149, %s16, 3
        %s151 = smul.addr %s150, 32
        %s152 = smul.addr %s151, 4
        %s153 = scalar_lea.vmem %s0, %s152
      $region24: #{vae_forward.15} parent=19 // pred_fallthru
        _
      // Predicated region
      $region25: #{vae_forward.15} parent=19 // pred_check
        %p154 = pneg %p69
      $region26: #{vae_forward.15} parent=19 // pred_check_branch
        %156 = sbr.rel (%p154) target = $region28
      $region27: #{vae_forward.15} parent=19 // pred_region
        %p157 = scmp.lt.s32.totalorder %s16, 3
        %s158 = scalar_select %p157, %s16, 3
        %p159 = scmp.lt.s32.totalorder %s17, 0
        %s160 = scalar_select %p159, %s17, 0
        %s161 = smul.addr %s158, 64
        %s162 = sadd.s32 %s160, %s161
        %s163 = smul.addr %s162, 4
        %s164 = scalar_lea.vmem %s1, %s163
      $region28: #{vae_forward.15} parent=19 // pred_fallthru
        _
    $region20: #{vae_forward.15} parent=5 // pred_fallthru
      _
    %p165 = scmp.le.s32.totalorder 1, %s9
    %p166 = scmp.lt.s32.totalorder %s9, 5
    %p167 = pnand %p165, %p166
    %p168 = pneg %p167
    // Predicated region
    $region29: #{vae_forward.15} parent=5 // pred_check
      _
    $region30: #{vae_forward.15} parent=5 // pred_check_branch
      %170 = sbr.rel (%p167) target = $region32
    $region31: #{vae_forward.15} parent=5 // pred_region
      %s171 = ssub.s32 %s9, 1
      %p172 = scmp.lt.s32.totalorder %s18, 3
      %s173 = scalar_select %p172, %s18, 3
      %s174 = smul.addr %s173, 32
      %s175 = smul.addr %s174, 4
      %s176 = scalar_lea.vmem %s0, %s175
      %p177 = pneg %p47
      %p178 = pneg %p44
      %p179 = scmp.lt.s32.totalorder %s18, 3
      %s180 = scalar_select %p179, %s18, 3
      %p181 = scmp.lt.s32.totalorder %s19, 0
      %s182 = scalar_select %p181, %s19, 0
      %s183 = smul.addr %s180, 64
      %s184 = sadd.s32 %s182, %s183
      %s185 = smul.addr %s184, 4
      %s186 = scalar_lea.vmem %s1, %s185
      %p187 = pneg %p75
      %p188 = pneg %p72
      %p189 = pneg %p96
      %p190 = pneg %p93
      %p191 = pneg %p124
      %p192 = pneg %p121
      %p193 = scmp.lt.s32.totalorder %s18, 3
      %s194 = scalar_select %p193, %s18, 3
      %p195 = scmp.lt.s32.totalorder %s19, 0
      %s196 = scalar_select %p195, %s19, 0
      %s197 = smul.addr %s194, 8
      %s198 = sadd.s32 %s196, %s197
      %s199 = smul.addr %s198, 4
      %s200 = scalar_lea.vmem %s3, %s199
      %p201 = scmp.lt.s32.totalorder %s18, 3
      %s202 = scalar_select %p201, %s18, 3
      %s203 = smul.addr %s202, 32
      %s204 = smul.addr %s203, 4
      %s205 = scalar_lea.vmem %s0, %s204
      %p206 = scmp.lt.s32.totalorder %s18, 3
      %s207 = scalar_select %p206, %s18, 3
      %p208 = scmp.lt.s32.totalorder %s19, 0
      %s209 = scalar_select %p208, %s19, 0
      %s210 = smul.addr %s207, 64
      %s211 = sadd.s32 %s209, %s210
      %s212 = smul.addr %s211, 4
      %s213 = scalar_lea.vmem %s1, %s212
      %p214 = scmp.lt.s32.totalorder %s18, 3
      %s215 = scalar_select %p214, %s18, 3
      %p216 = scmp.lt.s32.totalorder %s19, 0
      %s217 = scalar_select %p216, %s19, 0
      %s218 = smul.addr %s215, 8
      %s219 = sadd.s32 %s217, %s218
      %s220 = smul.addr %s219, 4
      %s221 = scalar_lea.vmem %s3, %s220
      %v222 = vld [vmem:[%s205] sm:$0xff]
      %v223 = vld [vmem:[%s205 + $0x8] sm:$0xff]
      %v224 = vld [vmem:[%s205 + $0x10] sm:$0xff]
      %v225 = vld [vmem:[%s205 + $0x18] sm:$0xff]
      %v226 = vld [vmem:[%s205 + $0x20] sm:$0xff]
      %v227 = vld [vmem:[%s205 + $0x28] sm:$0xff]
      %v228 = vld [vmem:[%s205 + $0x30] sm:$0xff]
      %v229 = vld [vmem:[%s205 + $0x38] sm:$0xff]
      %v230 = vld [vmem:[%s205 + $0x40] sm:$0xff]
      %v231 = vld [vmem:[%s205 + $0x48] sm:$0xff]
      %v232 = vld [vmem:[%s205 + $0x50] sm:$0xff]
      %v233 = vld [vmem:[%s205 + $0x58] sm:$0xff]
      %v234 = vld [vmem:[%s205 + $0x60] sm:$0xff]
      %v235 = vld [vmem:[%s205 + $0x68] sm:$0xff]
      %v236 = vld [vmem:[%s205 + $0x70] sm:$0xff]
      %v237 = vld [vmem:[%s205 + $0x78] sm:$0xff]
      %v238 = vld [vmem:[%s213] sm:$0xf]
      %v239 = vld [vmem:[%s213 + $0x4] sm:$0xf]
      %v240 = vld [vmem:[%s213 + $0x8] sm:$0xf]
      %v241 = vld [vmem:[%s213 + $0xc] sm:$0xf]
      %v242 = vld [vmem:[%s213 + $0x10] sm:$0xf]
      %v243 = vld [vmem:[%s213 + $0x14] sm:$0xf]
      %v244 = vld [vmem:[%s213 + $0x18] sm:$0xf]
      %v245 = vld [vmem:[%s213 + $0x1c] sm:$0xf]
      %v246 = vld [vmem:[%s213 + $0x20] sm:$0xf]
      %v247 = vld [vmem:[%s213 + $0x24] sm:$0xf]
      %v248 = vld [vmem:[%s213 + $0x28] sm:$0xf]
      %v249 = vld [vmem:[%s213 + $0x2c] sm:$0xf]
      %v250 = vld [vmem:[%s213 + $0x30] sm:$0xf]
      %v251 = vld [vmem:[%s213 + $0x34] sm:$0xf]
      %v252 = vld [vmem:[%s213 + $0x38] sm:$0xf]
      %v253 = vld [vmem:[%s213 + $0x3c] sm:$0xf]
      %v254 = vld [vmem:[%s213 + $0x40] sm:$0xf]
      %v255 = vld [vmem:[%s213 + $0x44] sm:$0xf]
      %v256 = vld [vmem:[%s213 + $0x48] sm:$0xf]
      %v257 = vld [vmem:[%s213 + $0x4c] sm:$0xf]
      %v258 = vld [vmem:[%s213 + $0x50] sm:$0xf]
      %v259 = vld [vmem:[%s213 + $0x54] sm:$0xf]
      %v260 = vld [vmem:[%s213 + $0x58] sm:$0xf]
      %v261 = vld [vmem:[%s213 + $0x5c] sm:$0xf]
      %v262 = vld [vmem:[%s213 + $0x60] sm:$0xf]
      %v263 = vld [vmem:[%s213 + $0x64] sm:$0xf]
      %v264 = vld [vmem:[%s213 + $0x68] sm:$0xf]
      %v265 = vld [vmem:[%s213 + $0x6c] sm:$0xf]
      %v266 = vld [vmem:[%s213 + $0x70] sm:$0xf]
      %v267 = vld [vmem:[%s213 + $0x74] sm:$0xf]
      %v268 = vld [vmem:[%s213 + $0x78] sm:$0xf]
      %v269 = vld [vmem:[%s213 + $0x7c] sm:$0xf]
      %v270 = vld [vmem:[%s213 + $0x80] sm:$0xf]
      %v271 = vld [vmem:[%s213 + $0x84] sm:$0xf]
      %v272 = vld [vmem:[%s213 + $0x88] sm:$0xf]
      %v273 = vld [vmem:[%s213 + $0x8c] sm:$0xf]
      %v274 = vld [vmem:[%s213 + $0x90] sm:$0xf]
      %v275 = vld [vmem:[%s213 + $0x94] sm:$0xf]
      %v276 = vld [vmem:[%s213 + $0x98] sm:$0xf]
      %v277 = vld [vmem:[%s213 + $0x9c] sm:$0xf]
      %v278 = vld [vmem:[%s213 + $0xa0] sm:$0xf]
      %v279 = vld [vmem:[%s213 + $0xa4] sm:$0xf]
      %v280 = vld [vmem:[%s213 + $0xa8] sm:$0xf]
      %v281 = vld [vmem:[%s213 + $0xac] sm:$0xf]
      %v282 = vld [vmem:[%s213 + $0xb0] sm:$0xf]
      %v283 = vld [vmem:[%s213 + $0xb4] sm:$0xf]
      %v284 = vld [vmem:[%s213 + $0xb8] sm:$0xf]
      %v285 = vld [vmem:[%s213 + $0xbc] sm:$0xf]
      %v286 = vld [vmem:[%s213 + $0xc0] sm:$0xf]
      %v287 = vld [vmem:[%s213 + $0xc4] sm:$0xf]
      %v288 = vld [vmem:[%s213 + $0xc8] sm:$0xf]
      %v289 = vld [vmem:[%s213 + $0xcc] sm:$0xf]
      %v290 = vld [vmem:[%s213 + $0xd0] sm:$0xf]
      %v291 = vld [vmem:[%s213 + $0xd4] sm:$0xf]
      %v292 = vld [vmem:[%s213 + $0xd8] sm:$0xf]
      %v293 = vld [vmem:[%s213 + $0xdc] sm:$0xf]
      %v294 = vld [vmem:[%s213 + $0xe0] sm:$0xf]
      %v295 = vld [vmem:[%s213 + $0xe4] sm:$0xf]
      %v296 = vld [vmem:[%s213 + $0xe8] sm:$0xf]
      %v297 = vld [vmem:[%s213 + $0xec] sm:$0xf]
      %v298 = vld [vmem:[%s213 + $0xf0] sm:$0xf]
      %v299 = vld [vmem:[%s213 + $0xf4] sm:$0xf]
      %v300 = vld [vmem:[%s213 + $0xf8] sm:$0xf]
      %v301 = vld [vmem:[%s213 + $0xfc] sm:$0xf]
      %v302 = vld [vmem:[%s2] sm:$0xff]
      %v303 = vld [vmem:[%s2 + $0x8] sm:$0xff]
      %v304 = vld [vmem:[%s2 + $0x10] sm:$0xff]
      %v305 = vld [vmem:[%s2 + $0x18] sm:$0xff]
      %v306 = vld [vmem:[%s2 + $0x20] sm:$0xff]
      %v307 = vld [vmem:[%s2 + $0x28] sm:$0xff]
      %v308 = vld [vmem:[%s2 + $0x30] sm:$0xff]
      %v309 = vld [vmem:[%s2 + $0x38] sm:$0xff]
      %311 = vset.pattern.permute.xlu0 0
      %312 = vperm.xlu0 %311, %v302
      %v313 = vpop.permute.xlu0 %312
      %316 = vset.pattern.permute.xlu0 0
      %317 = vperm.xlu0 %316, %v303
      %v318 = vpop.permute.xlu0 %317
      %321 = vset.pattern.permute.xlu0 0
      %322 = vperm.xlu0 %321, %v304
      %v323 = vpop.permute.xlu0 %322
      %326 = vset.pattern.permute.xlu0 0
      %327 = vperm.xlu0 %326, %v305
      %v328 = vpop.permute.xlu0 %327
      %331 = vset.pattern.permute.xlu0 0
      %332 = vperm.xlu0 %331, %v306
      %v333 = vpop.permute.xlu0 %332
      %336 = vset.pattern.permute.xlu0 0
      %337 = vperm.xlu0 %336, %v307
      %v338 = vpop.permute.xlu0 %337
      %341 = vset.pattern.permute.xlu0 0
      %342 = vperm.xlu0 %341, %v308
      %v343 = vpop.permute.xlu0 %342
      %346 = vset.pattern.permute.xlu0 0
      %347 = vperm.xlu0 %346, %v309
      %v348 = vpop.permute.xlu0 %347
      %v366 = vunpack.c.l.b16 %v222
      %v367 = vunpack.c.h.b16 %v222
      %v368 = vunpack.c.l.b16 %v223
      %v369 = vunpack.c.h.b16 %v223
      %v370 = vunpack.c.l.b16 %v224
      %v371 = vunpack.c.h.b16 %v224
      %v372 = vunpack.c.l.b16 %v225
      %v373 = vunpack.c.h.b16 %v225
      %v374 = vunpack.c.l.b16 %v226
      %v375 = vunpack.c.h.b16 %v226
      %v376 = vunpack.c.l.b16 %v227
      %v377 = vunpack.c.h.b16 %v227
      %v378 = vunpack.c.l.b16 %v228
      %v379 = vunpack.c.h.b16 %v228
      %v380 = vunpack.c.l.b16 %v229
      %v381 = vunpack.c.h.b16 %v229
      %v382 = vunpack.c.l.b16 %v230
      %v383 = vunpack.c.h.b16 %v230
      %v384 = vunpack.c.l.b16 %v231
      %v385 = vunpack.c.h.b16 %v231
      %v386 = vunpack.c.l.b16 %v232
      %v387 = vunpack.c.h.b16 %v232
      %v388 = vunpack.c.l.b16 %v233
      %v389 = vunpack.c.h.b16 %v233
      %v390 = vunpack.c.l.b16 %v234
      %v391 = vunpack.c.h.b16 %v234
      %v392 = vunpack.c.l.b16 %v235
      %v393 = vunpack.c.h.b16 %v235
      %v394 = vunpack.c.l.b16 %v236
      %v395 = vunpack.c.h.b16 %v236
      %v396 = vunpack.c.l.b16 %v237
      %v397 = vunpack.c.h.b16 %v237
      %v398 = vpack.c.b16 %v370, %v366
      %v399 = vpack.c.b16 %v371, %v367
      %v400 = vpack.c.b16 %v372, %v368
      %v401 = vpack.c.b16 %v373, %v369
      %v402 = vpack.c.b16 %v378, %v374
      %v403 = vpack.c.b16 %v379, %v375
      %v404 = vpack.c.b16 %v380, %v376
      %v405 = vpack.c.b16 %v381, %v377
      %v406 = vpack.c.b16 %v386, %v382
      %v407 = vpack.c.b16 %v387, %v383
      %v408 = vpack.c.b16 %v388, %v384
      %v409 = vpack.c.b16 %v389, %v385
      %v410 = vpack.c.b16 %v394, %v390
      %v411 = vpack.c.b16 %v395, %v391
      %v412 = vpack.c.b16 %v396, %v392
      %v413 = vpack.c.b16 %v397, %v393
      %v494 = vunpack.c.l.b16 %v238
      %v495 = vunpack.c.l.b16 %v239
      %v496 = vunpack.c.l.b16 %v240
      %v497 = vunpack.c.l.b16 %v241
      %v498 = vunpack.c.l.b16 %v242
      %v499 = vunpack.c.l.b16 %v243
      %v500 = vunpack.c.l.b16 %v244
      %v501 = vunpack.c.l.b16 %v245
      %v502 = vunpack.c.l.b16 %v246
      %v503 = vunpack.c.l.b16 %v247
      %v504 = vunpack.c.l.b16 %v248
      %v505 = vunpack.c.l.b16 %v249
      %v506 = vunpack.c.l.b16 %v250
      %v507 = vunpack.c.l.b16 %v251
      %v508 = vunpack.c.l.b16 %v252
      %v509 = vunpack.c.l.b16 %v253
      %v510 = vunpack.c.l.b16 %v254
      %v511 = vunpack.c.l.b16 %v255
      %v512 = vunpack.c.l.b16 %v256
      %v513 = vunpack.c.l.b16 %v257
      %v514 = vunpack.c.l.b16 %v258
      %v515 = vunpack.c.l.b16 %v259
      %v516 = vunpack.c.l.b16 %v260
      %v517 = vunpack.c.l.b16 %v261
      %v518 = vunpack.c.l.b16 %v262
      %v519 = vunpack.c.l.b16 %v263
      %v520 = vunpack.c.l.b16 %v264
      %v521 = vunpack.c.l.b16 %v265
      %v522 = vunpack.c.l.b16 %v266
      %v523 = vunpack.c.l.b16 %v267
      %v524 = vunpack.c.l.b16 %v268
      %v525 = vunpack.c.l.b16 %v269
      %v526 = vunpack.c.l.b16 %v270
      %v527 = vunpack.c.l.b16 %v271
      %v528 = vunpack.c.l.b16 %v272
      %v529 = vunpack.c.l.b16 %v273
      %v530 = vunpack.c.l.b16 %v274
      %v531 = vunpack.c.l.b16 %v275
      %v532 = vunpack.c.l.b16 %v276
      %v533 = vunpack.c.l.b16 %v277
      %v534 = vunpack.c.l.b16 %v278
      %v535 = vunpack.c.l.b16 %v279
      %v536 = vunpack.c.l.b16 %v280
      %v537 = vunpack.c.l.b16 %v281
      %v538 = vunpack.c.l.b16 %v282
      %v539 = vunpack.c.l.b16 %v283
      %v540 = vunpack.c.l.b16 %v284
      %v541 = vunpack.c.l.b16 %v285
      %v542 = vunpack.c.l.b16 %v286
      %v543 = vunpack.c.l.b16 %v287
      %v544 = vunpack.c.l.b16 %v288
      %v545 = vunpack.c.l.b16 %v289
      %v546 = vunpack.c.l.b16 %v290
      %v547 = vunpack.c.l.b16 %v291
      %v548 = vunpack.c.l.b16 %v292
      %v549 = vunpack.c.l.b16 %v293
      %v550 = vunpack.c.l.b16 %v294
      %v551 = vunpack.c.l.b16 %v295
      %v552 = vunpack.c.l.b16 %v296
      %v553 = vunpack.c.l.b16 %v297
      %v554 = vunpack.c.l.b16 %v298
      %v555 = vunpack.c.l.b16 %v299
      %v556 = vunpack.c.l.b16 %v300
      %v557 = vunpack.c.l.b16 %v301
      %v558 = vpack.c.b16 %v495, %v494
      %v559 = vpack.c.b16 %v497, %v496
      %v560 = vpack.c.b16 %v499, %v498
      %v561 = vpack.c.b16 %v501, %v500
      %v562 = vpack.c.b16 %v503, %v502
      %v563 = vpack.c.b16 %v505, %v504
      %v564 = vpack.c.b16 %v507, %v506
      %v565 = vpack.c.b16 %v509, %v508
      %v566 = vpack.c.b16 %v511, %v510
      %v567 = vpack.c.b16 %v513, %v512
      %v568 = vpack.c.b16 %v515, %v514
      %v569 = vpack.c.b16 %v517, %v516
      %v570 = vpack.c.b16 %v519, %v518
      %v571 = vpack.c.b16 %v521, %v520
      %v572 = vpack.c.b16 %v523, %v522
      %v573 = vpack.c.b16 %v525, %v524
      %v574 = vpack.c.b16 %v527, %v526
      %v575 = vpack.c.b16 %v529, %v528
      %v576 = vpack.c.b16 %v531, %v530
      %v577 = vpack.c.b16 %v533, %v532
      %v578 = vpack.c.b16 %v535, %v534
      %v579 = vpack.c.b16 %v537, %v536
      %v580 = vpack.c.b16 %v539, %v538
      %v581 = vpack.c.b16 %v541, %v540
      %v582 = vpack.c.b16 %v543, %v542
      %v583 = vpack.c.b16 %v545, %v544
      %v584 = vpack.c.b16 %v547, %v546
      %v585 = vpack.c.b16 %v549, %v548
      %v586 = vpack.c.b16 %v551, %v550
      %v587 = vpack.c.b16 %v553, %v552
      %v588 = vpack.c.b16 %v555, %v554
      %v589 = vpack.c.b16 %v557, %v556
      %622 = vmatpush.bf16.msra.mxu0 %v565
      %623 = vmatpush.bf16.msra.mxu0 %v564
      %624 = vmatpush.bf16.msra.mxu0 %v563
      %625 = vmatpush.bf16.msra.mxu0 %v562
      %626 = vmatpush.bf16.msra.mxu0 %v561
      %627 = vmatpush.bf16.msra.mxu0 %v560
      %628 = vmatpush.bf16.msra.mxu0 %v559
      %629 = vmatpush.bf16.msra.mxu0 %v558
      %630 = vmatmul.bf16.gmra.mxu0 %v398
      %v631 = vpop.f32.mrf.mxu0
      %v632 = vadd.f32 %v313, %v631
      %v633 = vpop.f32.mrf.mxu0
      %v634 = vadd.f32 %v318, %v633
      %635 = vmatmul.bf16.gmra.mxu0 %v402
      %v636 = vpop.f32.mrf.mxu0
      %v637 = vadd.f32 %v323, %v636
      %v638 = vpop.f32.mrf.mxu0
      %v639 = vadd.f32 %v328, %v638
      %640 = vmatmul.bf16.gmra.mxu0 %v406
      %v641 = vpop.f32.mrf.mxu0
      %v642 = vadd.f32 %v333, %v641
      %v643 = vpop.f32.mrf.mxu0
      %v644 = vadd.f32 %v338, %v643
      %645 = vmatmul.bf16.gmra.mxu0 %v410
      %v646 = vpop.f32.mrf.mxu0
      %v647 = vadd.f32 %v343, %v646
      %v648 = vpop.f32.mrf.mxu0
      %v649 = vadd.f32 %v348, %v648
      %650 = vdwg.mxu0
      %651 = vmatpush.bf16.msra.mxu0 %v573
      %652 = vmatpush.bf16.msra.mxu0 %v572
      %653 = vmatpush.bf16.msra.mxu0 %v571
      %654 = vmatpush.bf16.msra.mxu0 %v570
      %655 = vmatpush.bf16.msra.mxu0 %v569
      %656 = vmatpush.bf16.msra.mxu0 %v568
      %657 = vmatpush.bf16.msra.mxu0 %v567
      %658 = vmatpush.bf16.msra.mxu0 %v566
      %659 = vmatmul.bf16.gmra.mxu0 %v399
      %v660 = vpop.f32.mrf.mxu0
      %v661 = vadd.f32 %v632, %v660
      %v662 = vpop.f32.mrf.mxu0
      %v663 = vadd.f32 %v634, %v662
      %664 = vmatmul.bf16.gmra.mxu0 %v403
      %v665 = vpop.f32.mrf.mxu0
      %v666 = vadd.f32 %v637, %v665
      %v667 = vpop.f32.mrf.mxu0
      %v668 = vadd.f32 %v639, %v667
      %669 = vmatmul.bf16.gmra.mxu0 %v407
      %v670 = vpop.f32.mrf.mxu0
      %v671 = vadd.f32 %v642, %v670
      %v672 = vpop.f32.mrf.mxu0
      %v673 = vadd.f32 %v644, %v672
      %674 = vmatmul.bf16.gmra.mxu0 %v411
      %v675 = vpop.f32.mrf.mxu0
      %v676 = vadd.f32 %v647, %v675
      %v677 = vpop.f32.mrf.mxu0
      %v678 = vadd.f32 %v649, %v677
      %679 = vdwg.mxu0
      %680 = vmatpush.bf16.msra.mxu0 %v581
      %681 = vmatpush.bf16.msra.mxu0 %v580
      %682 = vmatpush.bf16.msra.mxu0 %v579
      %683 = vmatpush.bf16.msra.mxu0 %v578
      %684 = vmatpush.bf16.msra.mxu0 %v577
      %685 = vmatpush.bf16.msra.mxu0 %v576
      %686 = vmatpush.bf16.msra.mxu0 %v575
      %687 = vmatpush.bf16.msra.mxu0 %v574
      %688 = vmatmul.bf16.gmra.mxu0 %v400
      %v689 = vpop.f32.mrf.mxu0
      %v690 = vadd.f32 %v661, %v689
      %v691 = vpop.f32.mrf.mxu0
      %v692 = vadd.f32 %v663, %v691
      %693 = vmatmul.bf16.gmra.mxu0 %v404
      %v694 = vpop.f32.mrf.mxu0
      %v695 = vadd.f32 %v666, %v694
      %v696 = vpop.f32.mrf.mxu0
      %v697 = vadd.f32 %v668, %v696
      %698 = vmatmul.bf16.gmra.mxu0 %v408
      %v699 = vpop.f32.mrf.mxu0
      %v700 = vadd.f32 %v671, %v699
      %v701 = vpop.f32.mrf.mxu0
      %v702 = vadd.f32 %v673, %v701
      %703 = vmatmul.bf16.gmra.mxu0 %v412
      %v704 = vpop.f32.mrf.mxu0
      %v705 = vadd.f32 %v676, %v704
      %v706 = vpop.f32.mrf.mxu0
      %v707 = vadd.f32 %v678, %v706
      %708 = vdwg.mxu0
      %709 = vmatpush.bf16.msra.mxu0 %v589
      %710 = vmatpush.bf16.msra.mxu0 %v588
      %711 = vmatpush.bf16.msra.mxu0 %v587
      %712 = vmatpush.bf16.msra.mxu0 %v586
      %713 = vmatpush.bf16.msra.mxu0 %v585
      %714 = vmatpush.bf16.msra.mxu0 %v584
      %715 = vmatpush.bf16.msra.mxu0 %v583
      %716 = vmatpush.bf16.msra.mxu0 %v582
      %717 = vmatmul.bf16.gmra.mxu0 %v401
      %v718 = vpop.f32.mrf.mxu0
      %v719 = vadd.f32 %v690, %v718
      %v720 = vpop.f32.mrf.mxu0
      %v721 = vadd.f32 %v692, %v720
      %722 = vmatmul.bf16.gmra.mxu0 %v405
      %v723 = vpop.f32.mrf.mxu0
      %v724 = vadd.f32 %v695, %v723
      %v725 = vpop.f32.mrf.mxu0
      %v726 = vadd.f32 %v697, %v725
      %727 = vmatmul.bf16.gmra.mxu0 %v409
      %v728 = vpop.f32.mrf.mxu0
      %v729 = vadd.f32 %v700, %v728
      %v730 = vpop.f32.mrf.mxu0
      %v731 = vadd.f32 %v702, %v730
      %732 = vmatmul.bf16.gmra.mxu0 %v413
      %v733 = vpop.f32.mrf.mxu0
      %v734 = vadd.f32 %v705, %v733
      %v735 = vpop.f32.mrf.mxu0
      %v736 = vadd.f32 %v707, %v735
      %737 = vdwg.mxu0
      %v738 = vmax.f32 %v719, 0.0
      %v739 = vmax.f32 %v721, 0.0
      %v740 = vmax.f32 %v724, 0.0
      %v741 = vmax.f32 %v726, 0.0
      %v742 = vmax.f32 %v729, 0.0
      %v743 = vmax.f32 %v731, 0.0
      %v744 = vmax.f32 %v734, 0.0
      %v745 = vmax.f32 %v736, 0.0
      %v746 = vpack.c.bf16 %v738, %v738
      %v747 = vpack.c.bf16 %v739, %v739
      %v748 = vpack.c.bf16 %v740, %v740
      %v749 = vpack.c.bf16 %v741, %v741
      %v750 = vpack.c.bf16 %v742, %v742
      %v751 = vpack.c.bf16 %v743, %v743
      %v752 = vpack.c.bf16 %v744, %v744
      %v753 = vpack.c.bf16 %v745, %v745
      %vm754 = vcmask 257024
      %755 = vst.msk [vmem:[%s221] sm:$0xf] %vm754, %v746
      %756 = vst.msk [vmem:[%s221 + $0x4] sm:$0xf] %vm754, %v747
      %757 = vst.msk [vmem:[%s221 + $0x8] sm:$0xf] %vm754, %v748
      %758 = vst.msk [vmem:[%s221 + $0xc] sm:$0xf] %vm754, %v749
      %759 = vst.msk [vmem:[%s221 + $0x10] sm:$0xf] %vm754, %v750
      %760 = vst.msk [vmem:[%s221 + $0x14] sm:$0xf] %vm754, %v751
      %761 = vst.msk [vmem:[%s221 + $0x18] sm:$0xf] %vm754, %v752
      %762 = vst.msk [vmem:[%s221 + $0x1c] sm:$0xf] %vm754, %v753
      %p763 = scmp.lt.s32.totalorder %s18, 3
      %s764 = scalar_select %p763, %s18, 3
      %p765 = scmp.lt.s32.totalorder %s19, 0
      %s766 = scalar_select %p765, %s19, 0
      %s767 = smul.addr %s764, 8
      %s768 = sadd.s32 %s766, %s767
      %s769 = smul.addr %s768, 4
      %s770 = scalar_lea.vmem %s3, %s769
      // Predicated region
      $region33: #{vae_forward.15} parent=31 // pred_check
        %p771 = pneg %p121
      $region34: #{vae_forward.15} parent=31 // pred_check_branch
        %773 = sbr.rel (%p771) target = $region36
      $region35: #{vae_forward.15} parent=31 // pred_region
        _
      $region36: #{vae_forward.15} parent=31 // pred_fallthru
        _
    $region32: #{vae_forward.15} parent=5 // pred_fallthru
      _
    %p774 = scmp.le.s32.totalorder 2, %s9
    // Predicated region
    $region37: #{vae_forward.15} parent=5 // pred_check
      %p775 = pneg %p774
    $region38: #{vae_forward.15} parent=5 // pred_check_branch
      %777 = sbr.rel (%p775) target = $region40
    $region39: #{vae_forward.15} parent=5 // pred_region
      %s778 = ssub.s32 %s9, 2
      // Predicated region
      $region41: #{vae_forward.15} parent=39 // pred_check
        %p779 = pneg %p127
      $region42: #{vae_forward.15} parent=39 // pred_check_branch
        %781 = sbr.rel (%p779) target = $region44
      $region43: #{vae_forward.15} parent=39 // pred_region
        %p782 = scmp.lt.s32.totalorder %s20, 3
        %s783 = scalar_select %p782, %s20, 3
        %p784 = scmp.lt.s32.totalorder %s21, 0
        %s785 = scalar_select %p784, %s21, 0
        %s786 = smul.addr %s783, 8
        %s787 = sadd.s32 %s785, %s786
        %s788 = smul.addr %s787, 4
        %s789 = scalar_lea.vmem %s3, %s788
      $region44: #{vae_forward.15} parent=39 // pred_fallthru
        _
    $region40: #{vae_forward.15} parent=5 // pred_fallthru
      _
  $region6: #{vae_forward.15} parent=0 // loop_footer
    %s13 = sadd.s32 1, %s9
  $region7: #{vae_forward.15} parent=0 // loop_footer_branch
    %8 = sbr.rel target = $region3
  $region8: #{vae_forward.15} parent=0 // loop_exit
    _

// kernel: vae_forward.16
$region0: #{vae_forward.16}
  #allocation0 [shape = 'u32[]', space=smem, size = 0x4, offset = 0x4, fixed_abs, tag = 'smem constant byte address 0x4 - core index']
  #allocation1 [shape = 'u32[72,128]{1,0:T(1,128)}', space=vmem, size = 0x9000, scoped, tag = 'internal scratch']
  %s0 = inlined_call_operand.vmem [shape: bf16[4,32,256], index: 0, kind: input, shape index: {}]
  %s1 = inlined_call_operand.vmem [shape: bf16[4,256,128], index: 1, kind: input, shape index: {}]
  %s2 = inlined_call_operand.vmem [shape: f32[32,1], index: 2, kind: input, shape index: {}]
  %s3 = inlined_call_operand.vmem [shape: bf16[4,32,128], index: 3, kind: output, shape index: {}]
  %s4 = sld [smem:[#allocation0]]
  $region45: #{vae_forward.16} parent=0
    _
  %s6 = ssub.s32 1, %s4
  %s7 = scalar_select 0, %s6, %s4
  loop: start=0, step=1, limit=6
  $region2: #{vae_forward.16} parent=0 // loop_pre_header
    _
  $region3: #{vae_forward.16} parent=0 // loop_header
    %s9 = sphi 0, %s13
    %p10 = scmp.ge.s32.totalorder %s9, 6
    %s16 = sphi 0, %s28
    %s17 = sphi 0, %s24
    %s18 = sphi 0, %s16
    %s19 = sphi 0, %s17
    %s20 = sphi 0, %s18
    %s21 = sphi 0, %s19
    %s31 = sphi 0, %s33
    %s34 = sphi 0, %s31
    %s35 = sphi 0, %s34
    %s51 = sphi 0, %s35
    %s59 = sphi 0, %s61
    %s62 = sphi 0, %s59
    %s63 = sphi 0, %s62
    %s79 = sphi 0, %s63
    %s83 = sphi 0, %s83
    %s85 = sphi 0, %s83
    %s86 = sphi 0, %s85
    %s100 = sphi 0, %s86
    %s108 = sphi 0, %s110
    %s111 = sphi 0, %s108
    %s112 = sphi 0, %s111
    %s128 = sphi 0, %s112
  $region4: #{vae_forward.16} parent=0 // loop_header_branch
    %12 = sbr.rel (%p10) target = $region8
  $region5: #{vae_forward.16} parent=0 // loop_body
    %s14 = ssub.s32 %s9, 1
    %s15 = ssub.s32 %s9, 2
    %s22 = sadd.s32 1, %s17
    %p23 = scmp.ge.s32.totalorder %s22, 1
    %s24 = scalar_select %p23, 0, %s22
    %s25 = sadd.s32 1, %s16
    %s26 = scalar_select %p23, %s25, %s16
    %p27 = scmp.ge.s32.totalorder %s26, 4
    %s28 = scalar_select %p27, 0, %s26
    %s29 = ssub.s32 %s16, %s28
    %p30 = scmp.eq.s32.totalorder %s29, 0
    %s32 = sadd.s32 %s31, 1
    %s33 = scalar_select %p30, %s31, %s32
    %p36 = pneg %p30
    %p37 = scmp.eq.s32.totalorder %s9, 3
    %p38 = por %p36, %p37
    %p39 = scmp.ne.s32.totalorder %s31, %s34
    %p40 = scmp.eq.s32.totalorder %s9, 0
    %p41 = por %p39, %p40
    %p42 = scmp.ne.s32.totalorder %s31, %s34
    %p43 = scmp.eq.s32.totalorder %s14, 3
    %p44 = por %p42, %p43
    %p45 = scmp.ne.s32.totalorder %s34, %s35
    %p46 = scmp.eq.s32.totalorder %s14, 0
    %p47 = por %p45, %p46
    %p48 = scmp.ne.s32.totalorder %s34, %s35
    %p49 = scmp.eq.s32.totalorder %s15, 3
    %p50 = por %p48, %p49
    %p52 = scmp.ne.s32.totalorder %s35, %s51
    %p53 = scmp.eq.s32.totalorder %s15, 0
    %p54 = por %p52, %p53
    %s55 = ssub.s32 %s16, %s28
    %s56 = ssub.s32 %s17, %s24
    %s57 = sor.u32 %s55, %s56
    %p58 = scmp.eq.s32.totalorder %s57, 0
    %s60 = sadd.s32 %s59, 1
    %s61 = scalar_select %p58, %s59, %s60
    %p64 = pneg %p58
    %p65 = scmp.eq.s32.totalorder %s9, 3
    %p66 = por %p64, %p65
    %p67 = scmp.ne.s32.totalorder %s59, %s62
    %p68 = scmp.eq.s32.totalorder %s9, 0
    %p69 = por %p67, %p68
    %p70 = scmp.ne.s32.totalorder %s59, %s62
    %p71 = scmp.eq.s32.totalorder %s14, 3
    %p72 = por %p70, %p71
    %p73 = scmp.ne.s32.totalorder %s62, %s63
    %p74 = scmp.eq.s32.totalorder %s14, 0
    %p75 = por %p73, %p74
    %p76 = scmp.ne.s32.totalorder %s62, %s63
    %p77 = scmp.eq.s32.totalorder %s15, 3
    %p78 = por %p76, %p77
    %p80 = scmp.ne.s32.totalorder %s63, %s79
    %p81 = scmp.eq.s32.totalorder %s15, 0
    %p82 = por %p80, %p81
    %s84 = sadd.s32 %s83, 1
    %p87 = scmp.eq.s32.totalorder %s9, 3
    %p88 = scmp.ne.s32.totalorder %s83, %s85
    %p89 = scmp.eq.s32.totalorder %s9, 0
    %p90 = por %p88, %p89
    %p91 = scmp.ne.s32.totalorder %s83, %s85
    %p92 = scmp.eq.s32.totalorder %s14, 3
    %p93 = por %p91, %p92
    %p94 = scmp.ne.s32.totalorder %s85, %s86
    %p95 = scmp.eq.s32.totalorder %s14, 0
    %p96 = por %p94, %p95
    %p97 = scmp.ne.s32.totalorder %s85, %s86
    %p98 = scmp.eq.s32.totalorder %s15, 3
    %p99 = por %p97, %p98
    %p101 = scmp.ne.s32.totalorder %s86, %s100
    %p102 = scmp.eq.s32.totalorder %s15, 0
    %p103 = por %p101, %p102
    %s104 = ssub.s32 %s16, %s28
    %s105 = ssub.s32 %s17, %s24
    %s106 = sor.u32 %s104, %s105
    %p107 = scmp.eq.s32.totalorder %s106, 0
    %s109 = sadd.s32 %s108, 1
    %s110 = scalar_select %p107, %s108, %s109
    %p113 = pneg %p107
    %p114 = scmp.eq.s32.totalorder %s9, 3
    %p115 = por %p113, %p114
    %p116 = scmp.ne.s32.totalorder %s108, %s111
    %p117 = scmp.eq.s32.totalorder %s9, 0
    %p118 = por %p116, %p117
    %p119 = scmp.ne.s32.totalorder %s108, %s111
    %p120 = scmp.eq.s32.totalorder %s14, 3
    %p121 = por %p119, %p120
    %p122 = scmp.ne.s32.totalorder %s111, %s112
    %p123 = scmp.eq.s32.totalorder %s14, 0
    %p124 = por %p122, %p123
    %p125 = scmp.ne.s32.totalorder %s111, %s112
    %p126 = scmp.eq.s32.totalorder %s15, 3
    %p127 = por %p125, %p126
    %p129 = scmp.ne.s32.totalorder %s112, %s128
    %p130 = scmp.eq.s32.totalorder %s15, 0
    %p131 = por %p129, %p130
    %p132 = scmp.le.s32.totalorder 1, %s9
    %p133 = scmp.lt.s32.totalorder %s9, 5
    %p134 = pnand %p132, %p133
    %p135 = pneg %p134
    // Predicated region
    $region9: #{vae_forward.16} parent=5 // pred_check
      _
    $region10: #{vae_forward.16} parent=5 // pred_check_branch
      %137 = sbr.rel (%p134) target = $region12
    $region11: #{vae_forward.16} parent=5 // pred_region
      %s138 = ssub.s32 %s9, 1
      // Predicated region
      $region13: #{vae_forward.16} parent=11 // pred_check
        %p139 = pneg %p96
      $region14: #{vae_forward.16} parent=11 // pred_check_branch
        %141 = sbr.rel (%p139) target = $region16
      $region15: #{vae_forward.16} parent=11 // pred_region
        _
      $region16: #{vae_forward.16} parent=11 // pred_fallthru
        _
    $region12: #{vae_forward.16} parent=5 // pred_fallthru
      _
    %p142 = scmp.lt.s32.totalorder %s9, 4
    // Predicated region
    $region17: #{vae_forward.16} parent=5 // pred_check
      %p143 = pneg %p142
    $region18: #{vae_forward.16} parent=5 // pred_check_branch
      %145 = sbr.rel (%p143) target = $region20
    $region19: #{vae_forward.16} parent=5 // pred_region
      // Predicated region
      $region21: #{vae_forward.16} parent=19 // pred_check
        %p146 = pneg %p41
      $region22: #{vae_forward.16} parent=19 // pred_check_branch
        %148 = sbr.rel (%p146) target = $region24
      $region23: #{vae_forward.16} parent=19 // pred_region
        %p149 = scmp.lt.s32.totalorder %s16, 3
        %s150 = scalar_select %p149, %s16, 3
        %s151 = smul.addr %s150, 8
        %s152 = smul.addr %s151, 4
        %s153 = scalar_lea.vmem %s0, %s152
      $region24: #{vae_forward.16} parent=19 // pred_fallthru
        _
      // Predicated region
      $region25: #{vae_forward.16} parent=19 // pred_check
        %p154 = pneg %p69
      $region26: #{vae_forward.16} parent=19 // pred_check_branch
        %156 = sbr.rel (%p154) target = $region28
      $region27: #{vae_forward.16} parent=19 // pred_region
        %p157 = scmp.lt.s32.totalorder %s16, 3
        %s158 = scalar_select %p157, %s16, 3
        %p159 = scmp.lt.s32.totalorder %s17, 0
        %s160 = scalar_select %p159, %s17, 0
        %s161 = smul.addr %s158, 32
        %s162 = sadd.s32 %s160, %s161
        %s163 = smul.addr %s162, 4
        %s164 = scalar_lea.vmem %s1, %s163
      $region28: #{vae_forward.16} parent=19 // pred_fallthru
        _
    $region20: #{vae_forward.16} parent=5 // pred_fallthru
      _
    %p165 = scmp.le.s32.totalorder 1, %s9
    %p166 = scmp.lt.s32.totalorder %s9, 5
    %p167 = pnand %p165, %p166
    %p168 = pneg %p167
    // Predicated region
    $region29: #{vae_forward.16} parent=5 // pred_check
      _
    $region30: #{vae_forward.16} parent=5 // pred_check_branch
      %170 = sbr.rel (%p167) target = $region32
    $region31: #{vae_forward.16} parent=5 // pred_region
      %s171 = ssub.s32 %s9, 1
      %p172 = scmp.lt.s32.totalorder %s18, 3
      %s173 = scalar_select %p172, %s18, 3
      %s174 = smul.addr %s173, 8
      %s175 = smul.addr %s174, 4
      %s176 = scalar_lea.vmem %s0, %s175
      %p177 = pneg %p47
      %p178 = pneg %p44
      %p179 = scmp.lt.s32.totalorder %s18, 3
      %s180 = scalar_select %p179, %s18, 3
      %p181 = scmp.lt.s32.totalorder %s19, 0
      %s182 = scalar_select %p181, %s19, 0
      %s183 = smul.addr %s180, 32
      %s184 = sadd.s32 %s182, %s183
      %s185 = smul.addr %s184, 4
      %s186 = scalar_lea.vmem %s1, %s185
      %p187 = pneg %p75
      %p188 = pneg %p72
      %p189 = pneg %p96
      %p190 = pneg %p93
      %p191 = pneg %p124
      %p192 = pneg %p121
      %p193 = scmp.lt.s32.totalorder %s18, 3
      %s194 = scalar_select %p193, %s18, 3
      %p195 = scmp.lt.s32.totalorder %s19, 0
      %s196 = scalar_select %p195, %s19, 0
      %s197 = smul.addr %s194, 4
      %s198 = sadd.s32 %s196, %s197
      %s199 = smul.addr %s198, 4
      %s200 = scalar_lea.vmem %s3, %s199
      %p201 = scmp.lt.s32.totalorder %s18, 3
      %s202 = scalar_select %p201, %s18, 3
      %s203 = smul.addr %s202, 8
      %s204 = smul.addr %s203, 4
      %s205 = scalar_lea.vmem %s0, %s204
      %p206 = scmp.lt.s32.totalorder %s18, 3
      %s207 = scalar_select %p206, %s18, 3
      %p208 = scmp.lt.s32.totalorder %s19, 0
      %s209 = scalar_select %p208, %s19, 0
      %s210 = smul.addr %s207, 32
      %s211 = sadd.s32 %s209, %s210
      %s212 = smul.addr %s211, 4
      %s213 = scalar_lea.vmem %s1, %s212
      %p214 = scmp.lt.s32.totalorder %s18, 3
      %s215 = scalar_select %p214, %s18, 3
      %p216 = scmp.lt.s32.totalorder %s19, 0
      %s217 = scalar_select %p216, %s19, 0
      %s218 = smul.addr %s215, 4
      %s219 = sadd.s32 %s217, %s218
      %s220 = smul.addr %s219, 4
      %s221 = scalar_lea.vmem %s3, %s220
      %v222 = vld [vmem:[%s205] sm:$0xff]
      %v223 = vld [vmem:[%s205 + $0x8] sm:$0xff]
      %v224 = vld [vmem:[%s205 + $0x10] sm:$0xff]
      %v225 = vld [vmem:[%s205 + $0x18] sm:$0xff]
      %v226 = vld [vmem:[%s213] sm:$0xf]
      %v227 = vld [vmem:[%s213 + $0x4] sm:$0xf]
      %v228 = vld [vmem:[%s213 + $0x8] sm:$0xf]
      %v229 = vld [vmem:[%s213 + $0xc] sm:$0xf]
      %v230 = vld [vmem:[%s213 + $0x10] sm:$0xf]
      %v231 = vld [vmem:[%s213 + $0x14] sm:$0xf]
      %v232 = vld [vmem:[%s213 + $0x18] sm:$0xf]
      %v233 = vld [vmem:[%s213 + $0x1c] sm:$0xf]
      %v234 = vld [vmem:[%s213 + $0x20] sm:$0xf]
      %v235 = vld [vmem:[%s213 + $0x24] sm:$0xf]
      %v236 = vld [vmem:[%s213 + $0x28] sm:$0xf]
      %v237 = vld [vmem:[%s213 + $0x2c] sm:$0xf]
      %v238 = vld [vmem:[%s213 + $0x30] sm:$0xf]
      %v239 = vld [vmem:[%s213 + $0x34] sm:$0xf]
      %v240 = vld [vmem:[%s213 + $0x38] sm:$0xf]
      %v241 = vld [vmem:[%s213 + $0x3c] sm:$0xf]
      %v242 = vld [vmem:[%s213 + $0x40] sm:$0xf]
      %v243 = vld [vmem:[%s213 + $0x44] sm:$0xf]
      %v244 = vld [vmem:[%s213 + $0x48] sm:$0xf]
      %v245 = vld [vmem:[%s213 + $0x4c] sm:$0xf]
      %v246 = vld [vmem:[%s213 + $0x50] sm:$0xf]
      %v247 = vld [vmem:[%s213 + $0x54] sm:$0xf]
      %v248 = vld [vmem:[%s213 + $0x58] sm:$0xf]
      %v249 = vld [vmem:[%s213 + $0x5c] sm:$0xf]
      %v250 = vld [vmem:[%s213 + $0x60] sm:$0xf]
      %v251 = vld [vmem:[%s213 + $0x64] sm:$0xf]
      %v252 = vld [vmem:[%s213 + $0x68] sm:$0xf]
      %v253 = vld [vmem:[%s213 + $0x6c] sm:$0xf]
      %v254 = vld [vmem:[%s213 + $0x70] sm:$0xf]
      %v255 = vld [vmem:[%s213 + $0x74] sm:$0xf]
      %v256 = vld [vmem:[%s213 + $0x78] sm:$0xf]
      %v257 = vld [vmem:[%s213 + $0x7c] sm:$0xf]
      %v258 = vld [vmem:[%s2] sm:$0xff]
      %v259 = vld [vmem:[%s2 + $0x8] sm:$0xff]
      %v260 = vld [vmem:[%s2 + $0x10] sm:$0xff]
      %v261 = vld [vmem:[%s2 + $0x18] sm:$0xff]
      %263 = vset.pattern.permute.xlu0 0
      %264 = vperm.xlu0 %263, %v258
      %v265 = vpop.permute.xlu0 %264
      %268 = vset.pattern.permute.xlu0 0
      %269 = vperm.xlu0 %268, %v259
      %v270 = vpop.permute.xlu0 %269
      %273 = vset.pattern.permute.xlu0 0
      %274 = vperm.xlu0 %273, %v260
      %v275 = vpop.permute.xlu0 %274
      %278 = vset.pattern.permute.xlu0 0
      %279 = vperm.xlu0 %278, %v261
      %v280 = vpop.permute.xlu0 %279
      %v286 = vunpack.c.l.b16 %v222
      %v287 = vunpack.c.h.b16 %v222
      %v288 = vunpack.c.l.b16 %v223
      %v289 = vunpack.c.h.b16 %v223
      %v290 = vunpack.c.l.b16 %v224
      %v291 = vunpack.c.h.b16 %v224
      %v292 = vunpack.c.l.b16 %v225
      %v293 = vunpack.c.h.b16 %v225
      %v294 = vpack.c.b16 %v288, %v286
      %v295 = vpack.c.b16 %v289, %v287
      %v296 = vpack.c.b16 %v292, %v290
      %v297 = vpack.c.b16 %v293, %v291
      %v334 = vunpack.c.l.b16 %v226
      %v335 = vunpack.c.l.b16 %v227
      %v336 = vunpack.c.l.b16 %v228
      %v337 = vunpack.c.l.b16 %v229
      %v338 = vunpack.c.l.b16 %v230
      %v339 = vunpack.c.l.b16 %v231
      %v340 = vunpack.c.l.b16 %v232
      %v341 = vunpack.c.l.b16 %v233
      %v342 = vunpack.c.l.b16 %v234
      %v343 = vunpack.c.l.b16 %v235
      %v344 = vunpack.c.l.b16 %v236
      %v345 = vunpack.c.l.b16 %v237
      %v346 = vunpack.c.l.b16 %v238
      %v347 = vunpack.c.l.b16 %v239
      %v348 = vunpack.c.l.b16 %v240
      %v349 = vunpack.c.l.b16 %v241
      %v350 = vunpack.c.l.b16 %v242
      %v351 = vunpack.c.l.b16 %v243
      %v352 = vunpack.c.l.b16 %v244
      %v353 = vunpack.c.l.b16 %v245
      %v354 = vunpack.c.l.b16 %v246
      %v355 = vunpack.c.l.b16 %v247
      %v356 = vunpack.c.l.b16 %v248
      %v357 = vunpack.c.l.b16 %v249
      %v358 = vunpack.c.l.b16 %v250
      %v359 = vunpack.c.l.b16 %v251
      %v360 = vunpack.c.l.b16 %v252
      %v361 = vunpack.c.l.b16 %v253
      %v362 = vunpack.c.l.b16 %v254
      %v363 = vunpack.c.l.b16 %v255
      %v364 = vunpack.c.l.b16 %v256
      %v365 = vunpack.c.l.b16 %v257
      %v366 = vpack.c.b16 %v335, %v334
      %v367 = vpack.c.b16 %v337, %v336
      %v368 = vpack.c.b16 %v339, %v338
      %v369 = vpack.c.b16 %v341, %v340
      %v370 = vpack.c.b16 %v343, %v342
      %v371 = vpack.c.b16 %v345, %v344
      %v372 = vpack.c.b16 %v347, %v346
      %v373 = vpack.c.b16 %v349, %v348
      %v374 = vpack.c.b16 %v351, %v350
      %v375 = vpack.c.b16 %v353, %v352
      %v376 = vpack.c.b16 %v355, %v354
      %v377 = vpack.c.b16 %v357, %v356
      %v378 = vpack.c.b16 %v359, %v358
      %v379 = vpack.c.b16 %v361, %v360
      %v380 = vpack.c.b16 %v363, %v362
      %v381 = vpack.c.b16 %v365, %v364
      %398 = vmatpush.bf16.msra.mxu0 %v373
      %399 = vmatpush.bf16.msra.mxu0 %v372
      %400 = vmatpush.bf16.msra.mxu0 %v371
      %401 = vmatpush.bf16.msra.mxu0 %v370
      %402 = vmatpush.bf16.msra.mxu0 %v369
      %403 = vmatpush.bf16.msra.mxu0 %v368
      %404 = vmatpush.bf16.msra.mxu0 %v367
      %405 = vmatpush.bf16.msra.mxu0 %v366
      %406 = vmatmul.bf16.gmra.mxu0 %v294
      %v407 = vpop.f32.mrf.mxu0
      %v408 = vadd.f32 %v265, %v407
      %v409 = vpop.f32.mrf.mxu0
      %v410 = vadd.f32 %v270, %v409
      %411 = vmatmul.bf16.gmra.mxu0 %v296
      %v412 = vpop.f32.mrf.mxu0
      %v413 = vadd.f32 %v275, %v412
      %v414 = vpop.f32.mrf.mxu0
      %v415 = vadd.f32 %v280, %v414
      %416 = vdwg.mxu0
      %417 = vmatpush.bf16.msra.mxu0 %v381
      %418 = vmatpush.bf16.msra.mxu0 %v380
      %419 = vmatpush.bf16.msra.mxu0 %v379
      %420 = vmatpush.bf16.msra.mxu0 %v378
      %421 = vmatpush.bf16.msra.mxu0 %v377
      %422 = vmatpush.bf16.msra.mxu0 %v376
      %423 = vmatpush.bf16.msra.mxu0 %v375
      %424 = vmatpush.bf16.msra.mxu0 %v374
      %425 = vmatmul.bf16.gmra.mxu0 %v295
      %v426 = vpop.f32.mrf.mxu0
      %v427 = vadd.f32 %v408, %v426
      %v428 = vpop.f32.mrf.mxu0
      %v429 = vadd.f32 %v410, %v428
      %430 = vmatmul.bf16.gmra.mxu0 %v297
      %v431 = vpop.f32.mrf.mxu0
      %v432 = vadd.f32 %v413, %v431
      %v433 = vpop.f32.mrf.mxu0
      %v434 = vadd.f32 %v415, %v433
      %435 = vdwg.mxu0
      %v436 = vmax.f32 %v427, 0.0
      %v437 = vmax.f32 %v429, 0.0
      %v438 = vmax.f32 %v432, 0.0
      %v439 = vmax.f32 %v434, 0.0
      %v440 = vpack.c.bf16 %v436, %v436
      %v441 = vpack.c.bf16 %v437, %v437
      %v442 = vpack.c.bf16 %v438, %v438
      %v443 = vpack.c.bf16 %v439, %v439
      %444 = vst [vmem:[%s221] sm:$0xf] %v440
      %445 = vst [vmem:[%s221 + $0x4] sm:$0xf] %v441
      %446 = vst [vmem:[%s221 + $0x8] sm:$0xf] %v442
      %447 = vst [vmem:[%s221 + $0xc] sm:$0xf] %v443
      %p448 = scmp.lt.s32.totalorder %s18, 3
      %s449 = scalar_select %p448, %s18, 3
      %p450 = scmp.lt.s32.totalorder %s19, 0
      %s451 = scalar_select %p450, %s19, 0
      %s452 = smul.addr %s449, 4
      %s453 = sadd.s32 %s451, %s452
      %s454 = smul.addr %s453, 4
      %s455 = scalar_lea.vmem %s3, %s454
      // Predicated region
      $region33: #{vae_forward.16} parent=31 // pred_check
        %p456 = pneg %p121
      $region34: #{vae_forward.16} parent=31 // pred_check_branch
        %458 = sbr.rel (%p456) target = $region36
      $region35: #{vae_forward.16} parent=31 // pred_region
        _
      $region36: #{vae_forward.16} parent=31 // pred_fallthru
        _
    $region32: #{vae_forward.16} parent=5 // pred_fallthru
      _
    %p459 = scmp.le.s32.totalorder 2, %s9
    // Predicated region
    $region37: #{vae_forward.16} parent=5 // pred_check
      %p460 = pneg %p459
    $region38: #{vae_forward.16} parent=5 // pred_check_branch
      %462 = sbr.rel (%p460) target = $region40
    $region39: #{vae_forward.16} parent=5 // pred_region
      %s463 = ssub.s32 %s9, 2
      // Predicated region
      $region41: #{vae_forward.16} parent=39 // pred_check
        %p464 = pneg %p127
      $region42: #{vae_forward.16} parent=39 // pred_check_branch
        %466 = sbr.rel (%p464) target = $region44
      $region43: #{vae_forward.16} parent=39 // pred_region
        %p467 = scmp.lt.s32.totalorder %s20, 3
        %s468 = scalar_select %p467, %s20, 3
        %p469 = scmp.lt.s32.totalorder %s21, 0
        %s470 = scalar_select %p469, %s21, 0
        %s471 = smul.addr %s468, 4
        %s472 = sadd.s32 %s470, %s471
        %s473 = smul.addr %s472, 4
        %s474 = scalar_lea.vmem %s3, %s473
      $region44: #{vae_forward.16} parent=39 // pred_fallthru
        _
    $region40: #{vae_forward.16} parent=5 // pred_fallthru
      _
  $region6: #{vae_forward.16} parent=0 // loop_footer
    %s13 = sadd.s32 1, %s9
  $region7: #{vae_forward.16} parent=0 // loop_footer_branch
    %8 = sbr.rel target = $region3
  $region8: #{vae_forward.16} parent=0 // loop_exit
    _

// kernel: vae_forward.17
$region0: #{vae_forward.17}
  #allocation0 [shape = 'u32[]', space=smem, size = 0x4, offset = 0x4, fixed_abs, tag = 'smem constant byte address 0x4 - core index']
  #allocation1 [shape = 'u32[72,128]{1,0:T(1,128)}', space=vmem, size = 0x9000, scoped, tag = 'internal scratch']
  %s0 = inlined_call_operand.vmem [shape: bf16[4,3,128], index: 0, kind: input, shape index: {}]
  %s1 = inlined_call_operand.vmem [shape: bf16[4,128,512], index: 1, kind: input, shape index: {}]
  %s2 = inlined_call_operand.vmem [shape: f32[3,1], index: 2, kind: input, shape index: {}]
  %s3 = inlined_call_operand.vmem [shape: f32[4,3,512], index: 3, kind: output, shape index: {}]
  %s4 = sld [smem:[#allocation0]]
  $region83: #{vae_forward.17} parent=0
    _
  %s6 = ssub.s32 1, %s4
  %s7 = scalar_select 0, %s6, %s4
  $region1: #{vae_forward.17} parent=0
    #allocation2 [shape = 'u8[131072]{0}', space=vmem, size = 0x20000, scoped, tag = 'input window, operand 1']
    loop: start=0, step=1, limit=10
    $region2: #{vae_forward.17} parent=1 // loop_pre_header
      _
    $region3: #{vae_forward.17} parent=1 // loop_header
      %s9 = sphi 0, %s13
      %p10 = scmp.ge.s32.totalorder %s9, 10
      %s16 = sphi 0, %s28
      %s17 = sphi 0, %s24
      %s18 = sphi 0, %s16
      %s19 = sphi 0, %s17
      %s20 = sphi 0, %s18
      %s21 = sphi 0, %s19
      %s31 = sphi 0, %s33
      %s34 = sphi 0, %s31
      %s35 = sphi 0, %s34
      %s51 = sphi 0, %s35
      %s59 = sphi 0, %s61
      %s62 = sphi 0, %s59
      %s63 = sphi 0, %s62
      %s79 = sphi 0, %s63
      %s83 = sphi 0, %s83
      %s85 = sphi 0, %s83
      %s86 = sphi 0, %s85
      %s100 = sphi 0, %s86
      %s108 = sphi 0, %s110
      %s111 = sphi 0, %s108
      %s112 = sphi 0, %s111
      %s128 = sphi 0, %s112
    $region4: #{vae_forward.17} parent=1 // loop_header_branch
      %12 = sbr.rel (%p10) target = $region8
    $region5: #{vae_forward.17} parent=1 // loop_body
      %s14 = ssub.s32 %s9, 1
      %s15 = ssub.s32 %s9, 2
      %s22 = sadd.s32 1, %s17
      %p23 = scmp.ge.s32.totalorder %s22, 2
      %s24 = scalar_select %p23, 0, %s22
      %s25 = sadd.s32 1, %s16
      %s26 = scalar_select %p23, %s25, %s16
      %p27 = scmp.ge.s32.totalorder %s26, 4
      %s28 = scalar_select %p27, 0, %s26
      %s29 = ssub.s32 %s16, %s28
      %p30 = scmp.eq.s32.totalorder %s29, 0
      %s32 = sadd.s32 %s31, 1
      %s33 = scalar_select %p30, %s31, %s32
      %p36 = pneg %p30
      %p37 = scmp.eq.s32.totalorder %s9, 7
      %p38 = por %p36, %p37
      %p39 = scmp.ne.s32.totalorder %s31, %s34
      %p40 = scmp.eq.s32.totalorder %s9, 0
      %p41 = por %p39, %p40
      %p42 = scmp.ne.s32.totalorder %s31, %s34
      %p43 = scmp.eq.s32.totalorder %s14, 7
      %p44 = por %p42, %p43
      %p45 = scmp.ne.s32.totalorder %s34, %s35
      %p46 = scmp.eq.s32.totalorder %s14, 0
      %p47 = por %p45, %p46
      %p48 = scmp.ne.s32.totalorder %s34, %s35
      %p49 = scmp.eq.s32.totalorder %s15, 7
      %p50 = por %p48, %p49
      %p52 = scmp.ne.s32.totalorder %s35, %s51
      %p53 = scmp.eq.s32.totalorder %s15, 0
      %p54 = por %p52, %p53
      %s55 = ssub.s32 %s16, %s28
      %s56 = ssub.s32 %s17, %s24
      %s57 = sor.u32 %s55, %s56
      %p58 = scmp.eq.s32.totalorder %s57, 0
      %s60 = sadd.s32 %s59, 1
      %s61 = scalar_select %p58, %s59, %s60
      %p64 = pneg %p58
      %p65 = scmp.eq.s32.totalorder %s9, 7
      %p66 = por %p64, %p65
      %p67 = scmp.ne.s32.totalorder %s59, %s62
      %p68 = scmp.eq.s32.totalorder %s9, 0
      %p69 = por %p67, %p68
      %p70 = scmp.ne.s32.totalorder %s59, %s62
      %p71 = scmp.eq.s32.totalorder %s14, 7
      %p72 = por %p70, %p71
      %p73 = scmp.ne.s32.totalorder %s62, %s63
      %p74 = scmp.eq.s32.totalorder %s14, 0
      %p75 = por %p73, %p74
      %p76 = scmp.ne.s32.totalorder %s62, %s63
      %p77 = scmp.eq.s32.totalorder %s15, 7
      %p78 = por %p76, %p77
      %p80 = scmp.ne.s32.totalorder %s63, %s79
      %p81 = scmp.eq.s32.totalorder %s15, 0
      %p82 = por %p80, %p81
      %s84 = sadd.s32 %s83, 1
      %p87 = scmp.eq.s32.totalorder %s9, 7
      %p88 = scmp.ne.s32.totalorder %s83, %s85
      %p89 = scmp.eq.s32.totalorder %s9, 0
      %p90 = por %p88, %p89
      %p91 = scmp.ne.s32.totalorder %s83, %s85
      %p92 = scmp.eq.s32.totalorder %s14, 7
      %p93 = por %p91, %p92
      %p94 = scmp.ne.s32.totalorder %s85, %s86
      %p95 = scmp.eq.s32.totalorder %s14, 0
      %p96 = por %p94, %p95
      %p97 = scmp.ne.s32.totalorder %s85, %s86
      %p98 = scmp.eq.s32.totalorder %s15, 7
      %p99 = por %p97, %p98
      %p101 = scmp.ne.s32.totalorder %s86, %s100
      %p102 = scmp.eq.s32.totalorder %s15, 0
      %p103 = por %p101, %p102
      %s104 = ssub.s32 %s16, %s28
      %s105 = ssub.s32 %s17, %s24
      %s106 = sor.u32 %s104, %s105
      %p107 = scmp.eq.s32.totalorder %s106, 0
      %s109 = sadd.s32 %s108, 1
      %s110 = scalar_select %p107, %s108, %s109
      %p113 = pneg %p107
      %p114 = scmp.eq.s32.totalorder %s9, 7
      %p115 = por %p113, %p114
      %p116 = scmp.ne.s32.totalorder %s108, %s111
      %p117 = scmp.eq.s32.totalorder %s9, 0
      %p118 = por %p116, %p117
      %p119 = scmp.ne.s32.totalorder %s108, %s111
      %p120 = scmp.eq.s32.totalorder %s14, 7
      %p121 = por %p119, %p120
      %p122 = scmp.ne.s32.totalorder %s111, %s112
      %p123 = scmp.eq.s32.totalorder %s14, 0
      %p124 = por %p122, %p123
      %p125 = scmp.ne.s32.totalorder %s111, %s112
      %p126 = scmp.eq.s32.totalorder %s15, 7
      %p127 = por %p125, %p126
      %p129 = scmp.ne.s32.totalorder %s112, %s128
      %p130 = scmp.eq.s32.totalorder %s15, 0
      %p131 = por %p129, %p130
      %p132 = scmp.le.s32.totalorder 1, %s9
      %p133 = scmp.lt.s32.totalorder %s9, 9
      %p134 = pnand %p132, %p133
      %p135 = pneg %p134
      // Predicated region
      $region9: #{vae_forward.17} parent=5 // pred_check
        _
      $region10: #{vae_forward.17} parent=5 // pred_check_branch
        %137 = sbr.rel (%p134) target = $region12
      $region11: #{vae_forward.17} parent=5 // pred_region
        %s138 = ssub.s32 %s9, 1
        // Predicated region
        $region13: #{vae_forward.17} parent=11 // pred_check
          %p139 = pneg %p96
        $region14: #{vae_forward.17} parent=11 // pred_check_branch
          %141 = sbr.rel (%p139) target = $region16
        $region15: #{vae_forward.17} parent=11 // pred_region
          _
        $region16: #{vae_forward.17} parent=11 // pred_fallthru
          _
      $region12: #{vae_forward.17} parent=5 // pred_fallthru
        _
      %p142 = scmp.lt.s32.totalorder %s9, 8
      // Predicated region
      $region17: #{vae_forward.17} parent=5 // pred_check
        %p143 = pneg %p142
      $region18: #{vae_forward.17} parent=5 // pred_check_branch
        %145 = sbr.rel (%p143) target = $region20
      $region19: #{vae_forward.17} parent=5 // pred_region
        // Predicated region
        $region21: #{vae_forward.17} parent=19 // pred_check
          %p146 = pneg %p41
        $region22: #{vae_forward.17} parent=19 // pred_check_branch
          %148 = sbr.rel (%p146) target = $region24
        $region23: #{vae_forward.17} parent=19 // pred_region
          %p149 = scmp.lt.s32.totalorder %s16, 3
          %s150 = scalar_select %p149, %s16, 3
          %s151 = smul.addr %s150, 2
          %s152 = scalar_lea.vmem %s0, %s151
        $region24: #{vae_forward.17} parent=19 // pred_fallthru
          _
        // Predicated region
        $region25: #{vae_forward.17} parent=19 // pred_check
          %p153 = pneg %p69
        $region26: #{vae_forward.17} parent=19 // pred_check_branch
          %155 = sbr.rel (%p153) target = $region28
        $region27: #{vae_forward.17} parent=19 // pred_region
          %s156 = sand.u32 %s59, 1
          %s157 = sand.u32 %s59, 1
          %s158 = smul.addr %s157, 128
          %s159 = scalar_lea.vmem [#allocation2], %s158
          %s160 = smul.u32 2, %s17
          %s161 = smul.addr %s16, 64
          %s162 = sadd.s32 %s160, %s161
          %s163 = smul.addr %s162, 4
          %s164 = scalar_lea.vmem %s1, %s163
          // Predicated region
          $region29: #{vae_forward.17} parent=27 // pred_check
            _
          $region30: #{vae_forward.17} parent=27 // pred_check_branch
            %166 = sbr.rel (0) target = $region32
          $region31: #{vae_forward.17} parent=27 // pred_region
            // Predicated region
            $region33: #{vae_forward.17} parent=31 // pred_check
              _
            $region34: #{vae_forward.17} parent=31 // pred_check_branch
              %168 = sbr.rel (0) target = $region36
            $region35: #{vae_forward.17} parent=31 // pred_region
              // Predicated region
              $region48: #{vae_forward.17} parent=35 // pred_check
                _
              $region49: #{vae_forward.17} parent=35 // pred_check_branch
                %214 = sbr.rel (0) target = $region51
              $region50: #{vae_forward.17} parent=35 // pred_region
                loop: start=0, step=1, limit=1
                $region52: #{vae_forward.17} parent=50 // loop_pre_header
                  _
                $region53: #{vae_forward.17} parent=50 // loop_header
                  %s216 = sphi 0, %s220
                  %p217 = scmp.ge.s32.totalorder %s216, 1
                  %s221 = sphi %s164, %s164
                  %s222 = sphi %s159, %s159
                $region54: #{vae_forward.17} parent=50 // loop_header_branch
                  %219 = sbr.rel (%p217) target = $region58
                $region55: #{vae_forward.17} parent=50 // loop_body
                  %v223 = vld [vmem:[%s221] sm:$0xff]
                  %224 = vst [vmem:[%s222] sm:$0xff] %v223
                  %v225 = vld [vmem:[%s221 + $0x10] sm:$0xff]
                  %226 = vst [vmem:[%s222 + $0x8] sm:$0xff] %v225
                  %v227 = vld [vmem:[%s221 + $0x20] sm:$0xff]
                  %228 = vst [vmem:[%s222 + $0x10] sm:$0xff] %v227
                  %v229 = vld [vmem:[%s221 + $0x30] sm:$0xff]
                  %230 = vst [vmem:[%s222 + $0x18] sm:$0xff] %v229
                  %v231 = vld [vmem:[%s221 + $0x40] sm:$0xff]
                  %232 = vst [vmem:[%s222 + $0x20] sm:$0xff] %v231
                  %v233 = vld [vmem:[%s221 + $0x50] sm:$0xff]
                  %234 = vst [vmem:[%s222 + $0x28] sm:$0xff] %v233
                  %v235 = vld [vmem:[%s221 + $0x60] sm:$0xff]
                  %236 = vst [vmem:[%s222 + $0x30] sm:$0xff] %v235
                  %v237 = vld [vmem:[%s221 + $0x70] sm:$0xff]
                  %238 = vst [vmem:[%s222 + $0x38] sm:$0xff] %v237
                  %v239 = vld [vmem:[%s221 + $0x80] sm:$0xff]
                  %240 = vst [vmem:[%s222 + $0x40] sm:$0xff] %v239
                  %v241 = vld [vmem:[%s221 + $0x90] sm:$0xff]
                  %242 = vst [vmem:[%s222 + $0x48] sm:$0xff] %v241
                  %v243 = vld [vmem:[%s221 + $0xa0] sm:$0xff]
                  %244 = vst [vmem:[%s222 + $0x50] sm:$0xff] %v243
                  %v245 = vld [vmem:[%s221 + $0xb0] sm:$0xff]
                  %246 = vst [vmem:[%s222 + $0x58] sm:$0xff] %v245
                  %v247 = vld [vmem:[%s221 + $0xc0] sm:$0xff]
                  %248 = vst [vmem:[%s222 + $0x60] sm:$0xff] %v247
                  %v249 = vld [vmem:[%s221 + $0xd0] sm:$0xff]
                  %250 = vst [vmem:[%s222 + $0x68] sm:$0xff] %v249
                  %v251 = vld [vmem:[%s221 + $0xe0] sm:$0xff]
                  %252 = vst [vmem:[%s222 + $0x70] sm:$0xff] %v251
                  %v253 = vld [vmem:[%s221 + $0xf0] sm:$0xff]
                  %254 = vst [vmem:[%s222 + $0x78] sm:$0xff] %v253
                $region56: #{vae_forward.17} parent=50 // loop_footer
                  %s220 = sadd.s32 1, %s216
                $region57: #{vae_forward.17} parent=50 // loop_footer_branch
                  %215 = sbr.rel target = $region53
                $region58: #{vae_forward.17} parent=50 // loop_exit
                  _
              $region51: #{vae_forward.17} parent=35 // pred_fallthru
                _
              // Predicated region
              $region59: #{vae_forward.17} parent=35 // pred_check
                _
              $region60: #{vae_forward.17} parent=35 // pred_check_branch
                %256 = sbr.rel target = $region62
              $region61: #{vae_forward.17} parent=35 // pred_region
                _
              $region62: #{vae_forward.17} parent=35 // pred_fallthru
                _
            $region36: #{vae_forward.17} parent=31 // pred_fallthru
              _
            // Predicated region
            $region37: #{vae_forward.17} parent=31 // pred_check
              _
            $region38: #{vae_forward.17} parent=31 // pred_check_branch
              %170 = sbr.rel target = $region40
            $region39: #{vae_forward.17} parent=31 // pred_region
              %s172 = ssub.s32 256, 1
              loop: start=0, step=1, limit=1
              $region41: #{vae_forward.17} parent=39 // loop_pre_header
                _
              $region42: #{vae_forward.17} parent=39 // loop_header
                %s174 = sphi 0, %s178
                %p175 = scmp.ge.s32.totalorder %s174, 1
                %s179 = sphi %s164, %s164
                %s180 = sphi %s159, %s159
              $region43: #{vae_forward.17} parent=39 // loop_header_branch
                %177 = sbr.rel (%p175) target = $region47
              $region44: #{vae_forward.17} parent=39 // loop_body
                %v181 = vld [vmem:[%s179] sm:%s172]
                %182 = vst [vmem:[%s180] sm:%s172] %v181
                %v183 = vld [vmem:[%s179 + $0x10] sm:%s172]
                %184 = vst [vmem:[%s180 + $0x8] sm:%s172] %v183
                %v185 = vld [vmem:[%s179 + $0x20] sm:%s172]
                %186 = vst [vmem:[%s180 + $0x10] sm:%s172] %v185
                %v187 = vld [vmem:[%s179 + $0x30] sm:%s172]
                %188 = vst [vmem:[%s180 + $0x18] sm:%s172] %v187
                %v189 = vld [vmem:[%s179 + $0x40] sm:%s172]
                %190 = vst [vmem:[%s180 + $0x20] sm:%s172] %v189
                %v191 = vld [vmem:[%s179 + $0x50] sm:%s172]
                %192 = vst [vmem:[%s180 + $0x28] sm:%s172] %v191
                %v193 = vld [vmem:[%s179 + $0x60] sm:%s172]
                %194 = vst [vmem:[%s180 + $0x30] sm:%s172] %v193
                %v195 = vld [vmem:[%s179 + $0x70] sm:%s172]
                %196 = vst [vmem:[%s180 + $0x38] sm:%s172] %v195
                %v197 = vld [vmem:[%s179 + $0x80] sm:%s172]
                %198 = vst [vmem:[%s180 + $0x40] sm:%s172] %v197
                %v199 = vld [vmem:[%s179 + $0x90] sm:%s172]
                %200 = vst [vmem:[%s180 + $0x48] sm:%s172] %v199
                %v201 = vld [vmem:[%s179 + $0xa0] sm:%s172]
                %202 = vst [vmem:[%s180 + $0x50] sm:%s172] %v201
                %v203 = vld [vmem:[%s179 + $0xb0] sm:%s172]
                %204 = vst [vmem:[%s180 + $0x58] sm:%s172] %v203
                %v205 = vld [vmem:[%s179 + $0xc0] sm:%s172]
                %206 = vst [vmem:[%s180 + $0x60] sm:%s172] %v205
                %v207 = vld [vmem:[%s179 + $0xd0] sm:%s172]
                %208 = vst [vmem:[%s180 + $0x68] sm:%s172] %v207
                %v209 = vld [vmem:[%s179 + $0xe0] sm:%s172]
                %210 = vst [vmem:[%s180 + $0x70] sm:%s172] %v209
                %v211 = vld [vmem:[%s179 + $0xf0] sm:%s172]
                %212 = vst [vmem:[%s180 + $0x78] sm:%s172] %v211
              $region45: #{vae_forward.17} parent=39 // loop_footer
                %s178 = sadd.s32 1, %s174
              $region46: #{vae_forward.17} parent=39 // loop_footer_branch
                %173 = sbr.rel target = $region42
              $region47: #{vae_forward.17} parent=39 // loop_exit
                _
            $region40: #{vae_forward.17} parent=31 // pred_fallthru
              _
          $region32: #{vae_forward.17} parent=27 // pred_fallthru
            _
          %257 = vnop
        $region28: #{vae_forward.17} parent=19 // pred_fallthru
          _
      $region20: #{vae_forward.17} parent=5 // pred_fallthru
        _
      %p258 = scmp.le.s32.totalorder 1, %s9
      %p259 = scmp.lt.s32.totalorder %s9, 9
      %p260 = pnand %p258, %p259
      %p261 = pneg %p260
      // Predicated region
      $region63: #{vae_forward.17} parent=5 // pred_check
        _
      $region64: #{vae_forward.17} parent=5 // pred_check_branch
        %263 = sbr.rel (%p260) target = $region66
      $region65: #{vae_forward.17} parent=5 // pred_region
        %s264 = ssub.s32 %s9, 1
        %s265 = sand.u32 %s62, 1
        %s266 = sand.u32 %s62, 1
        %s267 = smul.addr %s266, 128
        %s268 = scalar_lea.vmem [#allocation2], %s267
        // Predicated region
        $region67: #{vae_forward.17} parent=65 // pred_check
          %p269 = pneg %p75
        $region68: #{vae_forward.17} parent=65 // pred_check_branch
          %271 = sbr.rel (%p269) target = $region70
        $region69: #{vae_forward.17} parent=65 // pred_region
          _
        $region70: #{vae_forward.17} parent=65 // pred_fallthru
          _
        %p272 = scmp.lt.s32.totalorder %s18, 3
        %s273 = scalar_select %p272, %s18, 3
        %s274 = smul.addr %s273, 2
        %s275 = scalar_lea.vmem %s0, %s274
        %p276 = pneg %p47
        %p277 = pneg %p44
        %s278 = sand.u32 %s62, 1
        %s279 = sand.u32 %s62, 1
        %s280 = smul.addr %s279, 128
        %s281 = scalar_lea.vmem [#allocation2], %s280
        %p282 = pneg %p75
        %p283 = pneg %p72
        %p284 = pneg %p96
        %p285 = pneg %p93
        %p286 = pneg %p124
        %p287 = pneg %p121
        %s288 = smul.u32 2, %s19
        %p289 = scmp.lt.s32.totalorder %s18, 3
        %s290 = scalar_select %p289, %s18, 3
        %p291 = scmp.lt.s32.totalorder %s288, 3
        %s292 = scalar_select %p291, %s288, 3
        %s293 = smul.addr %s290, 4
        %s294 = sadd.s32 %s292, %s293
        %s295 = smul.addr %s294, 4
        %s296 = scalar_lea.vmem %s3, %s295
        %p297 = scmp.lt.s32.totalorder %s18, 3
        %s298 = scalar_select %p297, %s18, 3
        %s299 = smul.addr %s298, 2
        %s300 = scalar_lea.vmem %s0, %s299
        %s301 = smul.u32 2, %s19
        %s302 = smul.u32 2, %s19
        %p303 = scmp.lt.s32.totalorder %s18, 3
        %s304 = scalar_select %p303, %s18, 3
        %p305 = scmp.lt.s32.totalorder %s302, 3
        %s306 = scalar_select %p305, %s302, 3
        %s307 = smul.addr %s304, 4
        %s308 = sadd.s32 %s306, %s307
        %s309 = smul.addr %s308, 4
        %s310 = scalar_lea.vmem %s3, %s309
        %s311 = smul.u32 2, %s19
        %v312 = vld [vmem:[%s300] sm:$0x3]
        %v313 = vld [vmem:[%s268] sm:$0xff]
        %v314 = vld [vmem:[%s268 + $0x8] sm:$0xff]
        %v315 = vld [vmem:[%s268 + $0x10] sm:$0xff]
        %v316 = vld [vmem:[%s268 + $0x18] sm:$0xff]
        %v317 = vld [vmem:[%s268 + $0x20] sm:$0xff]
        %v318 = vld [vmem:[%s268 + $0x28] sm:$0xff]
        %v319 = vld [vmem:[%s268 + $0x30] sm:$0xff]
        %v320 = vld [vmem:[%s268 + $0x38] sm:$0xff]
        %v321 = vld [vmem:[%s268 + $0x40] sm:$0xff]
        %v322 = vld [vmem:[%s268 + $0x48] sm:$0xff]
        %v323 = vld [vmem:[%s268 + $0x50] sm:$0xff]
        %v324 = vld [vmem:[%s268 + $0x58] sm:$0xff]
        %v325 = vld [vmem:[%s268 + $0x60] sm:$0xff]
        %v326 = vld [vmem:[%s268 + $0x68] sm:$0xff]
        %v327 = vld [vmem:[%s268 + $0x70] sm:$0xff]
        %v328 = vld [vmem:[%s268 + $0x78] sm:$0xff]
        %v329 = vld [vmem:[%s2] sm:$0x7]
        %331 = vset.pattern.permute.xlu0 0
        %332 = vperm.xlu0 %331, %v329
        %v333 = vpop.permute.xlu0 %332
        %v351 = vunpack.c.l.b16 %v313
        %v352 = vunpack.c.h.b16 %v313
        %v353 = vunpack.c.l.b16 %v314
        %v354 = vunpack.c.h.b16 %v314
        %v355 = vunpack.c.l.b16 %v315
        %v356 = vunpack.c.h.b16 %v315
        %v357 = vunpack.c.l.b16 %v316
        %v358 = vunpack.c.h.b16 %v316
        %v359 = vunpack.c.l.b16 %v317
        %v360 = vunpack.c.h.b16 %v317
        %v361 = vunpack.c.l.b16 %v318
        %v362 = vunpack.c.h.b16 %v318
        %v363 = vunpack.c.l.b16 %v319
        %v364 = vunpack.c.h.b16 %v319
        %v365 = vunpack.c.l.b16 %v320
        %v366 = vunpack.c.h.b16 %v320
        %v367 = vunpack.c.l.b16 %v321
        %v368 = vunpack.c.h.b16 %v321
        %v369 = vunpack.c.l.b16 %v322
        %v370 = vunpack.c.h.b16 %v322
        %v371 = vunpack.c.l.b16 %v323
        %v372 = vunpack.c.h.b16 %v323
        %v373 = vunpack.c.l.b16 %v324
        %v374 = vunpack.c.h.b16 %v324
        %v375 = vunpack.c.l.b16 %v325
        %v376 = vunpack.c.h.b16 %v325
        %v377 = vunpack.c.l.b16 %v326
        %v378 = vunpack.c.h.b16 %v326
        %v379 = vunpack.c.l.b16 %v327
        %v380 = vunpack.c.h.b16 %v327
        %v381 = vunpack.c.l.b16 %v328
        %v382 = vunpack.c.h.b16 %v328
        %v383 = vpack.c.b16 %v353, %v351
        %v384 = vpack.c.b16 %v354, %v352
        %v385 = vpack.c.b16 %v357, %v355
        %v386 = vpack.c.b16 %v358, %v356
        %v387 = vpack.c.b16 %v361, %v359
        %v388 = vpack.c.b16 %v362, %v360
        %v389 = vpack.c.b16 %v365, %v363
        %v390 = vpack.c.b16 %v366, %v364
        %v391 = vpack.c.b16 %v369, %v367
        %v392 = vpack.c.b16 %v370, %v368
        %v393 = vpack.c.b16 %v373, %v371
        %v394 = vpack.c.b16 %v374, %v372
        %v395 = vpack.c.b16 %v377, %v375
        %v396 = vpack.c.b16 %v378, %v376
        %v397 = vpack.c.b16 %v381, %v379
        %v398 = vpack.c.b16 %v382, %v380
        %415 = vmatpush.bf16.msra.mxu0 %v397
        %416 = vmatpush.bf16.msra.mxu0 %v395
        %417 = vmatpush.bf16.msra.mxu0 %v393
        %418 = vmatpush.bf16.msra.mxu0 %v391
        %419 = vmatpush.bf16.msra.mxu0 %v389
        %420 = vmatpush.bf16.msra.mxu0 %v387
        %421 = vmatpush.bf16.msra.mxu0 %v385
        %422 = vmatpush.bf16.msra.mxu0 %v383
        %423 = vmatmul.bf16.gmra.mxu0 %v312
        %v424 = vpop.f32.mrf.mxu0
        %v425 = vadd.f32 %v333, %v424
        %v426 = vpop.f32.mrf.mxu0
        %427 = vdwg.mxu0
        %428 = vmatpush.bf16.msra.mxu0 %v398
        %429 = vmatpush.bf16.msra.mxu0 %v396
        %430 = vmatpush.bf16.msra.mxu0 %v394
        %431 = vmatpush.bf16.msra.mxu0 %v392
        %432 = vmatpush.bf16.msra.mxu0 %v390
        %433 = vmatpush.bf16.msra.mxu0 %v388
        %434 = vmatpush.bf16.msra.mxu0 %v386
        %435 = vmatpush.bf16.msra.mxu0 %v384
        %436 = vmatmul.bf16.gmra.mxu0 %v312
        %v437 = vpop.f32.mrf.mxu0
        %v438 = vadd.f32 %v333, %v437
        %v439 = vpop.f32.mrf.mxu0
        %440 = vdwg.mxu0
        %v441 = vtanh.pop %v425
        %v442 = vtanh.pop %v438
        %v445 = vrot.slane %v442, 4
        %vm446 = vcmask 1043456
        %v447 = vsel %vm446, %v441, %v445
        %449 = vst [vmem:[%s310] sm:$0x77] %v447
        %s450 = smul.u32 2, %s19
        %p451 = scmp.lt.s32.totalorder %s18, 3
        %s452 = scalar_select %p451, %s18, 3
        %p453 = scmp.lt.s32.totalorder %s450, 3
        %s454 = scalar_select %p453, %s450, 3
        %s455 = smul.addr %s452, 4
        %s456 = sadd.s32 %s454, %s455
        %s457 = smul.addr %s456, 4
        %s458 = scalar_lea.vmem %s3, %s457
        // Predicated region
        $region71: #{vae_forward.17} parent=65 // pred_check
          %p459 = pneg %p121
        $region72: #{vae_forward.17} parent=65 // pred_check_branch
          %461 = sbr.rel (%p459) target = $region74
        $region73: #{vae_forward.17} parent=65 // pred_region
          %s462 = smul.u32 2, %s19
        $region74: #{vae_forward.17} parent=65 // pred_fallthru
          _
      $region66: #{vae_forward.17} parent=5 // pred_fallthru
        _
      %p463 = scmp.le.s32.totalorder 2, %s9
      // Predicated region
      $region75: #{vae_forward.17} parent=5 // pred_check
        %p464 = pneg %p463
      $region76: #{vae_forward.17} parent=5 // pred_check_branch
        %466 = sbr.rel (%p464) target = $region78
      $region77: #{vae_forward.17} parent=5 // pred_region
        %s467 = ssub.s32 %s9, 2
        // Predicated region
        $region79: #{vae_forward.17} parent=77 // pred_check
          %p468 = pneg %p127
        $region80: #{vae_forward.17} parent=77 // pred_check_branch
          %470 = sbr.rel (%p468) target = $region82
        $region81: #{vae_forward.17} parent=77 // pred_region
          %s471 = smul.u32 2, %s21
          %p472 = scmp.lt.s32.totalorder %s20, 3
          %s473 = scalar_select %p472, %s20, 3
          %p474 = scmp.lt.s32.totalorder %s471, 3
          %s475 = scalar_select %p474, %s471, 3
          %s476 = smul.addr %s473, 4
          %s477 = sadd.s32 %s475, %s476
          %s478 = smul.addr %s477, 4
          %s479 = scalar_lea.vmem %s3, %s478
        $region82: #{vae_forward.17} parent=77 // pred_fallthru
          _
      $region78: #{vae_forward.17} parent=5 // pred_fallthru
        _
    $region6: #{vae_forward.17} parent=1 // loop_footer
      %s13 = sadd.s32 1, %s9
    $region7: #{vae_forward.17} parent=1 // loop_footer_branch
      %8 = sbr.rel target = $region3
    $region8: #{vae_forward.17} parent=1 // loop_exit
      _

</llo_original>
